<compile_context>
chip_gen: v5e
topology: v5e:2x2
jax: 0.10.0
libtpu: 0.0.40
codegen_flags: <defaults>
</compile_context>

<pallas_src>
import functools

import jax
import jax.numpy as jnp
from jax.experimental import pallas as pl
from jax.experimental.pallas import tpu as pltpu


def _round_up(x, m):
    return (x + m - 1) // m * m


def se_basic_block_kernel(x_ref, w1_ref, w2_ref, s1_ref, b1_ref, s2_ref, b2_ref,
                          fw1_ref, fw2_ref, o_ref, pad_ref, *, H, W, Wp, Cp):
    # Shapes (per grid step = one image):
    #   x_ref   : (1, H, W, Cp)  f32   activations, NHWC, channels zero-padded to 128
    #   w*_ref  : (9, Cp, Cp)    bf16  conv taps, tap index t = 3*dy + dx
    #   s*/b*   : (1, Cp)        f32   folded BN scale / bias
    #   fw*_ref : (Cp, Cp)       bf16  SE fc weights (zero padded)
    #   o_ref   : (1, H, W, Cp)  f32
    #   pad_ref : (H+4, Wp, Cp)  f32   zero-halo padded activation scratch
    #
    # pad_ref layout: rows 0..1 top halo, rows 2..H+1 data (input row r at buffer
    # row r+2, cols 0..W-1; trailing cols W..Wp-1 kept zero so they provide the
    # right halo and the left halo of the next row after flattening), row H+2
    # bottom halo, row H+3 only feeds the discarded output columns (kept so every
    # flat tap index stays in bounds: max index = (H+3)*Wp + 1).
    Hp = H + 4
    Np = H * Wp                      # rows of the (flattened) conv output
    Npad = Hp * Wp
    L = 2 * Wp + Np                  # length of one dx-shifted working copy

    # ---- re-zero the halo every step (keeps batch steps independent -> megacore
    # safe).  All three stores are full-tile aligned (Wp, Wp - W multiples of 16).
    pad_ref[0:2, :, :] = jnp.zeros((2, Wp, Cp), jnp.float32)
    pad_ref[H + 2:H + 4, :, :] = jnp.zeros((2, Wp, Cp), jnp.float32)
    pad_ref[2:H + 2, W:Wp, :] = jnp.zeros((H, Wp - W, Cp), jnp.float32)

    def conv3x3(w_ref):
        # Flatten the padded buffer (free: Wp is a multiple of the sublane tile).
        x_all = pad_ref[...].reshape(Npad, Cp)
        # One dx-shifted working copy per tap column (2 sublane-shifted copies +
        # 1 aligned one) instead of 6 shifted matmul operands; cast to bf16 once
        # per copy (not once per tap).
        xq = tuple(
            x_all[Wp - 1 + dx:Wp - 1 + dx + L, :].astype(jnp.bfloat16)
            for dx in range(3))
        # 9 accumulated K=Cp matmuls with f32 accumulation (no im2col patch).
        acc = None
        for dy in range(3):
            base = dy * Wp            # multiple of 16 -> aligned bf16 sub-slices
            for dx in range(3):
                part = jnp.dot(xq[dx][base:base + Np, :], w_ref[3 * dy + dx],
                               preferred_element_type=jnp.float32)
                acc = part if acc is None else acc + part
        # Real output columns sit at 0..W-1 -> aligned crop; cols W..Wp-1 are junk.
        return acc.reshape(H, Wp, Cp)[:, 0:W, :]

    x = x_ref[0]                                                    # (H, W, Cp) f32

    # ---- conv1 -> bn1 -> relu
    pad_ref[2:H + 2, 0:W, :] = x                                    # aligned store
    a1 = jnp.maximum(conv3x3(w1_ref) * s1_ref[...] + b1_ref[...], 0.0)   # (H, W, Cp)

    # ---- conv2 -> bn2
    pad_ref[2:H + 2, 0:W, :] = a1                                   # aligned store
    o2 = conv3x3(w2_ref) * s2_ref[...] + b2_ref[...]                # (H, W, Cp)

    # ---- squeeze-and-excitation (fc weights zero-padded to Cp x Cp; exact)
    y = jnp.sum(o2.reshape(H * W, Cp), axis=0, keepdims=True) * (1.0 / (H * W))
    z = jnp.maximum(jnp.dot(y.astype(jnp.bfloat16), fw1_ref[...],
                            preferred_element_type=jnp.float32), 0.0)
    s = jax.nn.sigmoid(jnp.dot(z.astype(jnp.bfloat16), fw2_ref[...],
                               preferred_element_type=jnp.float32))       # (1, Cp)

    # ---- SE scale, residual add, relu (lane-dense, Cp == 128), aligned store
    o_ref[0] = jnp.maximum(o2 * s + x, 0.0).astype(o_ref.dtype)


def se_basic_block(x, params):
    """x: (B, H, W, C) f32 NHWC.  Torch BasicBlock(stride=1, downsample=None)."""
    B, H, W, C = x.shape
    assert W % 8 == 0, "kernel assumes sublane-aligned spatial width"
    Cp = _round_up(max(C, 128), 128)      # lane-dense channel padding
    Wp = _round_up(W + 2, 16)             # sublane-tile aligned padded width
    Hp = H + 4

    xc = jnp.pad(x, ((0, 0), (0, 0), (0, 0), (0, Cp - C))).astype(jnp.float32)

    def prep_w(w):                        # (3,3,Cin,Cout) -> (9, Cp, Cp) bf16
        w = jnp.pad(w, ((0, 0), (0, 0), (0, Cp - w.shape[2]), (0, Cp - w.shape[3])))
        return w.reshape(9, Cp, Cp).astype(jnp.bfloat16)

    def prep_v(v):                        # (..., C) -> (1, Cp) f32
        v = v.reshape(-1)
        return jnp.pad(v, (0, Cp - v.shape[0])).reshape(1, Cp).astype(jnp.float32)

    def prep_fc(w):                       # (in, out) -> (Cp, Cp) bf16
        w = jnp.pad(w, ((0, Cp - w.shape[0]), (0, Cp - w.shape[1])))
        return w.astype(jnp.bfloat16)

    w1 = prep_w(params["w1"]); w2 = prep_w(params["w2"])
    s1 = prep_v(params["bn1_scale"]); b1 = prep_v(params["bn1_bias"])
    s2 = prep_v(params["bn2_scale"]); b2 = prep_v(params["bn2_bias"])
    fw1 = prep_fc(params["se_w1"]); fw2 = prep_fc(params["se_w2"])

    kernel = functools.partial(se_basic_block_kernel, H=H, W=W, Wp=Wp, Cp=Cp)

    def full(shape):                      # weight/param blocks: same block every step
        return pl.BlockSpec(shape, lambda b: (0,) * len(shape))

    grid_spec = pltpu.PrefetchScalarGridSpec(
        num_scalar_prefetch=0,
        grid=(B,),
        in_specs=[
            pl.BlockSpec((1, H, W, Cp), lambda b: (b, 0, 0, 0)),
            full((9, Cp, Cp)), full((9, Cp, Cp)),
            full((1, Cp)), full((1, Cp)), full((1, Cp)), full((1, Cp)),
            full((Cp, Cp)), full((Cp, Cp)),
        ],
        out_specs=pl.BlockSpec((1, H, W, Cp), lambda b: (b, 0, 0, 0)),
        scratch_shapes=[pltpu.VMEM((Hp, Wp, Cp), jnp.float32)],
    )

    Np = H * Wp
    flops = B * (2 * 9 * 2 * Np * Cp * Cp + 2 * (2 * Cp * Cp) + 12 * H * W * Cp)
    bytes_accessed = (2 * B * H * W * Cp * 4                 # activations in + out
                      + 2 * 9 * Cp * Cp * 2 + 2 * Cp * Cp * 2 + 4 * Cp * 4)

    out = pl.pallas_call(
        kernel,
        grid_spec=grid_spec,
        out_shape=jax.ShapeDtypeStruct((B, H, W, Cp), jnp.float32),
        compiler_params=pltpu.CompilerParams(
            dimension_semantics=("parallel",),               # megacore on v7x
            vmem_limit_bytes=32 * 1024 * 1024),
        cost_estimate=pl.CostEstimate(flops=flops, transcendentals=B * Cp,
                                      bytes_accessed=bytes_accessed),
    )(xc, w1, w2, s1, b1, s2, b2, fw1, fw2)
    return out[..., :C]


# ------------------- pure-JAX reference (verification only) ------------------- #
def _conv3x3_ref(x, w):
    return jax.lax.conv_general_dilated(
        x, w, window_strides=(1, 1), padding=((1, 1), (1, 1)),
        dimension_numbers=("NHWC", "HWIO", "NHWC"))


def basic_block_ref(x, p):
    out = _conv3x3_ref(x, p["w1"]) * p["bn1_scale"] + p["bn1_bias"]
    out = jnp.maximum(out, 0.0)
    out = _conv3x3_ref(out, p["w2"]) * p["bn2_scale"] + p["bn2_bias"]
    y = jnp.mean(out, axis=(1, 2))
    z = jnp.maximum(y @ p["se_w1"], 0.0)
    s = jax.nn.sigmoid(z @ p["se_w2"])
    out = out * s[:, None, None, :]
    return jnp.maximum(out + x, 0.0)


if __name__ == "__main__":
    B, H, W = 2, 16, 16
    inplanes = planes = 16      # inplanes == planes since downsample=None, stride=1
    reduction = 16

    key = jax.random.PRNGKey(0)
    ks = jax.random.split(key, 12)

    def fold_bn(gamma, beta, mean, var, eps=1e-5):
        scale = gamma / jnp.sqrt(var + eps)
        bias = beta - mean * scale
        return scale.reshape(1, 1, 1, -1), bias.reshape(1, 1, 1, -1)

    bn1_scale, bn1_bias = fold_bn(
        jax.random.uniform(ks[2], (planes,), minval=0.5, maxval=1.5),
        0.1 * jax.random.normal(ks[3], (planes,)),
        0.1 * jax.random.normal(ks[4], (planes,)),
        jax.random.uniform(ks[5], (planes,), minval=0.5, maxval=1.5))
    bn2_scale, bn2_bias = fold_bn(
        jax.random.uniform(ks[6], (planes,), minval=0.5, maxval=1.5),
        0.1 * jax.random.normal(ks[7], (planes,)),
        0.1 * jax.random.normal(ks[8], (planes,)),
        jax.random.uniform(ks[9], (planes,), minval=0.5, maxval=1.5))

    params = {
        "w1": 0.1 * jax.random.normal(ks[0], (3, 3, inplanes, planes), jnp.float32),
        "w2": 0.1 * jax.random.normal(ks[1], (3, 3, planes, planes), jnp.float32),
        "bn1_scale": bn1_scale, "bn1_bias": bn1_bias,
        "bn2_scale": bn2_scale, "bn2_bias": bn2_bias,
        "se_w1": 0.2 * jax.random.normal(ks[10], (planes, planes // reduction), jnp.float32),
        "se_w2": 0.2 * jax.random.normal(ks[11], (planes // reduction, planes), jnp.float32),
    }

    x = jax.random.normal(jax.random.PRNGKey(42), (B, H, W, inplanes), jnp.float32)

    out = jax.block_until_ready(jax.jit(se_basic_block)(x, params))
    ref = jax.block_until_ready(basic_block_ref(x, params))

    assert out.shape == (B, H, W, planes)
    # bf16 MXU operands -> slightly loose tolerance vs the f32 reference.
    assert jnp.allclose(out, ref, rtol=2e-2, atol=2e-2), float(jnp.max(jnp.abs(out - ref)))
    print("KERNEL_OK")
</pallas_src>

<mosaic_0001>
module attributes {stable_mosaic.version = 11 : i64} {
  func.func @se_basic_block_kernel(%arg0: i32, %arg1: memref<1x16x16x128xf32, #tpu.memory_space<vmem>>, %arg2: memref<9x128x128xbf16, #tpu.memory_space<vmem>>, %arg3: memref<9x128x128xbf16, #tpu.memory_space<vmem>>, %arg4: memref<1x128xf32, #tpu.memory_space<vmem>>, %arg5: memref<1x128xf32, #tpu.memory_space<vmem>>, %arg6: memref<1x128xf32, #tpu.memory_space<vmem>>, %arg7: memref<1x128xf32, #tpu.memory_space<vmem>>, %arg8: memref<128x128xbf16, #tpu.memory_space<vmem>>, %arg9: memref<128x128xbf16, #tpu.memory_space<vmem>>, %arg10: memref<1x16x16x128xf32, #tpu.memory_space<vmem>>, %arg11: memref<20x32x128xf32, #tpu.memory_space<vmem>>) attributes {dimension_semantics = [#tpu.dimension_semantics<parallel>], iteration_bounds = array<i64: 2>, scalar_prefetch = 0 : i64, scratch_operands = 1 : i64, tpu.core_type = #tpu.core_type<tc>, window_params = [{transform_indices = @transform_0, window_bounds = array<i64: 1, 16, 16, 128>}, {pipeline_mode = #tpu.pipeline_mode<synchronous>, transform_indices = @transform_1, window_bounds = array<i64: 9, 128, 128>}, {pipeline_mode = #tpu.pipeline_mode<synchronous>, transform_indices = @transform_2, window_bounds = array<i64: 9, 128, 128>}, {pipeline_mode = #tpu.pipeline_mode<synchronous>, transform_indices = @transform_3, window_bounds = array<i64: 1, 128>}, {pipeline_mode = #tpu.pipeline_mode<synchronous>, transform_indices = @transform_4, window_bounds = array<i64: 1, 128>}, {pipeline_mode = #tpu.pipeline_mode<synchronous>, transform_indices = @transform_5, window_bounds = array<i64: 1, 128>}, {pipeline_mode = #tpu.pipeline_mode<synchronous>, transform_indices = @transform_6, window_bounds = array<i64: 1, 128>}, {pipeline_mode = #tpu.pipeline_mode<synchronous>, transform_indices = @transform_7, window_bounds = array<i64: 128, 128>}, {pipeline_mode = #tpu.pipeline_mode<synchronous>, transform_indices = @transform_8, window_bounds = array<i64: 128, 128>}, {transform_indices = @transform_9, window_bounds = array<i64: 1, 16, 16, 128>}]} {
    %cst = arith.constant 0.000000e+00 : f32
    %0 = vector.broadcast %cst : f32 to vector<2x32x128xf32>
    %c0 = arith.constant 0 : index
    %c0_0 = arith.constant 0 : index
    %c0_1 = arith.constant 0 : index
    %1 = vector.load %arg11[%c0, %c0_0, %c0_1] : memref<20x32x128xf32, #tpu.memory_space<vmem>>, vector<2x32x128xf32>
    tpu.vector_store %arg11[%c0, %c0_0, %c0_1], %0 {strides = array<i32>} : memref<20x32x128xf32, #tpu.memory_space<vmem>>, vector<2x32x128xf32>,
    %cst_2 = arith.constant 0.000000e+00 : f32
    %2 = vector.broadcast %cst_2 : f32 to vector<2x32x128xf32>
    %c18 = arith.constant 18 : index
    %c0_3 = arith.constant 0 : index
    %c0_4 = arith.constant 0 : index
    %3 = vector.load %arg11[%c18, %c0_3, %c0_4] : memref<20x32x128xf32, #tpu.memory_space<vmem>>, vector<2x32x128xf32>
    tpu.vector_store %arg11[%c18, %c0_3, %c0_4], %2 {strides = array<i32>} : memref<20x32x128xf32, #tpu.memory_space<vmem>>, vector<2x32x128xf32>,
    %cst_5 = arith.constant 0.000000e+00 : f32
    %4 = vector.broadcast %cst_5 : f32 to vector<16x16x128xf32>
    %c2 = arith.constant 2 : index
    %c16 = arith.constant 16 : index
    %c0_6 = arith.constant 0 : index
    %5 = vector.load %arg11[%c2, %c16, %c0_6] : memref<20x32x128xf32, #tpu.memory_space<vmem>>, vector<16x16x128xf32>
    tpu.vector_store %arg11[%c2, %c16, %c0_6], %4 {strides = array<i32>} : memref<20x32x128xf32, #tpu.memory_space<vmem>>, vector<16x16x128xf32>,
    %c0_7 = arith.constant 0 : index
    %c0_8 = arith.constant 0 : index
    %c0_9 = arith.constant 0 : index
    %c0_10 = arith.constant 0 : index
    %6 = vector.load %arg1[%c0_7, %c0_8, %c0_9, %c0_10] : memref<1x16x16x128xf32, #tpu.memory_space<vmem>>, vector<1x16x16x128xf32>
    %7 = vector.shape_cast %6 : vector<1x16x16x128xf32> to vector<16x16x128xf32>
    %c2_11 = arith.constant 2 : index
    %c0_12 = arith.constant 0 : index
    %c0_13 = arith.constant 0 : index
    %8 = vector.load %arg11[%c2_11, %c0_12, %c0_13] : memref<20x32x128xf32, #tpu.memory_space<vmem>>, vector<16x16x128xf32>
    tpu.vector_store %arg11[%c2_11, %c0_12, %c0_13], %7 {strides = array<i32>} : memref<20x32x128xf32, #tpu.memory_space<vmem>>, vector<16x16x128xf32>,
    %c0_14 = arith.constant 0 : index
    %c0_15 = arith.constant 0 : index
    %c0_16 = arith.constant 0 : index
    %9 = vector.load %arg11[%c0_14, %c0_15, %c0_16] : memref<20x32x128xf32, #tpu.memory_space<vmem>>, vector<20x32x128xf32>
    %10 = vector.shape_cast %9 : vector<20x32x128xf32> to vector<640x128xf32>
    %11 = vector.extract_strided_slice %10 {offsets = [31, 0], sizes = [576, 128], strides = [1, 1]} : vector<640x128xf32> to vector<576x128xf32>
    %12 = arith.truncf %11 : vector<576x128xf32> to vector<576x128xbf16>
    %13 = vector.extract_strided_slice %10 {offsets = [32, 0], sizes = [576, 128], strides = [1, 1]} : vector<640x128xf32> to vector<576x128xf32>
    %14 = arith.truncf %13 : vector<576x128xf32> to vector<576x128xbf16>
    %15 = vector.extract_strided_slice %10 {offsets = [33, 0], sizes = [576, 128], strides = [1, 1]} : vector<640x128xf32> to vector<576x128xf32>
    %16 = arith.truncf %15 : vector<576x128xf32> to vector<576x128xbf16>
    %17 = vector.extract_strided_slice %12 {offsets = [0, 0], sizes = [512, 128], strides = [1, 1]} : vector<576x128xbf16> to vector<512x128xbf16>
    %c0_17 = arith.constant 0 : index
    %c0_18 = arith.constant 0 : index
    %c0_19 = arith.constant 0 : index
    %18 = vector.load %arg2[%c0_17, %c0_18, %c0_19] : memref<9x128x128xbf16, #tpu.memory_space<vmem>>, vector<1x128x128xbf16>
    %19 = vector.shape_cast %18 : vector<1x128x128xbf16> to vector<128x128xbf16>
    %cst_20 = arith.constant dense<0.000000e+00> : vector<512x128xf32>
    %20 = tpu.matmul %17, %19, %cst_20 {dimension_numbers = #tpu.dot_dimension_numbers<[1], [0], [0], [1], [0, 0, 1, 1], [], []>} : vector<512x128xbf16>, vector<128x128xbf16>, vector<512x128xf32> -> vector<512x128xf32>
    %21 = vector.extract_strided_slice %14 {offsets = [0, 0], sizes = [512, 128], strides = [1, 1]} : vector<576x128xbf16> to vector<512x128xbf16>
    %c1 = arith.constant 1 : index
    %c0_21 = arith.constant 0 : index
    %c0_22 = arith.constant 0 : index
    %22 = vector.load %arg2[%c1, %c0_21, %c0_22] : memref<9x128x128xbf16, #tpu.memory_space<vmem>>, vector<1x128x128xbf16>
    %23 = vector.shape_cast %22 : vector<1x128x128xbf16> to vector<128x128xbf16>
    %cst_23 = arith.constant dense<0.000000e+00> : vector<512x128xf32>
    %24 = tpu.matmul %21, %23, %cst_23 {dimension_numbers = #tpu.dot_dimension_numbers<[1], [0], [0], [1], [0, 0, 1, 1], [], []>} : vector<512x128xbf16>, vector<128x128xbf16>, vector<512x128xf32> -> vector<512x128xf32>
    %25 = arith.addf %20, %24 : vector<512x128xf32>
    %26 = vector.extract_strided_slice %16 {offsets = [0, 0], sizes = [512, 128], strides = [1, 1]} : vector<576x128xbf16> to vector<512x128xbf16>
    %c2_24 = arith.constant 2 : index
    %c0_25 = arith.constant 0 : index
    %c0_26 = arith.constant 0 : index
    %27 = vector.load %arg2[%c2_24, %c0_25, %c0_26] : memref<9x128x128xbf16, #tpu.memory_space<vmem>>, vector<1x128x128xbf16>
    %28 = vector.shape_cast %27 : vector<1x128x128xbf16> to vector<128x128xbf16>
    %cst_27 = arith.constant dense<0.000000e+00> : vector<512x128xf32>
    %29 = tpu.matmul %26, %28, %cst_27 {dimension_numbers = #tpu.dot_dimension_numbers<[1], [0], [0], [1], [0, 0, 1, 1], [], []>} : vector<512x128xbf16>, vector<128x128xbf16>, vector<512x128xf32> -> vector<512x128xf32>
    %30 = arith.addf %25, %29 : vector<512x128xf32>
    %31 = vector.extract_strided_slice %12 {offsets = [32, 0], sizes = [512, 128], strides = [1, 1]} : vector<576x128xbf16> to vector<512x128xbf16>
    %c3 = arith.constant 3 : index
    %c0_28 = arith.constant 0 : index
    %c0_29 = arith.constant 0 : index
    %32 = vector.load %arg2[%c3, %c0_28, %c0_29] : memref<9x128x128xbf16, #tpu.memory_space<vmem>>, vector<1x128x128xbf16>
    %33 = vector.shape_cast %32 : vector<1x128x128xbf16> to vector<128x128xbf16>
    %cst_30 = arith.constant dense<0.000000e+00> : vector<512x128xf32>
    %34 = tpu.matmul %31, %33, %cst_30 {dimension_numbers = #tpu.dot_dimension_numbers<[1], [0], [0], [1], [0, 0, 1, 1], [], []>} : vector<512x128xbf16>, vector<128x128xbf16>, vector<512x128xf32> -> vector<512x128xf32>
    %35 = arith.addf %30, %34 : vector<512x128xf32>
    %36 = vector.extract_strided_slice %14 {offsets = [32, 0], sizes = [512, 128], strides = [1, 1]} : vector<576x128xbf16> to vector<512x128xbf16>
    %c4 = arith.constant 4 : index
    %c0_31 = arith.constant 0 : index
    %c0_32 = arith.constant 0 : index
    %37 = vector.load %arg2[%c4, %c0_31, %c0_32] : memref<9x128x128xbf16, #tpu.memory_space<vmem>>, vector<1x128x128xbf16>
    %38 = vector.shape_cast %37 : vector<1x128x128xbf16> to vector<128x128xbf16>
    %cst_33 = arith.constant dense<0.000000e+00> : vector<512x128xf32>
    %39 = tpu.matmul %36, %38, %cst_33 {dimension_numbers = #tpu.dot_dimension_numbers<[1], [0], [0], [1], [0, 0, 1, 1], [], []>} : vector<512x128xbf16>, vector<128x128xbf16>, vector<512x128xf32> -> vector<512x128xf32>
    %40 = arith.addf %35, %39 : vector<512x128xf32>
    %41 = vector.extract_strided_slice %16 {offsets = [32, 0], sizes = [512, 128], strides = [1, 1]} : vector<576x128xbf16> to vector<512x128xbf16>
    %c5 = arith.constant 5 : index
    %c0_34 = arith.constant 0 : index
    %c0_35 = arith.constant 0 : index
    %42 = vector.load %arg2[%c5, %c0_34, %c0_35] : memref<9x128x128xbf16, #tpu.memory_space<vmem>>, vector<1x128x128xbf16>
    %43 = vector.shape_cast %42 : vector<1x128x128xbf16> to vector<128x128xbf16>
    %cst_36 = arith.constant dense<0.000000e+00> : vector<512x128xf32>
    %44 = tpu.matmul %41, %43, %cst_36 {dimension_numbers = #tpu.dot_dimension_numbers<[1], [0], [0], [1], [0, 0, 1, 1], [], []>} : vector<512x128xbf16>, vector<128x128xbf16>, vector<512x128xf32> -> vector<512x128xf32>
    %45 = arith.addf %40, %44 : vector<512x128xf32>
    %46 = vector.extract_strided_slice %12 {offsets = [64, 0], sizes = [512, 128], strides = [1, 1]} : vector<576x128xbf16> to vector<512x128xbf16>
    %c6 = arith.constant 6 : index
    %c0_37 = arith.constant 0 : index
    %c0_38 = arith.constant 0 : index
    %47 = vector.load %arg2[%c6, %c0_37, %c0_38] : memref<9x128x128xbf16, #tpu.memory_space<vmem>>, vector<1x128x128xbf16>
    %48 = vector.shape_cast %47 : vector<1x128x128xbf16> to vector<128x128xbf16>
    %cst_39 = arith.constant dense<0.000000e+00> : vector<512x128xf32>
    %49 = tpu.matmul %46, %48, %cst_39 {dimension_numbers = #tpu.dot_dimension_numbers<[1], [0], [0], [1], [0, 0, 1, 1], [], []>} : vector<512x128xbf16>, vector<128x128xbf16>, vector<512x128xf32> -> vector<512x128xf32>
    %50 = arith.addf %45, %49 : vector<512x128xf32>
    %51 = vector.extract_strided_slice %14 {offsets = [64, 0], sizes = [512, 128], strides = [1, 1]} : vector<576x128xbf16> to vector<512x128xbf16>
    %c7 = arith.constant 7 : index
    %c0_40 = arith.constant 0 : index
    %c0_41 = arith.constant 0 : index
    %52 = vector.load %arg2[%c7, %c0_40, %c0_41] : memref<9x128x128xbf16, #tpu.memory_space<vmem>>, vector<1x128x128xbf16>
    %53 = vector.shape_cast %52 : vector<1x128x128xbf16> to vector<128x128xbf16>
    %cst_42 = arith.constant dense<0.000000e+00> : vector<512x128xf32>
    %54 = tpu.matmul %51, %53, %cst_42 {dimension_numbers = #tpu.dot_dimension_numbers<[1], [0], [0], [1], [0, 0, 1, 1], [], []>} : vector<512x128xbf16>, vector<128x128xbf16>, vector<512x128xf32> -> vector<512x128xf32>
    %55 = arith.addf %50, %54 : vector<512x128xf32>
    %56 = vector.extract_strided_slice %16 {offsets = [64, 0], sizes = [512, 128], strides = [1, 1]} : vector<576x128xbf16> to vector<512x128xbf16>
    %c8 = arith.constant 8 : index
    %c0_43 = arith.constant 0 : index
    %c0_44 = arith.constant 0 : index
    %57 = vector.load %arg2[%c8, %c0_43, %c0_44] : memref<9x128x128xbf16, #tpu.memory_space<vmem>>, vector<1x128x128xbf16>
    %58 = vector.shape_cast %57 : vector<1x128x128xbf16> to vector<128x128xbf16>
    %cst_45 = arith.constant dense<0.000000e+00> : vector<512x128xf32>
    %59 = tpu.matmul %56, %58, %cst_45 {dimension_numbers = #tpu.dot_dimension_numbers<[1], [0], [0], [1], [0, 0, 1, 1], [], []>} : vector<512x128xbf16>, vector<128x128xbf16>, vector<512x128xf32> -> vector<512x128xf32>
    %60 = arith.addf %55, %59 : vector<512x128xf32>
    %61 = vector.shape_cast %60 : vector<512x128xf32> to vector<16x32x128xf32>
    %62 = vector.extract_strided_slice %61 {offsets = [0, 0, 0], sizes = [16, 16, 128], strides = [1, 1, 1]} : vector<16x32x128xf32> to vector<16x16x128xf32>
    %c0_46 = arith.constant 0 : index
    %c0_47 = arith.constant 0 : index
    %63 = vector.load %arg4[%c0_46, %c0_47] : memref<1x128xf32, #tpu.memory_space<vmem>>, vector<1x128xf32>
    %64 = vector.shape_cast %63 : vector<1x128xf32> to vector<1x1x128xf32>
    %65 = vector.broadcast %64 : vector<1x1x128xf32> to vector<16x16x128xf32>
    %66 = arith.mulf %62, %65 : vector<16x16x128xf32>
    %c0_48 = arith.constant 0 : index
    %c0_49 = arith.constant 0 : index
    %67 = vector.load %arg5[%c0_48, %c0_49] : memref<1x128xf32, #tpu.memory_space<vmem>>, vector<1x128xf32>
    %68 = vector.shape_cast %67 : vector<1x128xf32> to vector<1x1x128xf32>
    %69 = vector.broadcast %68 : vector<1x1x128xf32> to vector<16x16x128xf32>
    %70 = arith.addf %66, %69 : vector<16x16x128xf32>
    %cst_50 = arith.constant 0.000000e+00 : f32
    %71 = vector.broadcast %cst_50 : f32 to vector<16x16x128xf32>
    %72 = arith.maximumf %70, %71 : vector<16x16x128xf32>
    %c2_51 = arith.constant 2 : index
    %c0_52 = arith.constant 0 : index
    %c0_53 = arith.constant 0 : index
    %73 = vector.load %arg11[%c2_51, %c0_52, %c0_53] : memref<20x32x128xf32, #tpu.memory_space<vmem>>, vector<16x16x128xf32>
    tpu.vector_store %arg11[%c2_51, %c0_52, %c0_53], %72 {strides = array<i32>} : memref<20x32x128xf32, #tpu.memory_space<vmem>>, vector<16x16x128xf32>,
    %c0_54 = arith.constant 0 : index
    %c0_55 = arith.constant 0 : index
    %c0_56 = arith.constant 0 : index
    %74 = vector.load %arg11[%c0_54, %c0_55, %c0_56] : memref<20x32x128xf32, #tpu.memory_space<vmem>>, vector<20x32x128xf32>
    %75 = vector.shape_cast %74 : vector<20x32x128xf32> to vector<640x128xf32>
    %76 = vector.extract_strided_slice %75 {offsets = [31, 0], sizes = [576, 128], strides = [1, 1]} : vector<640x128xf32> to vector<576x128xf32>
    %77 = arith.truncf %76 : vector<576x128xf32> to vector<576x128xbf16>
    %78 = vector.extract_strided_slice %75 {offsets = [32, 0], sizes = [576, 128], strides = [1, 1]} : vector<640x128xf32> to vector<576x128xf32>
    %79 = arith.truncf %78 : vector<576x128xf32> to vector<576x128xbf16>
    %80 = vector.extract_strided_slice %75 {offsets = [33, 0], sizes = [576, 128], strides = [1, 1]} : vector<640x128xf32> to vector<576x128xf32>
    %81 = arith.truncf %80 : vector<576x128xf32> to vector<576x128xbf16>
    %82 = vector.extract_strided_slice %77 {offsets = [0, 0], sizes = [512, 128], strides = [1, 1]} : vector<576x128xbf16> to vector<512x128xbf16>
    %c0_57 = arith.constant 0 : index
    %c0_58 = arith.constant 0 : index
    %c0_59 = arith.constant 0 : index
    %83 = vector.load %arg3[%c0_57, %c0_58, %c0_59] : memref<9x128x128xbf16, #tpu.memory_space<vmem>>, vector<1x128x128xbf16>
    %84 = vector.shape_cast %83 : vector<1x128x128xbf16> to vector<128x128xbf16>
    %cst_60 = arith.constant dense<0.000000e+00> : vector<512x128xf32>
    %85 = tpu.matmul %82, %84, %cst_60 {dimension_numbers = #tpu.dot_dimension_numbers<[1], [0], [0], [1], [0, 0, 1, 1], [], []>} : vector<512x128xbf16>, vector<128x128xbf16>, vector<512x128xf32> -> vector<512x128xf32>
    %86 = vector.extract_strided_slice %79 {offsets = [0, 0], sizes = [512, 128], strides = [1, 1]} : vector<576x128xbf16> to vector<512x128xbf16>
    %c1_61 = arith.constant 1 : index
    %c0_62 = arith.constant 0 : index
    %c0_63 = arith.constant 0 : index
    %87 = vector.load %arg3[%c1_61, %c0_62, %c0_63] : memref<9x128x128xbf16, #tpu.memory_space<vmem>>, vector<1x128x128xbf16>
    %88 = vector.shape_cast %87 : vector<1x128x128xbf16> to vector<128x128xbf16>
    %cst_64 = arith.constant dense<0.000000e+00> : vector<512x128xf32>
    %89 = tpu.matmul %86, %88, %cst_64 {dimension_numbers = #tpu.dot_dimension_numbers<[1], [0], [0], [1], [0, 0, 1, 1], [], []>} : vector<512x128xbf16>, vector<128x128xbf16>, vector<512x128xf32> -> vector<512x128xf32>
    %90 = arith.addf %85, %89 : vector<512x128xf32>
    %91 = vector.extract_strided_slice %81 {offsets = [0, 0], sizes = [512, 128], strides = [1, 1]} : vector<576x128xbf16> to vector<512x128xbf16>
    %c2_65 = arith.constant 2 : index
    %c0_66 = arith.constant 0 : index
    %c0_67 = arith.constant 0 : index
    %92 = vector.load %arg3[%c2_65, %c0_66, %c0_67] : memref<9x128x128xbf16, #tpu.memory_space<vmem>>, vector<1x128x128xbf16>
    %93 = vector.shape_cast %92 : vector<1x128x128xbf16> to vector<128x128xbf16>
    %cst_68 = arith.constant dense<0.000000e+00> : vector<512x128xf32>
    %94 = tpu.matmul %91, %93, %cst_68 {dimension_numbers = #tpu.dot_dimension_numbers<[1], [0], [0], [1], [0, 0, 1, 1], [], []>} : vector<512x128xbf16>, vector<128x128xbf16>, vector<512x128xf32> -> vector<512x128xf32>
    %95 = arith.addf %90, %94 : vector<512x128xf32>
    %96 = vector.extract_strided_slice %77 {offsets = [32, 0], sizes = [512, 128], strides = [1, 1]} : vector<576x128xbf16> to vector<512x128xbf16>
    %c3_69 = arith.constant 3 : index
    %c0_70 = arith.constant 0 : index
    %c0_71 = arith.constant 0 : index
    %97 = vector.load %arg3[%c3_69, %c0_70, %c0_71] : memref<9x128x128xbf16, #tpu.memory_space<vmem>>, vector<1x128x128xbf16>
    %98 = vector.shape_cast %97 : vector<1x128x128xbf16> to vector<128x128xbf16>
    %cst_72 = arith.constant dense<0.000000e+00> : vector<512x128xf32>
    %99 = tpu.matmul %96, %98, %cst_72 {dimension_numbers = #tpu.dot_dimension_numbers<[1], [0], [0], [1], [0, 0, 1, 1], [], []>} : vector<512x128xbf16>, vector<128x128xbf16>, vector<512x128xf32> -> vector<512x128xf32>
    %100 = arith.addf %95, %99 : vector<512x128xf32>
    %101 = vector.extract_strided_slice %79 {offsets = [32, 0], sizes = [512, 128], strides = [1, 1]} : vector<576x128xbf16> to vector<512x128xbf16>
    %c4_73 = arith.constant 4 : index
    %c0_74 = arith.constant 0 : index
    %c0_75 = arith.constant 0 : index
    %102 = vector.load %arg3[%c4_73, %c0_74, %c0_75] : memref<9x128x128xbf16, #tpu.memory_space<vmem>>, vector<1x128x128xbf16>
    %103 = vector.shape_cast %102 : vector<1x128x128xbf16> to vector<128x128xbf16>
    %cst_76 = arith.constant dense<0.000000e+00> : vector<512x128xf32>
    %104 = tpu.matmul %101, %103, %cst_76 {dimension_numbers = #tpu.dot_dimension_numbers<[1], [0], [0], [1], [0, 0, 1, 1], [], []>} : vector<512x128xbf16>, vector<128x128xbf16>, vector<512x128xf32> -> vector<512x128xf32>
    %105 = arith.addf %100, %104 : vector<512x128xf32>
    %106 = vector.extract_strided_slice %81 {offsets = [32, 0], sizes = [512, 128], strides = [1, 1]} : vector<576x128xbf16> to vector<512x128xbf16>
    %c5_77 = arith.constant 5 : index
    %c0_78 = arith.constant 0 : index
    %c0_79 = arith.constant 0 : index
    %107 = vector.load %arg3[%c5_77, %c0_78, %c0_79] : memref<9x128x128xbf16, #tpu.memory_space<vmem>>, vector<1x128x128xbf16>
    %108 = vector.shape_cast %107 : vector<1x128x128xbf16> to vector<128x128xbf16>
    %cst_80 = arith.constant dense<0.000000e+00> : vector<512x128xf32>
    %109 = tpu.matmul %106, %108, %cst_80 {dimension_numbers = #tpu.dot_dimension_numbers<[1], [0], [0], [1], [0, 0, 1, 1], [], []>} : vector<512x128xbf16>, vector<128x128xbf16>, vector<512x128xf32> -> vector<512x128xf32>
    %110 = arith.addf %105, %109 : vector<512x128xf32>
    %111 = vector.extract_strided_slice %77 {offsets = [64, 0], sizes = [512, 128], strides = [1, 1]} : vector<576x128xbf16> to vector<512x128xbf16>
    %c6_81 = arith.constant 6 : index
    %c0_82 = arith.constant 0 : index
    %c0_83 = arith.constant 0 : index
    %112 = vector.load %arg3[%c6_81, %c0_82, %c0_83] : memref<9x128x128xbf16, #tpu.memory_space<vmem>>, vector<1x128x128xbf16>
    %113 = vector.shape_cast %112 : vector<1x128x128xbf16> to vector<128x128xbf16>
    %cst_84 = arith.constant dense<0.000000e+00> : vector<512x128xf32>
    %114 = tpu.matmul %111, %113, %cst_84 {dimension_numbers = #tpu.dot_dimension_numbers<[1], [0], [0], [1], [0, 0, 1, 1], [], []>} : vector<512x128xbf16>, vector<128x128xbf16>, vector<512x128xf32> -> vector<512x128xf32>
    %115 = arith.addf %110, %114 : vector<512x128xf32>
    %116 = vector.extract_strided_slice %79 {offsets = [64, 0], sizes = [512, 128], strides = [1, 1]} : vector<576x128xbf16> to vector<512x128xbf16>
    %c7_85 = arith.constant 7 : index
    %c0_86 = arith.constant 0 : index
    %c0_87 = arith.constant 0 : index
    %117 = vector.load %arg3[%c7_85, %c0_86, %c0_87] : memref<9x128x128xbf16, #tpu.memory_space<vmem>>, vector<1x128x128xbf16>
    %118 = vector.shape_cast %117 : vector<1x128x128xbf16> to vector<128x128xbf16>
    %cst_88 = arith.constant dense<0.000000e+00> : vector<512x128xf32>
    %119 = tpu.matmul %116, %118, %cst_88 {dimension_numbers = #tpu.dot_dimension_numbers<[1], [0], [0], [1], [0, 0, 1, 1], [], []>} : vector<512x128xbf16>, vector<128x128xbf16>, vector<512x128xf32> -> vector<512x128xf32>
    %120 = arith.addf %115, %119 : vector<512x128xf32>
    %121 = vector.extract_strided_slice %81 {offsets = [64, 0], sizes = [512, 128], strides = [1, 1]} : vector<576x128xbf16> to vector<512x128xbf16>
    %c8_89 = arith.constant 8 : index
    %c0_90 = arith.constant 0 : index
    %c0_91 = arith.constant 0 : index
    %122 = vector.load %arg3[%c8_89, %c0_90, %c0_91] : memref<9x128x128xbf16, #tpu.memory_space<vmem>>, vector<1x128x128xbf16>
    %123 = vector.shape_cast %122 : vector<1x128x128xbf16> to vector<128x128xbf16>
    %cst_92 = arith.constant dense<0.000000e+00> : vector<512x128xf32>
    %124 = tpu.matmul %121, %123, %cst_92 {dimension_numbers = #tpu.dot_dimension_numbers<[1], [0], [0], [1], [0, 0, 1, 1], [], []>} : vector<512x128xbf16>, vector<128x128xbf16>, vector<512x128xf32> -> vector<512x128xf32>
    %125 = arith.addf %120, %124 : vector<512x128xf32>
    %126 = vector.shape_cast %125 : vector<512x128xf32> to vector<16x32x128xf32>
    %127 = vector.extract_strided_slice %126 {offsets = [0, 0, 0], sizes = [16, 16, 128], strides = [1, 1, 1]} : vector<16x32x128xf32> to vector<16x16x128xf32>
    %c0_93 = arith.constant 0 : index
    %c0_94 = arith.constant 0 : index
    %128 = vector.load %arg6[%c0_93, %c0_94] : memref<1x128xf32, #tpu.memory_space<vmem>>, vector<1x128xf32>
    %129 = vector.shape_cast %128 : vector<1x128xf32> to vector<1x1x128xf32>
    %130 = vector.broadcast %129 : vector<1x1x128xf32> to vector<16x16x128xf32>
    %131 = arith.mulf %127, %130 : vector<16x16x128xf32>
    %c0_95 = arith.constant 0 : index
    %c0_96 = arith.constant 0 : index
    %132 = vector.load %arg7[%c0_95, %c0_96] : memref<1x128xf32, #tpu.memory_space<vmem>>, vector<1x128xf32>
    %133 = vector.shape_cast %132 : vector<1x128xf32> to vector<1x1x128xf32>
    %134 = vector.broadcast %133 : vector<1x1x128xf32> to vector<16x16x128xf32>
    %135 = arith.addf %131, %134 : vector<16x16x128xf32>
    %136 = vector.shape_cast %135 : vector<16x16x128xf32> to vector<256x128xf32>
    %cst_97 = arith.constant dense<0.000000e+00> : vector<128xf32>
    %137 = vector.multi_reduction <add>, %136, %cst_97 [0] : vector<256x128xf32> to vector<128xf32>
    %138 = vector.shape_cast %137 : vector<128xf32> to vector<1x128xf32>
    %cst_98 = arith.constant 3.906250e-03 : f32
    %139 = vector.broadcast %cst_98 : f32 to vector<1x128xf32>
    %140 = arith.mulf %138, %139 : vector<1x128xf32>
    %141 = arith.truncf %140 : vector<1x128xf32> to vector<1x128xbf16>
    %c0_99 = arith.constant 0 : index
    %c0_100 = arith.constant 0 : index
    %142 = vector.load %arg8[%c0_99, %c0_100] : memref<128x128xbf16, #tpu.memory_space<vmem>>, vector<128x128xbf16>
    %cst_101 = arith.constant dense<0.000000e+00> : vector<1x128xf32>
    %143 = tpu.matmul %141, %142, %cst_101 {dimension_numbers = #tpu.dot_dimension_numbers<[1], [0], [0], [1], [0, 0, 1, 1], [], []>} : vector<1x128xbf16>, vector<128x128xbf16>, vector<1x128xf32> -> vector<1x128xf32>
    %cst_102 = arith.constant 0.000000e+00 : f32
    %144 = vector.broadcast %cst_102 : f32 to vector<1x128xf32>
    %145 = arith.maximumf %143, %144 : vector<1x128xf32>
    %146 = arith.truncf %145 : vector<1x128xf32> to vector<1x128xbf16>
    %c0_103 = arith.constant 0 : index
    %c0_104 = arith.constant 0 : index
    %147 = vector.load %arg9[%c0_103, %c0_104] : memref<128x128xbf16, #tpu.memory_space<vmem>>, vector<128x128xbf16>
    %cst_105 = arith.constant dense<0.000000e+00> : vector<1x128xf32>
    %148 = tpu.matmul %146, %147, %cst_105 {dimension_numbers = #tpu.dot_dimension_numbers<[1], [0], [0], [1], [0, 0, 1, 1], [], []>} : vector<1x128xbf16>, vector<128x128xbf16>, vector<1x128xf32> -> vector<1x128xf32>
    %149 = arith.negf %148 : vector<1x128xf32>
    %150 = math.exp %149 : vector<1x128xf32>
    %cst_106 = arith.constant 1.000000e+00 : f32
    %151 = vector.broadcast %cst_106 : f32 to vector<1x128xf32>
    %152 = arith.addf %151, %150 : vector<1x128xf32>
    %153 = arith.divf %151, %152 : vector<1x128xf32>
    %154 = vector.shape_cast %153 : vector<1x128xf32> to vector<1x1x128xf32>
    %155 = vector.broadcast %154 : vector<1x1x128xf32> to vector<16x16x128xf32>
    %156 = arith.mulf %135, %155 : vector<16x16x128xf32>
    %157 = arith.addf %156, %7 : vector<16x16x128xf32>
    %cst_107 = arith.constant 0.000000e+00 : f32
    %158 = vector.broadcast %cst_107 : f32 to vector<16x16x128xf32>
    %159 = arith.maximumf %157, %158 : vector<16x16x128xf32>
    %c0_108 = arith.constant 0 : index
    %c0_109 = arith.constant 0 : index
    %c0_110 = arith.constant 0 : index
    %c0_111 = arith.constant 0 : index
    %160 = vector.load %arg10[%c0_108, %c0_109, %c0_110, %c0_111] : memref<1x16x16x128xf32, #tpu.memory_space<vmem>>, vector<1x16x16x128xf32>
    %161 = vector.shape_cast %160 : vector<1x16x16x128xf32> to vector<16x16x128xf32>
    %162 = vector.shape_cast %159 : vector<16x16x128xf32> to vector<1x16x16x128xf32>
    tpu.vector_store %arg10[%c0_108, %c0_109, %c0_110, %c0_111], %162 {strides = array<i32>} : memref<1x16x16x128xf32, #tpu.memory_space<vmem>>, vector<1x16x16x128xf32>,
    return
  }
  func.func @transform_0(%arg0: i32) -> (i32, i32, i32, i32) {
    %c0_i32 = arith.constant 0 : i32
    %c0_i32_0 = arith.constant 0 : i32
    %c0_i32_1 = arith.constant 0 : i32
    %c0_i32_2 = arith.constant 0 : i32
    return %arg0, %c0_i32, %c0_i32_0, %c0_i32_1 : i32, i32, i32, i32
  }
  func.func @transform_1(%arg0: i32) -> (i32, i32, i32) {
    %c0_i32 = arith.constant 0 : i32
    %c0_i32_0 = arith.constant 0 : i32
    %c0_i32_1 = arith.constant 0 : i32
    %c0_i32_2 = arith.constant 0 : i32
    return %c0_i32, %c0_i32_0, %c0_i32_1 : i32, i32, i32
  }
  func.func @transform_2(%arg0: i32) -> (i32, i32, i32) {
    %c0_i32 = arith.constant 0 : i32
    %c0_i32_0 = arith.constant 0 : i32
    %c0_i32_1 = arith.constant 0 : i32
    %c0_i32_2 = arith.constant 0 : i32
    return %c0_i32, %c0_i32_0, %c0_i32_1 : i32, i32, i32
  }
  func.func @transform_3(%arg0: i32) -> (i32, i32) {
    %c0_i32 = arith.constant 0 : i32
    %c0_i32_0 = arith.constant 0 : i32
    %c0_i32_1 = arith.constant 0 : i32
    return %c0_i32, %c0_i32_0 : i32, i32
  }
  func.func @transform_4(%arg0: i32) -> (i32, i32) {
    %c0_i32 = arith.constant 0 : i32
    %c0_i32_0 = arith.constant 0 : i32
    %c0_i32_1 = arith.constant 0 : i32
    return %c0_i32, %c0_i32_0 : i32, i32
  }
  func.func @transform_5(%arg0: i32) -> (i32, i32) {
    %c0_i32 = arith.constant 0 : i32
    %c0_i32_0 = arith.constant 0 : i32
    %c0_i32_1 = arith.constant 0 : i32
    return %c0_i32, %c0_i32_0 : i32, i32
  }
  func.func @transform_6(%arg0: i32) -> (i32, i32) {
    %c0_i32 = arith.constant 0 : i32
    %c0_i32_0 = arith.constant 0 : i32
    %c0_i32_1 = arith.constant 0 : i32
    return %c0_i32, %c0_i32_0 : i32, i32
  }
  func.func @transform_7(%arg0: i32) -> (i32, i32) {
    %c0_i32 = arith.constant 0 : i32
    %c0_i32_0 = arith.constant 0 : i32
    %c0_i32_1 = arith.constant 0 : i32
    return %c0_i32, %c0_i32_0 : i32, i32
  }
  func.func @transform_8(%arg0: i32) -> (i32, i32) {
    %c0_i32 = arith.constant 0 : i32
    %c0_i32_0 = arith.constant 0 : i32
    %c0_i32_1 = arith.constant 0 : i32
    return %c0_i32, %c0_i32_0 : i32, i32
  }
  func.func @transform_9(%arg0: i32) -> (i32, i32, i32, i32) {
    %c0_i32 = arith.constant 0 : i32
    %c0_i32_0 = arith.constant 0 : i32
    %c0_i32_1 = arith.constant 0 : i32
    %c0_i32_2 = arith.constant 0 : i32
    return %arg0, %c0_i32, %c0_i32_0, %c0_i32_1 : i32, i32, i32, i32
  }
}

</mosaic_0001>

<llo_original>
// kernel: se_basic_block.1
$region0: #{se_basic_block.1}
  #allocation0 [shape = 'u32[]', space=smem, size = 0x4, offset = 0x4, fixed_abs, tag = 'smem constant byte address 0x4 - core index']
  #allocation1 [shape = 'u32[72,128]{1,0:T(1,128)}', space=vmem, size = 0x9000, scoped, tag = 'internal scratch']
  #allocation2 [shape = 'f32[20,32,128]{2,1,0:T(8,128)}', space=vmem, size = 0x50000, scoped, tag = 'scratch operand']
  %s0 = inlined_call_operand.vmem [shape: f32[2,16,16,128], index: 0, kind: input, shape index: {}]
  %s1 = inlined_call_operand.vmem [shape: bf16[9,128,128], index: 1, kind: input, shape index: {}]
  %s2 = inlined_call_operand.vmem [shape: bf16[9,128,128], index: 2, kind: input, shape index: {}]
  %s3 = inlined_call_operand.vmem [shape: f32[1,128], index: 3, kind: input, shape index: {}]
  %s4 = inlined_call_operand.vmem [shape: f32[1,128], index: 4, kind: input, shape index: {}]
  %s5 = inlined_call_operand.vmem [shape: f32[1,128], index: 5, kind: input, shape index: {}]
  %s6 = inlined_call_operand.vmem [shape: f32[1,128], index: 6, kind: input, shape index: {}]
  %s7 = inlined_call_operand.vmem [shape: bf16[128,128], index: 7, kind: input, shape index: {}]
  %s8 = inlined_call_operand.vmem [shape: bf16[128,128], index: 8, kind: input, shape index: {}]
  %s9 = inlined_call_operand.hbm [shape: f32[2,16,16,128], index: 9, kind: output, shape index: {}]
  %s10 = sld [smem:[#allocation0]]
  $region69: #{se_basic_block.1} parent=0
    _
  %s12 = ssub.s32 1, %s10
  %s13 = scalar_select 0, %s12, %s10
  $region1: #{se_basic_block.1} parent=0
    #allocation3 [shape = 'u8[262144]{0}', space=vmem, size = 0x40000, scoped, tag = 'output window, operand 0']
    #allocation4 [shape = 's32[2]{0}', space=sflag, size = 0x8, scoped, tag = 'scoped memory for se_basic_block.1']
    %14 = vsyncpa [#allocation4], 0
    %s15 = scalar_lea.sflag [#allocation4], 1
    %16 = vsyncpa %s15, 0
    loop: start=0, step=1, limit=4
    $region2: #{se_basic_block.1} parent=1 // loop_pre_header
      _
    $region3: #{se_basic_block.1} parent=1 // loop_header
      %s18 = sphi 0, %s22
      %p19 = scmp.ge.s32.totalorder %s18, 4
      %s28 = sphi 0, %s30
      %s31 = sphi 0, %s28
      %s32 = sphi 0, %s31
      %s48 = sphi 0, %s32
      %s52 = sphi 0, %s52
      %s54 = sphi 0, %s52
      %s55 = sphi 0, %s54
      %s69 = sphi 0, %s55
      %s73 = sphi 0, %s73
      %s75 = sphi 0, %s73
      %s76 = sphi 0, %s75
      %s90 = sphi 0, %s76
      %s94 = sphi 0, %s94
      %s96 = sphi 0, %s94
      %s97 = sphi 0, %s96
      %s111 = sphi 0, %s97
      %s115 = sphi 0, %s115
      %s117 = sphi 0, %s115
      %s118 = sphi 0, %s117
      %s132 = sphi 0, %s118
      %s136 = sphi 0, %s136
      %s138 = sphi 0, %s136
      %s139 = sphi 0, %s138
      %s153 = sphi 0, %s139
      %s157 = sphi 0, %s157
      %s159 = sphi 0, %s157
      %s160 = sphi 0, %s159
      %s174 = sphi 0, %s160
      %s178 = sphi 0, %s178
      %s180 = sphi 0, %s178
      %s181 = sphi 0, %s180
      %s195 = sphi 0, %s181
      %s199 = sphi 0, %s199
      %s201 = sphi 0, %s199
      %s202 = sphi 0, %s201
      %s216 = sphi 0, %s202
      %s222 = sphi 0, %s224
      %s225 = sphi 0, %s222
      %s226 = sphi 0, %s225
      %s242 = sphi 0, %s226
    $region4: #{se_basic_block.1} parent=1 // loop_header_branch
      %21 = sbr.rel (%p19) target = $region8
    $region5: #{se_basic_block.1} parent=1 // loop_body
      %s23 = ssub.s32 %s18, 1
      %s24 = ssub.s32 %s18, 2
      %s25 = sadd.s32 %s18, 1
      %s26 = ssub.s32 %s18, %s25
      %p27 = scmp.eq.s32.totalorder %s26, 0
      %s29 = sadd.s32 %s28, 1
      %s30 = scalar_select %p27, %s28, %s29
      %p33 = pneg %p27
      %p34 = scmp.eq.s32.totalorder %s18, 1
      %p35 = por %p33, %p34
      %p36 = scmp.ne.s32.totalorder %s28, %s31
      %p37 = scmp.eq.s32.totalorder %s18, 0
      %p38 = por %p36, %p37
      %p39 = scmp.ne.s32.totalorder %s28, %s31
      %p40 = scmp.eq.s32.totalorder %s23, 1
      %p41 = por %p39, %p40
      %p42 = scmp.ne.s32.totalorder %s31, %s32
      %p43 = scmp.eq.s32.totalorder %s23, 0
      %p44 = por %p42, %p43
      %p45 = scmp.ne.s32.totalorder %s31, %s32
      %p46 = scmp.eq.s32.totalorder %s24, 1
      %p47 = por %p45, %p46
      %p49 = scmp.ne.s32.totalorder %s32, %s48
      %p50 = scmp.eq.s32.totalorder %s24, 0
      %p51 = por %p49, %p50
      %s53 = sadd.s32 %s52, 1
      %p56 = scmp.eq.s32.totalorder %s18, 1
      %p57 = scmp.ne.s32.totalorder %s52, %s54
      %p58 = scmp.eq.s32.totalorder %s18, 0
      %p59 = por %p57, %p58
      %p60 = scmp.ne.s32.totalorder %s52, %s54
      %p61 = scmp.eq.s32.totalorder %s23, 1
      %p62 = por %p60, %p61
      %p63 = scmp.ne.s32.totalorder %s54, %s55
      %p64 = scmp.eq.s32.totalorder %s23, 0
      %p65 = por %p63, %p64
      %p66 = scmp.ne.s32.totalorder %s54, %s55
      %p67 = scmp.eq.s32.totalorder %s24, 1
      %p68 = por %p66, %p67
      %p70 = scmp.ne.s32.totalorder %s55, %s69
      %p71 = scmp.eq.s32.totalorder %s24, 0
      %p72 = por %p70, %p71
      %s74 = sadd.s32 %s73, 1
      %p77 = scmp.eq.s32.totalorder %s18, 1
      %p78 = scmp.ne.s32.totalorder %s73, %s75
      %p79 = scmp.eq.s32.totalorder %s18, 0
      %p80 = por %p78, %p79
      %p81 = scmp.ne.s32.totalorder %s73, %s75
      %p82 = scmp.eq.s32.totalorder %s23, 1
      %p83 = por %p81, %p82
      %p84 = scmp.ne.s32.totalorder %s75, %s76
      %p85 = scmp.eq.s32.totalorder %s23, 0
      %p86 = por %p84, %p85
      %p87 = scmp.ne.s32.totalorder %s75, %s76
      %p88 = scmp.eq.s32.totalorder %s24, 1
      %p89 = por %p87, %p88
      %p91 = scmp.ne.s32.totalorder %s76, %s90
      %p92 = scmp.eq.s32.totalorder %s24, 0
      %p93 = por %p91, %p92
      %s95 = sadd.s32 %s94, 1
      %p98 = scmp.eq.s32.totalorder %s18, 1
      %p99 = scmp.ne.s32.totalorder %s94, %s96
      %p100 = scmp.eq.s32.totalorder %s18, 0
      %p101 = por %p99, %p100
      %p102 = scmp.ne.s32.totalorder %s94, %s96
      %p103 = scmp.eq.s32.totalorder %s23, 1
      %p104 = por %p102, %p103
      %p105 = scmp.ne.s32.totalorder %s96, %s97
      %p106 = scmp.eq.s32.totalorder %s23, 0
      %p107 = por %p105, %p106
      %p108 = scmp.ne.s32.totalorder %s96, %s97
      %p109 = scmp.eq.s32.totalorder %s24, 1
      %p110 = por %p108, %p109
      %p112 = scmp.ne.s32.totalorder %s97, %s111
      %p113 = scmp.eq.s32.totalorder %s24, 0
      %p114 = por %p112, %p113
      %s116 = sadd.s32 %s115, 1
      %p119 = scmp.eq.s32.totalorder %s18, 1
      %p120 = scmp.ne.s32.totalorder %s115, %s117
      %p121 = scmp.eq.s32.totalorder %s18, 0
      %p122 = por %p120, %p121
      %p123 = scmp.ne.s32.totalorder %s115, %s117
      %p124 = scmp.eq.s32.totalorder %s23, 1
      %p125 = por %p123, %p124
      %p126 = scmp.ne.s32.totalorder %s117, %s118
      %p127 = scmp.eq.s32.totalorder %s23, 0
      %p128 = por %p126, %p127
      %p129 = scmp.ne.s32.totalorder %s117, %s118
      %p130 = scmp.eq.s32.totalorder %s24, 1
      %p131 = por %p129, %p130
      %p133 = scmp.ne.s32.totalorder %s118, %s132
      %p134 = scmp.eq.s32.totalorder %s24, 0
      %p135 = por %p133, %p134
      %s137 = sadd.s32 %s136, 1
      %p140 = scmp.eq.s32.totalorder %s18, 1
      %p141 = scmp.ne.s32.totalorder %s136, %s138
      %p142 = scmp.eq.s32.totalorder %s18, 0
      %p143 = por %p141, %p142
      %p144 = scmp.ne.s32.totalorder %s136, %s138
      %p145 = scmp.eq.s32.totalorder %s23, 1
      %p146 = por %p144, %p145
      %p147 = scmp.ne.s32.totalorder %s138, %s139
      %p148 = scmp.eq.s32.totalorder %s23, 0
      %p149 = por %p147, %p148
      %p150 = scmp.ne.s32.totalorder %s138, %s139
      %p151 = scmp.eq.s32.totalorder %s24, 1
      %p152 = por %p150, %p151
      %p154 = scmp.ne.s32.totalorder %s139, %s153
      %p155 = scmp.eq.s32.totalorder %s24, 0
      %p156 = por %p154, %p155
      %s158 = sadd.s32 %s157, 1
      %p161 = scmp.eq.s32.totalorder %s18, 1
      %p162 = scmp.ne.s32.totalorder %s157, %s159
      %p163 = scmp.eq.s32.totalorder %s18, 0
      %p164 = por %p162, %p163
      %p165 = scmp.ne.s32.totalorder %s157, %s159
      %p166 = scmp.eq.s32.totalorder %s23, 1
      %p167 = por %p165, %p166
      %p168 = scmp.ne.s32.totalorder %s159, %s160
      %p169 = scmp.eq.s32.totalorder %s23, 0
      %p170 = por %p168, %p169
      %p171 = scmp.ne.s32.totalorder %s159, %s160
      %p172 = scmp.eq.s32.totalorder %s24, 1
      %p173 = por %p171, %p172
      %p175 = scmp.ne.s32.totalorder %s160, %s174
      %p176 = scmp.eq.s32.totalorder %s24, 0
      %p177 = por %p175, %p176
      %s179 = sadd.s32 %s178, 1
      %p182 = scmp.eq.s32.totalorder %s18, 1
      %p183 = scmp.ne.s32.totalorder %s178, %s180
      %p184 = scmp.eq.s32.totalorder %s18, 0
      %p185 = por %p183, %p184
      %p186 = scmp.ne.s32.totalorder %s178, %s180
      %p187 = scmp.eq.s32.totalorder %s23, 1
      %p188 = por %p186, %p187
      %p189 = scmp.ne.s32.totalorder %s180, %s181
      %p190 = scmp.eq.s32.totalorder %s23, 0
      %p191 = por %p189, %p190
      %p192 = scmp.ne.s32.totalorder %s180, %s181
      %p193 = scmp.eq.s32.totalorder %s24, 1
      %p194 = por %p192, %p193
      %p196 = scmp.ne.s32.totalorder %s181, %s195
      %p197 = scmp.eq.s32.totalorder %s24, 0
      %p198 = por %p196, %p197
      %s200 = sadd.s32 %s199, 1
      %p203 = scmp.eq.s32.totalorder %s18, 1
      %p204 = scmp.ne.s32.totalorder %s199, %s201
      %p205 = scmp.eq.s32.totalorder %s18, 0
      %p206 = por %p204, %p205
      %p207 = scmp.ne.s32.totalorder %s199, %s201
      %p208 = scmp.eq.s32.totalorder %s23, 1
      %p209 = por %p207, %p208
      %p210 = scmp.ne.s32.totalorder %s201, %s202
      %p211 = scmp.eq.s32.totalorder %s23, 0
      %p212 = por %p210, %p211
      %p213 = scmp.ne.s32.totalorder %s201, %s202
      %p214 = scmp.eq.s32.totalorder %s24, 1
      %p215 = por %p213, %p214
      %p217 = scmp.ne.s32.totalorder %s202, %s216
      %p218 = scmp.eq.s32.totalorder %s24, 0
      %p219 = por %p217, %p218
      %s220 = ssub.s32 %s18, %s25
      %p221 = scmp.eq.s32.totalorder %s220, 0
      %s223 = sadd.s32 %s222, 1
      %s224 = scalar_select %p221, %s222, %s223
      %p227 = pneg %p221
      %p228 = scmp.eq.s32.totalorder %s18, 1
      %p229 = por %p227, %p228
      %p230 = scmp.ne.s32.totalorder %s222, %s225
      %p231 = scmp.eq.s32.totalorder %s18, 0
      %p232 = por %p230, %p231
      %p233 = scmp.ne.s32.totalorder %s222, %s225
      %p234 = scmp.eq.s32.totalorder %s23, 1
      %p235 = por %p233, %p234
      %p236 = scmp.ne.s32.totalorder %s225, %s226
      %p237 = scmp.eq.s32.totalorder %s23, 0
      %p238 = por %p236, %p237
      %p239 = scmp.ne.s32.totalorder %s225, %s226
      %p240 = scmp.eq.s32.totalorder %s24, 1
      %p241 = por %p239, %p240
      %p243 = scmp.ne.s32.totalorder %s226, %s242
      %p244 = scmp.eq.s32.totalorder %s24, 0
      %p245 = por %p243, %p244
      %p246 = scmp.le.s32.totalorder 1, %s18
      %p247 = scmp.lt.s32.totalorder %s18, 3
      %p248 = pnand %p246, %p247
      %p249 = pneg %p248
      // Predicated region
      $region9: #{se_basic_block.1} parent=5 // pred_check
        _
      $region10: #{se_basic_block.1} parent=5 // pred_check_branch
        %251 = sbr.rel (%p248) target = $region12
      $region11: #{se_basic_block.1} parent=5 // pred_region
        %s252 = ssub.s32 %s18, 1
        // Predicated region
        $region13: #{se_basic_block.1} parent=11 // pred_check
          %p253 = pneg %p65
        $region14: #{se_basic_block.1} parent=11 // pred_check_branch
          %255 = sbr.rel (%p253) target = $region16
        $region15: #{se_basic_block.1} parent=11 // pred_region
          _
        $region16: #{se_basic_block.1} parent=11 // pred_fallthru
          _
        // Predicated region
        $region17: #{se_basic_block.1} parent=11 // pred_check
          %p256 = pneg %p86
        $region18: #{se_basic_block.1} parent=11 // pred_check_branch
          %258 = sbr.rel (%p256) target = $region20
        $region19: #{se_basic_block.1} parent=11 // pred_region
          _
        $region20: #{se_basic_block.1} parent=11 // pred_fallthru
          _
        // Predicated region
        $region21: #{se_basic_block.1} parent=11 // pred_check
          %p259 = pneg %p107
        $region22: #{se_basic_block.1} parent=11 // pred_check_branch
          %261 = sbr.rel (%p259) target = $region24
        $region23: #{se_basic_block.1} parent=11 // pred_region
          _
        $region24: #{se_basic_block.1} parent=11 // pred_fallthru
          _
        // Predicated region
        $region25: #{se_basic_block.1} parent=11 // pred_check
          %p262 = pneg %p128
        $region26: #{se_basic_block.1} parent=11 // pred_check_branch
          %264 = sbr.rel (%p262) target = $region28
        $region27: #{se_basic_block.1} parent=11 // pred_region
          _
        $region28: #{se_basic_block.1} parent=11 // pred_fallthru
          _
        // Predicated region
        $region29: #{se_basic_block.1} parent=11 // pred_check
          %p265 = pneg %p149
        $region30: #{se_basic_block.1} parent=11 // pred_check_branch
          %267 = sbr.rel (%p265) target = $region32
        $region31: #{se_basic_block.1} parent=11 // pred_region
          _
        $region32: #{se_basic_block.1} parent=11 // pred_fallthru
          _
        // Predicated region
        $region33: #{se_basic_block.1} parent=11 // pred_check
          %p268 = pneg %p170
        $region34: #{se_basic_block.1} parent=11 // pred_check_branch
          %270 = sbr.rel (%p268) target = $region36
        $region35: #{se_basic_block.1} parent=11 // pred_region
          _
        $region36: #{se_basic_block.1} parent=11 // pred_fallthru
          _
        // Predicated region
        $region37: #{se_basic_block.1} parent=11 // pred_check
          %p271 = pneg %p191
        $region38: #{se_basic_block.1} parent=11 // pred_check_branch
          %273 = sbr.rel (%p271) target = $region40
        $region39: #{se_basic_block.1} parent=11 // pred_region
          _
        $region40: #{se_basic_block.1} parent=11 // pred_fallthru
          _
        // Predicated region
        $region41: #{se_basic_block.1} parent=11 // pred_check
          %p274 = pneg %p212
        $region42: #{se_basic_block.1} parent=11 // pred_check_branch
          %276 = sbr.rel (%p274) target = $region44
        $region43: #{se_basic_block.1} parent=11 // pred_region
          _
        $region44: #{se_basic_block.1} parent=11 // pred_fallthru
          _
      $region12: #{se_basic_block.1} parent=5 // pred_fallthru
        _
      %p277 = scmp.lt.s32.totalorder %s18, 2
      // Predicated region
      $region45: #{se_basic_block.1} parent=5 // pred_check
        %p278 = pneg %p277
      $region46: #{se_basic_block.1} parent=5 // pred_check_branch
        %280 = sbr.rel (%p278) target = $region48
      $region47: #{se_basic_block.1} parent=5 // pred_region
        // Predicated region
        $region49: #{se_basic_block.1} parent=47 // pred_check
          %p281 = pneg %p38
        $region50: #{se_basic_block.1} parent=47 // pred_check_branch
          %283 = sbr.rel (%p281) target = $region52
        $region51: #{se_basic_block.1} parent=47 // pred_region
          %p284 = scmp.lt.s32.totalorder %s18, 1
          %s285 = scalar_select %p284, %s18, 1
          %s286 = smul.addr %s285, 32
          %s287 = smul.addr %s286, 8
          %s288 = scalar_lea.vmem %s0, %s287
        $region52: #{se_basic_block.1} parent=47 // pred_fallthru
          _
      $region48: #{se_basic_block.1} parent=5 // pred_fallthru
        _
      %p289 = scmp.le.s32.totalorder 1, %s18
      %p290 = scmp.lt.s32.totalorder %s18, 3
      %p291 = pnand %p289, %p290
      %p292 = pneg %p291
      // Predicated region
      $region53: #{se_basic_block.1} parent=5 // pred_check
        _
      $region54: #{se_basic_block.1} parent=5 // pred_check_branch
        %294 = sbr.rel (%p291) target = $region56
      $region55: #{se_basic_block.1} parent=5 // pred_region
        %s295 = ssub.s32 %s18, 1
        %p296 = scmp.lt.s32.totalorder %s23, 1
        %s297 = scalar_select %p296, %s23, 1
        %s298 = smul.addr %s297, 32
        %s299 = smul.addr %s298, 8
        %s300 = scalar_lea.vmem %s0, %s299
        %p301 = pneg %p44
        %p302 = pneg %p41
        %p303 = pneg %p65
        %p304 = pneg %p62
        %p305 = pneg %p86
        %p306 = pneg %p83
        %p307 = pneg %p107
        %p308 = pneg %p104
        %p309 = pneg %p128
        %p310 = pneg %p125
        %p311 = pneg %p149
        %p312 = pneg %p146
        %p313 = pneg %p170
        %p314 = pneg %p167
        %p315 = pneg %p191
        %p316 = pneg %p188
        %p317 = pneg %p212
        %p318 = pneg %p209
        %p319 = pneg %p238
        %p320 = pneg %p235
        %s321 = sand.u32 %s225, 1
        %s322 = scalar_lea.sflag [#allocation4], %s321
        %s323 = sand.u32 %s225, 1
        %s324 = smul.addr %s323, 256
        %s325 = scalar_lea.vmem [#allocation3], %s324
        %p326 = scmp.lt.s32.totalorder %s23, 1
        %s327 = scalar_select %p326, %s23, 1
        %s328 = smul.addr %s327, 32
        %s329 = smul.addr %s328, 8
        %s330 = scalar_lea.vmem %s0, %s329
        %331 = vst [vmem:[#allocation2] sm:$0xff] 0.0
        %332 = vst [vmem:[#allocation2 + $0x8] sm:$0xff] 0.0
        %333 = vst [vmem:[#allocation2 + $0x10] sm:$0xff] 0.0
        %334 = vst [vmem:[#allocation2 + $0x18] sm:$0xff] 0.0
        %335 = vst [vmem:[#allocation2 + $0x20] sm:$0xff] 0.0
        %336 = vst [vmem:[#allocation2 + $0x28] sm:$0xff] 0.0
        %337 = vst [vmem:[#allocation2 + $0x30] sm:$0xff] 0.0
        %338 = vst [vmem:[#allocation2 + $0x38] sm:$0xff] 0.0
        %s339 = scalar_lea.vmem [#allocation2], 576
        %340 = vst [vmem:[%s339] sm:$0xff] 0.0
        %341 = vst [vmem:[%s339 + $0x8] sm:$0xff] 0.0
        %342 = vst [vmem:[%s339 + $0x10] sm:$0xff] 0.0
        %343 = vst [vmem:[%s339 + $0x18] sm:$0xff] 0.0
        %344 = vst [vmem:[%s339 + $0x20] sm:$0xff] 0.0
        %345 = vst [vmem:[%s339 + $0x28] sm:$0xff] 0.0
        %346 = vst [vmem:[%s339 + $0x30] sm:$0xff] 0.0
        %347 = vst [vmem:[%s339 + $0x38] sm:$0xff] 0.0
        %s348 = scalar_lea.vmem [#allocation2], 64
        %349 = vst [vmem:[%s348 + $0x10] sm:$0xff] 0.0
        %350 = vst [vmem:[%s348 + $0x18] sm:$0xff] 0.0
        %351 = vst [vmem:[%s348 + $0x30] sm:$0xff] 0.0
        %352 = vst [vmem:[%s348 + $0x38] sm:$0xff] 0.0
        %353 = vst [vmem:[%s348 + $0x50] sm:$0xff] 0.0
        %354 = vst [vmem:[%s348 + $0x58] sm:$0xff] 0.0
        %355 = vst [vmem:[%s348 + $0x70] sm:$0xff] 0.0
        %356 = vst [vmem:[%s348 + $0x78] sm:$0xff] 0.0
        %357 = vst [vmem:[%s348 + $0x90] sm:$0xff] 0.0
        %358 = vst [vmem:[%s348 + $0x98] sm:$0xff] 0.0
        %359 = vst [vmem:[%s348 + $0xb0] sm:$0xff] 0.0
        %360 = vst [vmem:[%s348 + $0xb8] sm:$0xff] 0.0
        %361 = vst [vmem:[%s348 + $0xd0] sm:$0xff] 0.0
        %362 = vst [vmem:[%s348 + $0xd8] sm:$0xff] 0.0
        %363 = vst [vmem:[%s348 + $0xf0] sm:$0xff] 0.0
        %364 = vst [vmem:[%s348 + $0xf8] sm:$0xff] 0.0
        %365 = vst [vmem:[%s348 + $0x110] sm:$0xff] 0.0
        %366 = vst [vmem:[%s348 + $0x118] sm:$0xff] 0.0
        %367 = vst [vmem:[%s348 + $0x130] sm:$0xff] 0.0
        %368 = vst [vmem:[%s348 + $0x138] sm:$0xff] 0.0
        %369 = vst [vmem:[%s348 + $0x150] sm:$0xff] 0.0
        %370 = vst [vmem:[%s348 + $0x158] sm:$0xff] 0.0
        %371 = vst [vmem:[%s348 + $0x170] sm:$0xff] 0.0
        %372 = vst [vmem:[%s348 + $0x178] sm:$0xff] 0.0
        %373 = vst [vmem:[%s348 + $0x190] sm:$0xff] 0.0
        %374 = vst [vmem:[%s348 + $0x198] sm:$0xff] 0.0
        %375 = vst [vmem:[%s348 + $0x1b0] sm:$0xff] 0.0
        %376 = vst [vmem:[%s348 + $0x1b8] sm:$0xff] 0.0
        %377 = vst [vmem:[%s348 + $0x1d0] sm:$0xff] 0.0
        %378 = vst [vmem:[%s348 + $0x1d8] sm:$0xff] 0.0
        %379 = vst [vmem:[%s348 + $0x1f0] sm:$0xff] 0.0
        %380 = vst [vmem:[%s348 + $0x1f8] sm:$0xff] 0.0
        %v381 = vld [vmem:[%s330] sm:$0xff]
        %v382 = vld [vmem:[%s330 + $0x8] sm:$0xff]
        %v383 = vld [vmem:[%s330 + $0x10] sm:$0xff]
        %v384 = vld [vmem:[%s330 + $0x18] sm:$0xff]
        %v385 = vld [vmem:[%s330 + $0x20] sm:$0xff]
        %v386 = vld [vmem:[%s330 + $0x28] sm:$0xff]
        %v387 = vld [vmem:[%s330 + $0x30] sm:$0xff]
        %v388 = vld [vmem:[%s330 + $0x38] sm:$0xff]
        %v389 = vld [vmem:[%s330 + $0x40] sm:$0xff]
        %v390 = vld [vmem:[%s330 + $0x48] sm:$0xff]
        %v391 = vld [vmem:[%s330 + $0x50] sm:$0xff]
        %v392 = vld [vmem:[%s330 + $0x58] sm:$0xff]
        %v393 = vld [vmem:[%s330 + $0x60] sm:$0xff]
        %v394 = vld [vmem:[%s330 + $0x68] sm:$0xff]
        %v395 = vld [vmem:[%s330 + $0x70] sm:$0xff]
        %v396 = vld [vmem:[%s330 + $0x78] sm:$0xff]
        %v397 = vld [vmem:[%s330 + $0x80] sm:$0xff]
        %v398 = vld [vmem:[%s330 + $0x88] sm:$0xff]
        %v399 = vld [vmem:[%s330 + $0x90] sm:$0xff]
        %v400 = vld [vmem:[%s330 + $0x98] sm:$0xff]
        %v401 = vld [vmem:[%s330 + $0xa0] sm:$0xff]
        %v402 = vld [vmem:[%s330 + $0xa8] sm:$0xff]
        %v403 = vld [vmem:[%s330 + $0xb0] sm:$0xff]
        %v404 = vld [vmem:[%s330 + $0xb8] sm:$0xff]
        %v405 = vld [vmem:[%s330 + $0xc0] sm:$0xff]
        %v406 = vld [vmem:[%s330 + $0xc8] sm:$0xff]
        %v407 = vld [vmem:[%s330 + $0xd0] sm:$0xff]
        %v408 = vld [vmem:[%s330 + $0xd8] sm:$0xff]
        %v409 = vld [vmem:[%s330 + $0xe0] sm:$0xff]
        %v410 = vld [vmem:[%s330 + $0xe8] sm:$0xff]
        %v411 = vld [vmem:[%s330 + $0xf0] sm:$0xff]
        %v412 = vld [vmem:[%s330 + $0xf8] sm:$0xff]
        %413 = vst [vmem:[%s348] sm:$0xff] %v381
        %414 = vst [vmem:[%s348 + $0x8] sm:$0xff] %v382
        %415 = vst [vmem:[%s348 + $0x20] sm:$0xff] %v383
        %416 = vst [vmem:[%s348 + $0x28] sm:$0xff] %v384
        %417 = vst [vmem:[%s348 + $0x40] sm:$0xff] %v385
        %418 = vst [vmem:[%s348 + $0x48] sm:$0xff] %v386
        %419 = vst [vmem:[%s348 + $0x60] sm:$0xff] %v387
        %420 = vst [vmem:[%s348 + $0x68] sm:$0xff] %v388
        %421 = vst [vmem:[%s348 + $0x80] sm:$0xff] %v389
        %422 = vst [vmem:[%s348 + $0x88] sm:$0xff] %v390
        %423 = vst [vmem:[%s348 + $0xa0] sm:$0xff] %v391
        %424 = vst [vmem:[%s348 + $0xa8] sm:$0xff] %v392
        %425 = vst [vmem:[%s348 + $0xc0] sm:$0xff] %v393
        %426 = vst [vmem:[%s348 + $0xc8] sm:$0xff] %v394
        %427 = vst [vmem:[%s348 + $0xe0] sm:$0xff] %v395
        %428 = vst [vmem:[%s348 + $0xe8] sm:$0xff] %v396
        %429 = vst [vmem:[%s348 + $0x100] sm:$0xff] %v397
        %430 = vst [vmem:[%s348 + $0x108] sm:$0xff] %v398
        %431 = vst [vmem:[%s348 + $0x120] sm:$0xff] %v399
        %432 = vst [vmem:[%s348 + $0x128] sm:$0xff] %v400
        %433 = vst [vmem:[%s348 + $0x140] sm:$0xff] %v401
        %434 = vst [vmem:[%s348 + $0x148] sm:$0xff] %v402
        %435 = vst [vmem:[%s348 + $0x160] sm:$0xff] %v403
        %436 = vst [vmem:[%s348 + $0x168] sm:$0xff] %v404
        %437 = vst [vmem:[%s348 + $0x180] sm:$0xff] %v405
        %438 = vst [vmem:[%s348 + $0x188] sm:$0xff] %v406
        %439 = vst [vmem:[%s348 + $0x1a0] sm:$0xff] %v407
        %440 = vst [vmem:[%s348 + $0x1a8] sm:$0xff] %v408
        %441 = vst [vmem:[%s348 + $0x1c0] sm:$0xff] %v409
        %442 = vst [vmem:[%s348 + $0x1c8] sm:$0xff] %v410
        %443 = vst [vmem:[%s348 + $0x1e0] sm:$0xff] %v411
        %444 = vst [vmem:[%s348 + $0x1e8] sm:$0xff] %v412
        %v445 = vld [vmem:[#allocation2 + $0x18] sm:$0xff]
        %v446 = vld [vmem:[#allocation2 + $0x20] sm:$0xff]
        %v447 = vld [vmem:[#allocation2 + $0x28] sm:$0xff]
        %v448 = vld [vmem:[#allocation2 + $0x30] sm:$0xff]
        %v449 = vld [vmem:[#allocation2 + $0x38] sm:$0xff]
        %v450 = vld [vmem:[#allocation2 + $0x40] sm:$0xff]
        %v451 = vld [vmem:[#allocation2 + $0x48] sm:$0xff]
        %v452 = vld [vmem:[#allocation2 + $0x50] sm:$0xff]
        %v453 = vld [vmem:[#allocation2 + $0x58] sm:$0xff]
        %v454 = vld [vmem:[#allocation2 + $0x60] sm:$0xff]
        %v455 = vld [vmem:[#allocation2 + $0x68] sm:$0xff]
        %v456 = vld [vmem:[#allocation2 + $0x70] sm:$0xff]
        %v457 = vld [vmem:[#allocation2 + $0x78] sm:$0xff]
        %v458 = vld [vmem:[#allocation2 + $0x80] sm:$0xff]
        %v459 = vld [vmem:[#allocation2 + $0x88] sm:$0xff]
        %v460 = vld [vmem:[#allocation2 + $0x90] sm:$0xff]
        %v461 = vld [vmem:[#allocation2 + $0x98] sm:$0xff]
        %v462 = vld [vmem:[#allocation2 + $0xa0] sm:$0xff]
        %v463 = vld [vmem:[#allocation2 + $0xa8] sm:$0xff]
        %v464 = vld [vmem:[#allocation2 + $0xb0] sm:$0xff]
        %v465 = vld [vmem:[#allocation2 + $0xb8] sm:$0xff]
        %v466 = vld [vmem:[#allocation2 + $0xc0] sm:$0xff]
        %v467 = vld [vmem:[#allocation2 + $0xc8] sm:$0xff]
        %v468 = vld [vmem:[#allocation2 + $0xd0] sm:$0xff]
        %v469 = vld [vmem:[#allocation2 + $0xd8] sm:$0xff]
        %v470 = vld [vmem:[#allocation2 + $0xe0] sm:$0xff]
        %v471 = vld [vmem:[#allocation2 + $0xe8] sm:$0xff]
        %v472 = vld [vmem:[#allocation2 + $0xf0] sm:$0xff]
        %v473 = vld [vmem:[#allocation2 + $0xf8] sm:$0xff]
        %v474 = vld [vmem:[#allocation2 + $0x100] sm:$0xff]
        %v475 = vld [vmem:[#allocation2 + $0x108] sm:$0xff]
        %v476 = vld [vmem:[#allocation2 + $0x110] sm:$0xff]
        %v477 = vld [vmem:[#allocation2 + $0x118] sm:$0xff]
        %v478 = vld [vmem:[#allocation2 + $0x120] sm:$0xff]
        %v479 = vld [vmem:[#allocation2 + $0x128] sm:$0xff]
        %v480 = vld [vmem:[#allocation2 + $0x130] sm:$0xff]
        %v481 = vld [vmem:[#allocation2 + $0x138] sm:$0xff]
        %v482 = vld [vmem:[#allocation2 + $0x140] sm:$0xff]
        %v483 = vld [vmem:[#allocation2 + $0x148] sm:$0xff]
        %v484 = vld [vmem:[#allocation2 + $0x150] sm:$0xff]
        %v485 = vld [vmem:[#allocation2 + $0x158] sm:$0xff]
        %v486 = vld [vmem:[#allocation2 + $0x160] sm:$0xff]
        %v487 = vld [vmem:[#allocation2 + $0x168] sm:$0xff]
        %v488 = vld [vmem:[#allocation2 + $0x170] sm:$0xff]
        %v489 = vld [vmem:[#allocation2 + $0x178] sm:$0xff]
        %v490 = vld [vmem:[#allocation2 + $0x180] sm:$0xff]
        %v491 = vld [vmem:[#allocation2 + $0x188] sm:$0xff]
        %v492 = vld [vmem:[#allocation2 + $0x190] sm:$0xff]
        %v493 = vld [vmem:[#allocation2 + $0x198] sm:$0xff]
        %v494 = vld [vmem:[#allocation2 + $0x1a0] sm:$0xff]
        %v495 = vld [vmem:[#allocation2 + $0x1a8] sm:$0xff]
        %v496 = vld [vmem:[#allocation2 + $0x1b0] sm:$0xff]
        %v497 = vld [vmem:[#allocation2 + $0x1b8] sm:$0xff]
        %v498 = vld [vmem:[#allocation2 + $0x1c0] sm:$0xff]
        %v499 = vld [vmem:[#allocation2 + $0x1c8] sm:$0xff]
        %v500 = vld [vmem:[#allocation2 + $0x1d0] sm:$0xff]
        %v501 = vld [vmem:[#allocation2 + $0x1d8] sm:$0xff]
        %v502 = vld [vmem:[#allocation2 + $0x1e0] sm:$0xff]
        %v503 = vld [vmem:[#allocation2 + $0x1e8] sm:$0xff]
        %v504 = vld [vmem:[#allocation2 + $0x1f0] sm:$0xff]
        %v505 = vld [vmem:[#allocation2 + $0x1f8] sm:$0xff]
        %v506 = vld [vmem:[#allocation2 + $0x200] sm:$0xff]
        %v507 = vld [vmem:[#allocation2 + $0x208] sm:$0xff]
        %v508 = vld [vmem:[#allocation2 + $0x210] sm:$0xff]
        %v509 = vld [vmem:[#allocation2 + $0x218] sm:$0xff]
        %v510 = vld [vmem:[#allocation2 + $0x220] sm:$0xff]
        %v511 = vld [vmem:[#allocation2 + $0x228] sm:$0xff]
        %v512 = vld [vmem:[#allocation2 + $0x230] sm:$0xff]
        %v513 = vld [vmem:[#allocation2 + $0x238] sm:$0xff]
        %v514 = vld [vmem:[#allocation2 + $0x240] sm:$0xff]
        %v515 = vld [vmem:[#allocation2 + $0x248] sm:$0xff]
        %v516 = vld [vmem:[#allocation2 + $0x250] sm:$0xff]
        %v517 = vld [vmem:[#allocation2 + $0x258] sm:$0xff]
        %v518 = vld [vmem:[#allocation2 + $0x260] sm:$0xff]
        %v519 = vpack.c.bf16 %v445, %v445
        %v520 = vpack.c.bf16 %v446, %v446
        %v521 = vpack.c.bf16 %v447, %v447
        %v522 = vpack.c.bf16 %v448, %v448
        %v523 = vpack.c.bf16 %v449, %v449
        %v524 = vpack.c.bf16 %v450, %v450
        %v525 = vpack.c.bf16 %v451, %v451
        %v526 = vpack.c.bf16 %v452, %v452
        %v527 = vpack.c.bf16 %v453, %v453
        %v528 = vpack.c.bf16 %v454, %v454
        %v529 = vpack.c.bf16 %v455, %v455
        %v530 = vpack.c.bf16 %v456, %v456
        %v531 = vpack.c.bf16 %v457, %v457
        %v532 = vpack.c.bf16 %v458, %v458
        %v533 = vpack.c.bf16 %v459, %v459
        %v534 = vpack.c.bf16 %v460, %v460
        %v535 = vpack.c.bf16 %v461, %v461
        %v536 = vpack.c.bf16 %v462, %v462
        %v537 = vpack.c.bf16 %v463, %v463
        %v538 = vpack.c.bf16 %v464, %v464
        %v539 = vpack.c.bf16 %v465, %v465
        %v540 = vpack.c.bf16 %v466, %v466
        %v541 = vpack.c.bf16 %v467, %v467
        %v542 = vpack.c.bf16 %v468, %v468
        %v543 = vpack.c.bf16 %v469, %v469
        %v544 = vpack.c.bf16 %v470, %v470
        %v545 = vpack.c.bf16 %v471, %v471
        %v546 = vpack.c.bf16 %v472, %v472
        %v547 = vpack.c.bf16 %v473, %v473
        %v548 = vpack.c.bf16 %v474, %v474
        %v549 = vpack.c.bf16 %v475, %v475
        %v550 = vpack.c.bf16 %v476, %v476
        %v551 = vpack.c.bf16 %v477, %v477
        %v552 = vpack.c.bf16 %v478, %v478
        %v553 = vpack.c.bf16 %v479, %v479
        %v554 = vpack.c.bf16 %v480, %v480
        %v555 = vpack.c.bf16 %v481, %v481
        %v556 = vpack.c.bf16 %v482, %v482
        %v557 = vpack.c.bf16 %v483, %v483
        %v558 = vpack.c.bf16 %v484, %v484
        %v559 = vpack.c.bf16 %v485, %v485
        %v560 = vpack.c.bf16 %v486, %v486
        %v561 = vpack.c.bf16 %v487, %v487
        %v562 = vpack.c.bf16 %v488, %v488
        %v563 = vpack.c.bf16 %v489, %v489
        %v564 = vpack.c.bf16 %v490, %v490
        %v565 = vpack.c.bf16 %v491, %v491
        %v566 = vpack.c.bf16 %v492, %v492
        %v567 = vpack.c.bf16 %v493, %v493
        %v568 = vpack.c.bf16 %v494, %v494
        %v569 = vpack.c.bf16 %v495, %v495
        %v570 = vpack.c.bf16 %v496, %v496
        %v571 = vpack.c.bf16 %v497, %v497
        %v572 = vpack.c.bf16 %v498, %v498
        %v573 = vpack.c.bf16 %v499, %v499
        %v574 = vpack.c.bf16 %v500, %v500
        %v575 = vpack.c.bf16 %v501, %v501
        %v576 = vpack.c.bf16 %v502, %v502
        %v577 = vpack.c.bf16 %v503, %v503
        %v578 = vpack.c.bf16 %v504, %v504
        %v579 = vpack.c.bf16 %v505, %v505
        %v580 = vpack.c.bf16 %v506, %v506
        %v581 = vpack.c.bf16 %v507, %v507
        %v582 = vpack.c.bf16 %v508, %v508
        %v583 = vpack.c.bf16 %v509, %v509
        %v584 = vpack.c.bf16 %v510, %v510
        %v585 = vpack.c.bf16 %v511, %v511
        %v586 = vpack.c.bf16 %v512, %v512
        %v587 = vpack.c.bf16 %v513, %v513
        %v588 = vpack.c.bf16 %v514, %v514
        %v589 = vpack.c.bf16 %v515, %v515
        %v590 = vpack.c.bf16 %v516, %v516
        %v591 = vpack.c.bf16 %v517, %v517
        %v592 = vpack.c.bf16 %v518, %v518
        %v593 = vld [vmem:[%s1] sm:$0xf]
        %v594 = vld [vmem:[%s1 + $0x4] sm:$0xf]
        %v595 = vld [vmem:[%s1 + $0x8] sm:$0xf]
        %v596 = vld [vmem:[%s1 + $0xc] sm:$0xf]
        %v597 = vld [vmem:[%s1 + $0x10] sm:$0xf]
        %v598 = vld [vmem:[%s1 + $0x14] sm:$0xf]
        %v599 = vld [vmem:[%s1 + $0x18] sm:$0xf]
        %v600 = vld [vmem:[%s1 + $0x1c] sm:$0xf]
        %v601 = vld [vmem:[%s1 + $0x20] sm:$0xf]
        %v602 = vld [vmem:[%s1 + $0x24] sm:$0xf]
        %v603 = vld [vmem:[%s1 + $0x28] sm:$0xf]
        %v604 = vld [vmem:[%s1 + $0x2c] sm:$0xf]
        %v605 = vld [vmem:[%s1 + $0x30] sm:$0xf]
        %v606 = vld [vmem:[%s1 + $0x34] sm:$0xf]
        %v607 = vld [vmem:[%s1 + $0x38] sm:$0xf]
        %v608 = vld [vmem:[%s1 + $0x3c] sm:$0xf]
        %s609 = scalar_lea.vmem %s1, 64
        %v610 = vld [vmem:[%s609] sm:$0xf]
        %v611 = vld [vmem:[%s609 + $0x4] sm:$0xf]
        %v612 = vld [vmem:[%s609 + $0x8] sm:$0xf]
        %v613 = vld [vmem:[%s609 + $0xc] sm:$0xf]
        %v614 = vld [vmem:[%s609 + $0x10] sm:$0xf]
        %v615 = vld [vmem:[%s609 + $0x14] sm:$0xf]
        %v616 = vld [vmem:[%s609 + $0x18] sm:$0xf]
        %v617 = vld [vmem:[%s609 + $0x1c] sm:$0xf]
        %v618 = vld [vmem:[%s609 + $0x20] sm:$0xf]
        %v619 = vld [vmem:[%s609 + $0x24] sm:$0xf]
        %v620 = vld [vmem:[%s609 + $0x28] sm:$0xf]
        %v621 = vld [vmem:[%s609 + $0x2c] sm:$0xf]
        %v622 = vld [vmem:[%s609 + $0x30] sm:$0xf]
        %v623 = vld [vmem:[%s609 + $0x34] sm:$0xf]
        %v624 = vld [vmem:[%s609 + $0x38] sm:$0xf]
        %v625 = vld [vmem:[%s609 + $0x3c] sm:$0xf]
        %v690 = vunpack.c.l.b16 %v520
        %v691 = vunpack.c.l.b16 %v521
        %v692 = vunpack.c.l.b16 %v522
        %v693 = vunpack.c.l.b16 %v523
        %v694 = vunpack.c.l.b16 %v524
        %v695 = vunpack.c.l.b16 %v525
        %v696 = vunpack.c.l.b16 %v526
        %v697 = vunpack.c.l.b16 %v527
        %v698 = vunpack.c.l.b16 %v528
        %v699 = vunpack.c.l.b16 %v529
        %v700 = vunpack.c.l.b16 %v530
        %v701 = vunpack.c.l.b16 %v531
        %v702 = vunpack.c.l.b16 %v532
        %v703 = vunpack.c.l.b16 %v533
        %v704 = vunpack.c.l.b16 %v534
        %v705 = vunpack.c.l.b16 %v535
        %v706 = vunpack.c.l.b16 %v536
        %v707 = vunpack.c.l.b16 %v537
        %v708 = vunpack.c.l.b16 %v538
        %v709 = vunpack.c.l.b16 %v539
        %v710 = vunpack.c.l.b16 %v540
        %v711 = vunpack.c.l.b16 %v541
        %v712 = vunpack.c.l.b16 %v542
        %v713 = vunpack.c.l.b16 %v543
        %v714 = vunpack.c.l.b16 %v544
        %v715 = vunpack.c.l.b16 %v545
        %v716 = vunpack.c.l.b16 %v546
        %v717 = vunpack.c.l.b16 %v547
        %v718 = vunpack.c.l.b16 %v548
        %v719 = vunpack.c.l.b16 %v549
        %v720 = vunpack.c.l.b16 %v550
        %v721 = vunpack.c.l.b16 %v551
        %v722 = vunpack.c.l.b16 %v552
        %v723 = vunpack.c.l.b16 %v553
        %v724 = vunpack.c.l.b16 %v554
        %v725 = vunpack.c.l.b16 %v555
        %v726 = vunpack.c.l.b16 %v556
        %v727 = vunpack.c.l.b16 %v557
        %v728 = vunpack.c.l.b16 %v558
        %v729 = vunpack.c.l.b16 %v559
        %v730 = vunpack.c.l.b16 %v560
        %v731 = vunpack.c.l.b16 %v561
        %v732 = vunpack.c.l.b16 %v562
        %v733 = vunpack.c.l.b16 %v563
        %v734 = vunpack.c.l.b16 %v564
        %v735 = vunpack.c.l.b16 %v565
        %v736 = vunpack.c.l.b16 %v566
        %v737 = vunpack.c.l.b16 %v567
        %v738 = vunpack.c.l.b16 %v568
        %v739 = vunpack.c.l.b16 %v569
        %v740 = vunpack.c.l.b16 %v570
        %v741 = vunpack.c.l.b16 %v571
        %v742 = vunpack.c.l.b16 %v572
        %v743 = vunpack.c.l.b16 %v573
        %v744 = vunpack.c.l.b16 %v574
        %v745 = vunpack.c.l.b16 %v575
        %v746 = vunpack.c.l.b16 %v576
        %v747 = vunpack.c.l.b16 %v577
        %v748 = vunpack.c.l.b16 %v578
        %v749 = vunpack.c.l.b16 %v579
        %v750 = vunpack.c.l.b16 %v580
        %v751 = vunpack.c.l.b16 %v581
        %v752 = vunpack.c.l.b16 %v582
        %v753 = vunpack.c.l.b16 %v583
        %v754 = vpack.c.b16 %v691, %v690
        %v755 = vpack.c.b16 %v693, %v692
        %v756 = vpack.c.b16 %v695, %v694
        %v757 = vpack.c.b16 %v697, %v696
        %v758 = vpack.c.b16 %v699, %v698
        %v759 = vpack.c.b16 %v701, %v700
        %v760 = vpack.c.b16 %v703, %v702
        %v761 = vpack.c.b16 %v705, %v704
        %v762 = vpack.c.b16 %v707, %v706
        %v763 = vpack.c.b16 %v709, %v708
        %v764 = vpack.c.b16 %v711, %v710
        %v765 = vpack.c.b16 %v713, %v712
        %v766 = vpack.c.b16 %v715, %v714
        %v767 = vpack.c.b16 %v717, %v716
        %v768 = vpack.c.b16 %v719, %v718
        %v769 = vpack.c.b16 %v721, %v720
        %v770 = vpack.c.b16 %v723, %v722
        %v771 = vpack.c.b16 %v725, %v724
        %v772 = vpack.c.b16 %v727, %v726
        %v773 = vpack.c.b16 %v729, %v728
        %v774 = vpack.c.b16 %v731, %v730
        %v775 = vpack.c.b16 %v733, %v732
        %v776 = vpack.c.b16 %v735, %v734
        %v777 = vpack.c.b16 %v737, %v736
        %v778 = vpack.c.b16 %v739, %v738
        %v779 = vpack.c.b16 %v741, %v740
        %v780 = vpack.c.b16 %v743, %v742
        %v781 = vpack.c.b16 %v745, %v744
        %v782 = vpack.c.b16 %v747, %v746
        %v783 = vpack.c.b16 %v749, %v748
        %v784 = vpack.c.b16 %v751, %v750
        %v785 = vpack.c.b16 %v753, %v752
        %v834 = vunpack.c.l.b16 %v610
        %v835 = vunpack.c.l.b16 %v611
        %v836 = vunpack.c.l.b16 %v612
        %v837 = vunpack.c.l.b16 %v613
        %v838 = vunpack.c.l.b16 %v614
        %v839 = vunpack.c.l.b16 %v615
        %v840 = vunpack.c.l.b16 %v616
        %v841 = vunpack.c.l.b16 %v617
        %v842 = vunpack.c.l.b16 %v618
        %v843 = vunpack.c.l.b16 %v619
        %v844 = vunpack.c.l.b16 %v620
        %v845 = vunpack.c.l.b16 %v621
        %v846 = vunpack.c.l.b16 %v622
        %v847 = vunpack.c.l.b16 %v623
        %v848 = vunpack.c.l.b16 %v624
        %v849 = vunpack.c.l.b16 %v625
        %v850 = vpack.c.b16 %v835, %v834
        %v851 = vpack.c.b16 %v837, %v836
        %v852 = vpack.c.b16 %v839, %v838
        %v853 = vpack.c.b16 %v841, %v840
        %v854 = vpack.c.b16 %v843, %v842
        %v855 = vpack.c.b16 %v845, %v844
        %v856 = vpack.c.b16 %v847, %v846
        %v857 = vpack.c.b16 %v849, %v848
        %866 = vmatpush.bf16.msra.mxu0 %v857
        %867 = vmatpush.bf16.msra.mxu0 %v856
        %868 = vmatpush.bf16.msra.mxu0 %v855
        %869 = vmatpush.bf16.msra.mxu0 %v854
        %870 = vmatpush.bf16.msra.mxu0 %v853
        %871 = vmatpush.bf16.msra.mxu0 %v852
        %872 = vmatpush.bf16.msra.mxu0 %v851
        %873 = vmatpush.bf16.msra.mxu0 %v850
        %874 = vmatmul.bf16.gmra.mxu0 %v754
        %v875 = vpop.f32.mrf.mxu0
        %v876 = vadd.f32 0.0, %v875
        %v877 = vpop.f32.mrf.mxu0
        %v878 = vadd.f32 0.0, %v877
        %879 = vmatmul.bf16.gmra.mxu0 %v755
        %v880 = vpop.f32.mrf.mxu0
        %v881 = vpop.f32.mrf.mxu0
        %882 = vmatmul.bf16.gmra.mxu0 %v756
        %v883 = vpop.f32.mrf.mxu0
        %v884 = vadd.f32 0.0, %v883
        %v885 = vpop.f32.mrf.mxu0
        %v886 = vadd.f32 0.0, %v885
        %887 = vmatmul.bf16.gmra.mxu0 %v757
        %v888 = vpop.f32.mrf.mxu0
        %v889 = vpop.f32.mrf.mxu0
        %890 = vmatmul.bf16.gmra.mxu0 %v758
        %v891 = vpop.f32.mrf.mxu0
        %v892 = vadd.f32 0.0, %v891
        %v893 = vpop.f32.mrf.mxu0
        %v894 = vadd.f32 0.0, %v893
        %895 = vmatmul.bf16.gmra.mxu0 %v759
        %v896 = vpop.f32.mrf.mxu0
        %v897 = vpop.f32.mrf.mxu0
        %898 = vmatmul.bf16.gmra.mxu0 %v760
        %v899 = vpop.f32.mrf.mxu0
        %v900 = vadd.f32 0.0, %v899
        %v901 = vpop.f32.mrf.mxu0
        %v902 = vadd.f32 0.0, %v901
        %903 = vmatmul.bf16.gmra.mxu0 %v761
        %v904 = vpop.f32.mrf.mxu0
        %v905 = vpop.f32.mrf.mxu0
        %906 = vmatmul.bf16.gmra.mxu0 %v762
        %v907 = vpop.f32.mrf.mxu0
        %v908 = vadd.f32 0.0, %v907
        %v909 = vpop.f32.mrf.mxu0
        %v910 = vadd.f32 0.0, %v909
        %911 = vmatmul.bf16.gmra.mxu0 %v763
        %v912 = vpop.f32.mrf.mxu0
        %v913 = vpop.f32.mrf.mxu0
        %914 = vmatmul.bf16.gmra.mxu0 %v764
        %v915 = vpop.f32.mrf.mxu0
        %v916 = vadd.f32 0.0, %v915
        %v917 = vpop.f32.mrf.mxu0
        %v918 = vadd.f32 0.0, %v917
        %919 = vmatmul.bf16.gmra.mxu0 %v765
        %v920 = vpop.f32.mrf.mxu0
        %v921 = vpop.f32.mrf.mxu0
        %922 = vmatmul.bf16.gmra.mxu0 %v766
        %v923 = vpop.f32.mrf.mxu0
        %v924 = vadd.f32 0.0, %v923
        %v925 = vpop.f32.mrf.mxu0
        %v926 = vadd.f32 0.0, %v925
        %927 = vmatmul.bf16.gmra.mxu0 %v767
        %v928 = vpop.f32.mrf.mxu0
        %v929 = vpop.f32.mrf.mxu0
        %930 = vmatmul.bf16.gmra.mxu0 %v768
        %v931 = vpop.f32.mrf.mxu0
        %v932 = vadd.f32 0.0, %v931
        %v933 = vpop.f32.mrf.mxu0
        %v934 = vadd.f32 0.0, %v933
        %935 = vmatmul.bf16.gmra.mxu0 %v769
        %v936 = vpop.f32.mrf.mxu0
        %v937 = vpop.f32.mrf.mxu0
        %938 = vmatmul.bf16.gmra.mxu0 %v770
        %v939 = vpop.f32.mrf.mxu0
        %v940 = vadd.f32 0.0, %v939
        %v941 = vpop.f32.mrf.mxu0
        %v942 = vadd.f32 0.0, %v941
        %943 = vmatmul.bf16.gmra.mxu0 %v771
        %v944 = vpop.f32.mrf.mxu0
        %v945 = vpop.f32.mrf.mxu0
        %946 = vmatmul.bf16.gmra.mxu0 %v772
        %v947 = vpop.f32.mrf.mxu0
        %v948 = vadd.f32 0.0, %v947
        %v949 = vpop.f32.mrf.mxu0
        %v950 = vadd.f32 0.0, %v949
        %951 = vmatmul.bf16.gmra.mxu0 %v773
        %v952 = vpop.f32.mrf.mxu0
        %v953 = vpop.f32.mrf.mxu0
        %954 = vmatmul.bf16.gmra.mxu0 %v774
        %v955 = vpop.f32.mrf.mxu0
        %v956 = vadd.f32 0.0, %v955
        %v957 = vpop.f32.mrf.mxu0
        %v958 = vadd.f32 0.0, %v957
        %959 = vmatmul.bf16.gmra.mxu0 %v775
        %v960 = vpop.f32.mrf.mxu0
        %v961 = vpop.f32.mrf.mxu0
        %962 = vmatmul.bf16.gmra.mxu0 %v776
        %v963 = vpop.f32.mrf.mxu0
        %v964 = vadd.f32 0.0, %v963
        %v965 = vpop.f32.mrf.mxu0
        %v966 = vadd.f32 0.0, %v965
        %967 = vmatmul.bf16.gmra.mxu0 %v777
        %v968 = vpop.f32.mrf.mxu0
        %v969 = vpop.f32.mrf.mxu0
        %970 = vmatmul.bf16.gmra.mxu0 %v778
        %v971 = vpop.f32.mrf.mxu0
        %v972 = vadd.f32 0.0, %v971
        %v973 = vpop.f32.mrf.mxu0
        %v974 = vadd.f32 0.0, %v973
        %975 = vmatmul.bf16.gmra.mxu0 %v779
        %v976 = vpop.f32.mrf.mxu0
        %v977 = vpop.f32.mrf.mxu0
        %978 = vmatmul.bf16.gmra.mxu0 %v780
        %v979 = vpop.f32.mrf.mxu0
        %v980 = vadd.f32 0.0, %v979
        %v981 = vpop.f32.mrf.mxu0
        %v982 = vadd.f32 0.0, %v981
        %983 = vmatmul.bf16.gmra.mxu0 %v781
        %v984 = vpop.f32.mrf.mxu0
        %v985 = vpop.f32.mrf.mxu0
        %986 = vmatmul.bf16.gmra.mxu0 %v782
        %v987 = vpop.f32.mrf.mxu0
        %v988 = vadd.f32 0.0, %v987
        %v989 = vpop.f32.mrf.mxu0
        %v990 = vadd.f32 0.0, %v989
        %991 = vmatmul.bf16.gmra.mxu0 %v783
        %v992 = vpop.f32.mrf.mxu0
        %v993 = vpop.f32.mrf.mxu0
        %994 = vmatmul.bf16.gmra.mxu0 %v784
        %v995 = vpop.f32.mrf.mxu0
        %v996 = vadd.f32 0.0, %v995
        %v997 = vpop.f32.mrf.mxu0
        %v998 = vadd.f32 0.0, %v997
        %999 = vmatmul.bf16.gmra.mxu0 %v785
        %v1000 = vpop.f32.mrf.mxu0
        %v1001 = vpop.f32.mrf.mxu0
        %1002 = vdwg.mxu0
        %v1004 = vunpack.c.l.b16 %v519
        %v1005 = vpack.c.b16 %v690, %v1004
        %v1006 = vpack.c.b16 %v692, %v691
        %v1007 = vpack.c.b16 %v694, %v693
        %v1008 = vpack.c.b16 %v696, %v695
        %v1009 = vpack.c.b16 %v698, %v697
        %v1010 = vpack.c.b16 %v700, %v699
        %v1011 = vpack.c.b16 %v702, %v701
        %v1012 = vpack.c.b16 %v704, %v703
        %v1013 = vpack.c.b16 %v706, %v705
        %v1014 = vpack.c.b16 %v708, %v707
        %v1015 = vpack.c.b16 %v710, %v709
        %v1016 = vpack.c.b16 %v712, %v711
        %v1017 = vpack.c.b16 %v714, %v713
        %v1018 = vpack.c.b16 %v716, %v715
        %v1019 = vpack.c.b16 %v718, %v717
        %v1020 = vpack.c.b16 %v720, %v719
        %v1021 = vpack.c.b16 %v722, %v721
        %v1022 = vpack.c.b16 %v724, %v723
        %v1023 = vpack.c.b16 %v726, %v725
        %v1024 = vpack.c.b16 %v728, %v727
        %v1025 = vpack.c.b16 %v730, %v729
        %v1026 = vpack.c.b16 %v732, %v731
        %v1027 = vpack.c.b16 %v734, %v733
        %v1028 = vpack.c.b16 %v736, %v735
        %v1029 = vpack.c.b16 %v738, %v737
        %v1030 = vpack.c.b16 %v740, %v739
        %v1031 = vpack.c.b16 %v742, %v741
        %v1032 = vpack.c.b16 %v744, %v743
        %v1033 = vpack.c.b16 %v746, %v745
        %v1034 = vpack.c.b16 %v748, %v747
        %v1035 = vpack.c.b16 %v750, %v749
        %v1036 = vpack.c.b16 %v752, %v751
        %v1037 = vpack.c.b16 %v753, %v753
        %vm1038 = vsmask.f32 4352
        %v1040 = vshrl.u32 %v1005, 16
        %v1042 = vrot.slane %v1040, 3
        %v1043 = vshll.u32 %v1005, 16
        %v1045 = vrot.slane %v1043, 4
        %v1046 = vor.u32 %v1042, %v1045
        %v1048 = vshrl.u32 %v1006, 16
        %v1050 = vrot.slane %v1048, 3
        %v1051 = vshll.u32 %v1006, 16
        %v1053 = vrot.slane %v1051, 4
        %v1054 = vor.u32 %v1050, %v1053
        %v1055 = vsel %vm1038, %v1046, %v1054
        %v1057 = vshrl.u32 %v1007, 16
        %v1059 = vrot.slane %v1057, 3
        %v1060 = vshll.u32 %v1007, 16
        %v1062 = vrot.slane %v1060, 4
        %v1063 = vor.u32 %v1059, %v1062
        %v1064 = vsel %vm1038, %v1054, %v1063
        %v1066 = vshrl.u32 %v1008, 16
        %v1068 = vrot.slane %v1066, 3
        %v1069 = vshll.u32 %v1008, 16
        %v1071 = vrot.slane %v1069, 4
        %v1072 = vor.u32 %v1068, %v1071
        %v1073 = vsel %vm1038, %v1063, %v1072
        %v1075 = vshrl.u32 %v1009, 16
        %v1077 = vrot.slane %v1075, 3
        %v1078 = vshll.u32 %v1009, 16
        %v1080 = vrot.slane %v1078, 4
        %v1081 = vor.u32 %v1077, %v1080
        %v1082 = vsel %vm1038, %v1072, %v1081
        %v1084 = vshrl.u32 %v1010, 16
        %v1086 = vrot.slane %v1084, 3
        %v1087 = vshll.u32 %v1010, 16
        %v1089 = vrot.slane %v1087, 4
        %v1090 = vor.u32 %v1086, %v1089
        %v1091 = vsel %vm1038, %v1081, %v1090
        %v1093 = vshrl.u32 %v1011, 16
        %v1095 = vrot.slane %v1093, 3
        %v1096 = vshll.u32 %v1011, 16
        %v1098 = vrot.slane %v1096, 4
        %v1099 = vor.u32 %v1095, %v1098
        %v1100 = vsel %vm1038, %v1090, %v1099
        %v1102 = vshrl.u32 %v1012, 16
        %v1104 = vrot.slane %v1102, 3
        %v1105 = vshll.u32 %v1012, 16
        %v1107 = vrot.slane %v1105, 4
        %v1108 = vor.u32 %v1104, %v1107
        %v1109 = vsel %vm1038, %v1099, %v1108
        %v1111 = vshrl.u32 %v1013, 16
        %v1113 = vrot.slane %v1111, 3
        %v1114 = vshll.u32 %v1013, 16
        %v1116 = vrot.slane %v1114, 4
        %v1117 = vor.u32 %v1113, %v1116
        %v1118 = vsel %vm1038, %v1108, %v1117
        %v1120 = vshrl.u32 %v1014, 16
        %v1122 = vrot.slane %v1120, 3
        %v1123 = vshll.u32 %v1014, 16
        %v1125 = vrot.slane %v1123, 4
        %v1126 = vor.u32 %v1122, %v1125
        %v1127 = vsel %vm1038, %v1117, %v1126
        %v1129 = vshrl.u32 %v1015, 16
        %v1131 = vrot.slane %v1129, 3
        %v1132 = vshll.u32 %v1015, 16
        %v1134 = vrot.slane %v1132, 4
        %v1135 = vor.u32 %v1131, %v1134
        %v1136 = vsel %vm1038, %v1126, %v1135
        %v1138 = vshrl.u32 %v1016, 16
        %v1140 = vrot.slane %v1138, 3
        %v1141 = vshll.u32 %v1016, 16
        %v1143 = vrot.slane %v1141, 4
        %v1144 = vor.u32 %v1140, %v1143
        %v1145 = vsel %vm1038, %v1135, %v1144
        %v1147 = vshrl.u32 %v1017, 16
        %v1149 = vrot.slane %v1147, 3
        %v1150 = vshll.u32 %v1017, 16
        %v1152 = vrot.slane %v1150, 4
        %v1153 = vor.u32 %v1149, %v1152
        %v1154 = vsel %vm1038, %v1144, %v1153
        %v1156 = vshrl.u32 %v1018, 16
        %v1158 = vrot.slane %v1156, 3
        %v1159 = vshll.u32 %v1018, 16
        %v1161 = vrot.slane %v1159, 4
        %v1162 = vor.u32 %v1158, %v1161
        %v1163 = vsel %vm1038, %v1153, %v1162
        %v1165 = vshrl.u32 %v1019, 16
        %v1167 = vrot.slane %v1165, 3
        %v1168 = vshll.u32 %v1019, 16
        %v1170 = vrot.slane %v1168, 4
        %v1171 = vor.u32 %v1167, %v1170
        %v1172 = vsel %vm1038, %v1162, %v1171
        %v1174 = vshrl.u32 %v1020, 16
        %v1176 = vrot.slane %v1174, 3
        %v1177 = vshll.u32 %v1020, 16
        %v1179 = vrot.slane %v1177, 4
        %v1180 = vor.u32 %v1176, %v1179
        %v1181 = vsel %vm1038, %v1171, %v1180
        %v1183 = vshrl.u32 %v1021, 16
        %v1185 = vrot.slane %v1183, 3
        %v1186 = vshll.u32 %v1021, 16
        %v1188 = vrot.slane %v1186, 4
        %v1189 = vor.u32 %v1185, %v1188
        %v1190 = vsel %vm1038, %v1180, %v1189
        %v1192 = vshrl.u32 %v1022, 16
        %v1194 = vrot.slane %v1192, 3
        %v1195 = vshll.u32 %v1022, 16
        %v1197 = vrot.slane %v1195, 4
        %v1198 = vor.u32 %v1194, %v1197
        %v1199 = vsel %vm1038, %v1189, %v1198
        %v1201 = vshrl.u32 %v1023, 16
        %v1203 = vrot.slane %v1201, 3
        %v1204 = vshll.u32 %v1023, 16
        %v1206 = vrot.slane %v1204, 4
        %v1207 = vor.u32 %v1203, %v1206
        %v1208 = vsel %vm1038, %v1198, %v1207
        %v1210 = vshrl.u32 %v1024, 16
        %v1212 = vrot.slane %v1210, 3
        %v1213 = vshll.u32 %v1024, 16
        %v1215 = vrot.slane %v1213, 4
        %v1216 = vor.u32 %v1212, %v1215
        %v1217 = vsel %vm1038, %v1207, %v1216
        %v1219 = vshrl.u32 %v1025, 16
        %v1221 = vrot.slane %v1219, 3
        %v1222 = vshll.u32 %v1025, 16
        %v1224 = vrot.slane %v1222, 4
        %v1225 = vor.u32 %v1221, %v1224
        %v1226 = vsel %vm1038, %v1216, %v1225
        %v1228 = vshrl.u32 %v1026, 16
        %v1230 = vrot.slane %v1228, 3
        %v1231 = vshll.u32 %v1026, 16
        %v1233 = vrot.slane %v1231, 4
        %v1234 = vor.u32 %v1230, %v1233
        %v1235 = vsel %vm1038, %v1225, %v1234
        %v1237 = vshrl.u32 %v1027, 16
        %v1239 = vrot.slane %v1237, 3
        %v1240 = vshll.u32 %v1027, 16
        %v1242 = vrot.slane %v1240, 4
        %v1243 = vor.u32 %v1239, %v1242
        %v1244 = vsel %vm1038, %v1234, %v1243
        %v1246 = vshrl.u32 %v1028, 16
        %v1248 = vrot.slane %v1246, 3
        %v1249 = vshll.u32 %v1028, 16
        %v1251 = vrot.slane %v1249, 4
        %v1252 = vor.u32 %v1248, %v1251
        %v1253 = vsel %vm1038, %v1243, %v1252
        %v1255 = vshrl.u32 %v1029, 16
        %v1257 = vrot.slane %v1255, 3
        %v1258 = vshll.u32 %v1029, 16
        %v1260 = vrot.slane %v1258, 4
        %v1261 = vor.u32 %v1257, %v1260
        %v1262 = vsel %vm1038, %v1252, %v1261
        %v1264 = vshrl.u32 %v1030, 16
        %v1266 = vrot.slane %v1264, 3
        %v1267 = vshll.u32 %v1030, 16
        %v1269 = vrot.slane %v1267, 4
        %v1270 = vor.u32 %v1266, %v1269
        %v1271 = vsel %vm1038, %v1261, %v1270
        %v1273 = vshrl.u32 %v1031, 16
        %v1275 = vrot.slane %v1273, 3
        %v1276 = vshll.u32 %v1031, 16
        %v1278 = vrot.slane %v1276, 4
        %v1279 = vor.u32 %v1275, %v1278
        %v1280 = vsel %vm1038, %v1270, %v1279
        %v1282 = vshrl.u32 %v1032, 16
        %v1284 = vrot.slane %v1282, 3
        %v1285 = vshll.u32 %v1032, 16
        %v1287 = vrot.slane %v1285, 4
        %v1288 = vor.u32 %v1284, %v1287
        %v1289 = vsel %vm1038, %v1279, %v1288
        %v1291 = vshrl.u32 %v1033, 16
        %v1293 = vrot.slane %v1291, 3
        %v1294 = vshll.u32 %v1033, 16
        %v1296 = vrot.slane %v1294, 4
        %v1297 = vor.u32 %v1293, %v1296
        %v1298 = vsel %vm1038, %v1288, %v1297
        %v1300 = vshrl.u32 %v1034, 16
        %v1302 = vrot.slane %v1300, 3
        %v1303 = vshll.u32 %v1034, 16
        %v1305 = vrot.slane %v1303, 4
        %v1306 = vor.u32 %v1302, %v1305
        %v1307 = vsel %vm1038, %v1297, %v1306
        %v1309 = vshrl.u32 %v1035, 16
        %v1311 = vrot.slane %v1309, 3
        %v1312 = vshll.u32 %v1035, 16
        %v1314 = vrot.slane %v1312, 4
        %v1315 = vor.u32 %v1311, %v1314
        %v1316 = vsel %vm1038, %v1306, %v1315
        %v1318 = vshrl.u32 %v1036, 16
        %v1320 = vrot.slane %v1318, 3
        %v1321 = vshll.u32 %v1036, 16
        %v1323 = vrot.slane %v1321, 4
        %v1324 = vor.u32 %v1320, %v1323
        %v1325 = vsel %vm1038, %v1315, %v1324
        %v1327 = vshrl.u32 %v1037, 16
        %v1329 = vrot.slane %v1327, 3
        %v1330 = vshll.u32 %v1037, 16
        %v1332 = vrot.slane %v1330, 4
        %v1333 = vor.u32 %v1329, %v1332
        %v1334 = vsel %vm1038, %v1324, %v1333
        %v1383 = vunpack.c.l.b16 %v593
        %v1384 = vunpack.c.l.b16 %v594
        %v1385 = vunpack.c.l.b16 %v595
        %v1386 = vunpack.c.l.b16 %v596
        %v1387 = vunpack.c.l.b16 %v597
        %v1388 = vunpack.c.l.b16 %v598
        %v1389 = vunpack.c.l.b16 %v599
        %v1390 = vunpack.c.l.b16 %v600
        %v1391 = vunpack.c.l.b16 %v601
        %v1392 = vunpack.c.l.b16 %v602
        %v1393 = vunpack.c.l.b16 %v603
        %v1394 = vunpack.c.l.b16 %v604
        %v1395 = vunpack.c.l.b16 %v605
        %v1396 = vunpack.c.l.b16 %v606
        %v1397 = vunpack.c.l.b16 %v607
        %v1398 = vunpack.c.l.b16 %v608
        %v1399 = vpack.c.b16 %v1384, %v1383
        %v1400 = vpack.c.b16 %v1386, %v1385
        %v1401 = vpack.c.b16 %v1388, %v1387
        %v1402 = vpack.c.b16 %v1390, %v1389
        %v1403 = vpack.c.b16 %v1392, %v1391
        %v1404 = vpack.c.b16 %v1394, %v1393
        %v1405 = vpack.c.b16 %v1396, %v1395
        %v1406 = vpack.c.b16 %v1398, %v1397
        %1415 = vmatpush.bf16.msra.mxu0 %v1406
        %1416 = vmatpush.bf16.msra.mxu0 %v1405
        %1417 = vmatpush.bf16.msra.mxu0 %v1404
        %1418 = vmatpush.bf16.msra.mxu0 %v1403
        %1419 = vmatpush.bf16.msra.mxu0 %v1402
        %1420 = vmatpush.bf16.msra.mxu0 %v1401
        %1421 = vmatpush.bf16.msra.mxu0 %v1400
        %1422 = vmatpush.bf16.msra.mxu0 %v1399
        %1423 = vmatmul.bf16.gmra.mxu0 %v1055
        %v1424 = vpop.f32.mrf.mxu0
        %v1425 = vadd.f32 %v876, %v1424
        %v1426 = vpop.f32.mrf.mxu0
        %v1427 = vadd.f32 %v878, %v1426
        %1428 = vmatmul.bf16.gmra.mxu0 %v1064
        %v1429 = vpop.f32.mrf.mxu0
        %v1430 = vpop.f32.mrf.mxu0
        %1431 = vmatmul.bf16.gmra.mxu0 %v1073
        %v1432 = vpop.f32.mrf.mxu0
        %v1433 = vadd.f32 %v884, %v1432
        %v1434 = vpop.f32.mrf.mxu0
        %v1435 = vadd.f32 %v886, %v1434
        %1436 = vmatmul.bf16.gmra.mxu0 %v1082
        %v1437 = vpop.f32.mrf.mxu0
        %v1438 = vpop.f32.mrf.mxu0
        %1439 = vmatmul.bf16.gmra.mxu0 %v1091
        %v1440 = vpop.f32.mrf.mxu0
        %v1441 = vadd.f32 %v892, %v1440
        %v1442 = vpop.f32.mrf.mxu0
        %v1443 = vadd.f32 %v894, %v1442
        %1444 = vmatmul.bf16.gmra.mxu0 %v1100
        %v1445 = vpop.f32.mrf.mxu0
        %v1446 = vpop.f32.mrf.mxu0
        %1447 = vmatmul.bf16.gmra.mxu0 %v1109
        %v1448 = vpop.f32.mrf.mxu0
        %v1449 = vadd.f32 %v900, %v1448
        %v1450 = vpop.f32.mrf.mxu0
        %v1451 = vadd.f32 %v902, %v1450
        %1452 = vmatmul.bf16.gmra.mxu0 %v1118
        %v1453 = vpop.f32.mrf.mxu0
        %v1454 = vpop.f32.mrf.mxu0
        %1455 = vmatmul.bf16.gmra.mxu0 %v1127
        %v1456 = vpop.f32.mrf.mxu0
        %v1457 = vadd.f32 %v908, %v1456
        %v1458 = vpop.f32.mrf.mxu0
        %v1459 = vadd.f32 %v910, %v1458
        %1460 = vmatmul.bf16.gmra.mxu0 %v1136
        %v1461 = vpop.f32.mrf.mxu0
        %v1462 = vpop.f32.mrf.mxu0
        %1463 = vmatmul.bf16.gmra.mxu0 %v1145
        %v1464 = vpop.f32.mrf.mxu0
        %v1465 = vadd.f32 %v916, %v1464
        %v1466 = vpop.f32.mrf.mxu0
        %v1467 = vadd.f32 %v918, %v1466
        %1468 = vmatmul.bf16.gmra.mxu0 %v1154
        %v1469 = vpop.f32.mrf.mxu0
        %v1470 = vpop.f32.mrf.mxu0
        %1471 = vmatmul.bf16.gmra.mxu0 %v1163
        %v1472 = vpop.f32.mrf.mxu0
        %v1473 = vadd.f32 %v924, %v1472
        %v1474 = vpop.f32.mrf.mxu0
        %v1475 = vadd.f32 %v926, %v1474
        %1476 = vmatmul.bf16.gmra.mxu0 %v1172
        %v1477 = vpop.f32.mrf.mxu0
        %v1478 = vpop.f32.mrf.mxu0
        %1479 = vmatmul.bf16.gmra.mxu0 %v1181
        %v1480 = vpop.f32.mrf.mxu0
        %v1481 = vadd.f32 %v932, %v1480
        %v1482 = vpop.f32.mrf.mxu0
        %v1483 = vadd.f32 %v934, %v1482
        %1484 = vmatmul.bf16.gmra.mxu0 %v1190
        %v1485 = vpop.f32.mrf.mxu0
        %v1486 = vpop.f32.mrf.mxu0
        %1487 = vmatmul.bf16.gmra.mxu0 %v1199
        %v1488 = vpop.f32.mrf.mxu0
        %v1489 = vadd.f32 %v940, %v1488
        %v1490 = vpop.f32.mrf.mxu0
        %v1491 = vadd.f32 %v942, %v1490
        %1492 = vmatmul.bf16.gmra.mxu0 %v1208
        %v1493 = vpop.f32.mrf.mxu0
        %v1494 = vpop.f32.mrf.mxu0
        %1495 = vmatmul.bf16.gmra.mxu0 %v1217
        %v1496 = vpop.f32.mrf.mxu0
        %v1497 = vadd.f32 %v948, %v1496
        %v1498 = vpop.f32.mrf.mxu0
        %v1499 = vadd.f32 %v950, %v1498
        %1500 = vmatmul.bf16.gmra.mxu0 %v1226
        %v1501 = vpop.f32.mrf.mxu0
        %v1502 = vpop.f32.mrf.mxu0
        %1503 = vmatmul.bf16.gmra.mxu0 %v1235
        %v1504 = vpop.f32.mrf.mxu0
        %v1505 = vadd.f32 %v956, %v1504
        %v1506 = vpop.f32.mrf.mxu0
        %v1507 = vadd.f32 %v958, %v1506
        %1508 = vmatmul.bf16.gmra.mxu0 %v1244
        %v1509 = vpop.f32.mrf.mxu0
        %v1510 = vpop.f32.mrf.mxu0
        %1511 = vmatmul.bf16.gmra.mxu0 %v1253
        %v1512 = vpop.f32.mrf.mxu0
        %v1513 = vadd.f32 %v964, %v1512
        %v1514 = vpop.f32.mrf.mxu0
        %v1515 = vadd.f32 %v966, %v1514
        %1516 = vmatmul.bf16.gmra.mxu0 %v1262
        %v1517 = vpop.f32.mrf.mxu0
        %v1518 = vpop.f32.mrf.mxu0
        %1519 = vmatmul.bf16.gmra.mxu0 %v1271
        %v1520 = vpop.f32.mrf.mxu0
        %v1521 = vadd.f32 %v972, %v1520
        %v1522 = vpop.f32.mrf.mxu0
        %v1523 = vadd.f32 %v974, %v1522
        %1524 = vmatmul.bf16.gmra.mxu0 %v1280
        %v1525 = vpop.f32.mrf.mxu0
        %v1526 = vpop.f32.mrf.mxu0
        %1527 = vmatmul.bf16.gmra.mxu0 %v1289
        %v1528 = vpop.f32.mrf.mxu0
        %v1529 = vadd.f32 %v980, %v1528
        %v1530 = vpop.f32.mrf.mxu0
        %v1531 = vadd.f32 %v982, %v1530
        %1532 = vmatmul.bf16.gmra.mxu0 %v1298
        %v1533 = vpop.f32.mrf.mxu0
        %v1534 = vpop.f32.mrf.mxu0
        %1535 = vmatmul.bf16.gmra.mxu0 %v1307
        %v1536 = vpop.f32.mrf.mxu0
        %v1537 = vadd.f32 %v988, %v1536
        %v1538 = vpop.f32.mrf.mxu0
        %v1539 = vadd.f32 %v990, %v1538
        %1540 = vmatmul.bf16.gmra.mxu0 %v1316
        %v1541 = vpop.f32.mrf.mxu0
        %v1542 = vpop.f32.mrf.mxu0
        %1543 = vmatmul.bf16.gmra.mxu0 %v1325
        %v1544 = vpop.f32.mrf.mxu0
        %v1545 = vadd.f32 %v996, %v1544
        %v1546 = vpop.f32.mrf.mxu0
        %v1547 = vadd.f32 %v998, %v1546
        %1548 = vmatmul.bf16.gmra.mxu0 %v1334
        %v1549 = vpop.f32.mrf.mxu0
        %v1550 = vpop.f32.mrf.mxu0
        %1551 = vdwg.mxu0
        %s1552 = scalar_lea.vmem %s1, 128
        %v1553 = vld [vmem:[%s1552] sm:$0xf]
        %v1554 = vld [vmem:[%s1552 + $0x4] sm:$0xf]
        %v1555 = vld [vmem:[%s1552 + $0x8] sm:$0xf]
        %v1556 = vld [vmem:[%s1552 + $0xc] sm:$0xf]
        %v1557 = vld [vmem:[%s1552 + $0x10] sm:$0xf]
        %v1558 = vld [vmem:[%s1552 + $0x14] sm:$0xf]
        %v1559 = vld [vmem:[%s1552 + $0x18] sm:$0xf]
        %v1560 = vld [vmem:[%s1552 + $0x1c] sm:$0xf]
        %v1561 = vld [vmem:[%s1552 + $0x20] sm:$0xf]
        %v1562 = vld [vmem:[%s1552 + $0x24] sm:$0xf]
        %v1563 = vld [vmem:[%s1552 + $0x28] sm:$0xf]
        %v1564 = vld [vmem:[%s1552 + $0x2c] sm:$0xf]
        %v1565 = vld [vmem:[%s1552 + $0x30] sm:$0xf]
        %v1566 = vld [vmem:[%s1552 + $0x34] sm:$0xf]
        %v1567 = vld [vmem:[%s1552 + $0x38] sm:$0xf]
        %v1568 = vld [vmem:[%s1552 + $0x3c] sm:$0xf]
        %v1570 = vunpack.c.l.b16 %v584
        %v1571 = vpack.c.b16 %v1570, %v1570
        %vm1572 = vsmask.f32 7424
        %v1574 = vshrl.u32 %v754, 16
        %v1576 = vshll.u32 %v754, 16
        %v1578 = vrot.slane %v1576, 1
        %v1579 = vor.u32 %v1574, %v1578
        %v1581 = vshll.u32 %v755, 16
        %v1583 = vrot.slane %v1581, 1
        %v1584 = vsel %vm1572, %v1579, %v1583
        %v1585 = vshrl.u32 %v755, 16
        %v1587 = vor.u32 %v1585, %v1583
        %v1589 = vshll.u32 %v756, 16
        %v1591 = vrot.slane %v1589, 1
        %v1592 = vsel %vm1572, %v1587, %v1591
        %v1593 = vshrl.u32 %v756, 16
        %v1595 = vor.u32 %v1593, %v1591
        %v1597 = vshll.u32 %v757, 16
        %v1599 = vrot.slane %v1597, 1
        %v1600 = vsel %vm1572, %v1595, %v1599
        %v1601 = vshrl.u32 %v757, 16
        %v1603 = vor.u32 %v1601, %v1599
        %v1605 = vshll.u32 %v758, 16
        %v1607 = vrot.slane %v1605, 1
        %v1608 = vsel %vm1572, %v1603, %v1607
        %v1609 = vshrl.u32 %v758, 16
        %v1611 = vor.u32 %v1609, %v1607
        %v1613 = vshll.u32 %v759, 16
        %v1615 = vrot.slane %v1613, 1
        %v1616 = vsel %vm1572, %v1611, %v1615
        %v1617 = vshrl.u32 %v759, 16
        %v1619 = vor.u32 %v1617, %v1615
        %v1621 = vshll.u32 %v760, 16
        %v1623 = vrot.slane %v1621, 1
        %v1624 = vsel %vm1572, %v1619, %v1623
        %v1625 = vshrl.u32 %v760, 16
        %v1627 = vor.u32 %v1625, %v1623
        %v1629 = vshll.u32 %v761, 16
        %v1631 = vrot.slane %v1629, 1
        %v1632 = vsel %vm1572, %v1627, %v1631
        %v1633 = vshrl.u32 %v761, 16
        %v1635 = vor.u32 %v1633, %v1631
        %v1637 = vshll.u32 %v762, 16
        %v1639 = vrot.slane %v1637, 1
        %v1640 = vsel %vm1572, %v1635, %v1639
        %v1641 = vshrl.u32 %v762, 16
        %v1643 = vor.u32 %v1641, %v1639
        %v1645 = vshll.u32 %v763, 16
        %v1647 = vrot.slane %v1645, 1
        %v1648 = vsel %vm1572, %v1643, %v1647
        %v1649 = vshrl.u32 %v763, 16
        %v1651 = vor.u32 %v1649, %v1647
        %v1653 = vshll.u32 %v764, 16
        %v1655 = vrot.slane %v1653, 1
        %v1656 = vsel %vm1572, %v1651, %v1655
        %v1657 = vshrl.u32 %v764, 16
        %v1659 = vor.u32 %v1657, %v1655
        %v1661 = vshll.u32 %v765, 16
        %v1663 = vrot.slane %v1661, 1
        %v1664 = vsel %vm1572, %v1659, %v1663
        %v1665 = vshrl.u32 %v765, 16
        %v1667 = vor.u32 %v1665, %v1663
        %v1669 = vshll.u32 %v766, 16
        %v1671 = vrot.slane %v1669, 1
        %v1672 = vsel %vm1572, %v1667, %v1671
        %v1673 = vshrl.u32 %v766, 16
        %v1675 = vor.u32 %v1673, %v1671
        %v1677 = vshll.u32 %v767, 16
        %v1679 = vrot.slane %v1677, 1
        %v1680 = vsel %vm1572, %v1675, %v1679
        %v1681 = vshrl.u32 %v767, 16
        %v1683 = vor.u32 %v1681, %v1679
        %v1685 = vshll.u32 %v768, 16
        %v1687 = vrot.slane %v1685, 1
        %v1688 = vsel %vm1572, %v1683, %v1687
        %v1689 = vshrl.u32 %v768, 16
        %v1691 = vor.u32 %v1689, %v1687
        %v1693 = vshll.u32 %v769, 16
        %v1695 = vrot.slane %v1693, 1
        %v1696 = vsel %vm1572, %v1691, %v1695
        %v1697 = vshrl.u32 %v769, 16
        %v1699 = vor.u32 %v1697, %v1695
        %v1701 = vshll.u32 %v770, 16
        %v1703 = vrot.slane %v1701, 1
        %v1704 = vsel %vm1572, %v1699, %v1703
        %v1705 = vshrl.u32 %v770, 16
        %v1707 = vor.u32 %v1705, %v1703
        %v1709 = vshll.u32 %v771, 16
        %v1711 = vrot.slane %v1709, 1
        %v1712 = vsel %vm1572, %v1707, %v1711
        %v1713 = vshrl.u32 %v771, 16
        %v1715 = vor.u32 %v1713, %v1711
        %v1717 = vshll.u32 %v772, 16
        %v1719 = vrot.slane %v1717, 1
        %v1720 = vsel %vm1572, %v1715, %v1719
        %v1721 = vshrl.u32 %v772, 16
        %v1723 = vor.u32 %v1721, %v1719
        %v1725 = vshll.u32 %v773, 16
        %v1727 = vrot.slane %v1725, 1
        %v1728 = vsel %vm1572, %v1723, %v1727
        %v1729 = vshrl.u32 %v773, 16
        %v1731 = vor.u32 %v1729, %v1727
        %v1733 = vshll.u32 %v774, 16
        %v1735 = vrot.slane %v1733, 1
        %v1736 = vsel %vm1572, %v1731, %v1735
        %v1737 = vshrl.u32 %v774, 16
        %v1739 = vor.u32 %v1737, %v1735
        %v1741 = vshll.u32 %v775, 16
        %v1743 = vrot.slane %v1741, 1
        %v1744 = vsel %vm1572, %v1739, %v1743
        %v1745 = vshrl.u32 %v775, 16
        %v1747 = vor.u32 %v1745, %v1743
        %v1749 = vshll.u32 %v776, 16
        %v1751 = vrot.slane %v1749, 1
        %v1752 = vsel %vm1572, %v1747, %v1751
        %v1753 = vshrl.u32 %v776, 16
        %v1755 = vor.u32 %v1753, %v1751
        %v1757 = vshll.u32 %v777, 16
        %v1759 = vrot.slane %v1757, 1
        %v1760 = vsel %vm1572, %v1755, %v1759
        %v1761 = vshrl.u32 %v777, 16
        %v1763 = vor.u32 %v1761, %v1759
        %v1765 = vshll.u32 %v778, 16
        %v1767 = vrot.slane %v1765, 1
        %v1768 = vsel %vm1572, %v1763, %v1767
        %v1769 = vshrl.u32 %v778, 16
        %v1771 = vor.u32 %v1769, %v1767
        %v1773 = vshll.u32 %v779, 16
        %v1775 = vrot.slane %v1773, 1
        %v1776 = vsel %vm1572, %v1771, %v1775
        %v1777 = vshrl.u32 %v779, 16
        %v1779 = vor.u32 %v1777, %v1775
        %v1781 = vshll.u32 %v780, 16
        %v1783 = vrot.slane %v1781, 1
        %v1784 = vsel %vm1572, %v1779, %v1783
        %v1785 = vshrl.u32 %v780, 16
        %v1787 = vor.u32 %v1785, %v1783
        %v1789 = vshll.u32 %v781, 16
        %v1791 = vrot.slane %v1789, 1
        %v1792 = vsel %vm1572, %v1787, %v1791
        %v1793 = vshrl.u32 %v781, 16
        %v1795 = vor.u32 %v1793, %v1791
        %v1797 = vshll.u32 %v782, 16
        %v1799 = vrot.slane %v1797, 1
        %v1800 = vsel %vm1572, %v1795, %v1799
        %v1801 = vshrl.u32 %v782, 16
        %v1803 = vor.u32 %v1801, %v1799
        %v1805 = vshll.u32 %v783, 16
        %v1807 = vrot.slane %v1805, 1
        %v1808 = vsel %vm1572, %v1803, %v1807
        %v1809 = vshrl.u32 %v783, 16
        %v1811 = vor.u32 %v1809, %v1807
        %v1813 = vshll.u32 %v784, 16
        %v1815 = vrot.slane %v1813, 1
        %v1816 = vsel %vm1572, %v1811, %v1815
        %v1817 = vshrl.u32 %v784, 16
        %v1819 = vor.u32 %v1817, %v1815
        %v1821 = vshll.u32 %v785, 16
        %v1823 = vrot.slane %v1821, 1
        %v1824 = vsel %vm1572, %v1819, %v1823
        %v1825 = vshrl.u32 %v785, 16
        %v1827 = vor.u32 %v1825, %v1823
        %v1829 = vshll.u32 %v1571, 16
        %v1831 = vrot.slane %v1829, 1
        %v1832 = vsel %vm1572, %v1827, %v1831
        %v1881 = vunpack.c.l.b16 %v1553
        %v1882 = vunpack.c.l.b16 %v1554
        %v1883 = vunpack.c.l.b16 %v1555
        %v1884 = vunpack.c.l.b16 %v1556
        %v1885 = vunpack.c.l.b16 %v1557
        %v1886 = vunpack.c.l.b16 %v1558
        %v1887 = vunpack.c.l.b16 %v1559
        %v1888 = vunpack.c.l.b16 %v1560
        %v1889 = vunpack.c.l.b16 %v1561
        %v1890 = vunpack.c.l.b16 %v1562
        %v1891 = vunpack.c.l.b16 %v1563
        %v1892 = vunpack.c.l.b16 %v1564
        %v1893 = vunpack.c.l.b16 %v1565
        %v1894 = vunpack.c.l.b16 %v1566
        %v1895 = vunpack.c.l.b16 %v1567
        %v1896 = vunpack.c.l.b16 %v1568
        %v1897 = vpack.c.b16 %v1882, %v1881
        %v1898 = vpack.c.b16 %v1884, %v1883
        %v1899 = vpack.c.b16 %v1886, %v1885
        %v1900 = vpack.c.b16 %v1888, %v1887
        %v1901 = vpack.c.b16 %v1890, %v1889
        %v1902 = vpack.c.b16 %v1892, %v1891
        %v1903 = vpack.c.b16 %v1894, %v1893
        %v1904 = vpack.c.b16 %v1896, %v1895
        %1913 = vmatpush.bf16.msra.mxu0 %v1904
        %1914 = vmatpush.bf16.msra.mxu0 %v1903
        %1915 = vmatpush.bf16.msra.mxu0 %v1902
        %1916 = vmatpush.bf16.msra.mxu0 %v1901
        %1917 = vmatpush.bf16.msra.mxu0 %v1900
        %1918 = vmatpush.bf16.msra.mxu0 %v1899
        %1919 = vmatpush.bf16.msra.mxu0 %v1898
        %1920 = vmatpush.bf16.msra.mxu0 %v1897
        %1921 = vmatmul.bf16.gmra.mxu0 %v1584
        %v1922 = vpop.f32.mrf.mxu0
        %v1923 = vadd.f32 0.0, %v1922
        %v1924 = vpop.f32.mrf.mxu0
        %v1925 = vadd.f32 0.0, %v1924
        %1926 = vmatmul.bf16.gmra.mxu0 %v1592
        %v1927 = vpop.f32.mrf.mxu0
        %v1928 = vpop.f32.mrf.mxu0
        %1929 = vmatmul.bf16.gmra.mxu0 %v1600
        %v1930 = vpop.f32.mrf.mxu0
        %v1931 = vadd.f32 0.0, %v1930
        %v1932 = vpop.f32.mrf.mxu0
        %v1933 = vadd.f32 0.0, %v1932
        %1934 = vmatmul.bf16.gmra.mxu0 %v1608
        %v1935 = vpop.f32.mrf.mxu0
        %v1936 = vpop.f32.mrf.mxu0
        %1937 = vmatmul.bf16.gmra.mxu0 %v1616
        %v1938 = vpop.f32.mrf.mxu0
        %v1939 = vadd.f32 0.0, %v1938
        %v1940 = vpop.f32.mrf.mxu0
        %v1941 = vadd.f32 0.0, %v1940
        %1942 = vmatmul.bf16.gmra.mxu0 %v1624
        %v1943 = vpop.f32.mrf.mxu0
        %v1944 = vpop.f32.mrf.mxu0
        %1945 = vmatmul.bf16.gmra.mxu0 %v1632
        %v1946 = vpop.f32.mrf.mxu0
        %v1947 = vadd.f32 0.0, %v1946
        %v1948 = vpop.f32.mrf.mxu0
        %v1949 = vadd.f32 0.0, %v1948
        %1950 = vmatmul.bf16.gmra.mxu0 %v1640
        %v1951 = vpop.f32.mrf.mxu0
        %v1952 = vpop.f32.mrf.mxu0
        %1953 = vmatmul.bf16.gmra.mxu0 %v1648
        %v1954 = vpop.f32.mrf.mxu0
        %v1955 = vadd.f32 0.0, %v1954
        %v1956 = vpop.f32.mrf.mxu0
        %v1957 = vadd.f32 0.0, %v1956
        %1958 = vmatmul.bf16.gmra.mxu0 %v1656
        %v1959 = vpop.f32.mrf.mxu0
        %v1960 = vpop.f32.mrf.mxu0
        %1961 = vmatmul.bf16.gmra.mxu0 %v1664
        %v1962 = vpop.f32.mrf.mxu0
        %v1963 = vadd.f32 0.0, %v1962
        %v1964 = vpop.f32.mrf.mxu0
        %v1965 = vadd.f32 0.0, %v1964
        %1966 = vmatmul.bf16.gmra.mxu0 %v1672
        %v1967 = vpop.f32.mrf.mxu0
        %v1968 = vpop.f32.mrf.mxu0
        %1969 = vmatmul.bf16.gmra.mxu0 %v1680
        %v1970 = vpop.f32.mrf.mxu0
        %v1971 = vadd.f32 0.0, %v1970
        %v1972 = vpop.f32.mrf.mxu0
        %v1973 = vadd.f32 0.0, %v1972
        %1974 = vmatmul.bf16.gmra.mxu0 %v1688
        %v1975 = vpop.f32.mrf.mxu0
        %v1976 = vpop.f32.mrf.mxu0
        %1977 = vmatmul.bf16.gmra.mxu0 %v1696
        %v1978 = vpop.f32.mrf.mxu0
        %v1979 = vadd.f32 0.0, %v1978
        %v1980 = vpop.f32.mrf.mxu0
        %v1981 = vadd.f32 0.0, %v1980
        %1982 = vmatmul.bf16.gmra.mxu0 %v1704
        %v1983 = vpop.f32.mrf.mxu0
        %v1984 = vpop.f32.mrf.mxu0
        %1985 = vmatmul.bf16.gmra.mxu0 %v1712
        %v1986 = vpop.f32.mrf.mxu0
        %v1987 = vadd.f32 0.0, %v1986
        %v1988 = vpop.f32.mrf.mxu0
        %v1989 = vadd.f32 0.0, %v1988
        %1990 = vmatmul.bf16.gmra.mxu0 %v1720
        %v1991 = vpop.f32.mrf.mxu0
        %v1992 = vpop.f32.mrf.mxu0
        %1993 = vmatmul.bf16.gmra.mxu0 %v1728
        %v1994 = vpop.f32.mrf.mxu0
        %v1995 = vadd.f32 0.0, %v1994
        %v1996 = vpop.f32.mrf.mxu0
        %v1997 = vadd.f32 0.0, %v1996
        %1998 = vmatmul.bf16.gmra.mxu0 %v1736
        %v1999 = vpop.f32.mrf.mxu0
        %v2000 = vpop.f32.mrf.mxu0
        %2001 = vmatmul.bf16.gmra.mxu0 %v1744
        %v2002 = vpop.f32.mrf.mxu0
        %v2003 = vadd.f32 0.0, %v2002
        %v2004 = vpop.f32.mrf.mxu0
        %v2005 = vadd.f32 0.0, %v2004
        %2006 = vmatmul.bf16.gmra.mxu0 %v1752
        %v2007 = vpop.f32.mrf.mxu0
        %v2008 = vpop.f32.mrf.mxu0
        %2009 = vmatmul.bf16.gmra.mxu0 %v1760
        %v2010 = vpop.f32.mrf.mxu0
        %v2011 = vadd.f32 0.0, %v2010
        %v2012 = vpop.f32.mrf.mxu0
        %v2013 = vadd.f32 0.0, %v2012
        %2014 = vmatmul.bf16.gmra.mxu0 %v1768
        %v2015 = vpop.f32.mrf.mxu0
        %v2016 = vpop.f32.mrf.mxu0
        %2017 = vmatmul.bf16.gmra.mxu0 %v1776
        %v2018 = vpop.f32.mrf.mxu0
        %v2019 = vadd.f32 0.0, %v2018
        %v2020 = vpop.f32.mrf.mxu0
        %v2021 = vadd.f32 0.0, %v2020
        %2022 = vmatmul.bf16.gmra.mxu0 %v1784
        %v2023 = vpop.f32.mrf.mxu0
        %v2024 = vpop.f32.mrf.mxu0
        %2025 = vmatmul.bf16.gmra.mxu0 %v1792
        %v2026 = vpop.f32.mrf.mxu0
        %v2027 = vadd.f32 0.0, %v2026
        %v2028 = vpop.f32.mrf.mxu0
        %v2029 = vadd.f32 0.0, %v2028
        %2030 = vmatmul.bf16.gmra.mxu0 %v1800
        %v2031 = vpop.f32.mrf.mxu0
        %v2032 = vpop.f32.mrf.mxu0
        %2033 = vmatmul.bf16.gmra.mxu0 %v1808
        %v2034 = vpop.f32.mrf.mxu0
        %v2035 = vadd.f32 0.0, %v2034
        %v2036 = vpop.f32.mrf.mxu0
        %v2037 = vadd.f32 0.0, %v2036
        %2038 = vmatmul.bf16.gmra.mxu0 %v1816
        %v2039 = vpop.f32.mrf.mxu0
        %v2040 = vpop.f32.mrf.mxu0
        %2041 = vmatmul.bf16.gmra.mxu0 %v1824
        %v2042 = vpop.f32.mrf.mxu0
        %v2043 = vadd.f32 0.0, %v2042
        %v2044 = vpop.f32.mrf.mxu0
        %v2045 = vadd.f32 0.0, %v2044
        %2046 = vmatmul.bf16.gmra.mxu0 %v1832
        %v2047 = vpop.f32.mrf.mxu0
        %v2048 = vpop.f32.mrf.mxu0
        %2049 = vdwg.mxu0
        %v2050 = vadd.f32 %v1425, %v1923
        %v2051 = vadd.f32 %v1427, %v1925
        %v2052 = vadd.f32 %v1433, %v1931
        %v2053 = vadd.f32 %v1435, %v1933
        %v2054 = vadd.f32 %v1441, %v1939
        %v2055 = vadd.f32 %v1443, %v1941
        %v2056 = vadd.f32 %v1449, %v1947
        %v2057 = vadd.f32 %v1451, %v1949
        %v2058 = vadd.f32 %v1457, %v1955
        %v2059 = vadd.f32 %v1459, %v1957
        %v2060 = vadd.f32 %v1465, %v1963
        %v2061 = vadd.f32 %v1467, %v1965
        %v2062 = vadd.f32 %v1473, %v1971
        %v2063 = vadd.f32 %v1475, %v1973
        %v2064 = vadd.f32 %v1481, %v1979
        %v2065 = vadd.f32 %v1483, %v1981
        %v2066 = vadd.f32 %v1489, %v1987
        %v2067 = vadd.f32 %v1491, %v1989
        %v2068 = vadd.f32 %v1497, %v1995
        %v2069 = vadd.f32 %v1499, %v1997
        %v2070 = vadd.f32 %v1505, %v2003
        %v2071 = vadd.f32 %v1507, %v2005
        %v2072 = vadd.f32 %v1513, %v2011
        %v2073 = vadd.f32 %v1515, %v2013
        %v2074 = vadd.f32 %v1521, %v2019
        %v2075 = vadd.f32 %v1523, %v2021
        %v2076 = vadd.f32 %v1529, %v2027
        %v2077 = vadd.f32 %v1531, %v2029
        %v2078 = vadd.f32 %v1537, %v2035
        %v2079 = vadd.f32 %v1539, %v2037
        %v2080 = vadd.f32 %v1545, %v2043
        %v2081 = vadd.f32 %v1547, %v2045
        %s2082 = scalar_lea.vmem %s1, 192
        %v2083 = vld [vmem:[%s2082] sm:$0xf]
        %v2084 = vld [vmem:[%s2082 + $0x4] sm:$0xf]
        %v2085 = vld [vmem:[%s2082 + $0x8] sm:$0xf]
        %v2086 = vld [vmem:[%s2082 + $0xc] sm:$0xf]
        %v2087 = vld [vmem:[%s2082 + $0x10] sm:$0xf]
        %v2088 = vld [vmem:[%s2082 + $0x14] sm:$0xf]
        %v2089 = vld [vmem:[%s2082 + $0x18] sm:$0xf]
        %v2090 = vld [vmem:[%s2082 + $0x1c] sm:$0xf]
        %v2091 = vld [vmem:[%s2082 + $0x20] sm:$0xf]
        %v2092 = vld [vmem:[%s2082 + $0x24] sm:$0xf]
        %v2093 = vld [vmem:[%s2082 + $0x28] sm:$0xf]
        %v2094 = vld [vmem:[%s2082 + $0x2c] sm:$0xf]
        %v2095 = vld [vmem:[%s2082 + $0x30] sm:$0xf]
        %v2096 = vld [vmem:[%s2082 + $0x34] sm:$0xf]
        %v2097 = vld [vmem:[%s2082 + $0x38] sm:$0xf]
        %v2098 = vld [vmem:[%s2082 + $0x3c] sm:$0xf]
        %v2102 = vunpack.c.l.b16 %v585
        %v2103 = vunpack.c.l.b16 %v586
        %v2104 = vunpack.c.l.b16 %v587
        %v2105 = vpack.c.b16 %v1570, %v753
        %v2106 = vpack.c.b16 %v2103, %v2102
        %v2107 = vpack.c.b16 %v2104, %v2104
        %v2109 = vshrl.u32 %v2105, 16
        %v2111 = vrot.slane %v2109, 3
        %v2112 = vshll.u32 %v2105, 16
        %v2114 = vrot.slane %v2112, 4
        %v2115 = vor.u32 %v2111, %v2114
        %v2116 = vsel %vm1038, %v1324, %v2115
        %v2118 = vshrl.u32 %v2106, 16
        %v2120 = vrot.slane %v2118, 3
        %v2121 = vshll.u32 %v2106, 16
        %v2123 = vrot.slane %v2121, 4
        %v2124 = vor.u32 %v2120, %v2123
        %v2125 = vsel %vm1038, %v2115, %v2124
        %v2127 = vshrl.u32 %v2107, 16
        %v2129 = vrot.slane %v2127, 3
        %v2130 = vshll.u32 %v2107, 16
        %v2132 = vrot.slane %v2130, 4
        %v2133 = vor.u32 %v2129, %v2132
        %v2134 = vsel %vm1038, %v2124, %v2133
        %v2154 = vunpack.c.l.b16 %v2083
        %v2155 = vunpack.c.l.b16 %v2084
        %v2156 = vunpack.c.l.b16 %v2085
        %v2157 = vunpack.c.l.b16 %v2086
        %v2158 = vunpack.c.l.b16 %v2087
        %v2159 = vunpack.c.l.b16 %v2088
        %v2160 = vunpack.c.l.b16 %v2089
        %v2161 = vunpack.c.l.b16 %v2090
        %v2162 = vunpack.c.l.b16 %v2091
        %v2163 = vunpack.c.l.b16 %v2092
        %v2164 = vunpack.c.l.b16 %v2093
        %v2165 = vunpack.c.l.b16 %v2094
        %v2166 = vunpack.c.l.b16 %v2095
        %v2167 = vunpack.c.l.b16 %v2096
        %v2168 = vunpack.c.l.b16 %v2097
        %v2169 = vunpack.c.l.b16 %v2098
        %v2170 = vpack.c.b16 %v2155, %v2154
        %v2171 = vpack.c.b16 %v2157, %v2156
        %v2172 = vpack.c.b16 %v2159, %v2158
        %v2173 = vpack.c.b16 %v2161, %v2160
        %v2174 = vpack.c.b16 %v2163, %v2162
        %v2175 = vpack.c.b16 %v2165, %v2164
        %v2176 = vpack.c.b16 %v2167, %v2166
        %v2177 = vpack.c.b16 %v2169, %v2168
        %2186 = vmatpush.bf16.msra.mxu0 %v2177
        %2187 = vmatpush.bf16.msra.mxu0 %v2176
        %2188 = vmatpush.bf16.msra.mxu0 %v2175
        %2189 = vmatpush.bf16.msra.mxu0 %v2174
        %2190 = vmatpush.bf16.msra.mxu0 %v2173
        %2191 = vmatpush.bf16.msra.mxu0 %v2172
        %2192 = vmatpush.bf16.msra.mxu0 %v2171
        %2193 = vmatpush.bf16.msra.mxu0 %v2170
        %2194 = vmatmul.bf16.gmra.mxu0 %v1073
        %v2195 = vpop.f32.mrf.mxu0
        %v2196 = vadd.f32 0.0, %v2195
        %v2197 = vpop.f32.mrf.mxu0
        %v2198 = vadd.f32 0.0, %v2197
        %2199 = vmatmul.bf16.gmra.mxu0 %v1082
        %v2200 = vpop.f32.mrf.mxu0
        %v2201 = vpop.f32.mrf.mxu0
        %2202 = vmatmul.bf16.gmra.mxu0 %v1091
        %v2203 = vpop.f32.mrf.mxu0
        %v2204 = vadd.f32 0.0, %v2203
        %v2205 = vpop.f32.mrf.mxu0
        %v2206 = vadd.f32 0.0, %v2205
        %2207 = vmatmul.bf16.gmra.mxu0 %v1100
        %v2208 = vpop.f32.mrf.mxu0
        %v2209 = vpop.f32.mrf.mxu0
        %2210 = vmatmul.bf16.gmra.mxu0 %v1109
        %v2211 = vpop.f32.mrf.mxu0
        %v2212 = vadd.f32 0.0, %v2211
        %v2213 = vpop.f32.mrf.mxu0
        %v2214 = vadd.f32 0.0, %v2213
        %2215 = vmatmul.bf16.gmra.mxu0 %v1118
        %v2216 = vpop.f32.mrf.mxu0
        %v2217 = vpop.f32.mrf.mxu0
        %2218 = vmatmul.bf16.gmra.mxu0 %v1127
        %v2219 = vpop.f32.mrf.mxu0
        %v2220 = vadd.f32 0.0, %v2219
        %v2221 = vpop.f32.mrf.mxu0
        %v2222 = vadd.f32 0.0, %v2221
        %2223 = vmatmul.bf16.gmra.mxu0 %v1136
        %v2224 = vpop.f32.mrf.mxu0
        %v2225 = vpop.f32.mrf.mxu0
        %2226 = vmatmul.bf16.gmra.mxu0 %v1145
        %v2227 = vpop.f32.mrf.mxu0
        %v2228 = vadd.f32 0.0, %v2227
        %v2229 = vpop.f32.mrf.mxu0
        %v2230 = vadd.f32 0.0, %v2229
        %2231 = vmatmul.bf16.gmra.mxu0 %v1154
        %v2232 = vpop.f32.mrf.mxu0
        %v2233 = vpop.f32.mrf.mxu0
        %2234 = vmatmul.bf16.gmra.mxu0 %v1163
        %v2235 = vpop.f32.mrf.mxu0
        %v2236 = vadd.f32 0.0, %v2235
        %v2237 = vpop.f32.mrf.mxu0
        %v2238 = vadd.f32 0.0, %v2237
        %2239 = vmatmul.bf16.gmra.mxu0 %v1172
        %v2240 = vpop.f32.mrf.mxu0
        %v2241 = vpop.f32.mrf.mxu0
        %2242 = vmatmul.bf16.gmra.mxu0 %v1181
        %v2243 = vpop.f32.mrf.mxu0
        %v2244 = vadd.f32 0.0, %v2243
        %v2245 = vpop.f32.mrf.mxu0
        %v2246 = vadd.f32 0.0, %v2245
        %2247 = vmatmul.bf16.gmra.mxu0 %v1190
        %v2248 = vpop.f32.mrf.mxu0
        %v2249 = vpop.f32.mrf.mxu0
        %2250 = vmatmul.bf16.gmra.mxu0 %v1199
        %v2251 = vpop.f32.mrf.mxu0
        %v2252 = vadd.f32 0.0, %v2251
        %v2253 = vpop.f32.mrf.mxu0
        %v2254 = vadd.f32 0.0, %v2253
        %2255 = vmatmul.bf16.gmra.mxu0 %v1208
        %v2256 = vpop.f32.mrf.mxu0
        %v2257 = vpop.f32.mrf.mxu0
        %2258 = vmatmul.bf16.gmra.mxu0 %v1217
        %v2259 = vpop.f32.mrf.mxu0
        %v2260 = vadd.f32 0.0, %v2259
        %v2261 = vpop.f32.mrf.mxu0
        %v2262 = vadd.f32 0.0, %v2261
        %2263 = vmatmul.bf16.gmra.mxu0 %v1226
        %v2264 = vpop.f32.mrf.mxu0
        %v2265 = vpop.f32.mrf.mxu0
        %2266 = vmatmul.bf16.gmra.mxu0 %v1235
        %v2267 = vpop.f32.mrf.mxu0
        %v2268 = vadd.f32 0.0, %v2267
        %v2269 = vpop.f32.mrf.mxu0
        %v2270 = vadd.f32 0.0, %v2269
        %2271 = vmatmul.bf16.gmra.mxu0 %v1244
        %v2272 = vpop.f32.mrf.mxu0
        %v2273 = vpop.f32.mrf.mxu0
        %2274 = vmatmul.bf16.gmra.mxu0 %v1253
        %v2275 = vpop.f32.mrf.mxu0
        %v2276 = vadd.f32 0.0, %v2275
        %v2277 = vpop.f32.mrf.mxu0
        %v2278 = vadd.f32 0.0, %v2277
        %2279 = vmatmul.bf16.gmra.mxu0 %v1262
        %v2280 = vpop.f32.mrf.mxu0
        %v2281 = vpop.f32.mrf.mxu0
        %2282 = vmatmul.bf16.gmra.mxu0 %v1271
        %v2283 = vpop.f32.mrf.mxu0
        %v2284 = vadd.f32 0.0, %v2283
        %v2285 = vpop.f32.mrf.mxu0
        %v2286 = vadd.f32 0.0, %v2285
        %2287 = vmatmul.bf16.gmra.mxu0 %v1280
        %v2288 = vpop.f32.mrf.mxu0
        %v2289 = vpop.f32.mrf.mxu0
        %2290 = vmatmul.bf16.gmra.mxu0 %v1289
        %v2291 = vpop.f32.mrf.mxu0
        %v2292 = vadd.f32 0.0, %v2291
        %v2293 = vpop.f32.mrf.mxu0
        %v2294 = vadd.f32 0.0, %v2293
        %2295 = vmatmul.bf16.gmra.mxu0 %v1298
        %v2296 = vpop.f32.mrf.mxu0
        %v2297 = vpop.f32.mrf.mxu0
        %2298 = vmatmul.bf16.gmra.mxu0 %v1307
        %v2299 = vpop.f32.mrf.mxu0
        %v2300 = vadd.f32 0.0, %v2299
        %v2301 = vpop.f32.mrf.mxu0
        %v2302 = vadd.f32 0.0, %v2301
        %2303 = vmatmul.bf16.gmra.mxu0 %v1316
        %v2304 = vpop.f32.mrf.mxu0
        %v2305 = vpop.f32.mrf.mxu0
        %2306 = vmatmul.bf16.gmra.mxu0 %v1325
        %v2307 = vpop.f32.mrf.mxu0
        %v2308 = vadd.f32 0.0, %v2307
        %v2309 = vpop.f32.mrf.mxu0
        %v2310 = vadd.f32 0.0, %v2309
        %2311 = vmatmul.bf16.gmra.mxu0 %v2116
        %v2312 = vpop.f32.mrf.mxu0
        %v2313 = vpop.f32.mrf.mxu0
        %2314 = vmatmul.bf16.gmra.mxu0 %v2125
        %v2315 = vpop.f32.mrf.mxu0
        %v2316 = vadd.f32 0.0, %v2315
        %v2317 = vpop.f32.mrf.mxu0
        %v2318 = vadd.f32 0.0, %v2317
        %2319 = vmatmul.bf16.gmra.mxu0 %v2134
        %v2320 = vpop.f32.mrf.mxu0
        %v2321 = vpop.f32.mrf.mxu0
        %2322 = vdwg.mxu0
        %v2323 = vadd.f32 %v2050, %v2196
        %v2324 = vadd.f32 %v2051, %v2198
        %v2325 = vadd.f32 %v2052, %v2204
        %v2326 = vadd.f32 %v2053, %v2206
        %v2327 = vadd.f32 %v2054, %v2212
        %v2328 = vadd.f32 %v2055, %v2214
        %v2329 = vadd.f32 %v2056, %v2220
        %v2330 = vadd.f32 %v2057, %v2222
        %v2331 = vadd.f32 %v2058, %v2228
        %v2332 = vadd.f32 %v2059, %v2230
        %v2333 = vadd.f32 %v2060, %v2236
        %v2334 = vadd.f32 %v2061, %v2238
        %v2335 = vadd.f32 %v2062, %v2244
        %v2336 = vadd.f32 %v2063, %v2246
        %v2337 = vadd.f32 %v2064, %v2252
        %v2338 = vadd.f32 %v2065, %v2254
        %v2339 = vadd.f32 %v2066, %v2260
        %v2340 = vadd.f32 %v2067, %v2262
        %v2341 = vadd.f32 %v2068, %v2268
        %v2342 = vadd.f32 %v2069, %v2270
        %v2343 = vadd.f32 %v2070, %v2276
        %v2344 = vadd.f32 %v2071, %v2278
        %v2345 = vadd.f32 %v2072, %v2284
        %v2346 = vadd.f32 %v2073, %v2286
        %v2347 = vadd.f32 %v2074, %v2292
        %v2348 = vadd.f32 %v2075, %v2294
        %v2349 = vadd.f32 %v2076, %v2300
        %v2350 = vadd.f32 %v2077, %v2302
        %v2351 = vadd.f32 %v2078, %v2308
        %v2352 = vadd.f32 %v2079, %v2310
        %v2353 = vadd.f32 %v2080, %v2316
        %v2354 = vadd.f32 %v2081, %v2318
        %s2355 = scalar_lea.vmem %s1, 256
        %v2356 = vld [vmem:[%s2355] sm:$0xf]
        %v2357 = vld [vmem:[%s2355 + $0x4] sm:$0xf]
        %v2358 = vld [vmem:[%s2355 + $0x8] sm:$0xf]
        %v2359 = vld [vmem:[%s2355 + $0xc] sm:$0xf]
        %v2360 = vld [vmem:[%s2355 + $0x10] sm:$0xf]
        %v2361 = vld [vmem:[%s2355 + $0x14] sm:$0xf]
        %v2362 = vld [vmem:[%s2355 + $0x18] sm:$0xf]
        %v2363 = vld [vmem:[%s2355 + $0x1c] sm:$0xf]
        %v2364 = vld [vmem:[%s2355 + $0x20] sm:$0xf]
        %v2365 = vld [vmem:[%s2355 + $0x24] sm:$0xf]
        %v2366 = vld [vmem:[%s2355 + $0x28] sm:$0xf]
        %v2367 = vld [vmem:[%s2355 + $0x2c] sm:$0xf]
        %v2368 = vld [vmem:[%s2355 + $0x30] sm:$0xf]
        %v2369 = vld [vmem:[%s2355 + $0x34] sm:$0xf]
        %v2370 = vld [vmem:[%s2355 + $0x38] sm:$0xf]
        %v2371 = vld [vmem:[%s2355 + $0x3c] sm:$0xf]
        %v2372 = vpack.c.b16 %v2102, %v1570
        %v2373 = vpack.c.b16 %v2104, %v2103
        %v2392 = vunpack.c.l.b16 %v2356
        %v2393 = vunpack.c.l.b16 %v2357
        %v2394 = vunpack.c.l.b16 %v2358
        %v2395 = vunpack.c.l.b16 %v2359
        %v2396 = vunpack.c.l.b16 %v2360
        %v2397 = vunpack.c.l.b16 %v2361
        %v2398 = vunpack.c.l.b16 %v2362
        %v2399 = vunpack.c.l.b16 %v2363
        %v2400 = vunpack.c.l.b16 %v2364
        %v2401 = vunpack.c.l.b16 %v2365
        %v2402 = vunpack.c.l.b16 %v2366
        %v2403 = vunpack.c.l.b16 %v2367
        %v2404 = vunpack.c.l.b16 %v2368
        %v2405 = vunpack.c.l.b16 %v2369
        %v2406 = vunpack.c.l.b16 %v2370
        %v2407 = vunpack.c.l.b16 %v2371
        %v2408 = vpack.c.b16 %v2393, %v2392
        %v2409 = vpack.c.b16 %v2395, %v2394
        %v2410 = vpack.c.b16 %v2397, %v2396
        %v2411 = vpack.c.b16 %v2399, %v2398
        %v2412 = vpack.c.b16 %v2401, %v2400
        %v2413 = vpack.c.b16 %v2403, %v2402
        %v2414 = vpack.c.b16 %v2405, %v2404
        %v2415 = vpack.c.b16 %v2407, %v2406
        %2424 = vmatpush.bf16.msra.mxu0 %v2415
        %2425 = vmatpush.bf16.msra.mxu0 %v2414
        %2426 = vmatpush.bf16.msra.mxu0 %v2413
        %2427 = vmatpush.bf16.msra.mxu0 %v2412
        %2428 = vmatpush.bf16.msra.mxu0 %v2411
        %2429 = vmatpush.bf16.msra.mxu0 %v2410
        %2430 = vmatpush.bf16.msra.mxu0 %v2409
        %2431 = vmatpush.bf16.msra.mxu0 %v2408
        %2432 = vmatmul.bf16.gmra.mxu0 %v756
        %v2433 = vpop.f32.mrf.mxu0
        %v2434 = vadd.f32 0.0, %v2433
        %v2435 = vpop.f32.mrf.mxu0
        %v2436 = vadd.f32 0.0, %v2435
        %2437 = vmatmul.bf16.gmra.mxu0 %v757
        %v2438 = vpop.f32.mrf.mxu0
        %v2439 = vpop.f32.mrf.mxu0
        %2440 = vmatmul.bf16.gmra.mxu0 %v758
        %v2441 = vpop.f32.mrf.mxu0
        %v2442 = vadd.f32 0.0, %v2441
        %v2443 = vpop.f32.mrf.mxu0
        %v2444 = vadd.f32 0.0, %v2443
        %2445 = vmatmul.bf16.gmra.mxu0 %v759
        %v2446 = vpop.f32.mrf.mxu0
        %v2447 = vpop.f32.mrf.mxu0
        %2448 = vmatmul.bf16.gmra.mxu0 %v760
        %v2449 = vpop.f32.mrf.mxu0
        %v2450 = vadd.f32 0.0, %v2449
        %v2451 = vpop.f32.mrf.mxu0
        %v2452 = vadd.f32 0.0, %v2451
        %2453 = vmatmul.bf16.gmra.mxu0 %v761
        %v2454 = vpop.f32.mrf.mxu0
        %v2455 = vpop.f32.mrf.mxu0
        %2456 = vmatmul.bf16.gmra.mxu0 %v762
        %v2457 = vpop.f32.mrf.mxu0
        %v2458 = vadd.f32 0.0, %v2457
        %v2459 = vpop.f32.mrf.mxu0
        %v2460 = vadd.f32 0.0, %v2459
        %2461 = vmatmul.bf16.gmra.mxu0 %v763
        %v2462 = vpop.f32.mrf.mxu0
        %v2463 = vpop.f32.mrf.mxu0
        %2464 = vmatmul.bf16.gmra.mxu0 %v764
        %v2465 = vpop.f32.mrf.mxu0
        %v2466 = vadd.f32 0.0, %v2465
        %v2467 = vpop.f32.mrf.mxu0
        %v2468 = vadd.f32 0.0, %v2467
        %2469 = vmatmul.bf16.gmra.mxu0 %v765
        %v2470 = vpop.f32.mrf.mxu0
        %v2471 = vpop.f32.mrf.mxu0
        %2472 = vmatmul.bf16.gmra.mxu0 %v766
        %v2473 = vpop.f32.mrf.mxu0
        %v2474 = vadd.f32 0.0, %v2473
        %v2475 = vpop.f32.mrf.mxu0
        %v2476 = vadd.f32 0.0, %v2475
        %2477 = vmatmul.bf16.gmra.mxu0 %v767
        %v2478 = vpop.f32.mrf.mxu0
        %v2479 = vpop.f32.mrf.mxu0
        %2480 = vmatmul.bf16.gmra.mxu0 %v768
        %v2481 = vpop.f32.mrf.mxu0
        %v2482 = vadd.f32 0.0, %v2481
        %v2483 = vpop.f32.mrf.mxu0
        %v2484 = vadd.f32 0.0, %v2483
        %2485 = vmatmul.bf16.gmra.mxu0 %v769
        %v2486 = vpop.f32.mrf.mxu0
        %v2487 = vpop.f32.mrf.mxu0
        %2488 = vmatmul.bf16.gmra.mxu0 %v770
        %v2489 = vpop.f32.mrf.mxu0
        %v2490 = vadd.f32 0.0, %v2489
        %v2491 = vpop.f32.mrf.mxu0
        %v2492 = vadd.f32 0.0, %v2491
        %2493 = vmatmul.bf16.gmra.mxu0 %v771
        %v2494 = vpop.f32.mrf.mxu0
        %v2495 = vpop.f32.mrf.mxu0
        %2496 = vmatmul.bf16.gmra.mxu0 %v772
        %v2497 = vpop.f32.mrf.mxu0
        %v2498 = vadd.f32 0.0, %v2497
        %v2499 = vpop.f32.mrf.mxu0
        %v2500 = vadd.f32 0.0, %v2499
        %2501 = vmatmul.bf16.gmra.mxu0 %v773
        %v2502 = vpop.f32.mrf.mxu0
        %v2503 = vpop.f32.mrf.mxu0
        %2504 = vmatmul.bf16.gmra.mxu0 %v774
        %v2505 = vpop.f32.mrf.mxu0
        %v2506 = vadd.f32 0.0, %v2505
        %v2507 = vpop.f32.mrf.mxu0
        %v2508 = vadd.f32 0.0, %v2507
        %2509 = vmatmul.bf16.gmra.mxu0 %v775
        %v2510 = vpop.f32.mrf.mxu0
        %v2511 = vpop.f32.mrf.mxu0
        %2512 = vmatmul.bf16.gmra.mxu0 %v776
        %v2513 = vpop.f32.mrf.mxu0
        %v2514 = vadd.f32 0.0, %v2513
        %v2515 = vpop.f32.mrf.mxu0
        %v2516 = vadd.f32 0.0, %v2515
        %2517 = vmatmul.bf16.gmra.mxu0 %v777
        %v2518 = vpop.f32.mrf.mxu0
        %v2519 = vpop.f32.mrf.mxu0
        %2520 = vmatmul.bf16.gmra.mxu0 %v778
        %v2521 = vpop.f32.mrf.mxu0
        %v2522 = vadd.f32 0.0, %v2521
        %v2523 = vpop.f32.mrf.mxu0
        %v2524 = vadd.f32 0.0, %v2523
        %2525 = vmatmul.bf16.gmra.mxu0 %v779
        %v2526 = vpop.f32.mrf.mxu0
        %v2527 = vpop.f32.mrf.mxu0
        %2528 = vmatmul.bf16.gmra.mxu0 %v780
        %v2529 = vpop.f32.mrf.mxu0
        %v2530 = vadd.f32 0.0, %v2529
        %v2531 = vpop.f32.mrf.mxu0
        %v2532 = vadd.f32 0.0, %v2531
        %2533 = vmatmul.bf16.gmra.mxu0 %v781
        %v2534 = vpop.f32.mrf.mxu0
        %v2535 = vpop.f32.mrf.mxu0
        %2536 = vmatmul.bf16.gmra.mxu0 %v782
        %v2537 = vpop.f32.mrf.mxu0
        %v2538 = vadd.f32 0.0, %v2537
        %v2539 = vpop.f32.mrf.mxu0
        %v2540 = vadd.f32 0.0, %v2539
        %2541 = vmatmul.bf16.gmra.mxu0 %v783
        %v2542 = vpop.f32.mrf.mxu0
        %v2543 = vpop.f32.mrf.mxu0
        %2544 = vmatmul.bf16.gmra.mxu0 %v784
        %v2545 = vpop.f32.mrf.mxu0
        %v2546 = vadd.f32 0.0, %v2545
        %v2547 = vpop.f32.mrf.mxu0
        %v2548 = vadd.f32 0.0, %v2547
        %2549 = vmatmul.bf16.gmra.mxu0 %v785
        %v2550 = vpop.f32.mrf.mxu0
        %v2551 = vpop.f32.mrf.mxu0
        %2552 = vmatmul.bf16.gmra.mxu0 %v2372
        %v2553 = vpop.f32.mrf.mxu0
        %v2554 = vadd.f32 0.0, %v2553
        %v2555 = vpop.f32.mrf.mxu0
        %v2556 = vadd.f32 0.0, %v2555
        %2557 = vmatmul.bf16.gmra.mxu0 %v2373
        %v2558 = vpop.f32.mrf.mxu0
        %v2559 = vpop.f32.mrf.mxu0
        %2560 = vdwg.mxu0
        %v2561 = vadd.f32 %v2323, %v2434
        %v2562 = vadd.f32 %v2324, %v2436
        %v2563 = vadd.f32 %v2325, %v2442
        %v2564 = vadd.f32 %v2326, %v2444
        %v2565 = vadd.f32 %v2327, %v2450
        %v2566 = vadd.f32 %v2328, %v2452
        %v2567 = vadd.f32 %v2329, %v2458
        %v2568 = vadd.f32 %v2330, %v2460
        %v2569 = vadd.f32 %v2331, %v2466
        %v2570 = vadd.f32 %v2332, %v2468
        %v2571 = vadd.f32 %v2333, %v2474
        %v2572 = vadd.f32 %v2334, %v2476
        %v2573 = vadd.f32 %v2335, %v2482
        %v2574 = vadd.f32 %v2336, %v2484
        %v2575 = vadd.f32 %v2337, %v2490
        %v2576 = vadd.f32 %v2338, %v2492
        %v2577 = vadd.f32 %v2339, %v2498
        %v2578 = vadd.f32 %v2340, %v2500
        %v2579 = vadd.f32 %v2341, %v2506
        %v2580 = vadd.f32 %v2342, %v2508
        %v2581 = vadd.f32 %v2343, %v2514
        %v2582 = vadd.f32 %v2344, %v2516
        %v2583 = vadd.f32 %v2345, %v2522
        %v2584 = vadd.f32 %v2346, %v2524
        %v2585 = vadd.f32 %v2347, %v2530
        %v2586 = vadd.f32 %v2348, %v2532
        %v2587 = vadd.f32 %v2349, %v2538
        %v2588 = vadd.f32 %v2350, %v2540
        %v2589 = vadd.f32 %v2351, %v2546
        %v2590 = vadd.f32 %v2352, %v2548
        %v2591 = vadd.f32 %v2353, %v2554
        %v2592 = vadd.f32 %v2354, %v2556
        %s2593 = scalar_lea.vmem %s1, 320
        %v2594 = vld [vmem:[%s2593] sm:$0xf]
        %v2595 = vld [vmem:[%s2593 + $0x4] sm:$0xf]
        %v2596 = vld [vmem:[%s2593 + $0x8] sm:$0xf]
        %v2597 = vld [vmem:[%s2593 + $0xc] sm:$0xf]
        %v2598 = vld [vmem:[%s2593 + $0x10] sm:$0xf]
        %v2599 = vld [vmem:[%s2593 + $0x14] sm:$0xf]
        %v2600 = vld [vmem:[%s2593 + $0x18] sm:$0xf]
        %v2601 = vld [vmem:[%s2593 + $0x1c] sm:$0xf]
        %v2602 = vld [vmem:[%s2593 + $0x20] sm:$0xf]
        %v2603 = vld [vmem:[%s2593 + $0x24] sm:$0xf]
        %v2604 = vld [vmem:[%s2593 + $0x28] sm:$0xf]
        %v2605 = vld [vmem:[%s2593 + $0x2c] sm:$0xf]
        %v2606 = vld [vmem:[%s2593 + $0x30] sm:$0xf]
        %v2607 = vld [vmem:[%s2593 + $0x34] sm:$0xf]
        %v2608 = vld [vmem:[%s2593 + $0x38] sm:$0xf]
        %v2609 = vld [vmem:[%s2593 + $0x3c] sm:$0xf]
        %v2611 = vunpack.c.l.b16 %v588
        %v2612 = vpack.c.b16 %v2611, %v2611
        %v2614 = vshll.u32 %v2372, 16
        %v2616 = vrot.slane %v2614, 1
        %v2617 = vsel %vm1572, %v1827, %v2616
        %v2618 = vshrl.u32 %v2372, 16
        %v2620 = vor.u32 %v2618, %v2616
        %v2622 = vshll.u32 %v2373, 16
        %v2624 = vrot.slane %v2622, 1
        %v2625 = vsel %vm1572, %v2620, %v2624
        %v2626 = vshrl.u32 %v2373, 16
        %v2628 = vor.u32 %v2626, %v2624
        %v2630 = vshll.u32 %v2612, 16
        %v2632 = vrot.slane %v2630, 1
        %v2633 = vsel %vm1572, %v2628, %v2632
        %v2653 = vunpack.c.l.b16 %v2594
        %v2654 = vunpack.c.l.b16 %v2595
        %v2655 = vunpack.c.l.b16 %v2596
        %v2656 = vunpack.c.l.b16 %v2597
        %v2657 = vunpack.c.l.b16 %v2598
        %v2658 = vunpack.c.l.b16 %v2599
        %v2659 = vunpack.c.l.b16 %v2600
        %v2660 = vunpack.c.l.b16 %v2601
        %v2661 = vunpack.c.l.b16 %v2602
        %v2662 = vunpack.c.l.b16 %v2603
        %v2663 = vunpack.c.l.b16 %v2604
        %v2664 = vunpack.c.l.b16 %v2605
        %v2665 = vunpack.c.l.b16 %v2606
        %v2666 = vunpack.c.l.b16 %v2607
        %v2667 = vunpack.c.l.b16 %v2608
        %v2668 = vunpack.c.l.b16 %v2609
        %v2669 = vpack.c.b16 %v2654, %v2653
        %v2670 = vpack.c.b16 %v2656, %v2655
        %v2671 = vpack.c.b16 %v2658, %v2657
        %v2672 = vpack.c.b16 %v2660, %v2659
        %v2673 = vpack.c.b16 %v2662, %v2661
        %v2674 = vpack.c.b16 %v2664, %v2663
        %v2675 = vpack.c.b16 %v2666, %v2665
        %v2676 = vpack.c.b16 %v2668, %v2667
        %2685 = vmatpush.bf16.msra.mxu0 %v2676
        %2686 = vmatpush.bf16.msra.mxu0 %v2675
        %2687 = vmatpush.bf16.msra.mxu0 %v2674
        %2688 = vmatpush.bf16.msra.mxu0 %v2673
        %2689 = vmatpush.bf16.msra.mxu0 %v2672
        %2690 = vmatpush.bf16.msra.mxu0 %v2671
        %2691 = vmatpush.bf16.msra.mxu0 %v2670
        %2692 = vmatpush.bf16.msra.mxu0 %v2669
        %2693 = vmatmul.bf16.gmra.mxu0 %v1600
        %v2694 = vpop.f32.mrf.mxu0
        %v2695 = vadd.f32 0.0, %v2694
        %v2696 = vpop.f32.mrf.mxu0
        %v2697 = vadd.f32 0.0, %v2696
        %2698 = vmatmul.bf16.gmra.mxu0 %v1608
        %v2699 = vpop.f32.mrf.mxu0
        %v2700 = vpop.f32.mrf.mxu0
        %2701 = vmatmul.bf16.gmra.mxu0 %v1616
        %v2702 = vpop.f32.mrf.mxu0
        %v2703 = vadd.f32 0.0, %v2702
        %v2704 = vpop.f32.mrf.mxu0
        %v2705 = vadd.f32 0.0, %v2704
        %2706 = vmatmul.bf16.gmra.mxu0 %v1624
        %v2707 = vpop.f32.mrf.mxu0
        %v2708 = vpop.f32.mrf.mxu0
        %2709 = vmatmul.bf16.gmra.mxu0 %v1632
        %v2710 = vpop.f32.mrf.mxu0
        %v2711 = vadd.f32 0.0, %v2710
        %v2712 = vpop.f32.mrf.mxu0
        %v2713 = vadd.f32 0.0, %v2712
        %2714 = vmatmul.bf16.gmra.mxu0 %v1640
        %v2715 = vpop.f32.mrf.mxu0
        %v2716 = vpop.f32.mrf.mxu0
        %2717 = vmatmul.bf16.gmra.mxu0 %v1648
        %v2718 = vpop.f32.mrf.mxu0
        %v2719 = vadd.f32 0.0, %v2718
        %v2720 = vpop.f32.mrf.mxu0
        %v2721 = vadd.f32 0.0, %v2720
        %2722 = vmatmul.bf16.gmra.mxu0 %v1656
        %v2723 = vpop.f32.mrf.mxu0
        %v2724 = vpop.f32.mrf.mxu0
        %2725 = vmatmul.bf16.gmra.mxu0 %v1664
        %v2726 = vpop.f32.mrf.mxu0
        %v2727 = vadd.f32 0.0, %v2726
        %v2728 = vpop.f32.mrf.mxu0
        %v2729 = vadd.f32 0.0, %v2728
        %2730 = vmatmul.bf16.gmra.mxu0 %v1672
        %v2731 = vpop.f32.mrf.mxu0
        %v2732 = vpop.f32.mrf.mxu0
        %2733 = vmatmul.bf16.gmra.mxu0 %v1680
        %v2734 = vpop.f32.mrf.mxu0
        %v2735 = vadd.f32 0.0, %v2734
        %v2736 = vpop.f32.mrf.mxu0
        %v2737 = vadd.f32 0.0, %v2736
        %2738 = vmatmul.bf16.gmra.mxu0 %v1688
        %v2739 = vpop.f32.mrf.mxu0
        %v2740 = vpop.f32.mrf.mxu0
        %2741 = vmatmul.bf16.gmra.mxu0 %v1696
        %v2742 = vpop.f32.mrf.mxu0
        %v2743 = vadd.f32 0.0, %v2742
        %v2744 = vpop.f32.mrf.mxu0
        %v2745 = vadd.f32 0.0, %v2744
        %2746 = vmatmul.bf16.gmra.mxu0 %v1704
        %v2747 = vpop.f32.mrf.mxu0
        %v2748 = vpop.f32.mrf.mxu0
        %2749 = vmatmul.bf16.gmra.mxu0 %v1712
        %v2750 = vpop.f32.mrf.mxu0
        %v2751 = vadd.f32 0.0, %v2750
        %v2752 = vpop.f32.mrf.mxu0
        %v2753 = vadd.f32 0.0, %v2752
        %2754 = vmatmul.bf16.gmra.mxu0 %v1720
        %v2755 = vpop.f32.mrf.mxu0
        %v2756 = vpop.f32.mrf.mxu0
        %2757 = vmatmul.bf16.gmra.mxu0 %v1728
        %v2758 = vpop.f32.mrf.mxu0
        %v2759 = vadd.f32 0.0, %v2758
        %v2760 = vpop.f32.mrf.mxu0
        %v2761 = vadd.f32 0.0, %v2760
        %2762 = vmatmul.bf16.gmra.mxu0 %v1736
        %v2763 = vpop.f32.mrf.mxu0
        %v2764 = vpop.f32.mrf.mxu0
        %2765 = vmatmul.bf16.gmra.mxu0 %v1744
        %v2766 = vpop.f32.mrf.mxu0
        %v2767 = vadd.f32 0.0, %v2766
        %v2768 = vpop.f32.mrf.mxu0
        %v2769 = vadd.f32 0.0, %v2768
        %2770 = vmatmul.bf16.gmra.mxu0 %v1752
        %v2771 = vpop.f32.mrf.mxu0
        %v2772 = vpop.f32.mrf.mxu0
        %2773 = vmatmul.bf16.gmra.mxu0 %v1760
        %v2774 = vpop.f32.mrf.mxu0
        %v2775 = vadd.f32 0.0, %v2774
        %v2776 = vpop.f32.mrf.mxu0
        %v2777 = vadd.f32 0.0, %v2776
        %2778 = vmatmul.bf16.gmra.mxu0 %v1768
        %v2779 = vpop.f32.mrf.mxu0
        %v2780 = vpop.f32.mrf.mxu0
        %2781 = vmatmul.bf16.gmra.mxu0 %v1776
        %v2782 = vpop.f32.mrf.mxu0
        %v2783 = vadd.f32 0.0, %v2782
        %v2784 = vpop.f32.mrf.mxu0
        %v2785 = vadd.f32 0.0, %v2784
        %2786 = vmatmul.bf16.gmra.mxu0 %v1784
        %v2787 = vpop.f32.mrf.mxu0
        %v2788 = vpop.f32.mrf.mxu0
        %2789 = vmatmul.bf16.gmra.mxu0 %v1792
        %v2790 = vpop.f32.mrf.mxu0
        %v2791 = vadd.f32 0.0, %v2790
        %v2792 = vpop.f32.mrf.mxu0
        %v2793 = vadd.f32 0.0, %v2792
        %2794 = vmatmul.bf16.gmra.mxu0 %v1800
        %v2795 = vpop.f32.mrf.mxu0
        %v2796 = vpop.f32.mrf.mxu0
        %2797 = vmatmul.bf16.gmra.mxu0 %v1808
        %v2798 = vpop.f32.mrf.mxu0
        %v2799 = vadd.f32 0.0, %v2798
        %v2800 = vpop.f32.mrf.mxu0
        %v2801 = vadd.f32 0.0, %v2800
        %2802 = vmatmul.bf16.gmra.mxu0 %v1816
        %v2803 = vpop.f32.mrf.mxu0
        %v2804 = vpop.f32.mrf.mxu0
        %2805 = vmatmul.bf16.gmra.mxu0 %v1824
        %v2806 = vpop.f32.mrf.mxu0
        %v2807 = vadd.f32 0.0, %v2806
        %v2808 = vpop.f32.mrf.mxu0
        %v2809 = vadd.f32 0.0, %v2808
        %2810 = vmatmul.bf16.gmra.mxu0 %v2617
        %v2811 = vpop.f32.mrf.mxu0
        %v2812 = vpop.f32.mrf.mxu0
        %2813 = vmatmul.bf16.gmra.mxu0 %v2625
        %v2814 = vpop.f32.mrf.mxu0
        %v2815 = vadd.f32 0.0, %v2814
        %v2816 = vpop.f32.mrf.mxu0
        %v2817 = vadd.f32 0.0, %v2816
        %2818 = vmatmul.bf16.gmra.mxu0 %v2633
        %v2819 = vpop.f32.mrf.mxu0
        %v2820 = vpop.f32.mrf.mxu0
        %2821 = vdwg.mxu0
        %v2822 = vadd.f32 %v2561, %v2695
        %v2823 = vadd.f32 %v2562, %v2697
        %v2824 = vadd.f32 %v2563, %v2703
        %v2825 = vadd.f32 %v2564, %v2705
        %v2826 = vadd.f32 %v2565, %v2711
        %v2827 = vadd.f32 %v2566, %v2713
        %v2828 = vadd.f32 %v2567, %v2719
        %v2829 = vadd.f32 %v2568, %v2721
        %v2830 = vadd.f32 %v2569, %v2727
        %v2831 = vadd.f32 %v2570, %v2729
        %v2832 = vadd.f32 %v2571, %v2735
        %v2833 = vadd.f32 %v2572, %v2737
        %v2834 = vadd.f32 %v2573, %v2743
        %v2835 = vadd.f32 %v2574, %v2745
        %v2836 = vadd.f32 %v2575, %v2751
        %v2837 = vadd.f32 %v2576, %v2753
        %v2838 = vadd.f32 %v2577, %v2759
        %v2839 = vadd.f32 %v2578, %v2761
        %v2840 = vadd.f32 %v2579, %v2767
        %v2841 = vadd.f32 %v2580, %v2769
        %v2842 = vadd.f32 %v2581, %v2775
        %v2843 = vadd.f32 %v2582, %v2777
        %v2844 = vadd.f32 %v2583, %v2783
        %v2845 = vadd.f32 %v2584, %v2785
        %v2846 = vadd.f32 %v2585, %v2791
        %v2847 = vadd.f32 %v2586, %v2793
        %v2848 = vadd.f32 %v2587, %v2799
        %v2849 = vadd.f32 %v2588, %v2801
        %v2850 = vadd.f32 %v2589, %v2807
        %v2851 = vadd.f32 %v2590, %v2809
        %v2852 = vadd.f32 %v2591, %v2815
        %v2853 = vadd.f32 %v2592, %v2817
        %s2854 = scalar_lea.vmem %s1, 384
        %v2855 = vld [vmem:[%s2854] sm:$0xf]
        %v2856 = vld [vmem:[%s2854 + $0x4] sm:$0xf]
        %v2857 = vld [vmem:[%s2854 + $0x8] sm:$0xf]
        %v2858 = vld [vmem:[%s2854 + $0xc] sm:$0xf]
        %v2859 = vld [vmem:[%s2854 + $0x10] sm:$0xf]
        %v2860 = vld [vmem:[%s2854 + $0x14] sm:$0xf]
        %v2861 = vld [vmem:[%s2854 + $0x18] sm:$0xf]
        %v2862 = vld [vmem:[%s2854 + $0x1c] sm:$0xf]
        %v2863 = vld [vmem:[%s2854 + $0x20] sm:$0xf]
        %v2864 = vld [vmem:[%s2854 + $0x24] sm:$0xf]
        %v2865 = vld [vmem:[%s2854 + $0x28] sm:$0xf]
        %v2866 = vld [vmem:[%s2854 + $0x2c] sm:$0xf]
        %v2867 = vld [vmem:[%s2854 + $0x30] sm:$0xf]
        %v2868 = vld [vmem:[%s2854 + $0x34] sm:$0xf]
        %v2869 = vld [vmem:[%s2854 + $0x38] sm:$0xf]
        %v2870 = vld [vmem:[%s2854 + $0x3c] sm:$0xf]
        %v2874 = vunpack.c.l.b16 %v589
        %v2875 = vunpack.c.l.b16 %v590
        %v2876 = vunpack.c.l.b16 %v591
        %v2877 = vpack.c.b16 %v2611, %v2104
        %v2878 = vpack.c.b16 %v2875, %v2874
        %v2879 = vpack.c.b16 %v2876, %v2876
        %v2881 = vshrl.u32 %v2877, 16
        %v2883 = vrot.slane %v2881, 3
        %v2884 = vshll.u32 %v2877, 16
        %v2886 = vrot.slane %v2884, 4
        %v2887 = vor.u32 %v2883, %v2886
        %v2888 = vsel %vm1038, %v2124, %v2887
        %v2890 = vshrl.u32 %v2878, 16
        %v2892 = vrot.slane %v2890, 3
        %v2893 = vshll.u32 %v2878, 16
        %v2895 = vrot.slane %v2893, 4
        %v2896 = vor.u32 %v2892, %v2895
        %v2897 = vsel %vm1038, %v2887, %v2896
        %v2899 = vshrl.u32 %v2879, 16
        %v2901 = vrot.slane %v2899, 3
        %v2902 = vshll.u32 %v2879, 16
        %v2904 = vrot.slane %v2902, 4
        %v2905 = vor.u32 %v2901, %v2904
        %v2906 = vsel %vm1038, %v2896, %v2905
        %v2926 = vunpack.c.l.b16 %v2855
        %v2927 = vunpack.c.l.b16 %v2856
        %v2928 = vunpack.c.l.b16 %v2857
        %v2929 = vunpack.c.l.b16 %v2858
        %v2930 = vunpack.c.l.b16 %v2859
        %v2931 = vunpack.c.l.b16 %v2860
        %v2932 = vunpack.c.l.b16 %v2861
        %v2933 = vunpack.c.l.b16 %v2862
        %v2934 = vunpack.c.l.b16 %v2863
        %v2935 = vunpack.c.l.b16 %v2864
        %v2936 = vunpack.c.l.b16 %v2865
        %v2937 = vunpack.c.l.b16 %v2866
        %v2938 = vunpack.c.l.b16 %v2867
        %v2939 = vunpack.c.l.b16 %v2868
        %v2940 = vunpack.c.l.b16 %v2869
        %v2941 = vunpack.c.l.b16 %v2870
        %v2942 = vpack.c.b16 %v2927, %v2926
        %v2943 = vpack.c.b16 %v2929, %v2928
        %v2944 = vpack.c.b16 %v2931, %v2930
        %v2945 = vpack.c.b16 %v2933, %v2932
        %v2946 = vpack.c.b16 %v2935, %v2934
        %v2947 = vpack.c.b16 %v2937, %v2936
        %v2948 = vpack.c.b16 %v2939, %v2938
        %v2949 = vpack.c.b16 %v2941, %v2940
        %2958 = vmatpush.bf16.msra.mxu0 %v2949
        %2959 = vmatpush.bf16.msra.mxu0 %v2948
        %2960 = vmatpush.bf16.msra.mxu0 %v2947
        %2961 = vmatpush.bf16.msra.mxu0 %v2946
        %2962 = vmatpush.bf16.msra.mxu0 %v2945
        %2963 = vmatpush.bf16.msra.mxu0 %v2944
        %2964 = vmatpush.bf16.msra.mxu0 %v2943
        %2965 = vmatpush.bf16.msra.mxu0 %v2942
        %2966 = vmatmul.bf16.gmra.mxu0 %v1091
        %v2967 = vpop.f32.mrf.mxu0
        %v2968 = vadd.f32 0.0, %v2967
        %v2969 = vpop.f32.mrf.mxu0
        %v2970 = vadd.f32 0.0, %v2969
        %2971 = vmatmul.bf16.gmra.mxu0 %v1100
        %v2972 = vpop.f32.mrf.mxu0
        %v2973 = vpop.f32.mrf.mxu0
        %2974 = vmatmul.bf16.gmra.mxu0 %v1109
        %v2975 = vpop.f32.mrf.mxu0
        %v2976 = vadd.f32 0.0, %v2975
        %v2977 = vpop.f32.mrf.mxu0
        %v2978 = vadd.f32 0.0, %v2977
        %2979 = vmatmul.bf16.gmra.mxu0 %v1118
        %v2980 = vpop.f32.mrf.mxu0
        %v2981 = vpop.f32.mrf.mxu0
        %2982 = vmatmul.bf16.gmra.mxu0 %v1127
        %v2983 = vpop.f32.mrf.mxu0
        %v2984 = vadd.f32 0.0, %v2983
        %v2985 = vpop.f32.mrf.mxu0
        %v2986 = vadd.f32 0.0, %v2985
        %2987 = vmatmul.bf16.gmra.mxu0 %v1136
        %v2988 = vpop.f32.mrf.mxu0
        %v2989 = vpop.f32.mrf.mxu0
        %2990 = vmatmul.bf16.gmra.mxu0 %v1145
        %v2991 = vpop.f32.mrf.mxu0
        %v2992 = vadd.f32 0.0, %v2991
        %v2993 = vpop.f32.mrf.mxu0
        %v2994 = vadd.f32 0.0, %v2993
        %2995 = vmatmul.bf16.gmra.mxu0 %v1154
        %v2996 = vpop.f32.mrf.mxu0
        %v2997 = vpop.f32.mrf.mxu0
        %2998 = vmatmul.bf16.gmra.mxu0 %v1163
        %v2999 = vpop.f32.mrf.mxu0
        %v3000 = vadd.f32 0.0, %v2999
        %v3001 = vpop.f32.mrf.mxu0
        %v3002 = vadd.f32 0.0, %v3001
        %3003 = vmatmul.bf16.gmra.mxu0 %v1172
        %v3004 = vpop.f32.mrf.mxu0
        %v3005 = vpop.f32.mrf.mxu0
        %3006 = vmatmul.bf16.gmra.mxu0 %v1181
        %v3007 = vpop.f32.mrf.mxu0
        %v3008 = vadd.f32 0.0, %v3007
        %v3009 = vpop.f32.mrf.mxu0
        %v3010 = vadd.f32 0.0, %v3009
        %3011 = vmatmul.bf16.gmra.mxu0 %v1190
        %v3012 = vpop.f32.mrf.mxu0
        %v3013 = vpop.f32.mrf.mxu0
        %3014 = vmatmul.bf16.gmra.mxu0 %v1199
        %v3015 = vpop.f32.mrf.mxu0
        %v3016 = vadd.f32 0.0, %v3015
        %v3017 = vpop.f32.mrf.mxu0
        %v3018 = vadd.f32 0.0, %v3017
        %3019 = vmatmul.bf16.gmra.mxu0 %v1208
        %v3020 = vpop.f32.mrf.mxu0
        %v3021 = vpop.f32.mrf.mxu0
        %3022 = vmatmul.bf16.gmra.mxu0 %v1217
        %v3023 = vpop.f32.mrf.mxu0
        %v3024 = vadd.f32 0.0, %v3023
        %v3025 = vpop.f32.mrf.mxu0
        %v3026 = vadd.f32 0.0, %v3025
        %3027 = vmatmul.bf16.gmra.mxu0 %v1226
        %v3028 = vpop.f32.mrf.mxu0
        %v3029 = vpop.f32.mrf.mxu0
        %3030 = vmatmul.bf16.gmra.mxu0 %v1235
        %v3031 = vpop.f32.mrf.mxu0
        %v3032 = vadd.f32 0.0, %v3031
        %v3033 = vpop.f32.mrf.mxu0
        %v3034 = vadd.f32 0.0, %v3033
        %3035 = vmatmul.bf16.gmra.mxu0 %v1244
        %v3036 = vpop.f32.mrf.mxu0
        %v3037 = vpop.f32.mrf.mxu0
        %3038 = vmatmul.bf16.gmra.mxu0 %v1253
        %v3039 = vpop.f32.mrf.mxu0
        %v3040 = vadd.f32 0.0, %v3039
        %v3041 = vpop.f32.mrf.mxu0
        %v3042 = vadd.f32 0.0, %v3041
        %3043 = vmatmul.bf16.gmra.mxu0 %v1262
        %v3044 = vpop.f32.mrf.mxu0
        %v3045 = vpop.f32.mrf.mxu0
        %3046 = vmatmul.bf16.gmra.mxu0 %v1271
        %v3047 = vpop.f32.mrf.mxu0
        %v3048 = vadd.f32 0.0, %v3047
        %v3049 = vpop.f32.mrf.mxu0
        %v3050 = vadd.f32 0.0, %v3049
        %3051 = vmatmul.bf16.gmra.mxu0 %v1280
        %v3052 = vpop.f32.mrf.mxu0
        %v3053 = vpop.f32.mrf.mxu0
        %3054 = vmatmul.bf16.gmra.mxu0 %v1289
        %v3055 = vpop.f32.mrf.mxu0
        %v3056 = vadd.f32 0.0, %v3055
        %v3057 = vpop.f32.mrf.mxu0
        %v3058 = vadd.f32 0.0, %v3057
        %3059 = vmatmul.bf16.gmra.mxu0 %v1298
        %v3060 = vpop.f32.mrf.mxu0
        %v3061 = vpop.f32.mrf.mxu0
        %3062 = vmatmul.bf16.gmra.mxu0 %v1307
        %v3063 = vpop.f32.mrf.mxu0
        %v3064 = vadd.f32 0.0, %v3063
        %v3065 = vpop.f32.mrf.mxu0
        %v3066 = vadd.f32 0.0, %v3065
        %3067 = vmatmul.bf16.gmra.mxu0 %v1316
        %v3068 = vpop.f32.mrf.mxu0
        %v3069 = vpop.f32.mrf.mxu0
        %3070 = vmatmul.bf16.gmra.mxu0 %v1325
        %v3071 = vpop.f32.mrf.mxu0
        %v3072 = vadd.f32 0.0, %v3071
        %v3073 = vpop.f32.mrf.mxu0
        %v3074 = vadd.f32 0.0, %v3073
        %3075 = vmatmul.bf16.gmra.mxu0 %v2116
        %v3076 = vpop.f32.mrf.mxu0
        %v3077 = vpop.f32.mrf.mxu0
        %3078 = vmatmul.bf16.gmra.mxu0 %v2125
        %v3079 = vpop.f32.mrf.mxu0
        %v3080 = vadd.f32 0.0, %v3079
        %v3081 = vpop.f32.mrf.mxu0
        %v3082 = vadd.f32 0.0, %v3081
        %3083 = vmatmul.bf16.gmra.mxu0 %v2888
        %v3084 = vpop.f32.mrf.mxu0
        %v3085 = vpop.f32.mrf.mxu0
        %3086 = vmatmul.bf16.gmra.mxu0 %v2897
        %v3087 = vpop.f32.mrf.mxu0
        %v3088 = vadd.f32 0.0, %v3087
        %v3089 = vpop.f32.mrf.mxu0
        %v3090 = vadd.f32 0.0, %v3089
        %3091 = vmatmul.bf16.gmra.mxu0 %v2906
        %v3092 = vpop.f32.mrf.mxu0
        %v3093 = vpop.f32.mrf.mxu0
        %3094 = vdwg.mxu0
        %v3095 = vadd.f32 %v2822, %v2968
        %v3096 = vadd.f32 %v2823, %v2970
        %v3097 = vadd.f32 %v2824, %v2976
        %v3098 = vadd.f32 %v2825, %v2978
        %v3099 = vadd.f32 %v2826, %v2984
        %v3100 = vadd.f32 %v2827, %v2986
        %v3101 = vadd.f32 %v2828, %v2992
        %v3102 = vadd.f32 %v2829, %v2994
        %v3103 = vadd.f32 %v2830, %v3000
        %v3104 = vadd.f32 %v2831, %v3002
        %v3105 = vadd.f32 %v2832, %v3008
        %v3106 = vadd.f32 %v2833, %v3010
        %v3107 = vadd.f32 %v2834, %v3016
        %v3108 = vadd.f32 %v2835, %v3018
        %v3109 = vadd.f32 %v2836, %v3024
        %v3110 = vadd.f32 %v2837, %v3026
        %v3111 = vadd.f32 %v2838, %v3032
        %v3112 = vadd.f32 %v2839, %v3034
        %v3113 = vadd.f32 %v2840, %v3040
        %v3114 = vadd.f32 %v2841, %v3042
        %v3115 = vadd.f32 %v2842, %v3048
        %v3116 = vadd.f32 %v2843, %v3050
        %v3117 = vadd.f32 %v2844, %v3056
        %v3118 = vadd.f32 %v2845, %v3058
        %v3119 = vadd.f32 %v2846, %v3064
        %v3120 = vadd.f32 %v2847, %v3066
        %v3121 = vadd.f32 %v2848, %v3072
        %v3122 = vadd.f32 %v2849, %v3074
        %v3123 = vadd.f32 %v2850, %v3080
        %v3124 = vadd.f32 %v2851, %v3082
        %v3125 = vadd.f32 %v2852, %v3088
        %v3126 = vadd.f32 %v2853, %v3090
        %s3127 = scalar_lea.vmem %s1, 448
        %v3128 = vld [vmem:[%s3127] sm:$0xf]
        %v3129 = vld [vmem:[%s3127 + $0x4] sm:$0xf]
        %v3130 = vld [vmem:[%s3127 + $0x8] sm:$0xf]
        %v3131 = vld [vmem:[%s3127 + $0xc] sm:$0xf]
        %v3132 = vld [vmem:[%s3127 + $0x10] sm:$0xf]
        %v3133 = vld [vmem:[%s3127 + $0x14] sm:$0xf]
        %v3134 = vld [vmem:[%s3127 + $0x18] sm:$0xf]
        %v3135 = vld [vmem:[%s3127 + $0x1c] sm:$0xf]
        %v3136 = vld [vmem:[%s3127 + $0x20] sm:$0xf]
        %v3137 = vld [vmem:[%s3127 + $0x24] sm:$0xf]
        %v3138 = vld [vmem:[%s3127 + $0x28] sm:$0xf]
        %v3139 = vld [vmem:[%s3127 + $0x2c] sm:$0xf]
        %v3140 = vld [vmem:[%s3127 + $0x30] sm:$0xf]
        %v3141 = vld [vmem:[%s3127 + $0x34] sm:$0xf]
        %v3142 = vld [vmem:[%s3127 + $0x38] sm:$0xf]
        %v3143 = vld [vmem:[%s3127 + $0x3c] sm:$0xf]
        %v3144 = vpack.c.b16 %v2874, %v2611
        %v3145 = vpack.c.b16 %v2876, %v2875
        %v3164 = vunpack.c.l.b16 %v3128
        %v3165 = vunpack.c.l.b16 %v3129
        %v3166 = vunpack.c.l.b16 %v3130
        %v3167 = vunpack.c.l.b16 %v3131
        %v3168 = vunpack.c.l.b16 %v3132
        %v3169 = vunpack.c.l.b16 %v3133
        %v3170 = vunpack.c.l.b16 %v3134
        %v3171 = vunpack.c.l.b16 %v3135
        %v3172 = vunpack.c.l.b16 %v3136
        %v3173 = vunpack.c.l.b16 %v3137
        %v3174 = vunpack.c.l.b16 %v3138
        %v3175 = vunpack.c.l.b16 %v3139
        %v3176 = vunpack.c.l.b16 %v3140
        %v3177 = vunpack.c.l.b16 %v3141
        %v3178 = vunpack.c.l.b16 %v3142
        %v3179 = vunpack.c.l.b16 %v3143
        %v3180 = vpack.c.b16 %v3165, %v3164
        %v3181 = vpack.c.b16 %v3167, %v3166
        %v3182 = vpack.c.b16 %v3169, %v3168
        %v3183 = vpack.c.b16 %v3171, %v3170
        %v3184 = vpack.c.b16 %v3173, %v3172
        %v3185 = vpack.c.b16 %v3175, %v3174
        %v3186 = vpack.c.b16 %v3177, %v3176
        %v3187 = vpack.c.b16 %v3179, %v3178
        %3196 = vmatpush.bf16.msra.mxu0 %v3187
        %3197 = vmatpush.bf16.msra.mxu0 %v3186
        %3198 = vmatpush.bf16.msra.mxu0 %v3185
        %3199 = vmatpush.bf16.msra.mxu0 %v3184
        %3200 = vmatpush.bf16.msra.mxu0 %v3183
        %3201 = vmatpush.bf16.msra.mxu0 %v3182
        %3202 = vmatpush.bf16.msra.mxu0 %v3181
        %3203 = vmatpush.bf16.msra.mxu0 %v3180
        %3204 = vmatmul.bf16.gmra.mxu0 %v758
        %v3205 = vpop.f32.mrf.mxu0
        %v3206 = vadd.f32 0.0, %v3205
        %v3207 = vpop.f32.mrf.mxu0
        %v3208 = vadd.f32 0.0, %v3207
        %3209 = vmatmul.bf16.gmra.mxu0 %v759
        %v3210 = vpop.f32.mrf.mxu0
        %v3211 = vpop.f32.mrf.mxu0
        %3212 = vmatmul.bf16.gmra.mxu0 %v760
        %v3213 = vpop.f32.mrf.mxu0
        %v3214 = vadd.f32 0.0, %v3213
        %v3215 = vpop.f32.mrf.mxu0
        %v3216 = vadd.f32 0.0, %v3215
        %3217 = vmatmul.bf16.gmra.mxu0 %v761
        %v3218 = vpop.f32.mrf.mxu0
        %v3219 = vpop.f32.mrf.mxu0
        %3220 = vmatmul.bf16.gmra.mxu0 %v762
        %v3221 = vpop.f32.mrf.mxu0
        %v3222 = vadd.f32 0.0, %v3221
        %v3223 = vpop.f32.mrf.mxu0
        %v3224 = vadd.f32 0.0, %v3223
        %3225 = vmatmul.bf16.gmra.mxu0 %v763
        %v3226 = vpop.f32.mrf.mxu0
        %v3227 = vpop.f32.mrf.mxu0
        %3228 = vmatmul.bf16.gmra.mxu0 %v764
        %v3229 = vpop.f32.mrf.mxu0
        %v3230 = vadd.f32 0.0, %v3229
        %v3231 = vpop.f32.mrf.mxu0
        %v3232 = vadd.f32 0.0, %v3231
        %3233 = vmatmul.bf16.gmra.mxu0 %v765
        %v3234 = vpop.f32.mrf.mxu0
        %v3235 = vpop.f32.mrf.mxu0
        %3236 = vmatmul.bf16.gmra.mxu0 %v766
        %v3237 = vpop.f32.mrf.mxu0
        %v3238 = vadd.f32 0.0, %v3237
        %v3239 = vpop.f32.mrf.mxu0
        %v3240 = vadd.f32 0.0, %v3239
        %3241 = vmatmul.bf16.gmra.mxu0 %v767
        %v3242 = vpop.f32.mrf.mxu0
        %v3243 = vpop.f32.mrf.mxu0
        %3244 = vmatmul.bf16.gmra.mxu0 %v768
        %v3245 = vpop.f32.mrf.mxu0
        %v3246 = vadd.f32 0.0, %v3245
        %v3247 = vpop.f32.mrf.mxu0
        %v3248 = vadd.f32 0.0, %v3247
        %3249 = vmatmul.bf16.gmra.mxu0 %v769
        %v3250 = vpop.f32.mrf.mxu0
        %v3251 = vpop.f32.mrf.mxu0
        %3252 = vmatmul.bf16.gmra.mxu0 %v770
        %v3253 = vpop.f32.mrf.mxu0
        %v3254 = vadd.f32 0.0, %v3253
        %v3255 = vpop.f32.mrf.mxu0
        %v3256 = vadd.f32 0.0, %v3255
        %3257 = vmatmul.bf16.gmra.mxu0 %v771
        %v3258 = vpop.f32.mrf.mxu0
        %v3259 = vpop.f32.mrf.mxu0
        %3260 = vmatmul.bf16.gmra.mxu0 %v772
        %v3261 = vpop.f32.mrf.mxu0
        %v3262 = vadd.f32 0.0, %v3261
        %v3263 = vpop.f32.mrf.mxu0
        %v3264 = vadd.f32 0.0, %v3263
        %3265 = vmatmul.bf16.gmra.mxu0 %v773
        %v3266 = vpop.f32.mrf.mxu0
        %v3267 = vpop.f32.mrf.mxu0
        %3268 = vmatmul.bf16.gmra.mxu0 %v774
        %v3269 = vpop.f32.mrf.mxu0
        %v3270 = vadd.f32 0.0, %v3269
        %v3271 = vpop.f32.mrf.mxu0
        %v3272 = vadd.f32 0.0, %v3271
        %3273 = vmatmul.bf16.gmra.mxu0 %v775
        %v3274 = vpop.f32.mrf.mxu0
        %v3275 = vpop.f32.mrf.mxu0
        %3276 = vmatmul.bf16.gmra.mxu0 %v776
        %v3277 = vpop.f32.mrf.mxu0
        %v3278 = vadd.f32 0.0, %v3277
        %v3279 = vpop.f32.mrf.mxu0
        %v3280 = vadd.f32 0.0, %v3279
        %3281 = vmatmul.bf16.gmra.mxu0 %v777
        %v3282 = vpop.f32.mrf.mxu0
        %v3283 = vpop.f32.mrf.mxu0
        %3284 = vmatmul.bf16.gmra.mxu0 %v778
        %v3285 = vpop.f32.mrf.mxu0
        %v3286 = vadd.f32 0.0, %v3285
        %v3287 = vpop.f32.mrf.mxu0
        %v3288 = vadd.f32 0.0, %v3287
        %3289 = vmatmul.bf16.gmra.mxu0 %v779
        %v3290 = vpop.f32.mrf.mxu0
        %v3291 = vpop.f32.mrf.mxu0
        %3292 = vmatmul.bf16.gmra.mxu0 %v780
        %v3293 = vpop.f32.mrf.mxu0
        %v3294 = vadd.f32 0.0, %v3293
        %v3295 = vpop.f32.mrf.mxu0
        %v3296 = vadd.f32 0.0, %v3295
        %3297 = vmatmul.bf16.gmra.mxu0 %v781
        %v3298 = vpop.f32.mrf.mxu0
        %v3299 = vpop.f32.mrf.mxu0
        %3300 = vmatmul.bf16.gmra.mxu0 %v782
        %v3301 = vpop.f32.mrf.mxu0
        %v3302 = vadd.f32 0.0, %v3301
        %v3303 = vpop.f32.mrf.mxu0
        %v3304 = vadd.f32 0.0, %v3303
        %3305 = vmatmul.bf16.gmra.mxu0 %v783
        %v3306 = vpop.f32.mrf.mxu0
        %v3307 = vpop.f32.mrf.mxu0
        %3308 = vmatmul.bf16.gmra.mxu0 %v784
        %v3309 = vpop.f32.mrf.mxu0
        %v3310 = vadd.f32 0.0, %v3309
        %v3311 = vpop.f32.mrf.mxu0
        %v3312 = vadd.f32 0.0, %v3311
        %3313 = vmatmul.bf16.gmra.mxu0 %v785
        %v3314 = vpop.f32.mrf.mxu0
        %v3315 = vpop.f32.mrf.mxu0
        %3316 = vmatmul.bf16.gmra.mxu0 %v2372
        %v3317 = vpop.f32.mrf.mxu0
        %v3318 = vadd.f32 0.0, %v3317
        %v3319 = vpop.f32.mrf.mxu0
        %v3320 = vadd.f32 0.0, %v3319
        %3321 = vmatmul.bf16.gmra.mxu0 %v2373
        %v3322 = vpop.f32.mrf.mxu0
        %v3323 = vpop.f32.mrf.mxu0
        %3324 = vmatmul.bf16.gmra.mxu0 %v3144
        %v3325 = vpop.f32.mrf.mxu0
        %v3326 = vadd.f32 0.0, %v3325
        %v3327 = vpop.f32.mrf.mxu0
        %v3328 = vadd.f32 0.0, %v3327
        %3329 = vmatmul.bf16.gmra.mxu0 %v3145
        %v3330 = vpop.f32.mrf.mxu0
        %v3331 = vpop.f32.mrf.mxu0
        %3332 = vdwg.mxu0
        %v3333 = vadd.f32 %v3095, %v3206
        %v3334 = vadd.f32 %v3096, %v3208
        %v3335 = vadd.f32 %v3097, %v3214
        %v3336 = vadd.f32 %v3098, %v3216
        %v3337 = vadd.f32 %v3099, %v3222
        %v3338 = vadd.f32 %v3100, %v3224
        %v3339 = vadd.f32 %v3101, %v3230
        %v3340 = vadd.f32 %v3102, %v3232
        %v3341 = vadd.f32 %v3103, %v3238
        %v3342 = vadd.f32 %v3104, %v3240
        %v3343 = vadd.f32 %v3105, %v3246
        %v3344 = vadd.f32 %v3106, %v3248
        %v3345 = vadd.f32 %v3107, %v3254
        %v3346 = vadd.f32 %v3108, %v3256
        %v3347 = vadd.f32 %v3109, %v3262
        %v3348 = vadd.f32 %v3110, %v3264
        %v3349 = vadd.f32 %v3111, %v3270
        %v3350 = vadd.f32 %v3112, %v3272
        %v3351 = vadd.f32 %v3113, %v3278
        %v3352 = vadd.f32 %v3114, %v3280
        %v3353 = vadd.f32 %v3115, %v3286
        %v3354 = vadd.f32 %v3116, %v3288
        %v3355 = vadd.f32 %v3117, %v3294
        %v3356 = vadd.f32 %v3118, %v3296
        %v3357 = vadd.f32 %v3119, %v3302
        %v3358 = vadd.f32 %v3120, %v3304
        %v3359 = vadd.f32 %v3121, %v3310
        %v3360 = vadd.f32 %v3122, %v3312
        %v3361 = vadd.f32 %v3123, %v3318
        %v3362 = vadd.f32 %v3124, %v3320
        %v3363 = vadd.f32 %v3125, %v3326
        %v3364 = vadd.f32 %v3126, %v3328
        %s3365 = scalar_lea.vmem %s1, 512
        %v3366 = vld [vmem:[%s3365] sm:$0xf]
        %v3367 = vld [vmem:[%s3365 + $0x4] sm:$0xf]
        %v3368 = vld [vmem:[%s3365 + $0x8] sm:$0xf]
        %v3369 = vld [vmem:[%s3365 + $0xc] sm:$0xf]
        %v3370 = vld [vmem:[%s3365 + $0x10] sm:$0xf]
        %v3371 = vld [vmem:[%s3365 + $0x14] sm:$0xf]
        %v3372 = vld [vmem:[%s3365 + $0x18] sm:$0xf]
        %v3373 = vld [vmem:[%s3365 + $0x1c] sm:$0xf]
        %v3374 = vld [vmem:[%s3365 + $0x20] sm:$0xf]
        %v3375 = vld [vmem:[%s3365 + $0x24] sm:$0xf]
        %v3376 = vld [vmem:[%s3365 + $0x28] sm:$0xf]
        %v3377 = vld [vmem:[%s3365 + $0x2c] sm:$0xf]
        %v3378 = vld [vmem:[%s3365 + $0x30] sm:$0xf]
        %v3379 = vld [vmem:[%s3365 + $0x34] sm:$0xf]
        %v3380 = vld [vmem:[%s3365 + $0x38] sm:$0xf]
        %v3381 = vld [vmem:[%s3365 + $0x3c] sm:$0xf]
        %v3383 = vunpack.c.l.b16 %v592
        %v3384 = vpack.c.b16 %v3383, %v3383
        %v3386 = vshll.u32 %v3144, 16
        %v3388 = vrot.slane %v3386, 1
        %v3389 = vsel %vm1572, %v2628, %v3388
        %v3390 = vshrl.u32 %v3144, 16
        %v3392 = vor.u32 %v3390, %v3388
        %v3394 = vshll.u32 %v3145, 16
        %v3396 = vrot.slane %v3394, 1
        %v3397 = vsel %vm1572, %v3392, %v3396
        %v3398 = vshrl.u32 %v3145, 16
        %v3400 = vor.u32 %v3398, %v3396
        %v3402 = vshll.u32 %v3384, 16
        %v3404 = vrot.slane %v3402, 1
        %v3405 = vsel %vm1572, %v3400, %v3404
        %v3425 = vunpack.c.l.b16 %v3366
        %v3426 = vunpack.c.l.b16 %v3367
        %v3427 = vunpack.c.l.b16 %v3368
        %v3428 = vunpack.c.l.b16 %v3369
        %v3429 = vunpack.c.l.b16 %v3370
        %v3430 = vunpack.c.l.b16 %v3371
        %v3431 = vunpack.c.l.b16 %v3372
        %v3432 = vunpack.c.l.b16 %v3373
        %v3433 = vunpack.c.l.b16 %v3374
        %v3434 = vunpack.c.l.b16 %v3375
        %v3435 = vunpack.c.l.b16 %v3376
        %v3436 = vunpack.c.l.b16 %v3377
        %v3437 = vunpack.c.l.b16 %v3378
        %v3438 = vunpack.c.l.b16 %v3379
        %v3439 = vunpack.c.l.b16 %v3380
        %v3440 = vunpack.c.l.b16 %v3381
        %v3441 = vpack.c.b16 %v3426, %v3425
        %v3442 = vpack.c.b16 %v3428, %v3427
        %v3443 = vpack.c.b16 %v3430, %v3429
        %v3444 = vpack.c.b16 %v3432, %v3431
        %v3445 = vpack.c.b16 %v3434, %v3433
        %v3446 = vpack.c.b16 %v3436, %v3435
        %v3447 = vpack.c.b16 %v3438, %v3437
        %v3448 = vpack.c.b16 %v3440, %v3439
        %3457 = vmatpush.bf16.msra.mxu0 %v3448
        %3458 = vmatpush.bf16.msra.mxu0 %v3447
        %3459 = vmatpush.bf16.msra.mxu0 %v3446
        %3460 = vmatpush.bf16.msra.mxu0 %v3445
        %3461 = vmatpush.bf16.msra.mxu0 %v3444
        %3462 = vmatpush.bf16.msra.mxu0 %v3443
        %3463 = vmatpush.bf16.msra.mxu0 %v3442
        %3464 = vmatpush.bf16.msra.mxu0 %v3441
        %3465 = vmatmul.bf16.gmra.mxu0 %v1616
        %v3466 = vpop.f32.mrf.mxu0
        %v3467 = vadd.f32 0.0, %v3466
        %v3468 = vpop.f32.mrf.mxu0
        %v3469 = vadd.f32 0.0, %v3468
        %3470 = vmatmul.bf16.gmra.mxu0 %v1624
        %v3471 = vpop.f32.mrf.mxu0
        %v3472 = vpop.f32.mrf.mxu0
        %3473 = vmatmul.bf16.gmra.mxu0 %v1632
        %v3474 = vpop.f32.mrf.mxu0
        %v3475 = vadd.f32 0.0, %v3474
        %v3476 = vpop.f32.mrf.mxu0
        %v3477 = vadd.f32 0.0, %v3476
        %3478 = vmatmul.bf16.gmra.mxu0 %v1640
        %v3479 = vpop.f32.mrf.mxu0
        %v3480 = vpop.f32.mrf.mxu0
        %3481 = vmatmul.bf16.gmra.mxu0 %v1648
        %v3482 = vpop.f32.mrf.mxu0
        %v3483 = vadd.f32 0.0, %v3482
        %v3484 = vpop.f32.mrf.mxu0
        %v3485 = vadd.f32 0.0, %v3484
        %3486 = vmatmul.bf16.gmra.mxu0 %v1656
        %v3487 = vpop.f32.mrf.mxu0
        %v3488 = vpop.f32.mrf.mxu0
        %3489 = vmatmul.bf16.gmra.mxu0 %v1664
        %v3490 = vpop.f32.mrf.mxu0
        %v3491 = vadd.f32 0.0, %v3490
        %v3492 = vpop.f32.mrf.mxu0
        %v3493 = vadd.f32 0.0, %v3492
        %3494 = vmatmul.bf16.gmra.mxu0 %v1672
        %v3495 = vpop.f32.mrf.mxu0
        %v3496 = vpop.f32.mrf.mxu0
        %3497 = vmatmul.bf16.gmra.mxu0 %v1680
        %v3498 = vpop.f32.mrf.mxu0
        %v3499 = vadd.f32 0.0, %v3498
        %v3500 = vpop.f32.mrf.mxu0
        %v3501 = vadd.f32 0.0, %v3500
        %3502 = vmatmul.bf16.gmra.mxu0 %v1688
        %v3503 = vpop.f32.mrf.mxu0
        %v3504 = vpop.f32.mrf.mxu0
        %3505 = vmatmul.bf16.gmra.mxu0 %v1696
        %v3506 = vpop.f32.mrf.mxu0
        %v3507 = vadd.f32 0.0, %v3506
        %v3508 = vpop.f32.mrf.mxu0
        %v3509 = vadd.f32 0.0, %v3508
        %3510 = vmatmul.bf16.gmra.mxu0 %v1704
        %v3511 = vpop.f32.mrf.mxu0
        %v3512 = vpop.f32.mrf.mxu0
        %3513 = vmatmul.bf16.gmra.mxu0 %v1712
        %v3514 = vpop.f32.mrf.mxu0
        %v3515 = vadd.f32 0.0, %v3514
        %v3516 = vpop.f32.mrf.mxu0
        %v3517 = vadd.f32 0.0, %v3516
        %3518 = vmatmul.bf16.gmra.mxu0 %v1720
        %v3519 = vpop.f32.mrf.mxu0
        %v3520 = vpop.f32.mrf.mxu0
        %3521 = vmatmul.bf16.gmra.mxu0 %v1728
        %v3522 = vpop.f32.mrf.mxu0
        %v3523 = vadd.f32 0.0, %v3522
        %v3524 = vpop.f32.mrf.mxu0
        %v3525 = vadd.f32 0.0, %v3524
        %3526 = vmatmul.bf16.gmra.mxu0 %v1736
        %v3527 = vpop.f32.mrf.mxu0
        %v3528 = vpop.f32.mrf.mxu0
        %3529 = vmatmul.bf16.gmra.mxu0 %v1744
        %v3530 = vpop.f32.mrf.mxu0
        %v3531 = vadd.f32 0.0, %v3530
        %v3532 = vpop.f32.mrf.mxu0
        %v3533 = vadd.f32 0.0, %v3532
        %3534 = vmatmul.bf16.gmra.mxu0 %v1752
        %v3535 = vpop.f32.mrf.mxu0
        %v3536 = vpop.f32.mrf.mxu0
        %3537 = vmatmul.bf16.gmra.mxu0 %v1760
        %v3538 = vpop.f32.mrf.mxu0
        %v3539 = vadd.f32 0.0, %v3538
        %v3540 = vpop.f32.mrf.mxu0
        %v3541 = vadd.f32 0.0, %v3540
        %3542 = vmatmul.bf16.gmra.mxu0 %v1768
        %v3543 = vpop.f32.mrf.mxu0
        %v3544 = vpop.f32.mrf.mxu0
        %3545 = vmatmul.bf16.gmra.mxu0 %v1776
        %v3546 = vpop.f32.mrf.mxu0
        %v3547 = vadd.f32 0.0, %v3546
        %v3548 = vpop.f32.mrf.mxu0
        %v3549 = vadd.f32 0.0, %v3548
        %3550 = vmatmul.bf16.gmra.mxu0 %v1784
        %v3551 = vpop.f32.mrf.mxu0
        %v3552 = vpop.f32.mrf.mxu0
        %3553 = vmatmul.bf16.gmra.mxu0 %v1792
        %v3554 = vpop.f32.mrf.mxu0
        %v3555 = vadd.f32 0.0, %v3554
        %v3556 = vpop.f32.mrf.mxu0
        %v3557 = vadd.f32 0.0, %v3556
        %3558 = vmatmul.bf16.gmra.mxu0 %v1800
        %v3559 = vpop.f32.mrf.mxu0
        %v3560 = vpop.f32.mrf.mxu0
        %3561 = vmatmul.bf16.gmra.mxu0 %v1808
        %v3562 = vpop.f32.mrf.mxu0
        %v3563 = vadd.f32 0.0, %v3562
        %v3564 = vpop.f32.mrf.mxu0
        %v3565 = vadd.f32 0.0, %v3564
        %3566 = vmatmul.bf16.gmra.mxu0 %v1816
        %v3567 = vpop.f32.mrf.mxu0
        %v3568 = vpop.f32.mrf.mxu0
        %3569 = vmatmul.bf16.gmra.mxu0 %v1824
        %v3570 = vpop.f32.mrf.mxu0
        %v3571 = vadd.f32 0.0, %v3570
        %v3572 = vpop.f32.mrf.mxu0
        %v3573 = vadd.f32 0.0, %v3572
        %3574 = vmatmul.bf16.gmra.mxu0 %v2617
        %v3575 = vpop.f32.mrf.mxu0
        %v3576 = vpop.f32.mrf.mxu0
        %3577 = vmatmul.bf16.gmra.mxu0 %v2625
        %v3578 = vpop.f32.mrf.mxu0
        %v3579 = vadd.f32 0.0, %v3578
        %v3580 = vpop.f32.mrf.mxu0
        %v3581 = vadd.f32 0.0, %v3580
        %3582 = vmatmul.bf16.gmra.mxu0 %v3389
        %v3583 = vpop.f32.mrf.mxu0
        %v3584 = vpop.f32.mrf.mxu0
        %3585 = vmatmul.bf16.gmra.mxu0 %v3397
        %v3586 = vpop.f32.mrf.mxu0
        %v3587 = vadd.f32 0.0, %v3586
        %v3588 = vpop.f32.mrf.mxu0
        %v3589 = vadd.f32 0.0, %v3588
        %3590 = vmatmul.bf16.gmra.mxu0 %v3405
        %v3591 = vpop.f32.mrf.mxu0
        %v3592 = vpop.f32.mrf.mxu0
        %3593 = vdwg.mxu0
        %v3594 = vadd.f32 %v3333, %v3467
        %v3595 = vadd.f32 %v3334, %v3469
        %v3596 = vadd.f32 %v3335, %v3475
        %v3597 = vadd.f32 %v3336, %v3477
        %v3598 = vadd.f32 %v3337, %v3483
        %v3599 = vadd.f32 %v3338, %v3485
        %v3600 = vadd.f32 %v3339, %v3491
        %v3601 = vadd.f32 %v3340, %v3493
        %v3602 = vadd.f32 %v3341, %v3499
        %v3603 = vadd.f32 %v3342, %v3501
        %v3604 = vadd.f32 %v3343, %v3507
        %v3605 = vadd.f32 %v3344, %v3509
        %v3606 = vadd.f32 %v3345, %v3515
        %v3607 = vadd.f32 %v3346, %v3517
        %v3608 = vadd.f32 %v3347, %v3523
        %v3609 = vadd.f32 %v3348, %v3525
        %v3610 = vadd.f32 %v3349, %v3531
        %v3611 = vadd.f32 %v3350, %v3533
        %v3612 = vadd.f32 %v3351, %v3539
        %v3613 = vadd.f32 %v3352, %v3541
        %v3614 = vadd.f32 %v3353, %v3547
        %v3615 = vadd.f32 %v3354, %v3549
        %v3616 = vadd.f32 %v3355, %v3555
        %v3617 = vadd.f32 %v3356, %v3557
        %v3618 = vadd.f32 %v3357, %v3563
        %v3619 = vadd.f32 %v3358, %v3565
        %v3620 = vadd.f32 %v3359, %v3571
        %v3621 = vadd.f32 %v3360, %v3573
        %v3622 = vadd.f32 %v3361, %v3579
        %v3623 = vadd.f32 %v3362, %v3581
        %v3624 = vadd.f32 %v3363, %v3587
        %v3625 = vadd.f32 %v3364, %v3589
        %v3626 = vld [vmem:[%s3] sm:$0x1]
        %v3628 = vperm.slane %v3626, 0
        %v3630 = vmul.f32 %v3594, %v3628
        %v3631 = vmul.f32 %v3595, %v3628
        %v3632 = vmul.f32 %v3596, %v3628
        %v3633 = vmul.f32 %v3597, %v3628
        %v3634 = vmul.f32 %v3598, %v3628
        %v3635 = vmul.f32 %v3599, %v3628
        %v3636 = vmul.f32 %v3600, %v3628
        %v3637 = vmul.f32 %v3601, %v3628
        %v3638 = vmul.f32 %v3602, %v3628
        %v3639 = vmul.f32 %v3603, %v3628
        %v3640 = vmul.f32 %v3604, %v3628
        %v3641 = vmul.f32 %v3605, %v3628
        %v3642 = vmul.f32 %v3606, %v3628
        %v3643 = vmul.f32 %v3607, %v3628
        %v3644 = vmul.f32 %v3608, %v3628
        %v3645 = vmul.f32 %v3609, %v3628
        %v3646 = vmul.f32 %v3610, %v3628
        %v3647 = vmul.f32 %v3611, %v3628
        %v3648 = vmul.f32 %v3612, %v3628
        %v3649 = vmul.f32 %v3613, %v3628
        %v3650 = vmul.f32 %v3614, %v3628
        %v3651 = vmul.f32 %v3615, %v3628
        %v3652 = vmul.f32 %v3616, %v3628
        %v3653 = vmul.f32 %v3617, %v3628
        %v3654 = vmul.f32 %v3618, %v3628
        %v3655 = vmul.f32 %v3619, %v3628
        %v3656 = vmul.f32 %v3620, %v3628
        %v3657 = vmul.f32 %v3621, %v3628
        %v3658 = vmul.f32 %v3622, %v3628
        %v3659 = vmul.f32 %v3623, %v3628
        %v3660 = vmul.f32 %v3624, %v3628
        %v3661 = vmul.f32 %v3625, %v3628
        %v3662 = vld [vmem:[%s4] sm:$0x1]
        %v3664 = vperm.slane %v3662, 0
        %v3666 = vadd.f32 %v3630, %v3664
        %v3667 = vadd.f32 %v3631, %v3664
        %v3668 = vadd.f32 %v3632, %v3664
        %v3669 = vadd.f32 %v3633, %v3664
        %v3670 = vadd.f32 %v3634, %v3664
        %v3671 = vadd.f32 %v3635, %v3664
        %v3672 = vadd.f32 %v3636, %v3664
        %v3673 = vadd.f32 %v3637, %v3664
        %v3674 = vadd.f32 %v3638, %v3664
        %v3675 = vadd.f32 %v3639, %v3664
        %v3676 = vadd.f32 %v3640, %v3664
        %v3677 = vadd.f32 %v3641, %v3664
        %v3678 = vadd.f32 %v3642, %v3664
        %v3679 = vadd.f32 %v3643, %v3664
        %v3680 = vadd.f32 %v3644, %v3664
        %v3681 = vadd.f32 %v3645, %v3664
        %v3682 = vadd.f32 %v3646, %v3664
        %v3683 = vadd.f32 %v3647, %v3664
        %v3684 = vadd.f32 %v3648, %v3664
        %v3685 = vadd.f32 %v3649, %v3664
        %v3686 = vadd.f32 %v3650, %v3664
        %v3687 = vadd.f32 %v3651, %v3664
        %v3688 = vadd.f32 %v3652, %v3664
        %v3689 = vadd.f32 %v3653, %v3664
        %v3690 = vadd.f32 %v3654, %v3664
        %v3691 = vadd.f32 %v3655, %v3664
        %v3692 = vadd.f32 %v3656, %v3664
        %v3693 = vadd.f32 %v3657, %v3664
        %v3694 = vadd.f32 %v3658, %v3664
        %v3695 = vadd.f32 %v3659, %v3664
        %v3696 = vadd.f32 %v3660, %v3664
        %v3697 = vadd.f32 %v3661, %v3664
        %v3698 = vmax.f32 %v3666, 0.0
        %v3699 = vmax.f32 %v3667, 0.0
        %v3700 = vmax.f32 %v3668, 0.0
        %v3701 = vmax.f32 %v3669, 0.0
        %v3702 = vmax.f32 %v3670, 0.0
        %v3703 = vmax.f32 %v3671, 0.0
        %v3704 = vmax.f32 %v3672, 0.0
        %v3705 = vmax.f32 %v3673, 0.0
        %v3706 = vmax.f32 %v3674, 0.0
        %v3707 = vmax.f32 %v3675, 0.0
        %v3708 = vmax.f32 %v3676, 0.0
        %v3709 = vmax.f32 %v3677, 0.0
        %v3710 = vmax.f32 %v3678, 0.0
        %v3711 = vmax.f32 %v3679, 0.0
        %v3712 = vmax.f32 %v3680, 0.0
        %v3713 = vmax.f32 %v3681, 0.0
        %v3714 = vmax.f32 %v3682, 0.0
        %v3715 = vmax.f32 %v3683, 0.0
        %v3716 = vmax.f32 %v3684, 0.0
        %v3717 = vmax.f32 %v3685, 0.0
        %v3718 = vmax.f32 %v3686, 0.0
        %v3719 = vmax.f32 %v3687, 0.0
        %v3720 = vmax.f32 %v3688, 0.0
        %v3721 = vmax.f32 %v3689, 0.0
        %v3722 = vmax.f32 %v3690, 0.0
        %v3723 = vmax.f32 %v3691, 0.0
        %v3724 = vmax.f32 %v3692, 0.0
        %v3725 = vmax.f32 %v3693, 0.0
        %v3726 = vmax.f32 %v3694, 0.0
        %v3727 = vmax.f32 %v3695, 0.0
        %v3728 = vmax.f32 %v3696, 0.0
        %v3729 = vmax.f32 %v3697, 0.0
        %3730 = vst [vmem:[%s348] sm:$0xff] %v3698
        %3731 = vst [vmem:[%s348 + $0x8] sm:$0xff] %v3699
        %3732 = vst [vmem:[%s348 + $0x20] sm:$0xff] %v3700
        %3733 = vst [vmem:[%s348 + $0x28] sm:$0xff] %v3701
        %3734 = vst [vmem:[%s348 + $0x40] sm:$0xff] %v3702
        %3735 = vst [vmem:[%s348 + $0x48] sm:$0xff] %v3703
        %3736 = vst [vmem:[%s348 + $0x60] sm:$0xff] %v3704
        %3737 = vst [vmem:[%s348 + $0x68] sm:$0xff] %v3705
        %3738 = vst [vmem:[%s348 + $0x80] sm:$0xff] %v3706
        %3739 = vst [vmem:[%s348 + $0x88] sm:$0xff] %v3707
        %3740 = vst [vmem:[%s348 + $0xa0] sm:$0xff] %v3708
        %3741 = vst [vmem:[%s348 + $0xa8] sm:$0xff] %v3709
        %3742 = vst [vmem:[%s348 + $0xc0] sm:$0xff] %v3710
        %3743 = vst [vmem:[%s348 + $0xc8] sm:$0xff] %v3711
        %3744 = vst [vmem:[%s348 + $0xe0] sm:$0xff] %v3712
        %3745 = vst [vmem:[%s348 + $0xe8] sm:$0xff] %v3713
        %3746 = vst [vmem:[%s348 + $0x100] sm:$0xff] %v3714
        %3747 = vst [vmem:[%s348 + $0x108] sm:$0xff] %v3715
        %3748 = vst [vmem:[%s348 + $0x120] sm:$0xff] %v3716
        %3749 = vst [vmem:[%s348 + $0x128] sm:$0xff] %v3717
        %3750 = vst [vmem:[%s348 + $0x140] sm:$0xff] %v3718
        %3751 = vst [vmem:[%s348 + $0x148] sm:$0xff] %v3719
        %3752 = vst [vmem:[%s348 + $0x160] sm:$0xff] %v3720
        %3753 = vst [vmem:[%s348 + $0x168] sm:$0xff] %v3721
        %3754 = vst [vmem:[%s348 + $0x180] sm:$0xff] %v3722
        %3755 = vst [vmem:[%s348 + $0x188] sm:$0xff] %v3723
        %3756 = vst [vmem:[%s348 + $0x1a0] sm:$0xff] %v3724
        %3757 = vst [vmem:[%s348 + $0x1a8] sm:$0xff] %v3725
        %3758 = vst [vmem:[%s348 + $0x1c0] sm:$0xff] %v3726
        %3759 = vst [vmem:[%s348 + $0x1c8] sm:$0xff] %v3727
        %3760 = vst [vmem:[%s348 + $0x1e0] sm:$0xff] %v3728
        %3761 = vst [vmem:[%s348 + $0x1e8] sm:$0xff] %v3729
        %v3762 = vld [vmem:[#allocation2 + $0x18] sm:$0xff]
        %v3763 = vld [vmem:[#allocation2 + $0x20] sm:$0xff]
        %v3764 = vld [vmem:[#allocation2 + $0x28] sm:$0xff]
        %v3765 = vld [vmem:[#allocation2 + $0x30] sm:$0xff]
        %v3766 = vld [vmem:[#allocation2 + $0x38] sm:$0xff]
        %v3767 = vld [vmem:[#allocation2 + $0x40] sm:$0xff]
        %v3768 = vld [vmem:[#allocation2 + $0x48] sm:$0xff]
        %v3769 = vld [vmem:[#allocation2 + $0x50] sm:$0xff]
        %v3770 = vld [vmem:[#allocation2 + $0x58] sm:$0xff]
        %v3771 = vld [vmem:[#allocation2 + $0x60] sm:$0xff]
        %v3772 = vld [vmem:[#allocation2 + $0x68] sm:$0xff]
        %v3773 = vld [vmem:[#allocation2 + $0x70] sm:$0xff]
        %v3774 = vld [vmem:[#allocation2 + $0x78] sm:$0xff]
        %v3775 = vld [vmem:[#allocation2 + $0x80] sm:$0xff]
        %v3776 = vld [vmem:[#allocation2 + $0x88] sm:$0xff]
        %v3777 = vld [vmem:[#allocation2 + $0x90] sm:$0xff]
        %v3778 = vld [vmem:[#allocation2 + $0x98] sm:$0xff]
        %v3779 = vld [vmem:[#allocation2 + $0xa0] sm:$0xff]
        %v3780 = vld [vmem:[#allocation2 + $0xa8] sm:$0xff]
        %v3781 = vld [vmem:[#allocation2 + $0xb0] sm:$0xff]
        %v3782 = vld [vmem:[#allocation2 + $0xb8] sm:$0xff]
        %v3783 = vld [vmem:[#allocation2 + $0xc0] sm:$0xff]
        %v3784 = vld [vmem:[#allocation2 + $0xc8] sm:$0xff]
        %v3785 = vld [vmem:[#allocation2 + $0xd0] sm:$0xff]
        %v3786 = vld [vmem:[#allocation2 + $0xd8] sm:$0xff]
        %v3787 = vld [vmem:[#allocation2 + $0xe0] sm:$0xff]
        %v3788 = vld [vmem:[#allocation2 + $0xe8] sm:$0xff]
        %v3789 = vld [vmem:[#allocation2 + $0xf0] sm:$0xff]
        %v3790 = vld [vmem:[#allocation2 + $0xf8] sm:$0xff]
        %v3791 = vld [vmem:[#allocation2 + $0x100] sm:$0xff]
        %v3792 = vld [vmem:[#allocation2 + $0x108] sm:$0xff]
        %v3793 = vld [vmem:[#allocation2 + $0x110] sm:$0xff]
        %v3794 = vld [vmem:[#allocation2 + $0x118] sm:$0xff]
        %v3795 = vld [vmem:[#allocation2 + $0x120] sm:$0xff]
        %v3796 = vld [vmem:[#allocation2 + $0x128] sm:$0xff]
        %v3797 = vld [vmem:[#allocation2 + $0x130] sm:$0xff]
        %v3798 = vld [vmem:[#allocation2 + $0x138] sm:$0xff]
        %v3799 = vld [vmem:[#allocation2 + $0x140] sm:$0xff]
        %v3800 = vld [vmem:[#allocation2 + $0x148] sm:$0xff]
        %v3801 = vld [vmem:[#allocation2 + $0x150] sm:$0xff]
        %v3802 = vld [vmem:[#allocation2 + $0x158] sm:$0xff]
        %v3803 = vld [vmem:[#allocation2 + $0x160] sm:$0xff]
        %v3804 = vld [vmem:[#allocation2 + $0x168] sm:$0xff]
        %v3805 = vld [vmem:[#allocation2 + $0x170] sm:$0xff]
        %v3806 = vld [vmem:[#allocation2 + $0x178] sm:$0xff]
        %v3807 = vld [vmem:[#allocation2 + $0x180] sm:$0xff]
        %v3808 = vld [vmem:[#allocation2 + $0x188] sm:$0xff]
        %v3809 = vld [vmem:[#allocation2 + $0x190] sm:$0xff]
        %v3810 = vld [vmem:[#allocation2 + $0x198] sm:$0xff]
        %v3811 = vld [vmem:[#allocation2 + $0x1a0] sm:$0xff]
        %v3812 = vld [vmem:[#allocation2 + $0x1a8] sm:$0xff]
        %v3813 = vld [vmem:[#allocation2 + $0x1b0] sm:$0xff]
        %v3814 = vld [vmem:[#allocation2 + $0x1b8] sm:$0xff]
        %v3815 = vld [vmem:[#allocation2 + $0x1c0] sm:$0xff]
        %v3816 = vld [vmem:[#allocation2 + $0x1c8] sm:$0xff]
        %v3817 = vld [vmem:[#allocation2 + $0x1d0] sm:$0xff]
        %v3818 = vld [vmem:[#allocation2 + $0x1d8] sm:$0xff]
        %v3819 = vld [vmem:[#allocation2 + $0x1e0] sm:$0xff]
        %v3820 = vld [vmem:[#allocation2 + $0x1e8] sm:$0xff]
        %v3821 = vld [vmem:[#allocation2 + $0x1f0] sm:$0xff]
        %v3822 = vld [vmem:[#allocation2 + $0x1f8] sm:$0xff]
        %v3823 = vld [vmem:[#allocation2 + $0x200] sm:$0xff]
        %v3824 = vld [vmem:[#allocation2 + $0x208] sm:$0xff]
        %v3825 = vld [vmem:[#allocation2 + $0x210] sm:$0xff]
        %v3826 = vld [vmem:[#allocation2 + $0x218] sm:$0xff]
        %v3827 = vld [vmem:[#allocation2 + $0x220] sm:$0xff]
        %v3828 = vld [vmem:[#allocation2 + $0x228] sm:$0xff]
        %v3829 = vld [vmem:[#allocation2 + $0x230] sm:$0xff]
        %v3830 = vld [vmem:[#allocation2 + $0x238] sm:$0xff]
        %v3831 = vld [vmem:[#allocation2 + $0x240] sm:$0xff]
        %v3832 = vld [vmem:[#allocation2 + $0x248] sm:$0xff]
        %v3833 = vld [vmem:[#allocation2 + $0x250] sm:$0xff]
        %v3834 = vld [vmem:[#allocation2 + $0x258] sm:$0xff]
        %v3835 = vld [vmem:[#allocation2 + $0x260] sm:$0xff]
        %v3836 = vpack.c.bf16 %v3762, %v3762
        %v3837 = vpack.c.bf16 %v3763, %v3763
        %v3838 = vpack.c.bf16 %v3764, %v3764
        %v3839 = vpack.c.bf16 %v3765, %v3765
        %v3840 = vpack.c.bf16 %v3766, %v3766
        %v3841 = vpack.c.bf16 %v3767, %v3767
        %v3842 = vpack.c.bf16 %v3768, %v3768
        %v3843 = vpack.c.bf16 %v3769, %v3769
        %v3844 = vpack.c.bf16 %v3770, %v3770
        %v3845 = vpack.c.bf16 %v3771, %v3771
        %v3846 = vpack.c.bf16 %v3772, %v3772
        %v3847 = vpack.c.bf16 %v3773, %v3773
        %v3848 = vpack.c.bf16 %v3774, %v3774
        %v3849 = vpack.c.bf16 %v3775, %v3775
        %v3850 = vpack.c.bf16 %v3776, %v3776
        %v3851 = vpack.c.bf16 %v3777, %v3777
        %v3852 = vpack.c.bf16 %v3778, %v3778
        %v3853 = vpack.c.bf16 %v3779, %v3779
        %v3854 = vpack.c.bf16 %v3780, %v3780
        %v3855 = vpack.c.bf16 %v3781, %v3781
        %v3856 = vpack.c.bf16 %v3782, %v3782
        %v3857 = vpack.c.bf16 %v3783, %v3783
        %v3858 = vpack.c.bf16 %v3784, %v3784
        %v3859 = vpack.c.bf16 %v3785, %v3785
        %v3860 = vpack.c.bf16 %v3786, %v3786
        %v3861 = vpack.c.bf16 %v3787, %v3787
        %v3862 = vpack.c.bf16 %v3788, %v3788
        %v3863 = vpack.c.bf16 %v3789, %v3789
        %v3864 = vpack.c.bf16 %v3790, %v3790
        %v3865 = vpack.c.bf16 %v3791, %v3791
        %v3866 = vpack.c.bf16 %v3792, %v3792
        %v3867 = vpack.c.bf16 %v3793, %v3793
        %v3868 = vpack.c.bf16 %v3794, %v3794
        %v3869 = vpack.c.bf16 %v3795, %v3795
        %v3870 = vpack.c.bf16 %v3796, %v3796
        %v3871 = vpack.c.bf16 %v3797, %v3797
        %v3872 = vpack.c.bf16 %v3798, %v3798
        %v3873 = vpack.c.bf16 %v3799, %v3799
        %v3874 = vpack.c.bf16 %v3800, %v3800
        %v3875 = vpack.c.bf16 %v3801, %v3801
        %v3876 = vpack.c.bf16 %v3802, %v3802
        %v3877 = vpack.c.bf16 %v3803, %v3803
        %v3878 = vpack.c.bf16 %v3804, %v3804
        %v3879 = vpack.c.bf16 %v3805, %v3805
        %v3880 = vpack.c.bf16 %v3806, %v3806
        %v3881 = vpack.c.bf16 %v3807, %v3807
        %v3882 = vpack.c.bf16 %v3808, %v3808
        %v3883 = vpack.c.bf16 %v3809, %v3809
        %v3884 = vpack.c.bf16 %v3810, %v3810
        %v3885 = vpack.c.bf16 %v3811, %v3811
        %v3886 = vpack.c.bf16 %v3812, %v3812
        %v3887 = vpack.c.bf16 %v3813, %v3813
        %v3888 = vpack.c.bf16 %v3814, %v3814
        %v3889 = vpack.c.bf16 %v3815, %v3815
        %v3890 = vpack.c.bf16 %v3816, %v3816
        %v3891 = vpack.c.bf16 %v3817, %v3817
        %v3892 = vpack.c.bf16 %v3818, %v3818
        %v3893 = vpack.c.bf16 %v3819, %v3819
        %v3894 = vpack.c.bf16 %v3820, %v3820
        %v3895 = vpack.c.bf16 %v3821, %v3821
        %v3896 = vpack.c.bf16 %v3822, %v3822
        %v3897 = vpack.c.bf16 %v3823, %v3823
        %v3898 = vpack.c.bf16 %v3824, %v3824
        %v3899 = vpack.c.bf16 %v3825, %v3825
        %v3900 = vpack.c.bf16 %v3826, %v3826
        %v3901 = vpack.c.bf16 %v3827, %v3827
        %v3902 = vpack.c.bf16 %v3828, %v3828
        %v3903 = vpack.c.bf16 %v3829, %v3829
        %v3904 = vpack.c.bf16 %v3830, %v3830
        %v3905 = vpack.c.bf16 %v3831, %v3831
        %v3906 = vpack.c.bf16 %v3832, %v3832
        %v3907 = vpack.c.bf16 %v3833, %v3833
        %v3908 = vpack.c.bf16 %v3834, %v3834
        %v3909 = vpack.c.bf16 %v3835, %v3835
        %v3910 = vld [vmem:[%s2] sm:$0xf]
        %v3911 = vld [vmem:[%s2 + $0x4] sm:$0xf]
        %v3912 = vld [vmem:[%s2 + $0x8] sm:$0xf]
        %v3913 = vld [vmem:[%s2 + $0xc] sm:$0xf]
        %v3914 = vld [vmem:[%s2 + $0x10] sm:$0xf]
        %v3915 = vld [vmem:[%s2 + $0x14] sm:$0xf]
        %v3916 = vld [vmem:[%s2 + $0x18] sm:$0xf]
        %v3917 = vld [vmem:[%s2 + $0x1c] sm:$0xf]
        %v3918 = vld [vmem:[%s2 + $0x20] sm:$0xf]
        %v3919 = vld [vmem:[%s2 + $0x24] sm:$0xf]
        %v3920 = vld [vmem:[%s2 + $0x28] sm:$0xf]
        %v3921 = vld [vmem:[%s2 + $0x2c] sm:$0xf]
        %v3922 = vld [vmem:[%s2 + $0x30] sm:$0xf]
        %v3923 = vld [vmem:[%s2 + $0x34] sm:$0xf]
        %v3924 = vld [vmem:[%s2 + $0x38] sm:$0xf]
        %v3925 = vld [vmem:[%s2 + $0x3c] sm:$0xf]
        %s3926 = scalar_lea.vmem %s2, 64
        %v3927 = vld [vmem:[%s3926] sm:$0xf]
        %v3928 = vld [vmem:[%s3926 + $0x4] sm:$0xf]
        %v3929 = vld [vmem:[%s3926 + $0x8] sm:$0xf]
        %v3930 = vld [vmem:[%s3926 + $0xc] sm:$0xf]
        %v3931 = vld [vmem:[%s3926 + $0x10] sm:$0xf]
        %v3932 = vld [vmem:[%s3926 + $0x14] sm:$0xf]
        %v3933 = vld [vmem:[%s3926 + $0x18] sm:$0xf]
        %v3934 = vld [vmem:[%s3926 + $0x1c] sm:$0xf]
        %v3935 = vld [vmem:[%s3926 + $0x20] sm:$0xf]
        %v3936 = vld [vmem:[%s3926 + $0x24] sm:$0xf]
        %v3937 = vld [vmem:[%s3926 + $0x28] sm:$0xf]
        %v3938 = vld [vmem:[%s3926 + $0x2c] sm:$0xf]
        %v3939 = vld [vmem:[%s3926 + $0x30] sm:$0xf]
        %v3940 = vld [vmem:[%s3926 + $0x34] sm:$0xf]
        %v3941 = vld [vmem:[%s3926 + $0x38] sm:$0xf]
        %v3942 = vld [vmem:[%s3926 + $0x3c] sm:$0xf]
        %v4007 = vunpack.c.l.b16 %v3837
        %v4008 = vunpack.c.l.b16 %v3838
        %v4009 = vunpack.c.l.b16 %v3839
        %v4010 = vunpack.c.l.b16 %v3840
        %v4011 = vunpack.c.l.b16 %v3841
        %v4012 = vunpack.c.l.b16 %v3842
        %v4013 = vunpack.c.l.b16 %v3843
        %v4014 = vunpack.c.l.b16 %v3844
        %v4015 = vunpack.c.l.b16 %v3845
        %v4016 = vunpack.c.l.b16 %v3846
        %v4017 = vunpack.c.l.b16 %v3847
        %v4018 = vunpack.c.l.b16 %v3848
        %v4019 = vunpack.c.l.b16 %v3849
        %v4020 = vunpack.c.l.b16 %v3850
        %v4021 = vunpack.c.l.b16 %v3851
        %v4022 = vunpack.c.l.b16 %v3852
        %v4023 = vunpack.c.l.b16 %v3853
        %v4024 = vunpack.c.l.b16 %v3854
        %v4025 = vunpack.c.l.b16 %v3855
        %v4026 = vunpack.c.l.b16 %v3856
        %v4027 = vunpack.c.l.b16 %v3857
        %v4028 = vunpack.c.l.b16 %v3858
        %v4029 = vunpack.c.l.b16 %v3859
        %v4030 = vunpack.c.l.b16 %v3860
        %v4031 = vunpack.c.l.b16 %v3861
        %v4032 = vunpack.c.l.b16 %v3862
        %v4033 = vunpack.c.l.b16 %v3863
        %v4034 = vunpack.c.l.b16 %v3864
        %v4035 = vunpack.c.l.b16 %v3865
        %v4036 = vunpack.c.l.b16 %v3866
        %v4037 = vunpack.c.l.b16 %v3867
        %v4038 = vunpack.c.l.b16 %v3868
        %v4039 = vunpack.c.l.b16 %v3869
        %v4040 = vunpack.c.l.b16 %v3870
        %v4041 = vunpack.c.l.b16 %v3871
        %v4042 = vunpack.c.l.b16 %v3872
        %v4043 = vunpack.c.l.b16 %v3873
        %v4044 = vunpack.c.l.b16 %v3874
        %v4045 = vunpack.c.l.b16 %v3875
        %v4046 = vunpack.c.l.b16 %v3876
        %v4047 = vunpack.c.l.b16 %v3877
        %v4048 = vunpack.c.l.b16 %v3878
        %v4049 = vunpack.c.l.b16 %v3879
        %v4050 = vunpack.c.l.b16 %v3880
        %v4051 = vunpack.c.l.b16 %v3881
        %v4052 = vunpack.c.l.b16 %v3882
        %v4053 = vunpack.c.l.b16 %v3883
        %v4054 = vunpack.c.l.b16 %v3884
        %v4055 = vunpack.c.l.b16 %v3885
        %v4056 = vunpack.c.l.b16 %v3886
        %v4057 = vunpack.c.l.b16 %v3887
        %v4058 = vunpack.c.l.b16 %v3888
        %v4059 = vunpack.c.l.b16 %v3889
        %v4060 = vunpack.c.l.b16 %v3890
        %v4061 = vunpack.c.l.b16 %v3891
        %v4062 = vunpack.c.l.b16 %v3892
        %v4063 = vunpack.c.l.b16 %v3893
        %v4064 = vunpack.c.l.b16 %v3894
        %v4065 = vunpack.c.l.b16 %v3895
        %v4066 = vunpack.c.l.b16 %v3896
        %v4067 = vunpack.c.l.b16 %v3897
        %v4068 = vunpack.c.l.b16 %v3898
        %v4069 = vunpack.c.l.b16 %v3899
        %v4070 = vunpack.c.l.b16 %v3900
        %v4071 = vpack.c.b16 %v4008, %v4007
        %v4072 = vpack.c.b16 %v4010, %v4009
        %v4073 = vpack.c.b16 %v4012, %v4011
        %v4074 = vpack.c.b16 %v4014, %v4013
        %v4075 = vpack.c.b16 %v4016, %v4015
        %v4076 = vpack.c.b16 %v4018, %v4017
        %v4077 = vpack.c.b16 %v4020, %v4019
        %v4078 = vpack.c.b16 %v4022, %v4021
        %v4079 = vpack.c.b16 %v4024, %v4023
        %v4080 = vpack.c.b16 %v4026, %v4025
        %v4081 = vpack.c.b16 %v4028, %v4027
        %v4082 = vpack.c.b16 %v4030, %v4029
        %v4083 = vpack.c.b16 %v4032, %v4031
        %v4084 = vpack.c.b16 %v4034, %v4033
        %v4085 = vpack.c.b16 %v4036, %v4035
        %v4086 = vpack.c.b16 %v4038, %v4037
        %v4087 = vpack.c.b16 %v4040, %v4039
        %v4088 = vpack.c.b16 %v4042, %v4041
        %v4089 = vpack.c.b16 %v4044, %v4043
        %v4090 = vpack.c.b16 %v4046, %v4045
        %v4091 = vpack.c.b16 %v4048, %v4047
        %v4092 = vpack.c.b16 %v4050, %v4049
        %v4093 = vpack.c.b16 %v4052, %v4051
        %v4094 = vpack.c.b16 %v4054, %v4053
        %v4095 = vpack.c.b16 %v4056, %v4055
        %v4096 = vpack.c.b16 %v4058, %v4057
        %v4097 = vpack.c.b16 %v4060, %v4059
        %v4098 = vpack.c.b16 %v4062, %v4061
        %v4099 = vpack.c.b16 %v4064, %v4063
        %v4100 = vpack.c.b16 %v4066, %v4065
        %v4101 = vpack.c.b16 %v4068, %v4067
        %v4102 = vpack.c.b16 %v4070, %v4069
        %v4151 = vunpack.c.l.b16 %v3927
        %v4152 = vunpack.c.l.b16 %v3928
        %v4153 = vunpack.c.l.b16 %v3929
        %v4154 = vunpack.c.l.b16 %v3930
        %v4155 = vunpack.c.l.b16 %v3931
        %v4156 = vunpack.c.l.b16 %v3932
        %v4157 = vunpack.c.l.b16 %v3933
        %v4158 = vunpack.c.l.b16 %v3934
        %v4159 = vunpack.c.l.b16 %v3935
        %v4160 = vunpack.c.l.b16 %v3936
        %v4161 = vunpack.c.l.b16 %v3937
        %v4162 = vunpack.c.l.b16 %v3938
        %v4163 = vunpack.c.l.b16 %v3939
        %v4164 = vunpack.c.l.b16 %v3940
        %v4165 = vunpack.c.l.b16 %v3941
        %v4166 = vunpack.c.l.b16 %v3942
        %v4167 = vpack.c.b16 %v4152, %v4151
        %v4168 = vpack.c.b16 %v4154, %v4153
        %v4169 = vpack.c.b16 %v4156, %v4155
        %v4170 = vpack.c.b16 %v4158, %v4157
        %v4171 = vpack.c.b16 %v4160, %v4159
        %v4172 = vpack.c.b16 %v4162, %v4161
        %v4173 = vpack.c.b16 %v4164, %v4163
        %v4174 = vpack.c.b16 %v4166, %v4165
        %4183 = vmatpush.bf16.msra.mxu0 %v4174
        %4184 = vmatpush.bf16.msra.mxu0 %v4173
        %4185 = vmatpush.bf16.msra.mxu0 %v4172
        %4186 = vmatpush.bf16.msra.mxu0 %v4171
        %4187 = vmatpush.bf16.msra.mxu0 %v4170
        %4188 = vmatpush.bf16.msra.mxu0 %v4169
        %4189 = vmatpush.bf16.msra.mxu0 %v4168
        %4190 = vmatpush.bf16.msra.mxu0 %v4167
        %4191 = vmatmul.bf16.gmra.mxu0 %v4071
        %v4192 = vpop.f32.mrf.mxu0
        %v4193 = vadd.f32 0.0, %v4192
        %v4194 = vpop.f32.mrf.mxu0
        %v4195 = vadd.f32 0.0, %v4194
        %4196 = vmatmul.bf16.gmra.mxu0 %v4072
        %v4197 = vpop.f32.mrf.mxu0
        %v4198 = vpop.f32.mrf.mxu0
        %4199 = vmatmul.bf16.gmra.mxu0 %v4073
        %v4200 = vpop.f32.mrf.mxu0
        %v4201 = vadd.f32 0.0, %v4200
        %v4202 = vpop.f32.mrf.mxu0
        %v4203 = vadd.f32 0.0, %v4202
        %4204 = vmatmul.bf16.gmra.mxu0 %v4074
        %v4205 = vpop.f32.mrf.mxu0
        %v4206 = vpop.f32.mrf.mxu0
        %4207 = vmatmul.bf16.gmra.mxu0 %v4075
        %v4208 = vpop.f32.mrf.mxu0
        %v4209 = vadd.f32 0.0, %v4208
        %v4210 = vpop.f32.mrf.mxu0
        %v4211 = vadd.f32 0.0, %v4210
        %4212 = vmatmul.bf16.gmra.mxu0 %v4076
        %v4213 = vpop.f32.mrf.mxu0
        %v4214 = vpop.f32.mrf.mxu0
        %4215 = vmatmul.bf16.gmra.mxu0 %v4077
        %v4216 = vpop.f32.mrf.mxu0
        %v4217 = vadd.f32 0.0, %v4216
        %v4218 = vpop.f32.mrf.mxu0
        %v4219 = vadd.f32 0.0, %v4218
        %4220 = vmatmul.bf16.gmra.mxu0 %v4078
        %v4221 = vpop.f32.mrf.mxu0
        %v4222 = vpop.f32.mrf.mxu0
        %4223 = vmatmul.bf16.gmra.mxu0 %v4079
        %v4224 = vpop.f32.mrf.mxu0
        %v4225 = vadd.f32 0.0, %v4224
        %v4226 = vpop.f32.mrf.mxu0
        %v4227 = vadd.f32 0.0, %v4226
        %4228 = vmatmul.bf16.gmra.mxu0 %v4080
        %v4229 = vpop.f32.mrf.mxu0
        %v4230 = vpop.f32.mrf.mxu0
        %4231 = vmatmul.bf16.gmra.mxu0 %v4081
        %v4232 = vpop.f32.mrf.mxu0
        %v4233 = vadd.f32 0.0, %v4232
        %v4234 = vpop.f32.mrf.mxu0
        %v4235 = vadd.f32 0.0, %v4234
        %4236 = vmatmul.bf16.gmra.mxu0 %v4082
        %v4237 = vpop.f32.mrf.mxu0
        %v4238 = vpop.f32.mrf.mxu0
        %4239 = vmatmul.bf16.gmra.mxu0 %v4083
        %v4240 = vpop.f32.mrf.mxu0
        %v4241 = vadd.f32 0.0, %v4240
        %v4242 = vpop.f32.mrf.mxu0
        %v4243 = vadd.f32 0.0, %v4242
        %4244 = vmatmul.bf16.gmra.mxu0 %v4084
        %v4245 = vpop.f32.mrf.mxu0
        %v4246 = vpop.f32.mrf.mxu0
        %4247 = vmatmul.bf16.gmra.mxu0 %v4085
        %v4248 = vpop.f32.mrf.mxu0
        %v4249 = vadd.f32 0.0, %v4248
        %v4250 = vpop.f32.mrf.mxu0
        %v4251 = vadd.f32 0.0, %v4250
        %4252 = vmatmul.bf16.gmra.mxu0 %v4086
        %v4253 = vpop.f32.mrf.mxu0
        %v4254 = vpop.f32.mrf.mxu0
        %4255 = vmatmul.bf16.gmra.mxu0 %v4087
        %v4256 = vpop.f32.mrf.mxu0
        %v4257 = vadd.f32 0.0, %v4256
        %v4258 = vpop.f32.mrf.mxu0
        %v4259 = vadd.f32 0.0, %v4258
        %4260 = vmatmul.bf16.gmra.mxu0 %v4088
        %v4261 = vpop.f32.mrf.mxu0
        %v4262 = vpop.f32.mrf.mxu0
        %4263 = vmatmul.bf16.gmra.mxu0 %v4089
        %v4264 = vpop.f32.mrf.mxu0
        %v4265 = vadd.f32 0.0, %v4264
        %v4266 = vpop.f32.mrf.mxu0
        %v4267 = vadd.f32 0.0, %v4266
        %4268 = vmatmul.bf16.gmra.mxu0 %v4090
        %v4269 = vpop.f32.mrf.mxu0
        %v4270 = vpop.f32.mrf.mxu0
        %4271 = vmatmul.bf16.gmra.mxu0 %v4091
        %v4272 = vpop.f32.mrf.mxu0
        %v4273 = vadd.f32 0.0, %v4272
        %v4274 = vpop.f32.mrf.mxu0
        %v4275 = vadd.f32 0.0, %v4274
        %4276 = vmatmul.bf16.gmra.mxu0 %v4092
        %v4277 = vpop.f32.mrf.mxu0
        %v4278 = vpop.f32.mrf.mxu0
        %4279 = vmatmul.bf16.gmra.mxu0 %v4093
        %v4280 = vpop.f32.mrf.mxu0
        %v4281 = vadd.f32 0.0, %v4280
        %v4282 = vpop.f32.mrf.mxu0
        %v4283 = vadd.f32 0.0, %v4282
        %4284 = vmatmul.bf16.gmra.mxu0 %v4094
        %v4285 = vpop.f32.mrf.mxu0
        %v4286 = vpop.f32.mrf.mxu0
        %4287 = vmatmul.bf16.gmra.mxu0 %v4095
        %v4288 = vpop.f32.mrf.mxu0
        %v4289 = vadd.f32 0.0, %v4288
        %v4290 = vpop.f32.mrf.mxu0
        %v4291 = vadd.f32 0.0, %v4290
        %4292 = vmatmul.bf16.gmra.mxu0 %v4096
        %v4293 = vpop.f32.mrf.mxu0
        %v4294 = vpop.f32.mrf.mxu0
        %4295 = vmatmul.bf16.gmra.mxu0 %v4097
        %v4296 = vpop.f32.mrf.mxu0
        %v4297 = vadd.f32 0.0, %v4296
        %v4298 = vpop.f32.mrf.mxu0
        %v4299 = vadd.f32 0.0, %v4298
        %4300 = vmatmul.bf16.gmra.mxu0 %v4098
        %v4301 = vpop.f32.mrf.mxu0
        %v4302 = vpop.f32.mrf.mxu0
        %4303 = vmatmul.bf16.gmra.mxu0 %v4099
        %v4304 = vpop.f32.mrf.mxu0
        %v4305 = vadd.f32 0.0, %v4304
        %v4306 = vpop.f32.mrf.mxu0
        %v4307 = vadd.f32 0.0, %v4306
        %4308 = vmatmul.bf16.gmra.mxu0 %v4100
        %v4309 = vpop.f32.mrf.mxu0
        %v4310 = vpop.f32.mrf.mxu0
        %4311 = vmatmul.bf16.gmra.mxu0 %v4101
        %v4312 = vpop.f32.mrf.mxu0
        %v4313 = vadd.f32 0.0, %v4312
        %v4314 = vpop.f32.mrf.mxu0
        %v4315 = vadd.f32 0.0, %v4314
        %4316 = vmatmul.bf16.gmra.mxu0 %v4102
        %v4317 = vpop.f32.mrf.mxu0
        %v4318 = vpop.f32.mrf.mxu0
        %4319 = vdwg.mxu0
        %v4321 = vunpack.c.l.b16 %v3836
        %v4322 = vpack.c.b16 %v4007, %v4321
        %v4323 = vpack.c.b16 %v4009, %v4008
        %v4324 = vpack.c.b16 %v4011, %v4010
        %v4325 = vpack.c.b16 %v4013, %v4012
        %v4326 = vpack.c.b16 %v4015, %v4014
        %v4327 = vpack.c.b16 %v4017, %v4016
        %v4328 = vpack.c.b16 %v4019, %v4018
        %v4329 = vpack.c.b16 %v4021, %v4020
        %v4330 = vpack.c.b16 %v4023, %v4022
        %v4331 = vpack.c.b16 %v4025, %v4024
        %v4332 = vpack.c.b16 %v4027, %v4026
        %v4333 = vpack.c.b16 %v4029, %v4028
        %v4334 = vpack.c.b16 %v4031, %v4030
        %v4335 = vpack.c.b16 %v4033, %v4032
        %v4336 = vpack.c.b16 %v4035, %v4034
        %v4337 = vpack.c.b16 %v4037, %v4036
        %v4338 = vpack.c.b16 %v4039, %v4038
        %v4339 = vpack.c.b16 %v4041, %v4040
        %v4340 = vpack.c.b16 %v4043, %v4042
        %v4341 = vpack.c.b16 %v4045, %v4044
        %v4342 = vpack.c.b16 %v4047, %v4046
        %v4343 = vpack.c.b16 %v4049, %v4048
        %v4344 = vpack.c.b16 %v4051, %v4050
        %v4345 = vpack.c.b16 %v4053, %v4052
        %v4346 = vpack.c.b16 %v4055, %v4054
        %v4347 = vpack.c.b16 %v4057, %v4056
        %v4348 = vpack.c.b16 %v4059, %v4058
        %v4349 = vpack.c.b16 %v4061, %v4060
        %v4350 = vpack.c.b16 %v4063, %v4062
        %v4351 = vpack.c.b16 %v4065, %v4064
        %v4352 = vpack.c.b16 %v4067, %v4066
        %v4353 = vpack.c.b16 %v4069, %v4068
        %v4354 = vpack.c.b16 %v4070, %v4070
        %v4356 = vshrl.u32 %v4322, 16
        %v4358 = vrot.slane %v4356, 3
        %v4359 = vshll.u32 %v4322, 16
        %v4361 = vrot.slane %v4359, 4
        %v4362 = vor.u32 %v4358, %v4361
        %v4364 = vshrl.u32 %v4323, 16
        %v4366 = vrot.slane %v4364, 3
        %v4367 = vshll.u32 %v4323, 16
        %v4369 = vrot.slane %v4367, 4
        %v4370 = vor.u32 %v4366, %v4369
        %v4371 = vsel %vm1038, %v4362, %v4370
        %v4373 = vshrl.u32 %v4324, 16
        %v4375 = vrot.slane %v4373, 3
        %v4376 = vshll.u32 %v4324, 16
        %v4378 = vrot.slane %v4376, 4
        %v4379 = vor.u32 %v4375, %v4378
        %v4380 = vsel %vm1038, %v4370, %v4379
        %v4382 = vshrl.u32 %v4325, 16
        %v4384 = vrot.slane %v4382, 3
        %v4385 = vshll.u32 %v4325, 16
        %v4387 = vrot.slane %v4385, 4
        %v4388 = vor.u32 %v4384, %v4387
        %v4389 = vsel %vm1038, %v4379, %v4388
        %v4391 = vshrl.u32 %v4326, 16
        %v4393 = vrot.slane %v4391, 3
        %v4394 = vshll.u32 %v4326, 16
        %v4396 = vrot.slane %v4394, 4
        %v4397 = vor.u32 %v4393, %v4396
        %v4398 = vsel %vm1038, %v4388, %v4397
        %v4400 = vshrl.u32 %v4327, 16
        %v4402 = vrot.slane %v4400, 3
        %v4403 = vshll.u32 %v4327, 16
        %v4405 = vrot.slane %v4403, 4
        %v4406 = vor.u32 %v4402, %v4405
        %v4407 = vsel %vm1038, %v4397, %v4406
        %v4409 = vshrl.u32 %v4328, 16
        %v4411 = vrot.slane %v4409, 3
        %v4412 = vshll.u32 %v4328, 16
        %v4414 = vrot.slane %v4412, 4
        %v4415 = vor.u32 %v4411, %v4414
        %v4416 = vsel %vm1038, %v4406, %v4415
        %v4418 = vshrl.u32 %v4329, 16
        %v4420 = vrot.slane %v4418, 3
        %v4421 = vshll.u32 %v4329, 16
        %v4423 = vrot.slane %v4421, 4
        %v4424 = vor.u32 %v4420, %v4423
        %v4425 = vsel %vm1038, %v4415, %v4424
        %v4427 = vshrl.u32 %v4330, 16
        %v4429 = vrot.slane %v4427, 3
        %v4430 = vshll.u32 %v4330, 16
        %v4432 = vrot.slane %v4430, 4
        %v4433 = vor.u32 %v4429, %v4432
        %v4434 = vsel %vm1038, %v4424, %v4433
        %v4436 = vshrl.u32 %v4331, 16
        %v4438 = vrot.slane %v4436, 3
        %v4439 = vshll.u32 %v4331, 16
        %v4441 = vrot.slane %v4439, 4
        %v4442 = vor.u32 %v4438, %v4441
        %v4443 = vsel %vm1038, %v4433, %v4442
        %v4445 = vshrl.u32 %v4332, 16
        %v4447 = vrot.slane %v4445, 3
        %v4448 = vshll.u32 %v4332, 16
        %v4450 = vrot.slane %v4448, 4
        %v4451 = vor.u32 %v4447, %v4450
        %v4452 = vsel %vm1038, %v4442, %v4451
        %v4454 = vshrl.u32 %v4333, 16
        %v4456 = vrot.slane %v4454, 3
        %v4457 = vshll.u32 %v4333, 16
        %v4459 = vrot.slane %v4457, 4
        %v4460 = vor.u32 %v4456, %v4459
        %v4461 = vsel %vm1038, %v4451, %v4460
        %v4463 = vshrl.u32 %v4334, 16
        %v4465 = vrot.slane %v4463, 3
        %v4466 = vshll.u32 %v4334, 16
        %v4468 = vrot.slane %v4466, 4
        %v4469 = vor.u32 %v4465, %v4468
        %v4470 = vsel %vm1038, %v4460, %v4469
        %v4472 = vshrl.u32 %v4335, 16
        %v4474 = vrot.slane %v4472, 3
        %v4475 = vshll.u32 %v4335, 16
        %v4477 = vrot.slane %v4475, 4
        %v4478 = vor.u32 %v4474, %v4477
        %v4479 = vsel %vm1038, %v4469, %v4478
        %v4481 = vshrl.u32 %v4336, 16
        %v4483 = vrot.slane %v4481, 3
        %v4484 = vshll.u32 %v4336, 16
        %v4486 = vrot.slane %v4484, 4
        %v4487 = vor.u32 %v4483, %v4486
        %v4488 = vsel %vm1038, %v4478, %v4487
        %v4490 = vshrl.u32 %v4337, 16
        %v4492 = vrot.slane %v4490, 3
        %v4493 = vshll.u32 %v4337, 16
        %v4495 = vrot.slane %v4493, 4
        %v4496 = vor.u32 %v4492, %v4495
        %v4497 = vsel %vm1038, %v4487, %v4496
        %v4499 = vshrl.u32 %v4338, 16
        %v4501 = vrot.slane %v4499, 3
        %v4502 = vshll.u32 %v4338, 16
        %v4504 = vrot.slane %v4502, 4
        %v4505 = vor.u32 %v4501, %v4504
        %v4506 = vsel %vm1038, %v4496, %v4505
        %v4508 = vshrl.u32 %v4339, 16
        %v4510 = vrot.slane %v4508, 3
        %v4511 = vshll.u32 %v4339, 16
        %v4513 = vrot.slane %v4511, 4
        %v4514 = vor.u32 %v4510, %v4513
        %v4515 = vsel %vm1038, %v4505, %v4514
        %v4517 = vshrl.u32 %v4340, 16
        %v4519 = vrot.slane %v4517, 3
        %v4520 = vshll.u32 %v4340, 16
        %v4522 = vrot.slane %v4520, 4
        %v4523 = vor.u32 %v4519, %v4522
        %v4524 = vsel %vm1038, %v4514, %v4523
        %v4526 = vshrl.u32 %v4341, 16
        %v4528 = vrot.slane %v4526, 3
        %v4529 = vshll.u32 %v4341, 16
        %v4531 = vrot.slane %v4529, 4
        %v4532 = vor.u32 %v4528, %v4531
        %v4533 = vsel %vm1038, %v4523, %v4532
        %v4535 = vshrl.u32 %v4342, 16
        %v4537 = vrot.slane %v4535, 3
        %v4538 = vshll.u32 %v4342, 16
        %v4540 = vrot.slane %v4538, 4
        %v4541 = vor.u32 %v4537, %v4540
        %v4542 = vsel %vm1038, %v4532, %v4541
        %v4544 = vshrl.u32 %v4343, 16
        %v4546 = vrot.slane %v4544, 3
        %v4547 = vshll.u32 %v4343, 16
        %v4549 = vrot.slane %v4547, 4
        %v4550 = vor.u32 %v4546, %v4549
        %v4551 = vsel %vm1038, %v4541, %v4550
        %v4553 = vshrl.u32 %v4344, 16
        %v4555 = vrot.slane %v4553, 3
        %v4556 = vshll.u32 %v4344, 16
        %v4558 = vrot.slane %v4556, 4
        %v4559 = vor.u32 %v4555, %v4558
        %v4560 = vsel %vm1038, %v4550, %v4559
        %v4562 = vshrl.u32 %v4345, 16
        %v4564 = vrot.slane %v4562, 3
        %v4565 = vshll.u32 %v4345, 16
        %v4567 = vrot.slane %v4565, 4
        %v4568 = vor.u32 %v4564, %v4567
        %v4569 = vsel %vm1038, %v4559, %v4568
        %v4571 = vshrl.u32 %v4346, 16
        %v4573 = vrot.slane %v4571, 3
        %v4574 = vshll.u32 %v4346, 16
        %v4576 = vrot.slane %v4574, 4
        %v4577 = vor.u32 %v4573, %v4576
        %v4578 = vsel %vm1038, %v4568, %v4577
        %v4580 = vshrl.u32 %v4347, 16
        %v4582 = vrot.slane %v4580, 3
        %v4583 = vshll.u32 %v4347, 16
        %v4585 = vrot.slane %v4583, 4
        %v4586 = vor.u32 %v4582, %v4585
        %v4587 = vsel %vm1038, %v4577, %v4586
        %v4589 = vshrl.u32 %v4348, 16
        %v4591 = vrot.slane %v4589, 3
        %v4592 = vshll.u32 %v4348, 16
        %v4594 = vrot.slane %v4592, 4
        %v4595 = vor.u32 %v4591, %v4594
        %v4596 = vsel %vm1038, %v4586, %v4595
        %v4598 = vshrl.u32 %v4349, 16
        %v4600 = vrot.slane %v4598, 3
        %v4601 = vshll.u32 %v4349, 16
        %v4603 = vrot.slane %v4601, 4
        %v4604 = vor.u32 %v4600, %v4603
        %v4605 = vsel %vm1038, %v4595, %v4604
        %v4607 = vshrl.u32 %v4350, 16
        %v4609 = vrot.slane %v4607, 3
        %v4610 = vshll.u32 %v4350, 16
        %v4612 = vrot.slane %v4610, 4
        %v4613 = vor.u32 %v4609, %v4612
        %v4614 = vsel %vm1038, %v4604, %v4613
        %v4616 = vshrl.u32 %v4351, 16
        %v4618 = vrot.slane %v4616, 3
        %v4619 = vshll.u32 %v4351, 16
        %v4621 = vrot.slane %v4619, 4
        %v4622 = vor.u32 %v4618, %v4621
        %v4623 = vsel %vm1038, %v4613, %v4622
        %v4625 = vshrl.u32 %v4352, 16
        %v4627 = vrot.slane %v4625, 3
        %v4628 = vshll.u32 %v4352, 16
        %v4630 = vrot.slane %v4628, 4
        %v4631 = vor.u32 %v4627, %v4630
        %v4632 = vsel %vm1038, %v4622, %v4631
        %v4634 = vshrl.u32 %v4353, 16
        %v4636 = vrot.slane %v4634, 3
        %v4637 = vshll.u32 %v4353, 16
        %v4639 = vrot.slane %v4637, 4
        %v4640 = vor.u32 %v4636, %v4639
        %v4641 = vsel %vm1038, %v4631, %v4640
        %v4643 = vshrl.u32 %v4354, 16
        %v4645 = vrot.slane %v4643, 3
        %v4646 = vshll.u32 %v4354, 16
        %v4648 = vrot.slane %v4646, 4
        %v4649 = vor.u32 %v4645, %v4648
        %v4650 = vsel %vm1038, %v4640, %v4649
        %v4699 = vunpack.c.l.b16 %v3910
        %v4700 = vunpack.c.l.b16 %v3911
        %v4701 = vunpack.c.l.b16 %v3912
        %v4702 = vunpack.c.l.b16 %v3913
        %v4703 = vunpack.c.l.b16 %v3914
        %v4704 = vunpack.c.l.b16 %v3915
        %v4705 = vunpack.c.l.b16 %v3916
        %v4706 = vunpack.c.l.b16 %v3917
        %v4707 = vunpack.c.l.b16 %v3918
        %v4708 = vunpack.c.l.b16 %v3919
        %v4709 = vunpack.c.l.b16 %v3920
        %v4710 = vunpack.c.l.b16 %v3921
        %v4711 = vunpack.c.l.b16 %v3922
        %v4712 = vunpack.c.l.b16 %v3923
        %v4713 = vunpack.c.l.b16 %v3924
        %v4714 = vunpack.c.l.b16 %v3925
        %v4715 = vpack.c.b16 %v4700, %v4699
        %v4716 = vpack.c.b16 %v4702, %v4701
        %v4717 = vpack.c.b16 %v4704, %v4703
        %v4718 = vpack.c.b16 %v4706, %v4705
        %v4719 = vpack.c.b16 %v4708, %v4707
        %v4720 = vpack.c.b16 %v4710, %v4709
        %v4721 = vpack.c.b16 %v4712, %v4711
        %v4722 = vpack.c.b16 %v4714, %v4713
        %4731 = vmatpush.bf16.msra.mxu0 %v4722
        %4732 = vmatpush.bf16.msra.mxu0 %v4721
        %4733 = vmatpush.bf16.msra.mxu0 %v4720
        %4734 = vmatpush.bf16.msra.mxu0 %v4719
        %4735 = vmatpush.bf16.msra.mxu0 %v4718
        %4736 = vmatpush.bf16.msra.mxu0 %v4717
        %4737 = vmatpush.bf16.msra.mxu0 %v4716
        %4738 = vmatpush.bf16.msra.mxu0 %v4715
        %4739 = vmatmul.bf16.gmra.mxu0 %v4371
        %v4740 = vpop.f32.mrf.mxu0
        %v4741 = vadd.f32 %v4193, %v4740
        %v4742 = vpop.f32.mrf.mxu0
        %v4743 = vadd.f32 %v4195, %v4742
        %4744 = vmatmul.bf16.gmra.mxu0 %v4380
        %v4745 = vpop.f32.mrf.mxu0
        %v4746 = vpop.f32.mrf.mxu0
        %4747 = vmatmul.bf16.gmra.mxu0 %v4389
        %v4748 = vpop.f32.mrf.mxu0
        %v4749 = vadd.f32 %v4201, %v4748
        %v4750 = vpop.f32.mrf.mxu0
        %v4751 = vadd.f32 %v4203, %v4750
        %4752 = vmatmul.bf16.gmra.mxu0 %v4398
        %v4753 = vpop.f32.mrf.mxu0
        %v4754 = vpop.f32.mrf.mxu0
        %4755 = vmatmul.bf16.gmra.mxu0 %v4407
        %v4756 = vpop.f32.mrf.mxu0
        %v4757 = vadd.f32 %v4209, %v4756
        %v4758 = vpop.f32.mrf.mxu0
        %v4759 = vadd.f32 %v4211, %v4758
        %4760 = vmatmul.bf16.gmra.mxu0 %v4416
        %v4761 = vpop.f32.mrf.mxu0
        %v4762 = vpop.f32.mrf.mxu0
        %4763 = vmatmul.bf16.gmra.mxu0 %v4425
        %v4764 = vpop.f32.mrf.mxu0
        %v4765 = vadd.f32 %v4217, %v4764
        %v4766 = vpop.f32.mrf.mxu0
        %v4767 = vadd.f32 %v4219, %v4766
        %4768 = vmatmul.bf16.gmra.mxu0 %v4434
        %v4769 = vpop.f32.mrf.mxu0
        %v4770 = vpop.f32.mrf.mxu0
        %4771 = vmatmul.bf16.gmra.mxu0 %v4443
        %v4772 = vpop.f32.mrf.mxu0
        %v4773 = vadd.f32 %v4225, %v4772
        %v4774 = vpop.f32.mrf.mxu0
        %v4775 = vadd.f32 %v4227, %v4774
        %4776 = vmatmul.bf16.gmra.mxu0 %v4452
        %v4777 = vpop.f32.mrf.mxu0
        %v4778 = vpop.f32.mrf.mxu0
        %4779 = vmatmul.bf16.gmra.mxu0 %v4461
        %v4780 = vpop.f32.mrf.mxu0
        %v4781 = vadd.f32 %v4233, %v4780
        %v4782 = vpop.f32.mrf.mxu0
        %v4783 = vadd.f32 %v4235, %v4782
        %4784 = vmatmul.bf16.gmra.mxu0 %v4470
        %v4785 = vpop.f32.mrf.mxu0
        %v4786 = vpop.f32.mrf.mxu0
        %4787 = vmatmul.bf16.gmra.mxu0 %v4479
        %v4788 = vpop.f32.mrf.mxu0
        %v4789 = vadd.f32 %v4241, %v4788
        %v4790 = vpop.f32.mrf.mxu0
        %v4791 = vadd.f32 %v4243, %v4790
        %4792 = vmatmul.bf16.gmra.mxu0 %v4488
        %v4793 = vpop.f32.mrf.mxu0
        %v4794 = vpop.f32.mrf.mxu0
        %4795 = vmatmul.bf16.gmra.mxu0 %v4497
        %v4796 = vpop.f32.mrf.mxu0
        %v4797 = vadd.f32 %v4249, %v4796
        %v4798 = vpop.f32.mrf.mxu0
        %v4799 = vadd.f32 %v4251, %v4798
        %4800 = vmatmul.bf16.gmra.mxu0 %v4506
        %v4801 = vpop.f32.mrf.mxu0
        %v4802 = vpop.f32.mrf.mxu0
        %4803 = vmatmul.bf16.gmra.mxu0 %v4515
        %v4804 = vpop.f32.mrf.mxu0
        %v4805 = vadd.f32 %v4257, %v4804
        %v4806 = vpop.f32.mrf.mxu0
        %v4807 = vadd.f32 %v4259, %v4806
        %4808 = vmatmul.bf16.gmra.mxu0 %v4524
        %v4809 = vpop.f32.mrf.mxu0
        %v4810 = vpop.f32.mrf.mxu0
        %4811 = vmatmul.bf16.gmra.mxu0 %v4533
        %v4812 = vpop.f32.mrf.mxu0
        %v4813 = vadd.f32 %v4265, %v4812
        %v4814 = vpop.f32.mrf.mxu0
        %v4815 = vadd.f32 %v4267, %v4814
        %4816 = vmatmul.bf16.gmra.mxu0 %v4542
        %v4817 = vpop.f32.mrf.mxu0
        %v4818 = vpop.f32.mrf.mxu0
        %4819 = vmatmul.bf16.gmra.mxu0 %v4551
        %v4820 = vpop.f32.mrf.mxu0
        %v4821 = vadd.f32 %v4273, %v4820
        %v4822 = vpop.f32.mrf.mxu0
        %v4823 = vadd.f32 %v4275, %v4822
        %4824 = vmatmul.bf16.gmra.mxu0 %v4560
        %v4825 = vpop.f32.mrf.mxu0
        %v4826 = vpop.f32.mrf.mxu0
        %4827 = vmatmul.bf16.gmra.mxu0 %v4569
        %v4828 = vpop.f32.mrf.mxu0
        %v4829 = vadd.f32 %v4281, %v4828
        %v4830 = vpop.f32.mrf.mxu0
        %v4831 = vadd.f32 %v4283, %v4830
        %4832 = vmatmul.bf16.gmra.mxu0 %v4578
        %v4833 = vpop.f32.mrf.mxu0
        %v4834 = vpop.f32.mrf.mxu0
        %4835 = vmatmul.bf16.gmra.mxu0 %v4587
        %v4836 = vpop.f32.mrf.mxu0
        %v4837 = vadd.f32 %v4289, %v4836
        %v4838 = vpop.f32.mrf.mxu0
        %v4839 = vadd.f32 %v4291, %v4838
        %4840 = vmatmul.bf16.gmra.mxu0 %v4596
        %v4841 = vpop.f32.mrf.mxu0
        %v4842 = vpop.f32.mrf.mxu0
        %4843 = vmatmul.bf16.gmra.mxu0 %v4605
        %v4844 = vpop.f32.mrf.mxu0
        %v4845 = vadd.f32 %v4297, %v4844
        %v4846 = vpop.f32.mrf.mxu0
        %v4847 = vadd.f32 %v4299, %v4846
        %4848 = vmatmul.bf16.gmra.mxu0 %v4614
        %v4849 = vpop.f32.mrf.mxu0
        %v4850 = vpop.f32.mrf.mxu0
        %4851 = vmatmul.bf16.gmra.mxu0 %v4623
        %v4852 = vpop.f32.mrf.mxu0
        %v4853 = vadd.f32 %v4305, %v4852
        %v4854 = vpop.f32.mrf.mxu0
        %v4855 = vadd.f32 %v4307, %v4854
        %4856 = vmatmul.bf16.gmra.mxu0 %v4632
        %v4857 = vpop.f32.mrf.mxu0
        %v4858 = vpop.f32.mrf.mxu0
        %4859 = vmatmul.bf16.gmra.mxu0 %v4641
        %v4860 = vpop.f32.mrf.mxu0
        %v4861 = vadd.f32 %v4313, %v4860
        %v4862 = vpop.f32.mrf.mxu0
        %v4863 = vadd.f32 %v4315, %v4862
        %4864 = vmatmul.bf16.gmra.mxu0 %v4650
        %v4865 = vpop.f32.mrf.mxu0
        %v4866 = vpop.f32.mrf.mxu0
        %4867 = vdwg.mxu0
        %s4868 = scalar_lea.vmem %s2, 128
        %v4869 = vld [vmem:[%s4868] sm:$0xf]
        %v4870 = vld [vmem:[%s4868 + $0x4] sm:$0xf]
        %v4871 = vld [vmem:[%s4868 + $0x8] sm:$0xf]
        %v4872 = vld [vmem:[%s4868 + $0xc] sm:$0xf]
        %v4873 = vld [vmem:[%s4868 + $0x10] sm:$0xf]
        %v4874 = vld [vmem:[%s4868 + $0x14] sm:$0xf]
        %v4875 = vld [vmem:[%s4868 + $0x18] sm:$0xf]
        %v4876 = vld [vmem:[%s4868 + $0x1c] sm:$0xf]
        %v4877 = vld [vmem:[%s4868 + $0x20] sm:$0xf]
        %v4878 = vld [vmem:[%s4868 + $0x24] sm:$0xf]
        %v4879 = vld [vmem:[%s4868 + $0x28] sm:$0xf]
        %v4880 = vld [vmem:[%s4868 + $0x2c] sm:$0xf]
        %v4881 = vld [vmem:[%s4868 + $0x30] sm:$0xf]
        %v4882 = vld [vmem:[%s4868 + $0x34] sm:$0xf]
        %v4883 = vld [vmem:[%s4868 + $0x38] sm:$0xf]
        %v4884 = vld [vmem:[%s4868 + $0x3c] sm:$0xf]
        %v4886 = vunpack.c.l.b16 %v3901
        %v4887 = vpack.c.b16 %v4886, %v4886
        %v4889 = vshrl.u32 %v4071, 16
        %v4891 = vshll.u32 %v4071, 16
        %v4893 = vrot.slane %v4891, 1
        %v4894 = vor.u32 %v4889, %v4893
        %v4896 = vshll.u32 %v4072, 16
        %v4898 = vrot.slane %v4896, 1
        %v4899 = vsel %vm1572, %v4894, %v4898
        %v4900 = vshrl.u32 %v4072, 16
        %v4902 = vor.u32 %v4900, %v4898
        %v4904 = vshll.u32 %v4073, 16
        %v4906 = vrot.slane %v4904, 1
        %v4907 = vsel %vm1572, %v4902, %v4906
        %v4908 = vshrl.u32 %v4073, 16
        %v4910 = vor.u32 %v4908, %v4906
        %v4912 = vshll.u32 %v4074, 16
        %v4914 = vrot.slane %v4912, 1
        %v4915 = vsel %vm1572, %v4910, %v4914
        %v4916 = vshrl.u32 %v4074, 16
        %v4918 = vor.u32 %v4916, %v4914
        %v4920 = vshll.u32 %v4075, 16
        %v4922 = vrot.slane %v4920, 1
        %v4923 = vsel %vm1572, %v4918, %v4922
        %v4924 = vshrl.u32 %v4075, 16
        %v4926 = vor.u32 %v4924, %v4922
        %v4928 = vshll.u32 %v4076, 16
        %v4930 = vrot.slane %v4928, 1
        %v4931 = vsel %vm1572, %v4926, %v4930
        %v4932 = vshrl.u32 %v4076, 16
        %v4934 = vor.u32 %v4932, %v4930
        %v4936 = vshll.u32 %v4077, 16
        %v4938 = vrot.slane %v4936, 1
        %v4939 = vsel %vm1572, %v4934, %v4938
        %v4940 = vshrl.u32 %v4077, 16
        %v4942 = vor.u32 %v4940, %v4938
        %v4944 = vshll.u32 %v4078, 16
        %v4946 = vrot.slane %v4944, 1
        %v4947 = vsel %vm1572, %v4942, %v4946
        %v4948 = vshrl.u32 %v4078, 16
        %v4950 = vor.u32 %v4948, %v4946
        %v4952 = vshll.u32 %v4079, 16
        %v4954 = vrot.slane %v4952, 1
        %v4955 = vsel %vm1572, %v4950, %v4954
        %v4956 = vshrl.u32 %v4079, 16
        %v4958 = vor.u32 %v4956, %v4954
        %v4960 = vshll.u32 %v4080, 16
        %v4962 = vrot.slane %v4960, 1
        %v4963 = vsel %vm1572, %v4958, %v4962
        %v4964 = vshrl.u32 %v4080, 16
        %v4966 = vor.u32 %v4964, %v4962
        %v4968 = vshll.u32 %v4081, 16
        %v4970 = vrot.slane %v4968, 1
        %v4971 = vsel %vm1572, %v4966, %v4970
        %v4972 = vshrl.u32 %v4081, 16
        %v4974 = vor.u32 %v4972, %v4970
        %v4976 = vshll.u32 %v4082, 16
        %v4978 = vrot.slane %v4976, 1
        %v4979 = vsel %vm1572, %v4974, %v4978
        %v4980 = vshrl.u32 %v4082, 16
        %v4982 = vor.u32 %v4980, %v4978
        %v4984 = vshll.u32 %v4083, 16
        %v4986 = vrot.slane %v4984, 1
        %v4987 = vsel %vm1572, %v4982, %v4986
        %v4988 = vshrl.u32 %v4083, 16
        %v4990 = vor.u32 %v4988, %v4986
        %v4992 = vshll.u32 %v4084, 16
        %v4994 = vrot.slane %v4992, 1
        %v4995 = vsel %vm1572, %v4990, %v4994
        %v4996 = vshrl.u32 %v4084, 16
        %v4998 = vor.u32 %v4996, %v4994
        %v5000 = vshll.u32 %v4085, 16
        %v5002 = vrot.slane %v5000, 1
        %v5003 = vsel %vm1572, %v4998, %v5002
        %v5004 = vshrl.u32 %v4085, 16
        %v5006 = vor.u32 %v5004, %v5002
        %v5008 = vshll.u32 %v4086, 16
        %v5010 = vrot.slane %v5008, 1
        %v5011 = vsel %vm1572, %v5006, %v5010
        %v5012 = vshrl.u32 %v4086, 16
        %v5014 = vor.u32 %v5012, %v5010
        %v5016 = vshll.u32 %v4087, 16
        %v5018 = vrot.slane %v5016, 1
        %v5019 = vsel %vm1572, %v5014, %v5018
        %v5020 = vshrl.u32 %v4087, 16
        %v5022 = vor.u32 %v5020, %v5018
        %v5024 = vshll.u32 %v4088, 16
        %v5026 = vrot.slane %v5024, 1
        %v5027 = vsel %vm1572, %v5022, %v5026
        %v5028 = vshrl.u32 %v4088, 16
        %v5030 = vor.u32 %v5028, %v5026
        %v5032 = vshll.u32 %v4089, 16
        %v5034 = vrot.slane %v5032, 1
        %v5035 = vsel %vm1572, %v5030, %v5034
        %v5036 = vshrl.u32 %v4089, 16
        %v5038 = vor.u32 %v5036, %v5034
        %v5040 = vshll.u32 %v4090, 16
        %v5042 = vrot.slane %v5040, 1
        %v5043 = vsel %vm1572, %v5038, %v5042
        %v5044 = vshrl.u32 %v4090, 16
        %v5046 = vor.u32 %v5044, %v5042
        %v5048 = vshll.u32 %v4091, 16
        %v5050 = vrot.slane %v5048, 1
        %v5051 = vsel %vm1572, %v5046, %v5050
        %v5052 = vshrl.u32 %v4091, 16
        %v5054 = vor.u32 %v5052, %v5050
        %v5056 = vshll.u32 %v4092, 16
        %v5058 = vrot.slane %v5056, 1
        %v5059 = vsel %vm1572, %v5054, %v5058
        %v5060 = vshrl.u32 %v4092, 16
        %v5062 = vor.u32 %v5060, %v5058
        %v5064 = vshll.u32 %v4093, 16
        %v5066 = vrot.slane %v5064, 1
        %v5067 = vsel %vm1572, %v5062, %v5066
        %v5068 = vshrl.u32 %v4093, 16
        %v5070 = vor.u32 %v5068, %v5066
        %v5072 = vshll.u32 %v4094, 16
        %v5074 = vrot.slane %v5072, 1
        %v5075 = vsel %vm1572, %v5070, %v5074
        %v5076 = vshrl.u32 %v4094, 16
        %v5078 = vor.u32 %v5076, %v5074
        %v5080 = vshll.u32 %v4095, 16
        %v5082 = vrot.slane %v5080, 1
        %v5083 = vsel %vm1572, %v5078, %v5082
        %v5084 = vshrl.u32 %v4095, 16
        %v5086 = vor.u32 %v5084, %v5082
        %v5088 = vshll.u32 %v4096, 16
        %v5090 = vrot.slane %v5088, 1
        %v5091 = vsel %vm1572, %v5086, %v5090
        %v5092 = vshrl.u32 %v4096, 16
        %v5094 = vor.u32 %v5092, %v5090
        %v5096 = vshll.u32 %v4097, 16
        %v5098 = vrot.slane %v5096, 1
        %v5099 = vsel %vm1572, %v5094, %v5098
        %v5100 = vshrl.u32 %v4097, 16
        %v5102 = vor.u32 %v5100, %v5098
        %v5104 = vshll.u32 %v4098, 16
        %v5106 = vrot.slane %v5104, 1
        %v5107 = vsel %vm1572, %v5102, %v5106
        %v5108 = vshrl.u32 %v4098, 16
        %v5110 = vor.u32 %v5108, %v5106
        %v5112 = vshll.u32 %v4099, 16
        %v5114 = vrot.slane %v5112, 1
        %v5115 = vsel %vm1572, %v5110, %v5114
        %v5116 = vshrl.u32 %v4099, 16
        %v5118 = vor.u32 %v5116, %v5114
        %v5120 = vshll.u32 %v4100, 16
        %v5122 = vrot.slane %v5120, 1
        %v5123 = vsel %vm1572, %v5118, %v5122
        %v5124 = vshrl.u32 %v4100, 16
        %v5126 = vor.u32 %v5124, %v5122
        %v5128 = vshll.u32 %v4101, 16
        %v5130 = vrot.slane %v5128, 1
        %v5131 = vsel %vm1572, %v5126, %v5130
        %v5132 = vshrl.u32 %v4101, 16
        %v5134 = vor.u32 %v5132, %v5130
        %v5136 = vshll.u32 %v4102, 16
        %v5138 = vrot.slane %v5136, 1
        %v5139 = vsel %vm1572, %v5134, %v5138
        %v5140 = vshrl.u32 %v4102, 16
        %v5142 = vor.u32 %v5140, %v5138
        %v5144 = vshll.u32 %v4887, 16
        %v5146 = vrot.slane %v5144, 1
        %v5147 = vsel %vm1572, %v5142, %v5146
        %v5196 = vunpack.c.l.b16 %v4869
        %v5197 = vunpack.c.l.b16 %v4870
        %v5198 = vunpack.c.l.b16 %v4871
        %v5199 = vunpack.c.l.b16 %v4872
        %v5200 = vunpack.c.l.b16 %v4873
        %v5201 = vunpack.c.l.b16 %v4874
        %v5202 = vunpack.c.l.b16 %v4875
        %v5203 = vunpack.c.l.b16 %v4876
        %v5204 = vunpack.c.l.b16 %v4877
        %v5205 = vunpack.c.l.b16 %v4878
        %v5206 = vunpack.c.l.b16 %v4879
        %v5207 = vunpack.c.l.b16 %v4880
        %v5208 = vunpack.c.l.b16 %v4881
        %v5209 = vunpack.c.l.b16 %v4882
        %v5210 = vunpack.c.l.b16 %v4883
        %v5211 = vunpack.c.l.b16 %v4884
        %v5212 = vpack.c.b16 %v5197, %v5196
        %v5213 = vpack.c.b16 %v5199, %v5198
        %v5214 = vpack.c.b16 %v5201, %v5200
        %v5215 = vpack.c.b16 %v5203, %v5202
        %v5216 = vpack.c.b16 %v5205, %v5204
        %v5217 = vpack.c.b16 %v5207, %v5206
        %v5218 = vpack.c.b16 %v5209, %v5208
        %v5219 = vpack.c.b16 %v5211, %v5210
        %5228 = vmatpush.bf16.msra.mxu0 %v5219
        %5229 = vmatpush.bf16.msra.mxu0 %v5218
        %5230 = vmatpush.bf16.msra.mxu0 %v5217
        %5231 = vmatpush.bf16.msra.mxu0 %v5216
        %5232 = vmatpush.bf16.msra.mxu0 %v5215
        %5233 = vmatpush.bf16.msra.mxu0 %v5214
        %5234 = vmatpush.bf16.msra.mxu0 %v5213
        %5235 = vmatpush.bf16.msra.mxu0 %v5212
        %5236 = vmatmul.bf16.gmra.mxu0 %v4899
        %v5237 = vpop.f32.mrf.mxu0
        %v5238 = vadd.f32 0.0, %v5237
        %v5239 = vpop.f32.mrf.mxu0
        %v5240 = vadd.f32 0.0, %v5239
        %5241 = vmatmul.bf16.gmra.mxu0 %v4907
        %v5242 = vpop.f32.mrf.mxu0
        %v5243 = vpop.f32.mrf.mxu0
        %5244 = vmatmul.bf16.gmra.mxu0 %v4915
        %v5245 = vpop.f32.mrf.mxu0
        %v5246 = vadd.f32 0.0, %v5245
        %v5247 = vpop.f32.mrf.mxu0
        %v5248 = vadd.f32 0.0, %v5247
        %5249 = vmatmul.bf16.gmra.mxu0 %v4923
        %v5250 = vpop.f32.mrf.mxu0
        %v5251 = vpop.f32.mrf.mxu0
        %5252 = vmatmul.bf16.gmra.mxu0 %v4931
        %v5253 = vpop.f32.mrf.mxu0
        %v5254 = vadd.f32 0.0, %v5253
        %v5255 = vpop.f32.mrf.mxu0
        %v5256 = vadd.f32 0.0, %v5255
        %5257 = vmatmul.bf16.gmra.mxu0 %v4939
        %v5258 = vpop.f32.mrf.mxu0
        %v5259 = vpop.f32.mrf.mxu0
        %5260 = vmatmul.bf16.gmra.mxu0 %v4947
        %v5261 = vpop.f32.mrf.mxu0
        %v5262 = vadd.f32 0.0, %v5261
        %v5263 = vpop.f32.mrf.mxu0
        %v5264 = vadd.f32 0.0, %v5263
        %5265 = vmatmul.bf16.gmra.mxu0 %v4955
        %v5266 = vpop.f32.mrf.mxu0
        %v5267 = vpop.f32.mrf.mxu0
        %5268 = vmatmul.bf16.gmra.mxu0 %v4963
        %v5269 = vpop.f32.mrf.mxu0
        %v5270 = vadd.f32 0.0, %v5269
        %v5271 = vpop.f32.mrf.mxu0
        %v5272 = vadd.f32 0.0, %v5271
        %5273 = vmatmul.bf16.gmra.mxu0 %v4971
        %v5274 = vpop.f32.mrf.mxu0
        %v5275 = vpop.f32.mrf.mxu0
        %5276 = vmatmul.bf16.gmra.mxu0 %v4979
        %v5277 = vpop.f32.mrf.mxu0
        %v5278 = vadd.f32 0.0, %v5277
        %v5279 = vpop.f32.mrf.mxu0
        %v5280 = vadd.f32 0.0, %v5279
        %5281 = vmatmul.bf16.gmra.mxu0 %v4987
        %v5282 = vpop.f32.mrf.mxu0
        %v5283 = vpop.f32.mrf.mxu0
        %5284 = vmatmul.bf16.gmra.mxu0 %v4995
        %v5285 = vpop.f32.mrf.mxu0
        %v5286 = vadd.f32 0.0, %v5285
        %v5287 = vpop.f32.mrf.mxu0
        %v5288 = vadd.f32 0.0, %v5287
        %5289 = vmatmul.bf16.gmra.mxu0 %v5003
        %v5290 = vpop.f32.mrf.mxu0
        %v5291 = vpop.f32.mrf.mxu0
        %5292 = vmatmul.bf16.gmra.mxu0 %v5011
        %v5293 = vpop.f32.mrf.mxu0
        %v5294 = vadd.f32 0.0, %v5293
        %v5295 = vpop.f32.mrf.mxu0
        %v5296 = vadd.f32 0.0, %v5295
        %5297 = vmatmul.bf16.gmra.mxu0 %v5019
        %v5298 = vpop.f32.mrf.mxu0
        %v5299 = vpop.f32.mrf.mxu0
        %5300 = vmatmul.bf16.gmra.mxu0 %v5027
        %v5301 = vpop.f32.mrf.mxu0
        %v5302 = vadd.f32 0.0, %v5301
        %v5303 = vpop.f32.mrf.mxu0
        %v5304 = vadd.f32 0.0, %v5303
        %5305 = vmatmul.bf16.gmra.mxu0 %v5035
        %v5306 = vpop.f32.mrf.mxu0
        %v5307 = vpop.f32.mrf.mxu0
        %5308 = vmatmul.bf16.gmra.mxu0 %v5043
        %v5309 = vpop.f32.mrf.mxu0
        %v5310 = vadd.f32 0.0, %v5309
        %v5311 = vpop.f32.mrf.mxu0
        %v5312 = vadd.f32 0.0, %v5311
        %5313 = vmatmul.bf16.gmra.mxu0 %v5051
        %v5314 = vpop.f32.mrf.mxu0
        %v5315 = vpop.f32.mrf.mxu0
        %5316 = vmatmul.bf16.gmra.mxu0 %v5059
        %v5317 = vpop.f32.mrf.mxu0
        %v5318 = vadd.f32 0.0, %v5317
        %v5319 = vpop.f32.mrf.mxu0
        %v5320 = vadd.f32 0.0, %v5319
        %5321 = vmatmul.bf16.gmra.mxu0 %v5067
        %v5322 = vpop.f32.mrf.mxu0
        %v5323 = vpop.f32.mrf.mxu0
        %5324 = vmatmul.bf16.gmra.mxu0 %v5075
        %v5325 = vpop.f32.mrf.mxu0
        %v5326 = vadd.f32 0.0, %v5325
        %v5327 = vpop.f32.mrf.mxu0
        %v5328 = vadd.f32 0.0, %v5327
        %5329 = vmatmul.bf16.gmra.mxu0 %v5083
        %v5330 = vpop.f32.mrf.mxu0
        %v5331 = vpop.f32.mrf.mxu0
        %5332 = vmatmul.bf16.gmra.mxu0 %v5091
        %v5333 = vpop.f32.mrf.mxu0
        %v5334 = vadd.f32 0.0, %v5333
        %v5335 = vpop.f32.mrf.mxu0
        %v5336 = vadd.f32 0.0, %v5335
        %5337 = vmatmul.bf16.gmra.mxu0 %v5099
        %v5338 = vpop.f32.mrf.mxu0
        %v5339 = vpop.f32.mrf.mxu0
        %5340 = vmatmul.bf16.gmra.mxu0 %v5107
        %v5341 = vpop.f32.mrf.mxu0
        %v5342 = vadd.f32 0.0, %v5341
        %v5343 = vpop.f32.mrf.mxu0
        %v5344 = vadd.f32 0.0, %v5343
        %5345 = vmatmul.bf16.gmra.mxu0 %v5115
        %v5346 = vpop.f32.mrf.mxu0
        %v5347 = vpop.f32.mrf.mxu0
        %5348 = vmatmul.bf16.gmra.mxu0 %v5123
        %v5349 = vpop.f32.mrf.mxu0
        %v5350 = vadd.f32 0.0, %v5349
        %v5351 = vpop.f32.mrf.mxu0
        %v5352 = vadd.f32 0.0, %v5351
        %5353 = vmatmul.bf16.gmra.mxu0 %v5131
        %v5354 = vpop.f32.mrf.mxu0
        %v5355 = vpop.f32.mrf.mxu0
        %5356 = vmatmul.bf16.gmra.mxu0 %v5139
        %v5357 = vpop.f32.mrf.mxu0
        %v5358 = vadd.f32 0.0, %v5357
        %v5359 = vpop.f32.mrf.mxu0
        %v5360 = vadd.f32 0.0, %v5359
        %5361 = vmatmul.bf16.gmra.mxu0 %v5147
        %v5362 = vpop.f32.mrf.mxu0
        %v5363 = vpop.f32.mrf.mxu0
        %5364 = vdwg.mxu0
        %v5365 = vadd.f32 %v4741, %v5238
        %v5366 = vadd.f32 %v4743, %v5240
        %v5367 = vadd.f32 %v4749, %v5246
        %v5368 = vadd.f32 %v4751, %v5248
        %v5369 = vadd.f32 %v4757, %v5254
        %v5370 = vadd.f32 %v4759, %v5256
        %v5371 = vadd.f32 %v4765, %v5262
        %v5372 = vadd.f32 %v4767, %v5264
        %v5373 = vadd.f32 %v4773, %v5270
        %v5374 = vadd.f32 %v4775, %v5272
        %v5375 = vadd.f32 %v4781, %v5278
        %v5376 = vadd.f32 %v4783, %v5280
        %v5377 = vadd.f32 %v4789, %v5286
        %v5378 = vadd.f32 %v4791, %v5288
        %v5379 = vadd.f32 %v4797, %v5294
        %v5380 = vadd.f32 %v4799, %v5296
        %v5381 = vadd.f32 %v4805, %v5302
        %v5382 = vadd.f32 %v4807, %v5304
        %v5383 = vadd.f32 %v4813, %v5310
        %v5384 = vadd.f32 %v4815, %v5312
        %v5385 = vadd.f32 %v4821, %v5318
        %v5386 = vadd.f32 %v4823, %v5320
        %v5387 = vadd.f32 %v4829, %v5326
        %v5388 = vadd.f32 %v4831, %v5328
        %v5389 = vadd.f32 %v4837, %v5334
        %v5390 = vadd.f32 %v4839, %v5336
        %v5391 = vadd.f32 %v4845, %v5342
        %v5392 = vadd.f32 %v4847, %v5344
        %v5393 = vadd.f32 %v4853, %v5350
        %v5394 = vadd.f32 %v4855, %v5352
        %v5395 = vadd.f32 %v4861, %v5358
        %v5396 = vadd.f32 %v4863, %v5360
        %s5397 = scalar_lea.vmem %s2, 192
        %v5398 = vld [vmem:[%s5397] sm:$0xf]
        %v5399 = vld [vmem:[%s5397 + $0x4] sm:$0xf]
        %v5400 = vld [vmem:[%s5397 + $0x8] sm:$0xf]
        %v5401 = vld [vmem:[%s5397 + $0xc] sm:$0xf]
        %v5402 = vld [vmem:[%s5397 + $0x10] sm:$0xf]
        %v5403 = vld [vmem:[%s5397 + $0x14] sm:$0xf]
        %v5404 = vld [vmem:[%s5397 + $0x18] sm:$0xf]
        %v5405 = vld [vmem:[%s5397 + $0x1c] sm:$0xf]
        %v5406 = vld [vmem:[%s5397 + $0x20] sm:$0xf]
        %v5407 = vld [vmem:[%s5397 + $0x24] sm:$0xf]
        %v5408 = vld [vmem:[%s5397 + $0x28] sm:$0xf]
        %v5409 = vld [vmem:[%s5397 + $0x2c] sm:$0xf]
        %v5410 = vld [vmem:[%s5397 + $0x30] sm:$0xf]
        %v5411 = vld [vmem:[%s5397 + $0x34] sm:$0xf]
        %v5412 = vld [vmem:[%s5397 + $0x38] sm:$0xf]
        %v5413 = vld [vmem:[%s5397 + $0x3c] sm:$0xf]
        %v5417 = vunpack.c.l.b16 %v3902
        %v5418 = vunpack.c.l.b16 %v3903
        %v5419 = vunpack.c.l.b16 %v3904
        %v5420 = vpack.c.b16 %v4886, %v4070
        %v5421 = vpack.c.b16 %v5418, %v5417
        %v5422 = vpack.c.b16 %v5419, %v5419
        %v5424 = vshrl.u32 %v5420, 16
        %v5426 = vrot.slane %v5424, 3
        %v5427 = vshll.u32 %v5420, 16
        %v5429 = vrot.slane %v5427, 4
        %v5430 = vor.u32 %v5426, %v5429
        %v5431 = vsel %vm1038, %v4640, %v5430
        %v5433 = vshrl.u32 %v5421, 16
        %v5435 = vrot.slane %v5433, 3
        %v5436 = vshll.u32 %v5421, 16
        %v5438 = vrot.slane %v5436, 4
        %v5439 = vor.u32 %v5435, %v5438
        %v5440 = vsel %vm1038, %v5430, %v5439
        %v5442 = vshrl.u32 %v5422, 16
        %v5444 = vrot.slane %v5442, 3
        %v5445 = vshll.u32 %v5422, 16
        %v5447 = vrot.slane %v5445, 4
        %v5448 = vor.u32 %v5444, %v5447
        %v5449 = vsel %vm1038, %v5439, %v5448
        %v5469 = vunpack.c.l.b16 %v5398
        %v5470 = vunpack.c.l.b16 %v5399
        %v5471 = vunpack.c.l.b16 %v5400
        %v5472 = vunpack.c.l.b16 %v5401
        %v5473 = vunpack.c.l.b16 %v5402
        %v5474 = vunpack.c.l.b16 %v5403
        %v5475 = vunpack.c.l.b16 %v5404
        %v5476 = vunpack.c.l.b16 %v5405
        %v5477 = vunpack.c.l.b16 %v5406
        %v5478 = vunpack.c.l.b16 %v5407
        %v5479 = vunpack.c.l.b16 %v5408
        %v5480 = vunpack.c.l.b16 %v5409
        %v5481 = vunpack.c.l.b16 %v5410
        %v5482 = vunpack.c.l.b16 %v5411
        %v5483 = vunpack.c.l.b16 %v5412
        %v5484 = vunpack.c.l.b16 %v5413
        %v5485 = vpack.c.b16 %v5470, %v5469
        %v5486 = vpack.c.b16 %v5472, %v5471
        %v5487 = vpack.c.b16 %v5474, %v5473
        %v5488 = vpack.c.b16 %v5476, %v5475
        %v5489 = vpack.c.b16 %v5478, %v5477
        %v5490 = vpack.c.b16 %v5480, %v5479
        %v5491 = vpack.c.b16 %v5482, %v5481
        %v5492 = vpack.c.b16 %v5484, %v5483
        %5501 = vmatpush.bf16.msra.mxu0 %v5492
        %5502 = vmatpush.bf16.msra.mxu0 %v5491
        %5503 = vmatpush.bf16.msra.mxu0 %v5490
        %5504 = vmatpush.bf16.msra.mxu0 %v5489
        %5505 = vmatpush.bf16.msra.mxu0 %v5488
        %5506 = vmatpush.bf16.msra.mxu0 %v5487
        %5507 = vmatpush.bf16.msra.mxu0 %v5486
        %5508 = vmatpush.bf16.msra.mxu0 %v5485
        %5509 = vmatmul.bf16.gmra.mxu0 %v4389
        %v5510 = vpop.f32.mrf.mxu0
        %v5511 = vadd.f32 0.0, %v5510
        %v5512 = vpop.f32.mrf.mxu0
        %v5513 = vadd.f32 0.0, %v5512
        %5514 = vmatmul.bf16.gmra.mxu0 %v4398
        %v5515 = vpop.f32.mrf.mxu0
        %v5516 = vpop.f32.mrf.mxu0
        %5517 = vmatmul.bf16.gmra.mxu0 %v4407
        %v5518 = vpop.f32.mrf.mxu0
        %v5519 = vadd.f32 0.0, %v5518
        %v5520 = vpop.f32.mrf.mxu0
        %v5521 = vadd.f32 0.0, %v5520
        %5522 = vmatmul.bf16.gmra.mxu0 %v4416
        %v5523 = vpop.f32.mrf.mxu0
        %v5524 = vpop.f32.mrf.mxu0
        %5525 = vmatmul.bf16.gmra.mxu0 %v4425
        %v5526 = vpop.f32.mrf.mxu0
        %v5527 = vadd.f32 0.0, %v5526
        %v5528 = vpop.f32.mrf.mxu0
        %v5529 = vadd.f32 0.0, %v5528
        %5530 = vmatmul.bf16.gmra.mxu0 %v4434
        %v5531 = vpop.f32.mrf.mxu0
        %v5532 = vpop.f32.mrf.mxu0
        %5533 = vmatmul.bf16.gmra.mxu0 %v4443
        %v5534 = vpop.f32.mrf.mxu0
        %v5535 = vadd.f32 0.0, %v5534
        %v5536 = vpop.f32.mrf.mxu0
        %v5537 = vadd.f32 0.0, %v5536
        %5538 = vmatmul.bf16.gmra.mxu0 %v4452
        %v5539 = vpop.f32.mrf.mxu0
        %v5540 = vpop.f32.mrf.mxu0
        %5541 = vmatmul.bf16.gmra.mxu0 %v4461
        %v5542 = vpop.f32.mrf.mxu0
        %v5543 = vadd.f32 0.0, %v5542
        %v5544 = vpop.f32.mrf.mxu0
        %v5545 = vadd.f32 0.0, %v5544
        %5546 = vmatmul.bf16.gmra.mxu0 %v4470
        %v5547 = vpop.f32.mrf.mxu0
        %v5548 = vpop.f32.mrf.mxu0
        %5549 = vmatmul.bf16.gmra.mxu0 %v4479
        %v5550 = vpop.f32.mrf.mxu0
        %v5551 = vadd.f32 0.0, %v5550
        %v5552 = vpop.f32.mrf.mxu0
        %v5553 = vadd.f32 0.0, %v5552
        %5554 = vmatmul.bf16.gmra.mxu0 %v4488
        %v5555 = vpop.f32.mrf.mxu0
        %v5556 = vpop.f32.mrf.mxu0
        %5557 = vmatmul.bf16.gmra.mxu0 %v4497
        %v5558 = vpop.f32.mrf.mxu0
        %v5559 = vadd.f32 0.0, %v5558
        %v5560 = vpop.f32.mrf.mxu0
        %v5561 = vadd.f32 0.0, %v5560
        %5562 = vmatmul.bf16.gmra.mxu0 %v4506
        %v5563 = vpop.f32.mrf.mxu0
        %v5564 = vpop.f32.mrf.mxu0
        %5565 = vmatmul.bf16.gmra.mxu0 %v4515
        %v5566 = vpop.f32.mrf.mxu0
        %v5567 = vadd.f32 0.0, %v5566
        %v5568 = vpop.f32.mrf.mxu0
        %v5569 = vadd.f32 0.0, %v5568
        %5570 = vmatmul.bf16.gmra.mxu0 %v4524
        %v5571 = vpop.f32.mrf.mxu0
        %v5572 = vpop.f32.mrf.mxu0
        %5573 = vmatmul.bf16.gmra.mxu0 %v4533
        %v5574 = vpop.f32.mrf.mxu0
        %v5575 = vadd.f32 0.0, %v5574
        %v5576 = vpop.f32.mrf.mxu0
        %v5577 = vadd.f32 0.0, %v5576
        %5578 = vmatmul.bf16.gmra.mxu0 %v4542
        %v5579 = vpop.f32.mrf.mxu0
        %v5580 = vpop.f32.mrf.mxu0
        %5581 = vmatmul.bf16.gmra.mxu0 %v4551
        %v5582 = vpop.f32.mrf.mxu0
        %v5583 = vadd.f32 0.0, %v5582
        %v5584 = vpop.f32.mrf.mxu0
        %v5585 = vadd.f32 0.0, %v5584
        %5586 = vmatmul.bf16.gmra.mxu0 %v4560
        %v5587 = vpop.f32.mrf.mxu0
        %v5588 = vpop.f32.mrf.mxu0
        %5589 = vmatmul.bf16.gmra.mxu0 %v4569
        %v5590 = vpop.f32.mrf.mxu0
        %v5591 = vadd.f32 0.0, %v5590
        %v5592 = vpop.f32.mrf.mxu0
        %v5593 = vadd.f32 0.0, %v5592
        %5594 = vmatmul.bf16.gmra.mxu0 %v4578
        %v5595 = vpop.f32.mrf.mxu0
        %v5596 = vpop.f32.mrf.mxu0
        %5597 = vmatmul.bf16.gmra.mxu0 %v4587
        %v5598 = vpop.f32.mrf.mxu0
        %v5599 = vadd.f32 0.0, %v5598
        %v5600 = vpop.f32.mrf.mxu0
        %v5601 = vadd.f32 0.0, %v5600
        %5602 = vmatmul.bf16.gmra.mxu0 %v4596
        %v5603 = vpop.f32.mrf.mxu0
        %v5604 = vpop.f32.mrf.mxu0
        %5605 = vmatmul.bf16.gmra.mxu0 %v4605
        %v5606 = vpop.f32.mrf.mxu0
        %v5607 = vadd.f32 0.0, %v5606
        %v5608 = vpop.f32.mrf.mxu0
        %v5609 = vadd.f32 0.0, %v5608
        %5610 = vmatmul.bf16.gmra.mxu0 %v4614
        %v5611 = vpop.f32.mrf.mxu0
        %v5612 = vpop.f32.mrf.mxu0
        %5613 = vmatmul.bf16.gmra.mxu0 %v4623
        %v5614 = vpop.f32.mrf.mxu0
        %v5615 = vadd.f32 0.0, %v5614
        %v5616 = vpop.f32.mrf.mxu0
        %v5617 = vadd.f32 0.0, %v5616
        %5618 = vmatmul.bf16.gmra.mxu0 %v4632
        %v5619 = vpop.f32.mrf.mxu0
        %v5620 = vpop.f32.mrf.mxu0
        %5621 = vmatmul.bf16.gmra.mxu0 %v4641
        %v5622 = vpop.f32.mrf.mxu0
        %v5623 = vadd.f32 0.0, %v5622
        %v5624 = vpop.f32.mrf.mxu0
        %v5625 = vadd.f32 0.0, %v5624
        %5626 = vmatmul.bf16.gmra.mxu0 %v5431
        %v5627 = vpop.f32.mrf.mxu0
        %v5628 = vpop.f32.mrf.mxu0
        %5629 = vmatmul.bf16.gmra.mxu0 %v5440
        %v5630 = vpop.f32.mrf.mxu0
        %v5631 = vadd.f32 0.0, %v5630
        %v5632 = vpop.f32.mrf.mxu0
        %v5633 = vadd.f32 0.0, %v5632
        %5634 = vmatmul.bf16.gmra.mxu0 %v5449
        %v5635 = vpop.f32.mrf.mxu0
        %v5636 = vpop.f32.mrf.mxu0
        %5637 = vdwg.mxu0
        %v5638 = vadd.f32 %v5365, %v5511
        %v5639 = vadd.f32 %v5366, %v5513
        %v5640 = vadd.f32 %v5367, %v5519
        %v5641 = vadd.f32 %v5368, %v5521
        %v5642 = vadd.f32 %v5369, %v5527
        %v5643 = vadd.f32 %v5370, %v5529
        %v5644 = vadd.f32 %v5371, %v5535
        %v5645 = vadd.f32 %v5372, %v5537
        %v5646 = vadd.f32 %v5373, %v5543
        %v5647 = vadd.f32 %v5374, %v5545
        %v5648 = vadd.f32 %v5375, %v5551
        %v5649 = vadd.f32 %v5376, %v5553
        %v5650 = vadd.f32 %v5377, %v5559
        %v5651 = vadd.f32 %v5378, %v5561
        %v5652 = vadd.f32 %v5379, %v5567
        %v5653 = vadd.f32 %v5380, %v5569
        %v5654 = vadd.f32 %v5381, %v5575
        %v5655 = vadd.f32 %v5382, %v5577
        %v5656 = vadd.f32 %v5383, %v5583
        %v5657 = vadd.f32 %v5384, %v5585
        %v5658 = vadd.f32 %v5385, %v5591
        %v5659 = vadd.f32 %v5386, %v5593
        %v5660 = vadd.f32 %v5387, %v5599
        %v5661 = vadd.f32 %v5388, %v5601
        %v5662 = vadd.f32 %v5389, %v5607
        %v5663 = vadd.f32 %v5390, %v5609
        %v5664 = vadd.f32 %v5391, %v5615
        %v5665 = vadd.f32 %v5392, %v5617
        %v5666 = vadd.f32 %v5393, %v5623
        %v5667 = vadd.f32 %v5394, %v5625
        %v5668 = vadd.f32 %v5395, %v5631
        %v5669 = vadd.f32 %v5396, %v5633
        %s5670 = scalar_lea.vmem %s2, 256
        %v5671 = vld [vmem:[%s5670] sm:$0xf]
        %v5672 = vld [vmem:[%s5670 + $0x4] sm:$0xf]
        %v5673 = vld [vmem:[%s5670 + $0x8] sm:$0xf]
        %v5674 = vld [vmem:[%s5670 + $0xc] sm:$0xf]
        %v5675 = vld [vmem:[%s5670 + $0x10] sm:$0xf]
        %v5676 = vld [vmem:[%s5670 + $0x14] sm:$0xf]
        %v5677 = vld [vmem:[%s5670 + $0x18] sm:$0xf]
        %v5678 = vld [vmem:[%s5670 + $0x1c] sm:$0xf]
        %v5679 = vld [vmem:[%s5670 + $0x20] sm:$0xf]
        %v5680 = vld [vmem:[%s5670 + $0x24] sm:$0xf]
        %v5681 = vld [vmem:[%s5670 + $0x28] sm:$0xf]
        %v5682 = vld [vmem:[%s5670 + $0x2c] sm:$0xf]
        %v5683 = vld [vmem:[%s5670 + $0x30] sm:$0xf]
        %v5684 = vld [vmem:[%s5670 + $0x34] sm:$0xf]
        %v5685 = vld [vmem:[%s5670 + $0x38] sm:$0xf]
        %v5686 = vld [vmem:[%s5670 + $0x3c] sm:$0xf]
        %v5687 = vpack.c.b16 %v5417, %v4886
        %v5688 = vpack.c.b16 %v5419, %v5418
        %v5707 = vunpack.c.l.b16 %v5671
        %v5708 = vunpack.c.l.b16 %v5672
        %v5709 = vunpack.c.l.b16 %v5673
        %v5710 = vunpack.c.l.b16 %v5674
        %v5711 = vunpack.c.l.b16 %v5675
        %v5712 = vunpack.c.l.b16 %v5676
        %v5713 = vunpack.c.l.b16 %v5677
        %v5714 = vunpack.c.l.b16 %v5678
        %v5715 = vunpack.c.l.b16 %v5679
        %v5716 = vunpack.c.l.b16 %v5680
        %v5717 = vunpack.c.l.b16 %v5681
        %v5718 = vunpack.c.l.b16 %v5682
        %v5719 = vunpack.c.l.b16 %v5683
        %v5720 = vunpack.c.l.b16 %v5684
        %v5721 = vunpack.c.l.b16 %v5685
        %v5722 = vunpack.c.l.b16 %v5686
        %v5723 = vpack.c.b16 %v5708, %v5707
        %v5724 = vpack.c.b16 %v5710, %v5709
        %v5725 = vpack.c.b16 %v5712, %v5711
        %v5726 = vpack.c.b16 %v5714, %v5713
        %v5727 = vpack.c.b16 %v5716, %v5715
        %v5728 = vpack.c.b16 %v5718, %v5717
        %v5729 = vpack.c.b16 %v5720, %v5719
        %v5730 = vpack.c.b16 %v5722, %v5721
        %5739 = vmatpush.bf16.msra.mxu0 %v5730
        %5740 = vmatpush.bf16.msra.mxu0 %v5729
        %5741 = vmatpush.bf16.msra.mxu0 %v5728
        %5742 = vmatpush.bf16.msra.mxu0 %v5727
        %5743 = vmatpush.bf16.msra.mxu0 %v5726
        %5744 = vmatpush.bf16.msra.mxu0 %v5725
        %5745 = vmatpush.bf16.msra.mxu0 %v5724
        %5746 = vmatpush.bf16.msra.mxu0 %v5723
        %5747 = vmatmul.bf16.gmra.mxu0 %v4073
        %v5748 = vpop.f32.mrf.mxu0
        %v5749 = vadd.f32 0.0, %v5748
        %v5750 = vpop.f32.mrf.mxu0
        %v5751 = vadd.f32 0.0, %v5750
        %5752 = vmatmul.bf16.gmra.mxu0 %v4074
        %v5753 = vpop.f32.mrf.mxu0
        %v5754 = vpop.f32.mrf.mxu0
        %5755 = vmatmul.bf16.gmra.mxu0 %v4075
        %v5756 = vpop.f32.mrf.mxu0
        %v5757 = vadd.f32 0.0, %v5756
        %v5758 = vpop.f32.mrf.mxu0
        %v5759 = vadd.f32 0.0, %v5758
        %5760 = vmatmul.bf16.gmra.mxu0 %v4076
        %v5761 = vpop.f32.mrf.mxu0
        %v5762 = vpop.f32.mrf.mxu0
        %5763 = vmatmul.bf16.gmra.mxu0 %v4077
        %v5764 = vpop.f32.mrf.mxu0
        %v5765 = vadd.f32 0.0, %v5764
        %v5766 = vpop.f32.mrf.mxu0
        %v5767 = vadd.f32 0.0, %v5766
        %5768 = vmatmul.bf16.gmra.mxu0 %v4078
        %v5769 = vpop.f32.mrf.mxu0
        %v5770 = vpop.f32.mrf.mxu0
        %5771 = vmatmul.bf16.gmra.mxu0 %v4079
        %v5772 = vpop.f32.mrf.mxu0
        %v5773 = vadd.f32 0.0, %v5772
        %v5774 = vpop.f32.mrf.mxu0
        %v5775 = vadd.f32 0.0, %v5774
        %5776 = vmatmul.bf16.gmra.mxu0 %v4080
        %v5777 = vpop.f32.mrf.mxu0
        %v5778 = vpop.f32.mrf.mxu0
        %5779 = vmatmul.bf16.gmra.mxu0 %v4081
        %v5780 = vpop.f32.mrf.mxu0
        %v5781 = vadd.f32 0.0, %v5780
        %v5782 = vpop.f32.mrf.mxu0
        %v5783 = vadd.f32 0.0, %v5782
        %5784 = vmatmul.bf16.gmra.mxu0 %v4082
        %v5785 = vpop.f32.mrf.mxu0
        %v5786 = vpop.f32.mrf.mxu0
        %5787 = vmatmul.bf16.gmra.mxu0 %v4083
        %v5788 = vpop.f32.mrf.mxu0
        %v5789 = vadd.f32 0.0, %v5788
        %v5790 = vpop.f32.mrf.mxu0
        %v5791 = vadd.f32 0.0, %v5790
        %5792 = vmatmul.bf16.gmra.mxu0 %v4084
        %v5793 = vpop.f32.mrf.mxu0
        %v5794 = vpop.f32.mrf.mxu0
        %5795 = vmatmul.bf16.gmra.mxu0 %v4085
        %v5796 = vpop.f32.mrf.mxu0
        %v5797 = vadd.f32 0.0, %v5796
        %v5798 = vpop.f32.mrf.mxu0
        %v5799 = vadd.f32 0.0, %v5798
        %5800 = vmatmul.bf16.gmra.mxu0 %v4086
        %v5801 = vpop.f32.mrf.mxu0
        %v5802 = vpop.f32.mrf.mxu0
        %5803 = vmatmul.bf16.gmra.mxu0 %v4087
        %v5804 = vpop.f32.mrf.mxu0
        %v5805 = vadd.f32 0.0, %v5804
        %v5806 = vpop.f32.mrf.mxu0
        %v5807 = vadd.f32 0.0, %v5806
        %5808 = vmatmul.bf16.gmra.mxu0 %v4088
        %v5809 = vpop.f32.mrf.mxu0
        %v5810 = vpop.f32.mrf.mxu0
        %5811 = vmatmul.bf16.gmra.mxu0 %v4089
        %v5812 = vpop.f32.mrf.mxu0
        %v5813 = vadd.f32 0.0, %v5812
        %v5814 = vpop.f32.mrf.mxu0
        %v5815 = vadd.f32 0.0, %v5814
        %5816 = vmatmul.bf16.gmra.mxu0 %v4090
        %v5817 = vpop.f32.mrf.mxu0
        %v5818 = vpop.f32.mrf.mxu0
        %5819 = vmatmul.bf16.gmra.mxu0 %v4091
        %v5820 = vpop.f32.mrf.mxu0
        %v5821 = vadd.f32 0.0, %v5820
        %v5822 = vpop.f32.mrf.mxu0
        %v5823 = vadd.f32 0.0, %v5822
        %5824 = vmatmul.bf16.gmra.mxu0 %v4092
        %v5825 = vpop.f32.mrf.mxu0
        %v5826 = vpop.f32.mrf.mxu0
        %5827 = vmatmul.bf16.gmra.mxu0 %v4093
        %v5828 = vpop.f32.mrf.mxu0
        %v5829 = vadd.f32 0.0, %v5828
        %v5830 = vpop.f32.mrf.mxu0
        %v5831 = vadd.f32 0.0, %v5830
        %5832 = vmatmul.bf16.gmra.mxu0 %v4094
        %v5833 = vpop.f32.mrf.mxu0
        %v5834 = vpop.f32.mrf.mxu0
        %5835 = vmatmul.bf16.gmra.mxu0 %v4095
        %v5836 = vpop.f32.mrf.mxu0
        %v5837 = vadd.f32 0.0, %v5836
        %v5838 = vpop.f32.mrf.mxu0
        %v5839 = vadd.f32 0.0, %v5838
        %5840 = vmatmul.bf16.gmra.mxu0 %v4096
        %v5841 = vpop.f32.mrf.mxu0
        %v5842 = vpop.f32.mrf.mxu0
        %5843 = vmatmul.bf16.gmra.mxu0 %v4097
        %v5844 = vpop.f32.mrf.mxu0
        %v5845 = vadd.f32 0.0, %v5844
        %v5846 = vpop.f32.mrf.mxu0
        %v5847 = vadd.f32 0.0, %v5846
        %5848 = vmatmul.bf16.gmra.mxu0 %v4098
        %v5849 = vpop.f32.mrf.mxu0
        %v5850 = vpop.f32.mrf.mxu0
        %5851 = vmatmul.bf16.gmra.mxu0 %v4099
        %v5852 = vpop.f32.mrf.mxu0
        %v5853 = vadd.f32 0.0, %v5852
        %v5854 = vpop.f32.mrf.mxu0
        %v5855 = vadd.f32 0.0, %v5854
        %5856 = vmatmul.bf16.gmra.mxu0 %v4100
        %v5857 = vpop.f32.mrf.mxu0
        %v5858 = vpop.f32.mrf.mxu0
        %5859 = vmatmul.bf16.gmra.mxu0 %v4101
        %v5860 = vpop.f32.mrf.mxu0
        %v5861 = vadd.f32 0.0, %v5860
        %v5862 = vpop.f32.mrf.mxu0
        %v5863 = vadd.f32 0.0, %v5862
        %5864 = vmatmul.bf16.gmra.mxu0 %v4102
        %v5865 = vpop.f32.mrf.mxu0
        %v5866 = vpop.f32.mrf.mxu0
        %5867 = vmatmul.bf16.gmra.mxu0 %v5687
        %v5868 = vpop.f32.mrf.mxu0
        %v5869 = vadd.f32 0.0, %v5868
        %v5870 = vpop.f32.mrf.mxu0
        %v5871 = vadd.f32 0.0, %v5870
        %5872 = vmatmul.bf16.gmra.mxu0 %v5688
        %v5873 = vpop.f32.mrf.mxu0
        %v5874 = vpop.f32.mrf.mxu0
        %5875 = vdwg.mxu0
        %v5876 = vadd.f32 %v5638, %v5749
        %v5877 = vadd.f32 %v5639, %v5751
        %v5878 = vadd.f32 %v5640, %v5757
        %v5879 = vadd.f32 %v5641, %v5759
        %v5880 = vadd.f32 %v5642, %v5765
        %v5881 = vadd.f32 %v5643, %v5767
        %v5882 = vadd.f32 %v5644, %v5773
        %v5883 = vadd.f32 %v5645, %v5775
        %v5884 = vadd.f32 %v5646, %v5781
        %v5885 = vadd.f32 %v5647, %v5783
        %v5886 = vadd.f32 %v5648, %v5789
        %v5887 = vadd.f32 %v5649, %v5791
        %v5888 = vadd.f32 %v5650, %v5797
        %v5889 = vadd.f32 %v5651, %v5799
        %v5890 = vadd.f32 %v5652, %v5805
        %v5891 = vadd.f32 %v5653, %v5807
        %v5892 = vadd.f32 %v5654, %v5813
        %v5893 = vadd.f32 %v5655, %v5815
        %v5894 = vadd.f32 %v5656, %v5821
        %v5895 = vadd.f32 %v5657, %v5823
        %v5896 = vadd.f32 %v5658, %v5829
        %v5897 = vadd.f32 %v5659, %v5831
        %v5898 = vadd.f32 %v5660, %v5837
        %v5899 = vadd.f32 %v5661, %v5839
        %v5900 = vadd.f32 %v5662, %v5845
        %v5901 = vadd.f32 %v5663, %v5847
        %v5902 = vadd.f32 %v5664, %v5853
        %v5903 = vadd.f32 %v5665, %v5855
        %v5904 = vadd.f32 %v5666, %v5861
        %v5905 = vadd.f32 %v5667, %v5863
        %v5906 = vadd.f32 %v5668, %v5869
        %v5907 = vadd.f32 %v5669, %v5871
        %s5908 = scalar_lea.vmem %s2, 320
        %v5909 = vld [vmem:[%s5908] sm:$0xf]
        %v5910 = vld [vmem:[%s5908 + $0x4] sm:$0xf]
        %v5911 = vld [vmem:[%s5908 + $0x8] sm:$0xf]
        %v5912 = vld [vmem:[%s5908 + $0xc] sm:$0xf]
        %v5913 = vld [vmem:[%s5908 + $0x10] sm:$0xf]
        %v5914 = vld [vmem:[%s5908 + $0x14] sm:$0xf]
        %v5915 = vld [vmem:[%s5908 + $0x18] sm:$0xf]
        %v5916 = vld [vmem:[%s5908 + $0x1c] sm:$0xf]
        %v5917 = vld [vmem:[%s5908 + $0x20] sm:$0xf]
        %v5918 = vld [vmem:[%s5908 + $0x24] sm:$0xf]
        %v5919 = vld [vmem:[%s5908 + $0x28] sm:$0xf]
        %v5920 = vld [vmem:[%s5908 + $0x2c] sm:$0xf]
        %v5921 = vld [vmem:[%s5908 + $0x30] sm:$0xf]
        %v5922 = vld [vmem:[%s5908 + $0x34] sm:$0xf]
        %v5923 = vld [vmem:[%s5908 + $0x38] sm:$0xf]
        %v5924 = vld [vmem:[%s5908 + $0x3c] sm:$0xf]
        %v5926 = vunpack.c.l.b16 %v3905
        %v5927 = vpack.c.b16 %v5926, %v5926
        %v5929 = vshll.u32 %v5687, 16
        %v5931 = vrot.slane %v5929, 1
        %v5932 = vsel %vm1572, %v5142, %v5931
        %v5933 = vshrl.u32 %v5687, 16
        %v5935 = vor.u32 %v5933, %v5931
        %v5937 = vshll.u32 %v5688, 16
        %v5939 = vrot.slane %v5937, 1
        %v5940 = vsel %vm1572, %v5935, %v5939
        %v5941 = vshrl.u32 %v5688, 16
        %v5943 = vor.u32 %v5941, %v5939
        %v5945 = vshll.u32 %v5927, 16
        %v5947 = vrot.slane %v5945, 1
        %v5948 = vsel %vm1572, %v5943, %v5947
        %v5968 = vunpack.c.l.b16 %v5909
        %v5969 = vunpack.c.l.b16 %v5910
        %v5970 = vunpack.c.l.b16 %v5911
        %v5971 = vunpack.c.l.b16 %v5912
        %v5972 = vunpack.c.l.b16 %v5913
        %v5973 = vunpack.c.l.b16 %v5914
        %v5974 = vunpack.c.l.b16 %v5915
        %v5975 = vunpack.c.l.b16 %v5916
        %v5976 = vunpack.c.l.b16 %v5917
        %v5977 = vunpack.c.l.b16 %v5918
        %v5978 = vunpack.c.l.b16 %v5919
        %v5979 = vunpack.c.l.b16 %v5920
        %v5980 = vunpack.c.l.b16 %v5921
        %v5981 = vunpack.c.l.b16 %v5922
        %v5982 = vunpack.c.l.b16 %v5923
        %v5983 = vunpack.c.l.b16 %v5924
        %v5984 = vpack.c.b16 %v5969, %v5968
        %v5985 = vpack.c.b16 %v5971, %v5970
        %v5986 = vpack.c.b16 %v5973, %v5972
        %v5987 = vpack.c.b16 %v5975, %v5974
        %v5988 = vpack.c.b16 %v5977, %v5976
        %v5989 = vpack.c.b16 %v5979, %v5978
        %v5990 = vpack.c.b16 %v5981, %v5980
        %v5991 = vpack.c.b16 %v5983, %v5982
        %6000 = vmatpush.bf16.msra.mxu0 %v5991
        %6001 = vmatpush.bf16.msra.mxu0 %v5990
        %6002 = vmatpush.bf16.msra.mxu0 %v5989
        %6003 = vmatpush.bf16.msra.mxu0 %v5988
        %6004 = vmatpush.bf16.msra.mxu0 %v5987
        %6005 = vmatpush.bf16.msra.mxu0 %v5986
        %6006 = vmatpush.bf16.msra.mxu0 %v5985
        %6007 = vmatpush.bf16.msra.mxu0 %v5984
        %6008 = vmatmul.bf16.gmra.mxu0 %v4915
        %v6009 = vpop.f32.mrf.mxu0
        %v6010 = vadd.f32 0.0, %v6009
        %v6011 = vpop.f32.mrf.mxu0
        %v6012 = vadd.f32 0.0, %v6011
        %6013 = vmatmul.bf16.gmra.mxu0 %v4923
        %v6014 = vpop.f32.mrf.mxu0
        %v6015 = vpop.f32.mrf.mxu0
        %6016 = vmatmul.bf16.gmra.mxu0 %v4931
        %v6017 = vpop.f32.mrf.mxu0
        %v6018 = vadd.f32 0.0, %v6017
        %v6019 = vpop.f32.mrf.mxu0
        %v6020 = vadd.f32 0.0, %v6019
        %6021 = vmatmul.bf16.gmra.mxu0 %v4939
        %v6022 = vpop.f32.mrf.mxu0
        %v6023 = vpop.f32.mrf.mxu0
        %6024 = vmatmul.bf16.gmra.mxu0 %v4947
        %v6025 = vpop.f32.mrf.mxu0
        %v6026 = vadd.f32 0.0, %v6025
        %v6027 = vpop.f32.mrf.mxu0
        %v6028 = vadd.f32 0.0, %v6027
        %6029 = vmatmul.bf16.gmra.mxu0 %v4955
        %v6030 = vpop.f32.mrf.mxu0
        %v6031 = vpop.f32.mrf.mxu0
        %6032 = vmatmul.bf16.gmra.mxu0 %v4963
        %v6033 = vpop.f32.mrf.mxu0
        %v6034 = vadd.f32 0.0, %v6033
        %v6035 = vpop.f32.mrf.mxu0
        %v6036 = vadd.f32 0.0, %v6035
        %6037 = vmatmul.bf16.gmra.mxu0 %v4971
        %v6038 = vpop.f32.mrf.mxu0
        %v6039 = vpop.f32.mrf.mxu0
        %6040 = vmatmul.bf16.gmra.mxu0 %v4979
        %v6041 = vpop.f32.mrf.mxu0
        %v6042 = vadd.f32 0.0, %v6041
        %v6043 = vpop.f32.mrf.mxu0
        %v6044 = vadd.f32 0.0, %v6043
        %6045 = vmatmul.bf16.gmra.mxu0 %v4987
        %v6046 = vpop.f32.mrf.mxu0
        %v6047 = vpop.f32.mrf.mxu0
        %6048 = vmatmul.bf16.gmra.mxu0 %v4995
        %v6049 = vpop.f32.mrf.mxu0
        %v6050 = vadd.f32 0.0, %v6049
        %v6051 = vpop.f32.mrf.mxu0
        %v6052 = vadd.f32 0.0, %v6051
        %6053 = vmatmul.bf16.gmra.mxu0 %v5003
        %v6054 = vpop.f32.mrf.mxu0
        %v6055 = vpop.f32.mrf.mxu0
        %6056 = vmatmul.bf16.gmra.mxu0 %v5011
        %v6057 = vpop.f32.mrf.mxu0
        %v6058 = vadd.f32 0.0, %v6057
        %v6059 = vpop.f32.mrf.mxu0
        %v6060 = vadd.f32 0.0, %v6059
        %6061 = vmatmul.bf16.gmra.mxu0 %v5019
        %v6062 = vpop.f32.mrf.mxu0
        %v6063 = vpop.f32.mrf.mxu0
        %6064 = vmatmul.bf16.gmra.mxu0 %v5027
        %v6065 = vpop.f32.mrf.mxu0
        %v6066 = vadd.f32 0.0, %v6065
        %v6067 = vpop.f32.mrf.mxu0
        %v6068 = vadd.f32 0.0, %v6067
        %6069 = vmatmul.bf16.gmra.mxu0 %v5035
        %v6070 = vpop.f32.mrf.mxu0
        %v6071 = vpop.f32.mrf.mxu0
        %6072 = vmatmul.bf16.gmra.mxu0 %v5043
        %v6073 = vpop.f32.mrf.mxu0
        %v6074 = vadd.f32 0.0, %v6073
        %v6075 = vpop.f32.mrf.mxu0
        %v6076 = vadd.f32 0.0, %v6075
        %6077 = vmatmul.bf16.gmra.mxu0 %v5051
        %v6078 = vpop.f32.mrf.mxu0
        %v6079 = vpop.f32.mrf.mxu0
        %6080 = vmatmul.bf16.gmra.mxu0 %v5059
        %v6081 = vpop.f32.mrf.mxu0
        %v6082 = vadd.f32 0.0, %v6081
        %v6083 = vpop.f32.mrf.mxu0
        %v6084 = vadd.f32 0.0, %v6083
        %6085 = vmatmul.bf16.gmra.mxu0 %v5067
        %v6086 = vpop.f32.mrf.mxu0
        %v6087 = vpop.f32.mrf.mxu0
        %6088 = vmatmul.bf16.gmra.mxu0 %v5075
        %v6089 = vpop.f32.mrf.mxu0
        %v6090 = vadd.f32 0.0, %v6089
        %v6091 = vpop.f32.mrf.mxu0
        %v6092 = vadd.f32 0.0, %v6091
        %6093 = vmatmul.bf16.gmra.mxu0 %v5083
        %v6094 = vpop.f32.mrf.mxu0
        %v6095 = vpop.f32.mrf.mxu0
        %6096 = vmatmul.bf16.gmra.mxu0 %v5091
        %v6097 = vpop.f32.mrf.mxu0
        %v6098 = vadd.f32 0.0, %v6097
        %v6099 = vpop.f32.mrf.mxu0
        %v6100 = vadd.f32 0.0, %v6099
        %6101 = vmatmul.bf16.gmra.mxu0 %v5099
        %v6102 = vpop.f32.mrf.mxu0
        %v6103 = vpop.f32.mrf.mxu0
        %6104 = vmatmul.bf16.gmra.mxu0 %v5107
        %v6105 = vpop.f32.mrf.mxu0
        %v6106 = vadd.f32 0.0, %v6105
        %v6107 = vpop.f32.mrf.mxu0
        %v6108 = vadd.f32 0.0, %v6107
        %6109 = vmatmul.bf16.gmra.mxu0 %v5115
        %v6110 = vpop.f32.mrf.mxu0
        %v6111 = vpop.f32.mrf.mxu0
        %6112 = vmatmul.bf16.gmra.mxu0 %v5123
        %v6113 = vpop.f32.mrf.mxu0
        %v6114 = vadd.f32 0.0, %v6113
        %v6115 = vpop.f32.mrf.mxu0
        %v6116 = vadd.f32 0.0, %v6115
        %6117 = vmatmul.bf16.gmra.mxu0 %v5131
        %v6118 = vpop.f32.mrf.mxu0
        %v6119 = vpop.f32.mrf.mxu0
        %6120 = vmatmul.bf16.gmra.mxu0 %v5139
        %v6121 = vpop.f32.mrf.mxu0
        %v6122 = vadd.f32 0.0, %v6121
        %v6123 = vpop.f32.mrf.mxu0
        %v6124 = vadd.f32 0.0, %v6123
        %6125 = vmatmul.bf16.gmra.mxu0 %v5932
        %v6126 = vpop.f32.mrf.mxu0
        %v6127 = vpop.f32.mrf.mxu0
        %6128 = vmatmul.bf16.gmra.mxu0 %v5940
        %v6129 = vpop.f32.mrf.mxu0
        %v6130 = vadd.f32 0.0, %v6129
        %v6131 = vpop.f32.mrf.mxu0
        %v6132 = vadd.f32 0.0, %v6131
        %6133 = vmatmul.bf16.gmra.mxu0 %v5948
        %v6134 = vpop.f32.mrf.mxu0
        %v6135 = vpop.f32.mrf.mxu0
        %6136 = vdwg.mxu0
        %v6137 = vadd.f32 %v5876, %v6010
        %v6138 = vadd.f32 %v5877, %v6012
        %v6139 = vadd.f32 %v5878, %v6018
        %v6140 = vadd.f32 %v5879, %v6020
        %v6141 = vadd.f32 %v5880, %v6026
        %v6142 = vadd.f32 %v5881, %v6028
        %v6143 = vadd.f32 %v5882, %v6034
        %v6144 = vadd.f32 %v5883, %v6036
        %v6145 = vadd.f32 %v5884, %v6042
        %v6146 = vadd.f32 %v5885, %v6044
        %v6147 = vadd.f32 %v5886, %v6050
        %v6148 = vadd.f32 %v5887, %v6052
        %v6149 = vadd.f32 %v5888, %v6058
        %v6150 = vadd.f32 %v5889, %v6060
        %v6151 = vadd.f32 %v5890, %v6066
        %v6152 = vadd.f32 %v5891, %v6068
        %v6153 = vadd.f32 %v5892, %v6074
        %v6154 = vadd.f32 %v5893, %v6076
        %v6155 = vadd.f32 %v5894, %v6082
        %v6156 = vadd.f32 %v5895, %v6084
        %v6157 = vadd.f32 %v5896, %v6090
        %v6158 = vadd.f32 %v5897, %v6092
        %v6159 = vadd.f32 %v5898, %v6098
        %v6160 = vadd.f32 %v5899, %v6100
        %v6161 = vadd.f32 %v5900, %v6106
        %v6162 = vadd.f32 %v5901, %v6108
        %v6163 = vadd.f32 %v5902, %v6114
        %v6164 = vadd.f32 %v5903, %v6116
        %v6165 = vadd.f32 %v5904, %v6122
        %v6166 = vadd.f32 %v5905, %v6124
        %v6167 = vadd.f32 %v5906, %v6130
        %v6168 = vadd.f32 %v5907, %v6132
        %s6169 = scalar_lea.vmem %s2, 384
        %v6170 = vld [vmem:[%s6169] sm:$0xf]
        %v6171 = vld [vmem:[%s6169 + $0x4] sm:$0xf]
        %v6172 = vld [vmem:[%s6169 + $0x8] sm:$0xf]
        %v6173 = vld [vmem:[%s6169 + $0xc] sm:$0xf]
        %v6174 = vld [vmem:[%s6169 + $0x10] sm:$0xf]
        %v6175 = vld [vmem:[%s6169 + $0x14] sm:$0xf]
        %v6176 = vld [vmem:[%s6169 + $0x18] sm:$0xf]
        %v6177 = vld [vmem:[%s6169 + $0x1c] sm:$0xf]
        %v6178 = vld [vmem:[%s6169 + $0x20] sm:$0xf]
        %v6179 = vld [vmem:[%s6169 + $0x24] sm:$0xf]
        %v6180 = vld [vmem:[%s6169 + $0x28] sm:$0xf]
        %v6181 = vld [vmem:[%s6169 + $0x2c] sm:$0xf]
        %v6182 = vld [vmem:[%s6169 + $0x30] sm:$0xf]
        %v6183 = vld [vmem:[%s6169 + $0x34] sm:$0xf]
        %v6184 = vld [vmem:[%s6169 + $0x38] sm:$0xf]
        %v6185 = vld [vmem:[%s6169 + $0x3c] sm:$0xf]
        %v6189 = vunpack.c.l.b16 %v3906
        %v6190 = vunpack.c.l.b16 %v3907
        %v6191 = vunpack.c.l.b16 %v3908
        %v6192 = vpack.c.b16 %v5926, %v5419
        %v6193 = vpack.c.b16 %v6190, %v6189
        %v6194 = vpack.c.b16 %v6191, %v6191
        %v6196 = vshrl.u32 %v6192, 16
        %v6198 = vrot.slane %v6196, 3
        %v6199 = vshll.u32 %v6192, 16
        %v6201 = vrot.slane %v6199, 4
        %v6202 = vor.u32 %v6198, %v6201
        %v6203 = vsel %vm1038, %v5439, %v6202
        %v6205 = vshrl.u32 %v6193, 16
        %v6207 = vrot.slane %v6205, 3
        %v6208 = vshll.u32 %v6193, 16
        %v6210 = vrot.slane %v6208, 4
        %v6211 = vor.u32 %v6207, %v6210
        %v6212 = vsel %vm1038, %v6202, %v6211
        %v6214 = vshrl.u32 %v6194, 16
        %v6216 = vrot.slane %v6214, 3
        %v6217 = vshll.u32 %v6194, 16
        %v6219 = vrot.slane %v6217, 4
        %v6220 = vor.u32 %v6216, %v6219
        %v6221 = vsel %vm1038, %v6211, %v6220
        %v6241 = vunpack.c.l.b16 %v6170
        %v6242 = vunpack.c.l.b16 %v6171
        %v6243 = vunpack.c.l.b16 %v6172
        %v6244 = vunpack.c.l.b16 %v6173
        %v6245 = vunpack.c.l.b16 %v6174
        %v6246 = vunpack.c.l.b16 %v6175
        %v6247 = vunpack.c.l.b16 %v6176
        %v6248 = vunpack.c.l.b16 %v6177
        %v6249 = vunpack.c.l.b16 %v6178
        %v6250 = vunpack.c.l.b16 %v6179
        %v6251 = vunpack.c.l.b16 %v6180
        %v6252 = vunpack.c.l.b16 %v6181
        %v6253 = vunpack.c.l.b16 %v6182
        %v6254 = vunpack.c.l.b16 %v6183
        %v6255 = vunpack.c.l.b16 %v6184
        %v6256 = vunpack.c.l.b16 %v6185
        %v6257 = vpack.c.b16 %v6242, %v6241
        %v6258 = vpack.c.b16 %v6244, %v6243
        %v6259 = vpack.c.b16 %v6246, %v6245
        %v6260 = vpack.c.b16 %v6248, %v6247
        %v6261 = vpack.c.b16 %v6250, %v6249
        %v6262 = vpack.c.b16 %v6252, %v6251
        %v6263 = vpack.c.b16 %v6254, %v6253
        %v6264 = vpack.c.b16 %v6256, %v6255
        %6273 = vmatpush.bf16.msra.mxu0 %v6264
        %6274 = vmatpush.bf16.msra.mxu0 %v6263
        %6275 = vmatpush.bf16.msra.mxu0 %v6262
        %6276 = vmatpush.bf16.msra.mxu0 %v6261
        %6277 = vmatpush.bf16.msra.mxu0 %v6260
        %6278 = vmatpush.bf16.msra.mxu0 %v6259
        %6279 = vmatpush.bf16.msra.mxu0 %v6258
        %6280 = vmatpush.bf16.msra.mxu0 %v6257
        %6281 = vmatmul.bf16.gmra.mxu0 %v4407
        %v6282 = vpop.f32.mrf.mxu0
        %v6283 = vadd.f32 0.0, %v6282
        %v6284 = vpop.f32.mrf.mxu0
        %v6285 = vadd.f32 0.0, %v6284
        %6286 = vmatmul.bf16.gmra.mxu0 %v4416
        %v6287 = vpop.f32.mrf.mxu0
        %v6288 = vpop.f32.mrf.mxu0
        %6289 = vmatmul.bf16.gmra.mxu0 %v4425
        %v6290 = vpop.f32.mrf.mxu0
        %v6291 = vadd.f32 0.0, %v6290
        %v6292 = vpop.f32.mrf.mxu0
        %v6293 = vadd.f32 0.0, %v6292
        %6294 = vmatmul.bf16.gmra.mxu0 %v4434
        %v6295 = vpop.f32.mrf.mxu0
        %v6296 = vpop.f32.mrf.mxu0
        %6297 = vmatmul.bf16.gmra.mxu0 %v4443
        %v6298 = vpop.f32.mrf.mxu0
        %v6299 = vadd.f32 0.0, %v6298
        %v6300 = vpop.f32.mrf.mxu0
        %v6301 = vadd.f32 0.0, %v6300
        %6302 = vmatmul.bf16.gmra.mxu0 %v4452
        %v6303 = vpop.f32.mrf.mxu0
        %v6304 = vpop.f32.mrf.mxu0
        %6305 = vmatmul.bf16.gmra.mxu0 %v4461
        %v6306 = vpop.f32.mrf.mxu0
        %v6307 = vadd.f32 0.0, %v6306
        %v6308 = vpop.f32.mrf.mxu0
        %v6309 = vadd.f32 0.0, %v6308
        %6310 = vmatmul.bf16.gmra.mxu0 %v4470
        %v6311 = vpop.f32.mrf.mxu0
        %v6312 = vpop.f32.mrf.mxu0
        %6313 = vmatmul.bf16.gmra.mxu0 %v4479
        %v6314 = vpop.f32.mrf.mxu0
        %v6315 = vadd.f32 0.0, %v6314
        %v6316 = vpop.f32.mrf.mxu0
        %v6317 = vadd.f32 0.0, %v6316
        %6318 = vmatmul.bf16.gmra.mxu0 %v4488
        %v6319 = vpop.f32.mrf.mxu0
        %v6320 = vpop.f32.mrf.mxu0
        %6321 = vmatmul.bf16.gmra.mxu0 %v4497
        %v6322 = vpop.f32.mrf.mxu0
        %v6323 = vadd.f32 0.0, %v6322
        %v6324 = vpop.f32.mrf.mxu0
        %v6325 = vadd.f32 0.0, %v6324
        %6326 = vmatmul.bf16.gmra.mxu0 %v4506
        %v6327 = vpop.f32.mrf.mxu0
        %v6328 = vpop.f32.mrf.mxu0
        %6329 = vmatmul.bf16.gmra.mxu0 %v4515
        %v6330 = vpop.f32.mrf.mxu0
        %v6331 = vadd.f32 0.0, %v6330
        %v6332 = vpop.f32.mrf.mxu0
        %v6333 = vadd.f32 0.0, %v6332
        %6334 = vmatmul.bf16.gmra.mxu0 %v4524
        %v6335 = vpop.f32.mrf.mxu0
        %v6336 = vpop.f32.mrf.mxu0
        %6337 = vmatmul.bf16.gmra.mxu0 %v4533
        %v6338 = vpop.f32.mrf.mxu0
        %v6339 = vadd.f32 0.0, %v6338
        %v6340 = vpop.f32.mrf.mxu0
        %v6341 = vadd.f32 0.0, %v6340
        %6342 = vmatmul.bf16.gmra.mxu0 %v4542
        %v6343 = vpop.f32.mrf.mxu0
        %v6344 = vpop.f32.mrf.mxu0
        %6345 = vmatmul.bf16.gmra.mxu0 %v4551
        %v6346 = vpop.f32.mrf.mxu0
        %v6347 = vadd.f32 0.0, %v6346
        %v6348 = vpop.f32.mrf.mxu0
        %v6349 = vadd.f32 0.0, %v6348
        %6350 = vmatmul.bf16.gmra.mxu0 %v4560
        %v6351 = vpop.f32.mrf.mxu0
        %v6352 = vpop.f32.mrf.mxu0
        %6353 = vmatmul.bf16.gmra.mxu0 %v4569
        %v6354 = vpop.f32.mrf.mxu0
        %v6355 = vadd.f32 0.0, %v6354
        %v6356 = vpop.f32.mrf.mxu0
        %v6357 = vadd.f32 0.0, %v6356
        %6358 = vmatmul.bf16.gmra.mxu0 %v4578
        %v6359 = vpop.f32.mrf.mxu0
        %v6360 = vpop.f32.mrf.mxu0
        %6361 = vmatmul.bf16.gmra.mxu0 %v4587
        %v6362 = vpop.f32.mrf.mxu0
        %v6363 = vadd.f32 0.0, %v6362
        %v6364 = vpop.f32.mrf.mxu0
        %v6365 = vadd.f32 0.0, %v6364
        %6366 = vmatmul.bf16.gmra.mxu0 %v4596
        %v6367 = vpop.f32.mrf.mxu0
        %v6368 = vpop.f32.mrf.mxu0
        %6369 = vmatmul.bf16.gmra.mxu0 %v4605
        %v6370 = vpop.f32.mrf.mxu0
        %v6371 = vadd.f32 0.0, %v6370
        %v6372 = vpop.f32.mrf.mxu0
        %v6373 = vadd.f32 0.0, %v6372
        %6374 = vmatmul.bf16.gmra.mxu0 %v4614
        %v6375 = vpop.f32.mrf.mxu0
        %v6376 = vpop.f32.mrf.mxu0
        %6377 = vmatmul.bf16.gmra.mxu0 %v4623
        %v6378 = vpop.f32.mrf.mxu0
        %v6379 = vadd.f32 0.0, %v6378
        %v6380 = vpop.f32.mrf.mxu0
        %v6381 = vadd.f32 0.0, %v6380
        %6382 = vmatmul.bf16.gmra.mxu0 %v4632
        %v6383 = vpop.f32.mrf.mxu0
        %v6384 = vpop.f32.mrf.mxu0
        %6385 = vmatmul.bf16.gmra.mxu0 %v4641
        %v6386 = vpop.f32.mrf.mxu0
        %v6387 = vadd.f32 0.0, %v6386
        %v6388 = vpop.f32.mrf.mxu0
        %v6389 = vadd.f32 0.0, %v6388
        %6390 = vmatmul.bf16.gmra.mxu0 %v5431
        %v6391 = vpop.f32.mrf.mxu0
        %v6392 = vpop.f32.mrf.mxu0
        %6393 = vmatmul.bf16.gmra.mxu0 %v5440
        %v6394 = vpop.f32.mrf.mxu0
        %v6395 = vadd.f32 0.0, %v6394
        %v6396 = vpop.f32.mrf.mxu0
        %v6397 = vadd.f32 0.0, %v6396
        %6398 = vmatmul.bf16.gmra.mxu0 %v6203
        %v6399 = vpop.f32.mrf.mxu0
        %v6400 = vpop.f32.mrf.mxu0
        %6401 = vmatmul.bf16.gmra.mxu0 %v6212
        %v6402 = vpop.f32.mrf.mxu0
        %v6403 = vadd.f32 0.0, %v6402
        %v6404 = vpop.f32.mrf.mxu0
        %v6405 = vadd.f32 0.0, %v6404
        %6406 = vmatmul.bf16.gmra.mxu0 %v6221
        %v6407 = vpop.f32.mrf.mxu0
        %v6408 = vpop.f32.mrf.mxu0
        %6409 = vdwg.mxu0
        %v6410 = vadd.f32 %v6137, %v6283
        %v6411 = vadd.f32 %v6138, %v6285
        %v6412 = vadd.f32 %v6139, %v6291
        %v6413 = vadd.f32 %v6140, %v6293
        %v6414 = vadd.f32 %v6141, %v6299
        %v6415 = vadd.f32 %v6142, %v6301
        %v6416 = vadd.f32 %v6143, %v6307
        %v6417 = vadd.f32 %v6144, %v6309
        %v6418 = vadd.f32 %v6145, %v6315
        %v6419 = vadd.f32 %v6146, %v6317
        %v6420 = vadd.f32 %v6147, %v6323
        %v6421 = vadd.f32 %v6148, %v6325
        %v6422 = vadd.f32 %v6149, %v6331
        %v6423 = vadd.f32 %v6150, %v6333
        %v6424 = vadd.f32 %v6151, %v6339
        %v6425 = vadd.f32 %v6152, %v6341
        %v6426 = vadd.f32 %v6153, %v6347
        %v6427 = vadd.f32 %v6154, %v6349
        %v6428 = vadd.f32 %v6155, %v6355
        %v6429 = vadd.f32 %v6156, %v6357
        %v6430 = vadd.f32 %v6157, %v6363
        %v6431 = vadd.f32 %v6158, %v6365
        %v6432 = vadd.f32 %v6159, %v6371
        %v6433 = vadd.f32 %v6160, %v6373
        %v6434 = vadd.f32 %v6161, %v6379
        %v6435 = vadd.f32 %v6162, %v6381
        %v6436 = vadd.f32 %v6163, %v6387
        %v6437 = vadd.f32 %v6164, %v6389
        %v6438 = vadd.f32 %v6165, %v6395
        %v6439 = vadd.f32 %v6166, %v6397
        %v6440 = vadd.f32 %v6167, %v6403
        %v6441 = vadd.f32 %v6168, %v6405
        %s6442 = scalar_lea.vmem %s2, 448
        %v6443 = vld [vmem:[%s6442] sm:$0xf]
        %v6444 = vld [vmem:[%s6442 + $0x4] sm:$0xf]
        %v6445 = vld [vmem:[%s6442 + $0x8] sm:$0xf]
        %v6446 = vld [vmem:[%s6442 + $0xc] sm:$0xf]
        %v6447 = vld [vmem:[%s6442 + $0x10] sm:$0xf]
        %v6448 = vld [vmem:[%s6442 + $0x14] sm:$0xf]
        %v6449 = vld [vmem:[%s6442 + $0x18] sm:$0xf]
        %v6450 = vld [vmem:[%s6442 + $0x1c] sm:$0xf]
        %v6451 = vld [vmem:[%s6442 + $0x20] sm:$0xf]
        %v6452 = vld [vmem:[%s6442 + $0x24] sm:$0xf]
        %v6453 = vld [vmem:[%s6442 + $0x28] sm:$0xf]
        %v6454 = vld [vmem:[%s6442 + $0x2c] sm:$0xf]
        %v6455 = vld [vmem:[%s6442 + $0x30] sm:$0xf]
        %v6456 = vld [vmem:[%s6442 + $0x34] sm:$0xf]
        %v6457 = vld [vmem:[%s6442 + $0x38] sm:$0xf]
        %v6458 = vld [vmem:[%s6442 + $0x3c] sm:$0xf]
        %v6459 = vpack.c.b16 %v6189, %v5926
        %v6460 = vpack.c.b16 %v6191, %v6190
        %v6479 = vunpack.c.l.b16 %v6443
        %v6480 = vunpack.c.l.b16 %v6444
        %v6481 = vunpack.c.l.b16 %v6445
        %v6482 = vunpack.c.l.b16 %v6446
        %v6483 = vunpack.c.l.b16 %v6447
        %v6484 = vunpack.c.l.b16 %v6448
        %v6485 = vunpack.c.l.b16 %v6449
        %v6486 = vunpack.c.l.b16 %v6450
        %v6487 = vunpack.c.l.b16 %v6451
        %v6488 = vunpack.c.l.b16 %v6452
        %v6489 = vunpack.c.l.b16 %v6453
        %v6490 = vunpack.c.l.b16 %v6454
        %v6491 = vunpack.c.l.b16 %v6455
        %v6492 = vunpack.c.l.b16 %v6456
        %v6493 = vunpack.c.l.b16 %v6457
        %v6494 = vunpack.c.l.b16 %v6458
        %v6495 = vpack.c.b16 %v6480, %v6479
        %v6496 = vpack.c.b16 %v6482, %v6481
        %v6497 = vpack.c.b16 %v6484, %v6483
        %v6498 = vpack.c.b16 %v6486, %v6485
        %v6499 = vpack.c.b16 %v6488, %v6487
        %v6500 = vpack.c.b16 %v6490, %v6489
        %v6501 = vpack.c.b16 %v6492, %v6491
        %v6502 = vpack.c.b16 %v6494, %v6493
        %6511 = vmatpush.bf16.msra.mxu0 %v6502
        %6512 = vmatpush.bf16.msra.mxu0 %v6501
        %6513 = vmatpush.bf16.msra.mxu0 %v6500
        %6514 = vmatpush.bf16.msra.mxu0 %v6499
        %6515 = vmatpush.bf16.msra.mxu0 %v6498
        %6516 = vmatpush.bf16.msra.mxu0 %v6497
        %6517 = vmatpush.bf16.msra.mxu0 %v6496
        %6518 = vmatpush.bf16.msra.mxu0 %v6495
        %6519 = vmatmul.bf16.gmra.mxu0 %v4075
        %v6520 = vpop.f32.mrf.mxu0
        %v6521 = vadd.f32 0.0, %v6520
        %v6522 = vpop.f32.mrf.mxu0
        %v6523 = vadd.f32 0.0, %v6522
        %6524 = vmatmul.bf16.gmra.mxu0 %v4076
        %v6525 = vpop.f32.mrf.mxu0
        %v6526 = vpop.f32.mrf.mxu0
        %6527 = vmatmul.bf16.gmra.mxu0 %v4077
        %v6528 = vpop.f32.mrf.mxu0
        %v6529 = vadd.f32 0.0, %v6528
        %v6530 = vpop.f32.mrf.mxu0
        %v6531 = vadd.f32 0.0, %v6530
        %6532 = vmatmul.bf16.gmra.mxu0 %v4078
        %v6533 = vpop.f32.mrf.mxu0
        %v6534 = vpop.f32.mrf.mxu0
        %6535 = vmatmul.bf16.gmra.mxu0 %v4079
        %v6536 = vpop.f32.mrf.mxu0
        %v6537 = vadd.f32 0.0, %v6536
        %v6538 = vpop.f32.mrf.mxu0
        %v6539 = vadd.f32 0.0, %v6538
        %6540 = vmatmul.bf16.gmra.mxu0 %v4080
        %v6541 = vpop.f32.mrf.mxu0
        %v6542 = vpop.f32.mrf.mxu0
        %6543 = vmatmul.bf16.gmra.mxu0 %v4081
        %v6544 = vpop.f32.mrf.mxu0
        %v6545 = vadd.f32 0.0, %v6544
        %v6546 = vpop.f32.mrf.mxu0
        %v6547 = vadd.f32 0.0, %v6546
        %6548 = vmatmul.bf16.gmra.mxu0 %v4082
        %v6549 = vpop.f32.mrf.mxu0
        %v6550 = vpop.f32.mrf.mxu0
        %6551 = vmatmul.bf16.gmra.mxu0 %v4083
        %v6552 = vpop.f32.mrf.mxu0
        %v6553 = vadd.f32 0.0, %v6552
        %v6554 = vpop.f32.mrf.mxu0
        %v6555 = vadd.f32 0.0, %v6554
        %6556 = vmatmul.bf16.gmra.mxu0 %v4084
        %v6557 = vpop.f32.mrf.mxu0
        %v6558 = vpop.f32.mrf.mxu0
        %6559 = vmatmul.bf16.gmra.mxu0 %v4085
        %v6560 = vpop.f32.mrf.mxu0
        %v6561 = vadd.f32 0.0, %v6560
        %v6562 = vpop.f32.mrf.mxu0
        %v6563 = vadd.f32 0.0, %v6562
        %6564 = vmatmul.bf16.gmra.mxu0 %v4086
        %v6565 = vpop.f32.mrf.mxu0
        %v6566 = vpop.f32.mrf.mxu0
        %6567 = vmatmul.bf16.gmra.mxu0 %v4087
        %v6568 = vpop.f32.mrf.mxu0
        %v6569 = vadd.f32 0.0, %v6568
        %v6570 = vpop.f32.mrf.mxu0
        %v6571 = vadd.f32 0.0, %v6570
        %6572 = vmatmul.bf16.gmra.mxu0 %v4088
        %v6573 = vpop.f32.mrf.mxu0
        %v6574 = vpop.f32.mrf.mxu0
        %6575 = vmatmul.bf16.gmra.mxu0 %v4089
        %v6576 = vpop.f32.mrf.mxu0
        %v6577 = vadd.f32 0.0, %v6576
        %v6578 = vpop.f32.mrf.mxu0
        %v6579 = vadd.f32 0.0, %v6578
        %6580 = vmatmul.bf16.gmra.mxu0 %v4090
        %v6581 = vpop.f32.mrf.mxu0
        %v6582 = vpop.f32.mrf.mxu0
        %6583 = vmatmul.bf16.gmra.mxu0 %v4091
        %v6584 = vpop.f32.mrf.mxu0
        %v6585 = vadd.f32 0.0, %v6584
        %v6586 = vpop.f32.mrf.mxu0
        %v6587 = vadd.f32 0.0, %v6586
        %6588 = vmatmul.bf16.gmra.mxu0 %v4092
        %v6589 = vpop.f32.mrf.mxu0
        %v6590 = vpop.f32.mrf.mxu0
        %6591 = vmatmul.bf16.gmra.mxu0 %v4093
        %v6592 = vpop.f32.mrf.mxu0
        %v6593 = vadd.f32 0.0, %v6592
        %v6594 = vpop.f32.mrf.mxu0
        %v6595 = vadd.f32 0.0, %v6594
        %6596 = vmatmul.bf16.gmra.mxu0 %v4094
        %v6597 = vpop.f32.mrf.mxu0
        %v6598 = vpop.f32.mrf.mxu0
        %6599 = vmatmul.bf16.gmra.mxu0 %v4095
        %v6600 = vpop.f32.mrf.mxu0
        %v6601 = vadd.f32 0.0, %v6600
        %v6602 = vpop.f32.mrf.mxu0
        %v6603 = vadd.f32 0.0, %v6602
        %6604 = vmatmul.bf16.gmra.mxu0 %v4096
        %v6605 = vpop.f32.mrf.mxu0
        %v6606 = vpop.f32.mrf.mxu0
        %6607 = vmatmul.bf16.gmra.mxu0 %v4097
        %v6608 = vpop.f32.mrf.mxu0
        %v6609 = vadd.f32 0.0, %v6608
        %v6610 = vpop.f32.mrf.mxu0
        %v6611 = vadd.f32 0.0, %v6610
        %6612 = vmatmul.bf16.gmra.mxu0 %v4098
        %v6613 = vpop.f32.mrf.mxu0
        %v6614 = vpop.f32.mrf.mxu0
        %6615 = vmatmul.bf16.gmra.mxu0 %v4099
        %v6616 = vpop.f32.mrf.mxu0
        %v6617 = vadd.f32 0.0, %v6616
        %v6618 = vpop.f32.mrf.mxu0
        %v6619 = vadd.f32 0.0, %v6618
        %6620 = vmatmul.bf16.gmra.mxu0 %v4100
        %v6621 = vpop.f32.mrf.mxu0
        %v6622 = vpop.f32.mrf.mxu0
        %6623 = vmatmul.bf16.gmra.mxu0 %v4101
        %v6624 = vpop.f32.mrf.mxu0
        %v6625 = vadd.f32 0.0, %v6624
        %v6626 = vpop.f32.mrf.mxu0
        %v6627 = vadd.f32 0.0, %v6626
        %6628 = vmatmul.bf16.gmra.mxu0 %v4102
        %v6629 = vpop.f32.mrf.mxu0
        %v6630 = vpop.f32.mrf.mxu0
        %6631 = vmatmul.bf16.gmra.mxu0 %v5687
        %v6632 = vpop.f32.mrf.mxu0
        %v6633 = vadd.f32 0.0, %v6632
        %v6634 = vpop.f32.mrf.mxu0
        %v6635 = vadd.f32 0.0, %v6634
        %6636 = vmatmul.bf16.gmra.mxu0 %v5688
        %v6637 = vpop.f32.mrf.mxu0
        %v6638 = vpop.f32.mrf.mxu0
        %6639 = vmatmul.bf16.gmra.mxu0 %v6459
        %v6640 = vpop.f32.mrf.mxu0
        %v6641 = vadd.f32 0.0, %v6640
        %v6642 = vpop.f32.mrf.mxu0
        %v6643 = vadd.f32 0.0, %v6642
        %6644 = vmatmul.bf16.gmra.mxu0 %v6460
        %v6645 = vpop.f32.mrf.mxu0
        %v6646 = vpop.f32.mrf.mxu0
        %6647 = vdwg.mxu0
        %v6648 = vadd.f32 %v6410, %v6521
        %v6649 = vadd.f32 %v6411, %v6523
        %v6650 = vadd.f32 %v6412, %v6529
        %v6651 = vadd.f32 %v6413, %v6531
        %v6652 = vadd.f32 %v6414, %v6537
        %v6653 = vadd.f32 %v6415, %v6539
        %v6654 = vadd.f32 %v6416, %v6545
        %v6655 = vadd.f32 %v6417, %v6547
        %v6656 = vadd.f32 %v6418, %v6553
        %v6657 = vadd.f32 %v6419, %v6555
        %v6658 = vadd.f32 %v6420, %v6561
        %v6659 = vadd.f32 %v6421, %v6563
        %v6660 = vadd.f32 %v6422, %v6569
        %v6661 = vadd.f32 %v6423, %v6571
        %v6662 = vadd.f32 %v6424, %v6577
        %v6663 = vadd.f32 %v6425, %v6579
        %v6664 = vadd.f32 %v6426, %v6585
        %v6665 = vadd.f32 %v6427, %v6587
        %v6666 = vadd.f32 %v6428, %v6593
        %v6667 = vadd.f32 %v6429, %v6595
        %v6668 = vadd.f32 %v6430, %v6601
        %v6669 = vadd.f32 %v6431, %v6603
        %v6670 = vadd.f32 %v6432, %v6609
        %v6671 = vadd.f32 %v6433, %v6611
        %v6672 = vadd.f32 %v6434, %v6617
        %v6673 = vadd.f32 %v6435, %v6619
        %v6674 = vadd.f32 %v6436, %v6625
        %v6675 = vadd.f32 %v6437, %v6627
        %v6676 = vadd.f32 %v6438, %v6633
        %v6677 = vadd.f32 %v6439, %v6635
        %v6678 = vadd.f32 %v6440, %v6641
        %v6679 = vadd.f32 %v6441, %v6643
        %s6680 = scalar_lea.vmem %s2, 512
        %v6681 = vld [vmem:[%s6680] sm:$0xf]
        %v6682 = vld [vmem:[%s6680 + $0x4] sm:$0xf]
        %v6683 = vld [vmem:[%s6680 + $0x8] sm:$0xf]
        %v6684 = vld [vmem:[%s6680 + $0xc] sm:$0xf]
        %v6685 = vld [vmem:[%s6680 + $0x10] sm:$0xf]
        %v6686 = vld [vmem:[%s6680 + $0x14] sm:$0xf]
        %v6687 = vld [vmem:[%s6680 + $0x18] sm:$0xf]
        %v6688 = vld [vmem:[%s6680 + $0x1c] sm:$0xf]
        %v6689 = vld [vmem:[%s6680 + $0x20] sm:$0xf]
        %v6690 = vld [vmem:[%s6680 + $0x24] sm:$0xf]
        %v6691 = vld [vmem:[%s6680 + $0x28] sm:$0xf]
        %v6692 = vld [vmem:[%s6680 + $0x2c] sm:$0xf]
        %v6693 = vld [vmem:[%s6680 + $0x30] sm:$0xf]
        %v6694 = vld [vmem:[%s6680 + $0x34] sm:$0xf]
        %v6695 = vld [vmem:[%s6680 + $0x38] sm:$0xf]
        %v6696 = vld [vmem:[%s6680 + $0x3c] sm:$0xf]
        %v6698 = vunpack.c.l.b16 %v3909
        %v6699 = vpack.c.b16 %v6698, %v6698
        %v6701 = vshll.u32 %v6459, 16
        %v6703 = vrot.slane %v6701, 1
        %v6704 = vsel %vm1572, %v5943, %v6703
        %v6705 = vshrl.u32 %v6459, 16
        %v6707 = vor.u32 %v6705, %v6703
        %v6709 = vshll.u32 %v6460, 16
        %v6711 = vrot.slane %v6709, 1
        %v6712 = vsel %vm1572, %v6707, %v6711
        %v6713 = vshrl.u32 %v6460, 16
        %v6715 = vor.u32 %v6713, %v6711
        %v6717 = vshll.u32 %v6699, 16
        %v6719 = vrot.slane %v6717, 1
        %v6720 = vsel %vm1572, %v6715, %v6719
        %v6740 = vunpack.c.l.b16 %v6681
        %v6741 = vunpack.c.l.b16 %v6682
        %v6742 = vunpack.c.l.b16 %v6683
        %v6743 = vunpack.c.l.b16 %v6684
        %v6744 = vunpack.c.l.b16 %v6685
        %v6745 = vunpack.c.l.b16 %v6686
        %v6746 = vunpack.c.l.b16 %v6687
        %v6747 = vunpack.c.l.b16 %v6688
        %v6748 = vunpack.c.l.b16 %v6689
        %v6749 = vunpack.c.l.b16 %v6690
        %v6750 = vunpack.c.l.b16 %v6691
        %v6751 = vunpack.c.l.b16 %v6692
        %v6752 = vunpack.c.l.b16 %v6693
        %v6753 = vunpack.c.l.b16 %v6694
        %v6754 = vunpack.c.l.b16 %v6695
        %v6755 = vunpack.c.l.b16 %v6696
        %v6756 = vpack.c.b16 %v6741, %v6740
        %v6757 = vpack.c.b16 %v6743, %v6742
        %v6758 = vpack.c.b16 %v6745, %v6744
        %v6759 = vpack.c.b16 %v6747, %v6746
        %v6760 = vpack.c.b16 %v6749, %v6748
        %v6761 = vpack.c.b16 %v6751, %v6750
        %v6762 = vpack.c.b16 %v6753, %v6752
        %v6763 = vpack.c.b16 %v6755, %v6754
        %6772 = vmatpush.bf16.msra.mxu0 %v6763
        %6773 = vmatpush.bf16.msra.mxu0 %v6762
        %6774 = vmatpush.bf16.msra.mxu0 %v6761
        %6775 = vmatpush.bf16.msra.mxu0 %v6760
        %6776 = vmatpush.bf16.msra.mxu0 %v6759
        %6777 = vmatpush.bf16.msra.mxu0 %v6758
        %6778 = vmatpush.bf16.msra.mxu0 %v6757
        %6779 = vmatpush.bf16.msra.mxu0 %v6756
        %6780 = vmatmul.bf16.gmra.mxu0 %v4931
        %v6781 = vpop.f32.mrf.mxu0
        %v6782 = vadd.f32 0.0, %v6781
        %v6783 = vpop.f32.mrf.mxu0
        %v6784 = vadd.f32 0.0, %v6783
        %6785 = vmatmul.bf16.gmra.mxu0 %v4939
        %v6786 = vpop.f32.mrf.mxu0
        %v6787 = vpop.f32.mrf.mxu0
        %6788 = vmatmul.bf16.gmra.mxu0 %v4947
        %v6789 = vpop.f32.mrf.mxu0
        %v6790 = vadd.f32 0.0, %v6789
        %v6791 = vpop.f32.mrf.mxu0
        %v6792 = vadd.f32 0.0, %v6791
        %6793 = vmatmul.bf16.gmra.mxu0 %v4955
        %v6794 = vpop.f32.mrf.mxu0
        %v6795 = vpop.f32.mrf.mxu0
        %6796 = vmatmul.bf16.gmra.mxu0 %v4963
        %v6797 = vpop.f32.mrf.mxu0
        %v6798 = vadd.f32 0.0, %v6797
        %v6799 = vpop.f32.mrf.mxu0
        %v6800 = vadd.f32 0.0, %v6799
        %6801 = vmatmul.bf16.gmra.mxu0 %v4971
        %v6802 = vpop.f32.mrf.mxu0
        %v6803 = vpop.f32.mrf.mxu0
        %6804 = vmatmul.bf16.gmra.mxu0 %v4979
        %v6805 = vpop.f32.mrf.mxu0
        %v6806 = vadd.f32 0.0, %v6805
        %v6807 = vpop.f32.mrf.mxu0
        %v6808 = vadd.f32 0.0, %v6807
        %6809 = vmatmul.bf16.gmra.mxu0 %v4987
        %v6810 = vpop.f32.mrf.mxu0
        %v6811 = vpop.f32.mrf.mxu0
        %6812 = vmatmul.bf16.gmra.mxu0 %v4995
        %v6813 = vpop.f32.mrf.mxu0
        %v6814 = vadd.f32 0.0, %v6813
        %v6815 = vpop.f32.mrf.mxu0
        %v6816 = vadd.f32 0.0, %v6815
        %6817 = vmatmul.bf16.gmra.mxu0 %v5003
        %v6818 = vpop.f32.mrf.mxu0
        %v6819 = vpop.f32.mrf.mxu0
        %6820 = vmatmul.bf16.gmra.mxu0 %v5011
        %v6821 = vpop.f32.mrf.mxu0
        %v6822 = vadd.f32 0.0, %v6821
        %v6823 = vpop.f32.mrf.mxu0
        %v6824 = vadd.f32 0.0, %v6823
        %6825 = vmatmul.bf16.gmra.mxu0 %v5019
        %v6826 = vpop.f32.mrf.mxu0
        %v6827 = vpop.f32.mrf.mxu0
        %6828 = vmatmul.bf16.gmra.mxu0 %v5027
        %v6829 = vpop.f32.mrf.mxu0
        %v6830 = vadd.f32 0.0, %v6829
        %v6831 = vpop.f32.mrf.mxu0
        %v6832 = vadd.f32 0.0, %v6831
        %6833 = vmatmul.bf16.gmra.mxu0 %v5035
        %v6834 = vpop.f32.mrf.mxu0
        %v6835 = vpop.f32.mrf.mxu0
        %6836 = vmatmul.bf16.gmra.mxu0 %v5043
        %v6837 = vpop.f32.mrf.mxu0
        %v6838 = vadd.f32 0.0, %v6837
        %v6839 = vpop.f32.mrf.mxu0
        %v6840 = vadd.f32 0.0, %v6839
        %6841 = vmatmul.bf16.gmra.mxu0 %v5051
        %v6842 = vpop.f32.mrf.mxu0
        %v6843 = vpop.f32.mrf.mxu0
        %6844 = vmatmul.bf16.gmra.mxu0 %v5059
        %v6845 = vpop.f32.mrf.mxu0
        %v6846 = vadd.f32 0.0, %v6845
        %v6847 = vpop.f32.mrf.mxu0
        %v6848 = vadd.f32 0.0, %v6847
        %6849 = vmatmul.bf16.gmra.mxu0 %v5067
        %v6850 = vpop.f32.mrf.mxu0
        %v6851 = vpop.f32.mrf.mxu0
        %6852 = vmatmul.bf16.gmra.mxu0 %v5075
        %v6853 = vpop.f32.mrf.mxu0
        %v6854 = vadd.f32 0.0, %v6853
        %v6855 = vpop.f32.mrf.mxu0
        %v6856 = vadd.f32 0.0, %v6855
        %6857 = vmatmul.bf16.gmra.mxu0 %v5083
        %v6858 = vpop.f32.mrf.mxu0
        %v6859 = vpop.f32.mrf.mxu0
        %6860 = vmatmul.bf16.gmra.mxu0 %v5091
        %v6861 = vpop.f32.mrf.mxu0
        %v6862 = vadd.f32 0.0, %v6861
        %v6863 = vpop.f32.mrf.mxu0
        %v6864 = vadd.f32 0.0, %v6863
        %6865 = vmatmul.bf16.gmra.mxu0 %v5099
        %v6866 = vpop.f32.mrf.mxu0
        %v6867 = vpop.f32.mrf.mxu0
        %6868 = vmatmul.bf16.gmra.mxu0 %v5107
        %v6869 = vpop.f32.mrf.mxu0
        %v6870 = vadd.f32 0.0, %v6869
        %v6871 = vpop.f32.mrf.mxu0
        %v6872 = vadd.f32 0.0, %v6871
        %6873 = vmatmul.bf16.gmra.mxu0 %v5115
        %v6874 = vpop.f32.mrf.mxu0
        %v6875 = vpop.f32.mrf.mxu0
        %6876 = vmatmul.bf16.gmra.mxu0 %v5123
        %v6877 = vpop.f32.mrf.mxu0
        %v6878 = vadd.f32 0.0, %v6877
        %v6879 = vpop.f32.mrf.mxu0
        %v6880 = vadd.f32 0.0, %v6879
        %6881 = vmatmul.bf16.gmra.mxu0 %v5131
        %v6882 = vpop.f32.mrf.mxu0
        %v6883 = vpop.f32.mrf.mxu0
        %6884 = vmatmul.bf16.gmra.mxu0 %v5139
        %v6885 = vpop.f32.mrf.mxu0
        %v6886 = vadd.f32 0.0, %v6885
        %v6887 = vpop.f32.mrf.mxu0
        %v6888 = vadd.f32 0.0, %v6887
        %6889 = vmatmul.bf16.gmra.mxu0 %v5932
        %v6890 = vpop.f32.mrf.mxu0
        %v6891 = vpop.f32.mrf.mxu0
        %6892 = vmatmul.bf16.gmra.mxu0 %v5940
        %v6893 = vpop.f32.mrf.mxu0
        %v6894 = vadd.f32 0.0, %v6893
        %v6895 = vpop.f32.mrf.mxu0
        %v6896 = vadd.f32 0.0, %v6895
        %6897 = vmatmul.bf16.gmra.mxu0 %v6704
        %v6898 = vpop.f32.mrf.mxu0
        %v6899 = vpop.f32.mrf.mxu0
        %6900 = vmatmul.bf16.gmra.mxu0 %v6712
        %v6901 = vpop.f32.mrf.mxu0
        %v6902 = vadd.f32 0.0, %v6901
        %v6903 = vpop.f32.mrf.mxu0
        %v6904 = vadd.f32 0.0, %v6903
        %6905 = vmatmul.bf16.gmra.mxu0 %v6720
        %v6906 = vpop.f32.mrf.mxu0
        %v6907 = vpop.f32.mrf.mxu0
        %6908 = vdwg.mxu0
        %v6909 = vadd.f32 %v6648, %v6782
        %v6910 = vadd.f32 %v6649, %v6784
        %v6911 = vadd.f32 %v6650, %v6790
        %v6912 = vadd.f32 %v6651, %v6792
        %v6913 = vadd.f32 %v6652, %v6798
        %v6914 = vadd.f32 %v6653, %v6800
        %v6915 = vadd.f32 %v6654, %v6806
        %v6916 = vadd.f32 %v6655, %v6808
        %v6917 = vadd.f32 %v6656, %v6814
        %v6918 = vadd.f32 %v6657, %v6816
        %v6919 = vadd.f32 %v6658, %v6822
        %v6920 = vadd.f32 %v6659, %v6824
        %v6921 = vadd.f32 %v6660, %v6830
        %v6922 = vadd.f32 %v6661, %v6832
        %v6923 = vadd.f32 %v6662, %v6838
        %v6924 = vadd.f32 %v6663, %v6840
        %v6925 = vadd.f32 %v6664, %v6846
        %v6926 = vadd.f32 %v6665, %v6848
        %v6927 = vadd.f32 %v6666, %v6854
        %v6928 = vadd.f32 %v6667, %v6856
        %v6929 = vadd.f32 %v6668, %v6862
        %v6930 = vadd.f32 %v6669, %v6864
        %v6931 = vadd.f32 %v6670, %v6870
        %v6932 = vadd.f32 %v6671, %v6872
        %v6933 = vadd.f32 %v6672, %v6878
        %v6934 = vadd.f32 %v6673, %v6880
        %v6935 = vadd.f32 %v6674, %v6886
        %v6936 = vadd.f32 %v6675, %v6888
        %v6937 = vadd.f32 %v6676, %v6894
        %v6938 = vadd.f32 %v6677, %v6896
        %v6939 = vadd.f32 %v6678, %v6902
        %v6940 = vadd.f32 %v6679, %v6904
        %v6941 = vld [vmem:[%s5] sm:$0x1]
        %v6943 = vperm.slane %v6941, 0
        %v6945 = vmul.f32 %v6909, %v6943
        %v6946 = vmul.f32 %v6910, %v6943
        %v6947 = vmul.f32 %v6911, %v6943
        %v6948 = vmul.f32 %v6912, %v6943
        %v6949 = vmul.f32 %v6913, %v6943
        %v6950 = vmul.f32 %v6914, %v6943
        %v6951 = vmul.f32 %v6915, %v6943
        %v6952 = vmul.f32 %v6916, %v6943
        %v6953 = vmul.f32 %v6917, %v6943
        %v6954 = vmul.f32 %v6918, %v6943
        %v6955 = vmul.f32 %v6919, %v6943
        %v6956 = vmul.f32 %v6920, %v6943
        %v6957 = vmul.f32 %v6921, %v6943
        %v6958 = vmul.f32 %v6922, %v6943
        %v6959 = vmul.f32 %v6923, %v6943
        %v6960 = vmul.f32 %v6924, %v6943
        %v6961 = vmul.f32 %v6925, %v6943
        %v6962 = vmul.f32 %v6926, %v6943
        %v6963 = vmul.f32 %v6927, %v6943
        %v6964 = vmul.f32 %v6928, %v6943
        %v6965 = vmul.f32 %v6929, %v6943
        %v6966 = vmul.f32 %v6930, %v6943
        %v6967 = vmul.f32 %v6931, %v6943
        %v6968 = vmul.f32 %v6932, %v6943
        %v6969 = vmul.f32 %v6933, %v6943
        %v6970 = vmul.f32 %v6934, %v6943
        %v6971 = vmul.f32 %v6935, %v6943
        %v6972 = vmul.f32 %v6936, %v6943
        %v6973 = vmul.f32 %v6937, %v6943
        %v6974 = vmul.f32 %v6938, %v6943
        %v6975 = vmul.f32 %v6939, %v6943
        %v6976 = vmul.f32 %v6940, %v6943
        %v6977 = vld [vmem:[%s6] sm:$0x1]
        %v6979 = vperm.slane %v6977, 0
        %v6981 = vadd.f32 %v6945, %v6979
        %v6982 = vadd.f32 %v6946, %v6979
        %v6983 = vadd.f32 %v6947, %v6979
        %v6984 = vadd.f32 %v6948, %v6979
        %v6985 = vadd.f32 %v6949, %v6979
        %v6986 = vadd.f32 %v6950, %v6979
        %v6987 = vadd.f32 %v6951, %v6979
        %v6988 = vadd.f32 %v6952, %v6979
        %v6989 = vadd.f32 %v6953, %v6979
        %v6990 = vadd.f32 %v6954, %v6979
        %v6991 = vadd.f32 %v6955, %v6979
        %v6992 = vadd.f32 %v6956, %v6979
        %v6993 = vadd.f32 %v6957, %v6979
        %v6994 = vadd.f32 %v6958, %v6979
        %v6995 = vadd.f32 %v6959, %v6979
        %v6996 = vadd.f32 %v6960, %v6979
        %v6997 = vadd.f32 %v6961, %v6979
        %v6998 = vadd.f32 %v6962, %v6979
        %v6999 = vadd.f32 %v6963, %v6979
        %v7000 = vadd.f32 %v6964, %v6979
        %v7001 = vadd.f32 %v6965, %v6979
        %v7002 = vadd.f32 %v6966, %v6979
        %v7003 = vadd.f32 %v6967, %v6979
        %v7004 = vadd.f32 %v6968, %v6979
        %v7005 = vadd.f32 %v6969, %v6979
        %v7006 = vadd.f32 %v6970, %v6979
        %v7007 = vadd.f32 %v6971, %v6979
        %v7008 = vadd.f32 %v6972, %v6979
        %v7009 = vadd.f32 %v6973, %v6979
        %v7010 = vadd.f32 %v6974, %v6979
        %v7011 = vadd.f32 %v6975, %v6979
        %v7012 = vadd.f32 %v6976, %v6979
        %v7013 = vadd.f32 %v6981, %v6982
        %v7014 = vadd.f32 %v7013, %v6983
        %v7015 = vadd.f32 %v7014, %v6984
        %v7016 = vadd.f32 %v7015, %v6985
        %v7017 = vadd.f32 %v7016, %v6986
        %v7018 = vadd.f32 %v7017, %v6987
        %v7019 = vadd.f32 %v7018, %v6988
        %v7020 = vadd.f32 %v7019, %v6989
        %v7021 = vadd.f32 %v7020, %v6990
        %v7022 = vadd.f32 %v7021, %v6991
        %v7023 = vadd.f32 %v7022, %v6992
        %v7024 = vadd.f32 %v7023, %v6993
        %v7025 = vadd.f32 %v7024, %v6994
        %v7026 = vadd.f32 %v7025, %v6995
        %v7027 = vadd.f32 %v7026, %v6996
        %v7028 = vadd.f32 %v7027, %v6997
        %v7029 = vadd.f32 %v7028, %v6998
        %v7030 = vadd.f32 %v7029, %v6999
        %v7031 = vadd.f32 %v7030, %v7000
        %v7032 = vadd.f32 %v7031, %v7001
        %v7033 = vadd.f32 %v7032, %v7002
        %v7034 = vadd.f32 %v7033, %v7003
        %v7035 = vadd.f32 %v7034, %v7004
        %v7036 = vadd.f32 %v7035, %v7005
        %v7037 = vadd.f32 %v7036, %v7006
        %v7038 = vadd.f32 %v7037, %v7007
        %v7039 = vadd.f32 %v7038, %v7008
        %v7040 = vadd.f32 %v7039, %v7009
        %v7041 = vadd.f32 %v7040, %v7010
        %v7042 = vadd.f32 %v7041, %v7011
        %v7043 = vadd.f32 %v7042, %v7012
        %v7044 = vrot.slane %v7043, 4
        %v7045 = vadd.f32 %v7043, %v7044
        %v7046 = vrot.slane %v7045, 2
        %v7047 = vadd.f32 %v7045, %v7046
        %v7048 = vrot.slane %v7047, 1
        %v7049 = vadd.f32 %v7047, %v7048
        %v7050 = vmul.f32 %v7049, 0.00390625
        %v7051 = vpack.c.bf16 %v7050, %v7050
        %v7052 = vld [vmem:[%s7] sm:$0xf]
        %v7053 = vld [vmem:[%s7 + $0x4] sm:$0xf]
        %v7054 = vld [vmem:[%s7 + $0x8] sm:$0xf]
        %v7055 = vld [vmem:[%s7 + $0xc] sm:$0xf]
        %v7056 = vld [vmem:[%s7 + $0x10] sm:$0xf]
        %v7057 = vld [vmem:[%s7 + $0x14] sm:$0xf]
        %v7058 = vld [vmem:[%s7 + $0x18] sm:$0xf]
        %v7059 = vld [vmem:[%s7 + $0x1c] sm:$0xf]
        %v7060 = vld [vmem:[%s7 + $0x20] sm:$0xf]
        %v7061 = vld [vmem:[%s7 + $0x24] sm:$0xf]
        %v7062 = vld [vmem:[%s7 + $0x28] sm:$0xf]
        %v7063 = vld [vmem:[%s7 + $0x2c] sm:$0xf]
        %v7064 = vld [vmem:[%s7 + $0x30] sm:$0xf]
        %v7065 = vld [vmem:[%s7 + $0x34] sm:$0xf]
        %v7066 = vld [vmem:[%s7 + $0x38] sm:$0xf]
        %v7067 = vld [vmem:[%s7 + $0x3c] sm:$0xf]
        %v7084 = vunpack.c.l.b16 %v7052
        %v7085 = vunpack.c.l.b16 %v7053
        %v7086 = vunpack.c.l.b16 %v7054
        %v7087 = vunpack.c.l.b16 %v7055
        %v7088 = vunpack.c.l.b16 %v7056
        %v7089 = vunpack.c.l.b16 %v7057
        %v7090 = vunpack.c.l.b16 %v7058
        %v7091 = vunpack.c.l.b16 %v7059
        %v7092 = vunpack.c.l.b16 %v7060
        %v7093 = vunpack.c.l.b16 %v7061
        %v7094 = vunpack.c.l.b16 %v7062
        %v7095 = vunpack.c.l.b16 %v7063
        %v7096 = vunpack.c.l.b16 %v7064
        %v7097 = vunpack.c.l.b16 %v7065
        %v7098 = vunpack.c.l.b16 %v7066
        %v7099 = vunpack.c.l.b16 %v7067
        %v7100 = vpack.c.b16 %v7085, %v7084
        %v7101 = vpack.c.b16 %v7087, %v7086
        %v7102 = vpack.c.b16 %v7089, %v7088
        %v7103 = vpack.c.b16 %v7091, %v7090
        %v7104 = vpack.c.b16 %v7093, %v7092
        %v7105 = vpack.c.b16 %v7095, %v7094
        %v7106 = vpack.c.b16 %v7097, %v7096
        %v7107 = vpack.c.b16 %v7099, %v7098
        %7116 = vmatpush.bf16.msra.mxu0 %v7107
        %7117 = vmatpush.bf16.msra.mxu0 %v7106
        %7118 = vmatpush.bf16.msra.mxu0 %v7105
        %7119 = vmatpush.bf16.msra.mxu0 %v7104
        %7120 = vmatpush.bf16.msra.mxu0 %v7103
        %7121 = vmatpush.bf16.msra.mxu0 %v7102
        %7122 = vmatpush.bf16.msra.mxu0 %v7101
        %7123 = vmatpush.bf16.msra.mxu0 %v7100
        %7124 = vmatmul.bf16.gmra.mxu0 %v7051
        %v7125 = vpop.f32.mrf.mxu0
        %v7126 = vadd.f32 0.0, %v7125
        %v7127 = vpop.f32.mrf.mxu0
        %7128 = vdwg.mxu0
        %v7129 = vmax.f32 %v7126, 0.0
        %v7130 = vpack.c.bf16 %v7129, %v7129
        %v7131 = vld [vmem:[%s8] sm:$0xf]
        %v7132 = vld [vmem:[%s8 + $0x4] sm:$0xf]
        %v7133 = vld [vmem:[%s8 + $0x8] sm:$0xf]
        %v7134 = vld [vmem:[%s8 + $0xc] sm:$0xf]
        %v7135 = vld [vmem:[%s8 + $0x10] sm:$0xf]
        %v7136 = vld [vmem:[%s8 + $0x14] sm:$0xf]
        %v7137 = vld [vmem:[%s8 + $0x18] sm:$0xf]
        %v7138 = vld [vmem:[%s8 + $0x1c] sm:$0xf]
        %v7139 = vld [vmem:[%s8 + $0x20] sm:$0xf]
        %v7140 = vld [vmem:[%s8 + $0x24] sm:$0xf]
        %v7141 = vld [vmem:[%s8 + $0x28] sm:$0xf]
        %v7142 = vld [vmem:[%s8 + $0x2c] sm:$0xf]
        %v7143 = vld [vmem:[%s8 + $0x30] sm:$0xf]
        %v7144 = vld [vmem:[%s8 + $0x34] sm:$0xf]
        %v7145 = vld [vmem:[%s8 + $0x38] sm:$0xf]
        %v7146 = vld [vmem:[%s8 + $0x3c] sm:$0xf]
        %v7163 = vunpack.c.l.b16 %v7131
        %v7164 = vunpack.c.l.b16 %v7132
        %v7165 = vunpack.c.l.b16 %v7133
        %v7166 = vunpack.c.l.b16 %v7134
        %v7167 = vunpack.c.l.b16 %v7135
        %v7168 = vunpack.c.l.b16 %v7136
        %v7169 = vunpack.c.l.b16 %v7137
        %v7170 = vunpack.c.l.b16 %v7138
        %v7171 = vunpack.c.l.b16 %v7139
        %v7172 = vunpack.c.l.b16 %v7140
        %v7173 = vunpack.c.l.b16 %v7141
        %v7174 = vunpack.c.l.b16 %v7142
        %v7175 = vunpack.c.l.b16 %v7143
        %v7176 = vunpack.c.l.b16 %v7144
        %v7177 = vunpack.c.l.b16 %v7145
        %v7178 = vunpack.c.l.b16 %v7146
        %v7179 = vpack.c.b16 %v7164, %v7163
        %v7180 = vpack.c.b16 %v7166, %v7165
        %v7181 = vpack.c.b16 %v7168, %v7167
        %v7182 = vpack.c.b16 %v7170, %v7169
        %v7183 = vpack.c.b16 %v7172, %v7171
        %v7184 = vpack.c.b16 %v7174, %v7173
        %v7185 = vpack.c.b16 %v7176, %v7175
        %v7186 = vpack.c.b16 %v7178, %v7177
        %7195 = vmatpush.bf16.msra.mxu0 %v7186
        %7196 = vmatpush.bf16.msra.mxu0 %v7185
        %7197 = vmatpush.bf16.msra.mxu0 %v7184
        %7198 = vmatpush.bf16.msra.mxu0 %v7183
        %7199 = vmatpush.bf16.msra.mxu0 %v7182
        %7200 = vmatpush.bf16.msra.mxu0 %v7181
        %7201 = vmatpush.bf16.msra.mxu0 %v7180
        %7202 = vmatpush.bf16.msra.mxu0 %v7179
        %7203 = vmatmul.bf16.gmra.mxu0 %v7130
        %v7204 = vpop.f32.mrf.mxu0
        %v7205 = vadd.f32 0.0, %v7204
        %v7206 = vpop.f32.mrf.mxu0
        %7207 = vdwg.mxu0
        %v7208 = vxor.u32 %v7205, 2147483648
        %v7209 = vmul.f32 %v7208, 1.442695
        %v7210 = vpow.pop %v7209
        %v7211 = vadd.f32 %v7210, 1.0
        %v7212 = vrcp.pop %v7211
        %v7213 = vmul.f32 %v7211, %v7212
        %v7214 = vsub.f32 1.0, %v7213
        %v7215 = vmul.f32 %v7212, %v7214
        %v7216 = vadd.f32 %v7212, %v7215
        %vm7217 = vweird.f32 %v7211
        %vm7218 = vweird.f32 %v7212
        %vm7219 = vmor %vm7217, %vm7218
        %v7220 = vsel %vm7219, %v7212, %v7216
        %v7221 = vand.u32 2147483647, %v7211
        %vm7222 = vcmp.eq.f32.partialorder %v7221, 8.507059e+37
        %v7223 = vand.u32 %v7211, 2147483648
        %v7224 = vor.u32 1.1754944e-38, %v7223
        %v7225 = vsel %vm7222, %v7224, %v7220
        %v7226 = vmul.f32 1.0, %v7225
        %v7227 = vperm.slane %v7226, 0
        %v7228 = vmul.f32 %v6981, %v7227
        %v7229 = vmul.f32 %v6982, %v7227
        %v7230 = vmul.f32 %v6983, %v7227
        %v7231 = vmul.f32 %v6984, %v7227
        %v7232 = vmul.f32 %v6985, %v7227
        %v7233 = vmul.f32 %v6986, %v7227
        %v7234 = vmul.f32 %v6987, %v7227
        %v7235 = vmul.f32 %v6988, %v7227
        %v7236 = vmul.f32 %v6989, %v7227
        %v7237 = vmul.f32 %v6990, %v7227
        %v7238 = vmul.f32 %v6991, %v7227
        %v7239 = vmul.f32 %v6992, %v7227
        %v7240 = vmul.f32 %v6993, %v7227
        %v7241 = vmul.f32 %v6994, %v7227
        %v7242 = vmul.f32 %v6995, %v7227
        %v7243 = vmul.f32 %v6996, %v7227
        %v7244 = vmul.f32 %v6997, %v7227
        %v7245 = vmul.f32 %v6998, %v7227
        %v7246 = vmul.f32 %v6999, %v7227
        %v7247 = vmul.f32 %v7000, %v7227
        %v7248 = vmul.f32 %v7001, %v7227
        %v7249 = vmul.f32 %v7002, %v7227
        %v7250 = vmul.f32 %v7003, %v7227
        %v7251 = vmul.f32 %v7004, %v7227
        %v7252 = vmul.f32 %v7005, %v7227
        %v7253 = vmul.f32 %v7006, %v7227
        %v7254 = vmul.f32 %v7007, %v7227
        %v7255 = vmul.f32 %v7008, %v7227
        %v7256 = vmul.f32 %v7009, %v7227
        %v7257 = vmul.f32 %v7010, %v7227
        %v7258 = vmul.f32 %v7011, %v7227
        %v7259 = vmul.f32 %v7012, %v7227
        %v7260 = vadd.f32 %v7228, %v381
        %v7261 = vadd.f32 %v7229, %v382
        %v7262 = vadd.f32 %v7230, %v383
        %v7263 = vadd.f32 %v7231, %v384
        %v7264 = vadd.f32 %v7232, %v385
        %v7265 = vadd.f32 %v7233, %v386
        %v7266 = vadd.f32 %v7234, %v387
        %v7267 = vadd.f32 %v7235, %v388
        %v7268 = vadd.f32 %v7236, %v389
        %v7269 = vadd.f32 %v7237, %v390
        %v7270 = vadd.f32 %v7238, %v391
        %v7271 = vadd.f32 %v7239, %v392
        %v7272 = vadd.f32 %v7240, %v393
        %v7273 = vadd.f32 %v7241, %v394
        %v7274 = vadd.f32 %v7242, %v395
        %v7275 = vadd.f32 %v7243, %v396
        %v7276 = vadd.f32 %v7244, %v397
        %v7277 = vadd.f32 %v7245, %v398
        %v7278 = vadd.f32 %v7246, %v399
        %v7279 = vadd.f32 %v7247, %v400
        %v7280 = vadd.f32 %v7248, %v401
        %v7281 = vadd.f32 %v7249, %v402
        %v7282 = vadd.f32 %v7250, %v403
        %v7283 = vadd.f32 %v7251, %v404
        %v7284 = vadd.f32 %v7252, %v405
        %v7285 = vadd.f32 %v7253, %v406
        %v7286 = vadd.f32 %v7254, %v407
        %v7287 = vadd.f32 %v7255, %v408
        %v7288 = vadd.f32 %v7256, %v409
        %v7289 = vadd.f32 %v7257, %v410
        %v7290 = vadd.f32 %v7258, %v411
        %v7291 = vadd.f32 %v7259, %v412
        %v7292 = vmax.f32 %v7260, 0.0
        %v7293 = vmax.f32 %v7261, 0.0
        %v7294 = vmax.f32 %v7262, 0.0
        %v7295 = vmax.f32 %v7263, 0.0
        %v7296 = vmax.f32 %v7264, 0.0
        %v7297 = vmax.f32 %v7265, 0.0
        %v7298 = vmax.f32 %v7266, 0.0
        %v7299 = vmax.f32 %v7267, 0.0
        %v7300 = vmax.f32 %v7268, 0.0
        %v7301 = vmax.f32 %v7269, 0.0
        %v7302 = vmax.f32 %v7270, 0.0
        %v7303 = vmax.f32 %v7271, 0.0
        %v7304 = vmax.f32 %v7272, 0.0
        %v7305 = vmax.f32 %v7273, 0.0
        %v7306 = vmax.f32 %v7274, 0.0
        %v7307 = vmax.f32 %v7275, 0.0
        %v7308 = vmax.f32 %v7276, 0.0
        %v7309 = vmax.f32 %v7277, 0.0
        %v7310 = vmax.f32 %v7278, 0.0
        %v7311 = vmax.f32 %v7279, 0.0
        %v7312 = vmax.f32 %v7280, 0.0
        %v7313 = vmax.f32 %v7281, 0.0
        %v7314 = vmax.f32 %v7282, 0.0
        %v7315 = vmax.f32 %v7283, 0.0
        %v7316 = vmax.f32 %v7284, 0.0
        %v7317 = vmax.f32 %v7285, 0.0
        %v7318 = vmax.f32 %v7286, 0.0
        %v7319 = vmax.f32 %v7287, 0.0
        %v7320 = vmax.f32 %v7288, 0.0
        %v7321 = vmax.f32 %v7289, 0.0
        %v7322 = vmax.f32 %v7290, 0.0
        %v7323 = vmax.f32 %v7291, 0.0
        %7324 = vst [vmem:[%s325] sm:$0xff] %v7292
        %7325 = vst [vmem:[%s325 + $0x8] sm:$0xff] %v7293
        %7326 = vst [vmem:[%s325 + $0x10] sm:$0xff] %v7294
        %7327 = vst [vmem:[%s325 + $0x18] sm:$0xff] %v7295
        %7328 = vst [vmem:[%s325 + $0x20] sm:$0xff] %v7296
        %7329 = vst [vmem:[%s325 + $0x28] sm:$0xff] %v7297
        %7330 = vst [vmem:[%s325 + $0x30] sm:$0xff] %v7298
        %7331 = vst [vmem:[%s325 + $0x38] sm:$0xff] %v7299
        %7332 = vst [vmem:[%s325 + $0x40] sm:$0xff] %v7300
        %7333 = vst [vmem:[%s325 + $0x48] sm:$0xff] %v7301
        %7334 = vst [vmem:[%s325 + $0x50] sm:$0xff] %v7302
        %7335 = vst [vmem:[%s325 + $0x58] sm:$0xff] %v7303
        %7336 = vst [vmem:[%s325 + $0x60] sm:$0xff] %v7304
        %7337 = vst [vmem:[%s325 + $0x68] sm:$0xff] %v7305
        %7338 = vst [vmem:[%s325 + $0x70] sm:$0xff] %v7306
        %7339 = vst [vmem:[%s325 + $0x78] sm:$0xff] %v7307
        %7340 = vst [vmem:[%s325 + $0x80] sm:$0xff] %v7308
        %7341 = vst [vmem:[%s325 + $0x88] sm:$0xff] %v7309
        %7342 = vst [vmem:[%s325 + $0x90] sm:$0xff] %v7310
        %7343 = vst [vmem:[%s325 + $0x98] sm:$0xff] %v7311
        %7344 = vst [vmem:[%s325 + $0xa0] sm:$0xff] %v7312
        %7345 = vst [vmem:[%s325 + $0xa8] sm:$0xff] %v7313
        %7346 = vst [vmem:[%s325 + $0xb0] sm:$0xff] %v7314
        %7347 = vst [vmem:[%s325 + $0xb8] sm:$0xff] %v7315
        %7348 = vst [vmem:[%s325 + $0xc0] sm:$0xff] %v7316
        %7349 = vst [vmem:[%s325 + $0xc8] sm:$0xff] %v7317
        %7350 = vst [vmem:[%s325 + $0xd0] sm:$0xff] %v7318
        %7351 = vst [vmem:[%s325 + $0xd8] sm:$0xff] %v7319
        %7352 = vst [vmem:[%s325 + $0xe0] sm:$0xff] %v7320
        %7353 = vst [vmem:[%s325 + $0xe8] sm:$0xff] %v7321
        %7354 = vst [vmem:[%s325 + $0xf0] sm:$0xff] %v7322
        %7355 = vst [vmem:[%s325 + $0xf8] sm:$0xff] %v7323
        %s7356 = sand.u32 %s225, 1
        %s7357 = scalar_lea.sflag [#allocation4], %s7356
        %s7358 = sand.u32 %s225, 1
        %s7359 = smul.addr %s7358, 256
        %s7360 = scalar_lea.vmem [#allocation3], %s7359
        // Predicated region
        $region57: #{se_basic_block.1} parent=55 // pred_check
          %p7361 = pneg %p235
        $region58: #{se_basic_block.1} parent=55 // pred_check_branch
          %7363 = sbr.rel (%p7361) target = $region60
        $region59: #{se_basic_block.1} parent=55 // pred_region
          %7365 = vsyncadd %s7357, 0
          %s7366 = smul.addr %s23, 32
          %s7367 = smul.addr %s7366, 8
          %s7368 = scalar_lea.hbm %s9, %s7367
          %s7369 = sshll.u32 %s7360, 4
          %s7370 = int_to_ptr.vmem [resolvable:$true] %s7369
          %s7371 = sshll.u32 %s7368, 4
          %s7372 = int_to_ptr.hbm [resolvable:$true] %s7371
          %7377 = dma.vmem_to_hbm [thread:$0]  %s7370, 4096, %s7372, %s7357, 128, 128, 8
        $region60: #{se_basic_block.1} parent=55 // pred_fallthru
          _
      $region56: #{se_basic_block.1} parent=5 // pred_fallthru
        _
      %p7378 = scmp.le.s32.totalorder 2, %s18
      // Predicated region
      $region61: #{se_basic_block.1} parent=5 // pred_check
        %p7379 = pneg %p7378
      $region62: #{se_basic_block.1} parent=5 // pred_check_branch
        %7381 = sbr.rel (%p7379) target = $region64
      $region63: #{se_basic_block.1} parent=5 // pred_region
        %s7382 = ssub.s32 %s18, 2
        // Predicated region
        $region65: #{se_basic_block.1} parent=63 // pred_check
          %p7383 = pneg %p241
        $region66: #{se_basic_block.1} parent=63 // pred_check_branch
          %7385 = sbr.rel (%p7383) target = $region68
        $region67: #{se_basic_block.1} parent=63 // pred_region
          %s7386 = sand.u32 %s226, 1
          %s7387 = scalar_lea.sflag [#allocation4], %s7386
          %s7388 = sand.u32 %s226, 1
          %s7389 = smul.addr %s7388, 256
          %s7390 = scalar_lea.vmem [#allocation3], %s7389
          %7392 = dma.done %s7387, 4096
        $region68: #{se_basic_block.1} parent=63 // pred_fallthru
          _
      $region64: #{se_basic_block.1} parent=5 // pred_fallthru
        _
    $region6: #{se_basic_block.1} parent=1 // loop_footer
      %s22 = sadd.s32 1, %s18
    $region7: #{se_basic_block.1} parent=1 // loop_footer_branch
      %17 = sbr.rel target = $region3
    $region8: #{se_basic_block.1} parent=1 // loop_exit
      _
    %7393 = vsyncpa [#allocation4], 1
    %s7394 = scalar_lea.sflag [#allocation4], 1
    %7395 = vsyncpa %s7394, 1

</llo_original>
